<compile_context>
chip_gen: v7x
topology: tpu7x:2x2x1
jax: 0.10.0
libtpu: 0.0.40
codegen_flags: <defaults>
</compile_context>

<pallas_src>
import jax
import jax.numpy as jnp
from jax.experimental import pallas as pl
from jax.experimental.pallas import tpu as pltpu

C = 512            # channels fixed by the module definition
KH = KW = 3
EPS = 1e-5         # nn.BatchNorm2d default eps


def _build_im2col(col_ref, src2d, *, n_img, h_dim, w_dim, write_zeros):
    """(Re)build the (KH, M, KW*C) bf16 im2col scratch from an (M, C) activation.

    Afterwards col_ref[kh, n*H*W + h*W + w, kw*C + c]
        == zero_pad(src)[n, h + kh - 1, w + kw - 1, c],
    so col_ref[kh] is directly the (M, 3C) MXU LHS for kernel row kh.
    The single f32 -> bf16 cast of the activation happens here.
    """
    hw = h_dim * w_dim
    s = src2d.astype(jnp.bfloat16)                      # cast once per conv
    zero_row = jnp.zeros((1, C), jnp.bfloat16)
    for n in range(n_img):                              # static unroll (N small)
        r0 = n * hw
        sn = s[r0:r0 + hw, :]                           # (H*W, C) of image n
        # kw shifts: within an image, w-1 / w+1 are the previous / next M-row;
        # mask the rows that would wrap across an image-row boundary.
        up = jnp.concatenate([zero_row, sn[:hw - 1, :]], axis=0)
        dn = jnp.concatenate([sn[1:, :], zero_row], axis=0)
        w_idx = jax.lax.broadcasted_iota(jnp.int32, (hw, 1), 0) % w_dim
        left = jnp.where(w_idx == 0, jnp.bfloat16(0), up)            # src[., w-1]
        right = jnp.where(w_idx == w_dim - 1, jnp.bfloat16(0), dn)   # src[., w+1]
        slab = jnp.concatenate([left, sn, right], axis=-1)           # (H*W, 3C)
        # kh = 1 (centre kernel row): every output row is valid.
        col_ref[1, r0:r0 + hw, :] = slab
        # kh = 0: output row h reads source row h-1 (zero halo at h == 0).
        col_ref[0, r0 + w_dim:r0 + hw, :] = slab[:hw - w_dim, :]
        # kh = 2: output row h reads source row h+1 (zero halo at h == H-1).
        col_ref[2, r0:r0 + hw - w_dim, :] = slab[w_dim:, :]
        if write_zeros:  # halo rows never change -> only written on first build
            zero_halo = jnp.zeros((w_dim, KW * C), jnp.bfloat16)
            col_ref[0, r0:r0 + w_dim, :] = zero_halo
            col_ref[2, r0 + hw - w_dim:r0 + hw, :] = zero_halo


def _make_kernel(n_img, h_dim, w_dim):
    def kernel(x_ref, w_ref, g_ref, b_ref, o_ref, acc_ref, col_ref):
        conv = pl.program_id(0)          # 0: first conv/BN, 1: second conv/BN
        kh = pl.program_id(1)            # kernel row 0..2
        last_kh = pl.num_programs(1) - 1

        # Build the conv-1 im2col from the (VMEM-resident) input, once.
        @pl.when(jnp.logical_and(conv == 0, kh == 0))
        def _():
            _build_im2col(col_ref, x_ref[...], n_img=n_img, h_dim=h_dim,
                          w_dim=w_dim, write_zeros=True)

        @pl.when(kh == 0)
        def _():
            acc_ref[...] = jnp.zeros_like(acc_ref)

        # One kernel row: (M, 3C) x (3C, C) bf16 matmul, f32 accumulation.
        # col_ref[kh] is a pure leading-dim view -- no slice copy, no cast.
        acc_ref[...] += jnp.dot(col_ref[kh], w_ref[0, 0],
                                preferred_element_type=jnp.float32)

        # Conv epilogue: training-mode BatchNorm (+ ReLU / residual), fused.
        @pl.when(kh == last_kh)
        def _():
            y = acc_ref[...]                                   # (M, C) f32
            inv_m = 1.0 / float(y.shape[0])
            s1 = jnp.sum(y, axis=0, keepdims=True)             # one-pass stats
            s2 = jnp.sum(y * y, axis=0, keepdims=True)
            mean = s1 * inv_m
            var = s2 * inv_m - mean * mean                     # biased batch var
            scale = g_ref[...] * jax.lax.rsqrt(var + EPS)      # (1, C)
            shift = b_ref[...] - mean * scale
            yn = y * scale + shift

            @pl.when(conv == 0)
            def _():
                _build_im2col(col_ref, jnp.maximum(yn, 0.0), n_img=n_img,
                              h_dim=h_dim, w_dim=w_dim, write_zeros=False)

            @pl.when(conv == 1)
            def _():
                o_ref[...] = jnp.maximum(yn + x_ref[...], 0.0).astype(o_ref.dtype)

    return kernel


def _call(x_nhwc, w_all, g_all, b_all, *, deep_weight_pipeline):
    n_img, h_dim, w_dim, c = x_nhwc.shape
    assert c == C and C % 128 == 0
    m = n_img * h_dim * w_dim
    assert m % 8 == 0, "N*H*W must be a multiple of 8 for the (M, C) layout"
    x2d = x_nhwc.reshape(m, C)

    w_idx_map = lambda i, k: (i, k, 0, 0)
    if deep_weight_pipeline:
        # 3 weight buffers (~4.7 MB) keep the (binding) weight-DMA queue full
        # across the fat conv-0 epilogue (BN + ReLU + im2col rebuild).
        w_spec = pl.BlockSpec((1, 1, KW * C, C), w_idx_map,
                              pipeline_mode=pl.Buffered(3))
    else:
        w_spec = pl.BlockSpec((1, 1, KW * C, C), w_idx_map)

    grid_spec = pltpu.PrefetchScalarGridSpec(
        num_scalar_prefetch=0,
        grid=(2, KH),
        in_specs=[
            pl.BlockSpec((m, C), lambda i, k: (0, 0)),            # x, resident
            w_spec,                                               # per-row weight slab
            pl.BlockSpec((None, 1, C), lambda i, k: (i, 0, 0)),   # gamma
            pl.BlockSpec((None, 1, C), lambda i, k: (i, 0, 0)),   # beta
        ],
        out_specs=pl.BlockSpec((m, C), lambda i, k: (0, 0)),
        scratch_shapes=[
            pltpu.VMEM((m, C), jnp.float32),                  # conv accumulator
            pltpu.VMEM((KH, m, KW * C), jnp.bfloat16),        # im2col, view per kh
        ],
    )
    out2d = pl.pallas_call(
        _make_kernel(n_img, h_dim, w_dim),
        out_shape=jax.ShapeDtypeStruct((m, C), x_nhwc.dtype),
        grid_spec=grid_spec,
        compiler_params=pltpu.CompilerParams(
            dimension_semantics=("arbitrary", "arbitrary"),
        ),
    )(x2d, w_all, g_all, b_all)
    return out2d.reshape(n_img, h_dim, w_dim, C)


def residual_block(x_nhwc, w_all, g_all, b_all):
    """x_nhwc: (N,H,W,C) f32, w_all: (2, KH, KW*C, C) bf16, g/b: (2, 1, C) f32."""
    try:
        return _call(x_nhwc, w_all, g_all, b_all, deep_weight_pipeline=True)
    except Exception:  # version-dependent pl.Buffered support -> default depth
        return _call(x_nhwc, w_all, g_all, b_all, deep_weight_pipeline=False)


def _pack_weights(w1_oihw, w2_oihw):
    # OIHW -> (kh, kw, in, out) -> (kh, kw*C + in, out), stacked over the 2 convs.
    def pack(w):
        return jnp.transpose(w, (2, 3, 1, 0)).reshape(KH, KW * C, C)
    return jnp.stack([pack(w1_oihw), pack(w2_oihw)], axis=0).astype(jnp.bfloat16)


def _reference(x_nhwc, w1, g1, b1, w2, g2, b2, matmul_dtype=jnp.float32):
    prec = jax.lax.Precision.HIGHEST if matmul_dtype == jnp.float32 else None

    def conv(x, w_oihw):
        return jax.lax.conv_general_dilated(
            x.astype(matmul_dtype),
            jnp.transpose(w_oihw, (2, 3, 1, 0)).astype(matmul_dtype),
            (1, 1), "SAME",
            dimension_numbers=("NHWC", "HWIO", "NHWC"),
            preferred_element_type=jnp.float32,
            precision=prec)

    def bn(y, g, b):
        mean = jnp.mean(y, axis=(0, 1, 2), keepdims=True)
        var = jnp.mean((y - mean) ** 2, axis=(0, 1, 2), keepdims=True)
        return (y - mean) * g * jax.lax.rsqrt(var + EPS) + b

    h = jax.nn.relu(bn(conv(x_nhwc, w1), g1, b1))
    y = bn(conv(h, w2), g2, b2)
    return jax.nn.relu(x_nhwc + y)


if __name__ == "__main__":
    N, H, W = 2, 8, 8  # small spatial size; channels fixed at 512 by the module
    key = jax.random.PRNGKey(0)
    kx, kw1, kw2, kg1, kb1, kg2, kb2 = jax.random.split(key, 7)

    # PyTorch-shaped input (NCHW) and parameters (OIHW), deterministic init.
    x_nchw = jax.random.normal(kx, (N, C, H, W), jnp.float32)
    w1_oihw = 0.02 * jax.random.normal(kw1, (C, C, KH, KW), jnp.float32)
    w2_oihw = 0.02 * jax.random.normal(kw2, (C, C, KH, KW), jnp.float32)
    g1 = 1.0 + 0.1 * jax.random.normal(kg1, (C,), jnp.float32)
    b1 = 0.1 * jax.random.normal(kb1, (C,), jnp.float32)
    g2 = 1.0 + 0.1 * jax.random.normal(kg2, (C,), jnp.float32)
    b2 = 0.1 * jax.random.normal(kb2, (C,), jnp.float32)

    # Kernel-side layouts.
    x_nhwc = jnp.transpose(x_nchw, (0, 2, 3, 1))             # NCHW -> NHWC
    w_all = _pack_weights(w1_oihw, w2_oihw)                  # (2, 3, 3C, C) bf16
    g_all = jnp.stack([g1, g2], axis=0).reshape(2, 1, C)
    b_all = jnp.stack([b1, b2], axis=0).reshape(2, 1, C)

    out = jax.block_until_ready(residual_block(x_nhwc, w_all, g_all, b_all))
    assert out.shape == (N, H, W, C) and out.dtype == jnp.float32

    # Matched-precision reference (bf16 MXU operands, f32 accumulation / BN).
    ref_bf16 = jax.block_until_ready(
        _reference(x_nhwc, w1_oihw, g1, b1, w2_oihw, g2, b2, jnp.bfloat16))
    err_bf16 = float(jnp.max(jnp.abs(out - ref_bf16)))
    assert jnp.allclose(out, ref_bf16, atol=3e-3, rtol=3e-3), err_bf16

    # Loose sanity check against the full-f32 module forward.
    ref_f32 = jax.block_until_ready(
        _reference(x_nhwc, w1_oihw, g1, b1, w2_oihw, g2, b2, jnp.float32))
    err_f32 = float(jnp.max(jnp.abs(out - ref_f32)))
    assert jnp.allclose(out, ref_f32, atol=5e-2, rtol=5e-2), err_f32

    print("KERNEL_OK")
</pallas_src>

<mosaic_0001>
module attributes {stable_mosaic.version = 11 : i64} {
  func.func @kernel(%arg0: i32, %arg1: i32, %arg2: memref<128x512xf32, #tpu.memory_space<vmem>>, %arg3: memref<1x1x1536x512xbf16, #tpu.memory_space<vmem>>, %arg4: memref<1x1x512xf32, #tpu.memory_space<vmem>>, %arg5: memref<1x1x512xf32, #tpu.memory_space<vmem>>, %arg6: memref<128x512xf32, #tpu.memory_space<vmem>>, %arg7: memref<128x512xf32, #tpu.memory_space<vmem>>, %arg8: memref<3x128x1536xbf16, #tpu.memory_space<vmem>>) attributes {dimension_semantics = [#tpu.dimension_semantics<arbitrary>, #tpu.dimension_semantics<arbitrary>], iteration_bounds = array<i64: 2, 3>, scalar_prefetch = 0 : i64, scratch_operands = 2 : i64, tpu.core_type = #tpu.core_type<tc>, window_params = [{pipeline_mode = #tpu.pipeline_mode<synchronous>, transform_indices = @transform_0, window_bounds = array<i64: 128, 512>}, {transform_indices = @transform_1, window_bounds = array<i64: 1, 1, 1536, 512>}, {transform_indices = @transform_2, window_bounds = array<i64: 1, 1, 512>}, {transform_indices = @transform_3, window_bounds = array<i64: 1, 1, 512>}, {pipeline_mode = #tpu.pipeline_mode<synchronous>, transform_indices = @transform_4, window_bounds = array<i64: 128, 512>}]} {
    %c0_i32 = arith.constant 0 : i32
    %0 = arith.cmpi eq, %arg0, %c0_i32 : i32
    %c0_i32_0 = arith.constant 0 : i32
    %1 = arith.cmpi eq, %arg1, %c0_i32_0 : i32
    %2 = arith.andi %0, %1 : i1
    %3 = arith.extui %2 : i1 to i32
    %c0_i32_1 = arith.constant 0 : i32
    %4 = arith.cmpi ne, %3, %c0_i32_1 : i32
    scf.if %4 {
      %c0_14 = arith.constant 0 : index
      %c0_15 = arith.constant 0 : index
      %20 = vector.load %arg2[%c0_14, %c0_15] : memref<128x512xf32, #tpu.memory_space<vmem>>, vector<128x512xf32>
      %21 = arith.truncf %20 : vector<128x512xf32> to vector<128x512xbf16>
      %cst_16 = arith.constant 0.000000e+00 : bf16
      %22 = vector.broadcast %cst_16 : bf16 to vector<1x512xbf16>
      %23 = vector.extract_strided_slice %21 {offsets = [0, 0], sizes = [64, 512], strides = [1, 1]} : vector<128x512xbf16> to vector<64x512xbf16>
      %24 = vector.extract_strided_slice %23 {offsets = [0, 0], sizes = [63, 512], strides = [1, 1]} : vector<64x512xbf16> to vector<63x512xbf16>
      %25 = tpu.concatenate %22, %24 in 0 : vector<1x512xbf16>, vector<63x512xbf16> -> vector<64x512xbf16>
      %26 = vector.extract_strided_slice %23 {offsets = [1, 0], sizes = [63, 512], strides = [1, 1]} : vector<64x512xbf16> to vector<63x512xbf16>
      %27 = tpu.concatenate %26, %22 in 0 : vector<63x512xbf16>, vector<1x512xbf16> -> vector<64x512xbf16>
      %28 = tpu.iota {dimensions = array<i32: 0>} : vector<64x1xi32>
      %c8_i32 = arith.constant 8 : i32
      %c0_i32_17 = arith.constant 0 : i32
      %29 = arith.cmpi eq, %c8_i32, %c0_i32_17 : i32
      %c1_i32 = arith.constant 1 : i32
      %30 = arith.select %29, %c1_i32, %c8_i32 : i32
      %31 = vector.broadcast %30 : i32 to vector<64x1xi32>
      %32 = arith.remsi %28, %31 : vector<64x1xi32>
      %c0_i32_18 = arith.constant 0 : i32
      %33 = vector.broadcast %c0_i32_18 : i32 to vector<64x1xi32>
      %34 = arith.cmpi ne, %32, %33 : vector<64x1xi32>
      %c0_i32_19 = arith.constant 0 : i32
      %35 = vector.broadcast %c0_i32_19 : i32 to vector<64x1xi32>
      %36 = arith.cmpi slt, %32, %35 : vector<64x1xi32>
      %c0_i32_20 = arith.constant 0 : i32
      %37 = arith.cmpi slt, %30, %c0_i32_20 : i32
      %38 = vector.broadcast %37 : i1 to vector<64x1xi1>
      %39 = vector.broadcast %38 : vector<64x1xi1> to vector<64x1xi1>
      %40 = arith.xori %36, %39 : vector<64x1xi1>
      %41 = arith.andi %40, %34 : vector<64x1xi1>
      %42 = vector.broadcast %30 : i32 to vector<64x1xi32>
      %43 = arith.addi %32, %42 : vector<64x1xi32>
      %44 = arith.select %41, %43, %32 : vector<64x1xi1>, vector<64x1xi32>
      %c0_i32_21 = arith.constant 0 : i32
      %45 = vector.broadcast %c0_i32_21 : i32 to vector<64x1xi32>
      %46 = arith.cmpi eq, %44, %45 : vector<64x1xi32>
      %cst_22 = arith.constant 0.000000e+00 : bf16
      %47 = vector.shape_cast %46 : vector<64x1xi1> to vector<64x1xi1>
      %48 = vector.broadcast %47 : vector<64x1xi1> to vector<64x512xi1>
      %49 = vector.broadcast %cst_22 : bf16 to vector<64x512xbf16>
      %50 = arith.select %48, %49, %25 : vector<64x512xi1>, vector<64x512xbf16>
      %c7_i32 = arith.constant 7 : i32
      %51 = vector.broadcast %c7_i32 : i32 to vector<64x1xi32>
      %52 = arith.cmpi eq, %44, %51 : vector<64x1xi32>
      %cst_23 = arith.constant 0.000000e+00 : bf16
      %53 = vector.shape_cast %52 : vector<64x1xi1> to vector<64x1xi1>
      %54 = vector.broadcast %53 : vector<64x1xi1> to vector<64x512xi1>
      %55 = vector.broadcast %cst_23 : bf16 to vector<64x512xbf16>
      %56 = arith.select %54, %55, %27 : vector<64x512xi1>, vector<64x512xbf16>
      %57 = tpu.concatenate %50, %23, %56 in 1 : vector<64x512xbf16>, vector<64x512xbf16>, vector<64x512xbf16> -> vector<64x1536xbf16>
      %c1 = arith.constant 1 : index
      %c0_24 = arith.constant 0 : index
      %c0_25 = arith.constant 0 : index
      %58 = vector.load %arg8[%c1, %c0_24, %c0_25] : memref<3x128x1536xbf16, #tpu.memory_space<vmem>>, vector<1x64x1536xbf16>
      %59 = vector.shape_cast %58 : vector<1x64x1536xbf16> to vector<64x1536xbf16>
      %60 = vector.shape_cast %57 : vector<64x1536xbf16> to vector<1x64x1536xbf16>
      tpu.vector_store %arg8[%c1, %c0_24, %c0_25], %60 {strides = array<i32>} : memref<3x128x1536xbf16, #tpu.memory_space<vmem>>, vector<1x64x1536xbf16>,
      %61 = vector.extract_strided_slice %57 {offsets = [0, 0], sizes = [56, 1536], strides = [1, 1]} : vector<64x1536xbf16> to vector<56x1536xbf16>
      %c0_26 = arith.constant 0 : index
      %c8 = arith.constant 8 : index
      %c0_27 = arith.constant 0 : index
      %62 = vector.load %arg8[%c0_26, %c8, %c0_27] : memref<3x128x1536xbf16, #tpu.memory_space<vmem>>, vector<1x56x1536xbf16>
      %63 = vector.shape_cast %62 : vector<1x56x1536xbf16> to vector<56x1536xbf16>
      %64 = vector.shape_cast %61 : vector<56x1536xbf16> to vector<1x56x1536xbf16>
      tpu.vector_store %arg8[%c0_26, %c8, %c0_27], %64 {strides = array<i32>} : memref<3x128x1536xbf16, #tpu.memory_space<vmem>>, vector<1x56x1536xbf16>,
      %65 = vector.extract_strided_slice %57 {offsets = [8, 0], sizes = [56, 1536], strides = [1, 1]} : vector<64x1536xbf16> to vector<56x1536xbf16>
      %c2 = arith.constant 2 : index
      %c0_28 = arith.constant 0 : index
      %c0_29 = arith.constant 0 : index
      %66 = vector.load %arg8[%c2, %c0_28, %c0_29] : memref<3x128x1536xbf16, #tpu.memory_space<vmem>>, vector<1x56x1536xbf16>
      %67 = vector.shape_cast %66 : vector<1x56x1536xbf16> to vector<56x1536xbf16>
      %68 = vector.shape_cast %65 : vector<56x1536xbf16> to vector<1x56x1536xbf16>
      tpu.vector_store %arg8[%c2, %c0_28, %c0_29], %68 {strides = array<i32>} : memref<3x128x1536xbf16, #tpu.memory_space<vmem>>, vector<1x56x1536xbf16>,
      %cst_30 = arith.constant 0.000000e+00 : bf16
      %69 = vector.broadcast %cst_30 : bf16 to vector<8x1536xbf16>
      %c0_31 = arith.constant 0 : index
      %c0_32 = arith.constant 0 : index
      %c0_33 = arith.constant 0 : index
      %70 = vector.load %arg8[%c0_31, %c0_32, %c0_33] : memref<3x128x1536xbf16, #tpu.memory_space<vmem>>, vector<1x8x1536xbf16>
      %71 = vector.shape_cast %70 : vector<1x8x1536xbf16> to vector<8x1536xbf16>
      %72 = vector.shape_cast %69 : vector<8x1536xbf16> to vector<1x8x1536xbf16>
      tpu.vector_store %arg8[%c0_31, %c0_32, %c0_33], %72 {strides = array<i32>} : memref<3x128x1536xbf16, #tpu.memory_space<vmem>>, vector<1x8x1536xbf16>,
      %c2_34 = arith.constant 2 : index
      %c56 = arith.constant 56 : index
      %c0_35 = arith.constant 0 : index
      %73 = vector.load %arg8[%c2_34, %c56, %c0_35] : memref<3x128x1536xbf16, #tpu.memory_space<vmem>>, vector<1x8x1536xbf16>
      %74 = vector.shape_cast %73 : vector<1x8x1536xbf16> to vector<8x1536xbf16>
      %75 = vector.shape_cast %69 : vector<8x1536xbf16> to vector<1x8x1536xbf16>
      tpu.vector_store %arg8[%c2_34, %c56, %c0_35], %75 {strides = array<i32>} : memref<3x128x1536xbf16, #tpu.memory_space<vmem>>, vector<1x8x1536xbf16>,
      %76 = vector.extract_strided_slice %21 {offsets = [64, 0], sizes = [64, 512], strides = [1, 1]} : vector<128x512xbf16> to vector<64x512xbf16>
      %77 = vector.extract_strided_slice %76 {offsets = [0, 0], sizes = [63, 512], strides = [1, 1]} : vector<64x512xbf16> to vector<63x512xbf16>
      %78 = tpu.concatenate %22, %77 in 0 : vector<1x512xbf16>, vector<63x512xbf16> -> vector<64x512xbf16>
      %79 = vector.extract_strided_slice %76 {offsets = [1, 0], sizes = [63, 512], strides = [1, 1]} : vector<64x512xbf16> to vector<63x512xbf16>
      %80 = tpu.concatenate %79, %22 in 0 : vector<63x512xbf16>, vector<1x512xbf16> -> vector<64x512xbf16>
      %81 = tpu.iota {dimensions = array<i32: 0>} : vector<64x1xi32>
      %c8_i32_36 = arith.constant 8 : i32
      %c0_i32_37 = arith.constant 0 : i32
      %82 = arith.cmpi eq, %c8_i32_36, %c0_i32_37 : i32
      %c1_i32_38 = arith.constant 1 : i32
      %83 = arith.select %82, %c1_i32_38, %c8_i32_36 : i32
      %84 = vector.broadcast %83 : i32 to vector<64x1xi32>
      %85 = arith.remsi %81, %84 : vector<64x1xi32>
      %c0_i32_39 = arith.constant 0 : i32
      %86 = vector.broadcast %c0_i32_39 : i32 to vector<64x1xi32>
      %87 = arith.cmpi ne, %85, %86 : vector<64x1xi32>
      %c0_i32_40 = arith.constant 0 : i32
      %88 = vector.broadcast %c0_i32_40 : i32 to vector<64x1xi32>
      %89 = arith.cmpi slt, %85, %88 : vector<64x1xi32>
      %c0_i32_41 = arith.constant 0 : i32
      %90 = arith.cmpi slt, %83, %c0_i32_41 : i32
      %91 = vector.broadcast %90 : i1 to vector<64x1xi1>
      %92 = vector.broadcast %91 : vector<64x1xi1> to vector<64x1xi1>
      %93 = arith.xori %89, %92 : vector<64x1xi1>
      %94 = arith.andi %93, %87 : vector<64x1xi1>
      %95 = vector.broadcast %83 : i32 to vector<64x1xi32>
      %96 = arith.addi %85, %95 : vector<64x1xi32>
      %97 = arith.select %94, %96, %85 : vector<64x1xi1>, vector<64x1xi32>
      %c0_i32_42 = arith.constant 0 : i32
      %98 = vector.broadcast %c0_i32_42 : i32 to vector<64x1xi32>
      %99 = arith.cmpi eq, %97, %98 : vector<64x1xi32>
      %cst_43 = arith.constant 0.000000e+00 : bf16
      %100 = vector.shape_cast %99 : vector<64x1xi1> to vector<64x1xi1>
      %101 = vector.broadcast %100 : vector<64x1xi1> to vector<64x512xi1>
      %102 = vector.broadcast %cst_43 : bf16 to vector<64x512xbf16>
      %103 = arith.select %101, %102, %78 : vector<64x512xi1>, vector<64x512xbf16>
      %c7_i32_44 = arith.constant 7 : i32
      %104 = vector.broadcast %c7_i32_44 : i32 to vector<64x1xi32>
      %105 = arith.cmpi eq, %97, %104 : vector<64x1xi32>
      %cst_45 = arith.constant 0.000000e+00 : bf16
      %106 = vector.shape_cast %105 : vector<64x1xi1> to vector<64x1xi1>
      %107 = vector.broadcast %106 : vector<64x1xi1> to vector<64x512xi1>
      %108 = vector.broadcast %cst_45 : bf16 to vector<64x512xbf16>
      %109 = arith.select %107, %108, %80 : vector<64x512xi1>, vector<64x512xbf16>
      %110 = tpu.concatenate %103, %76, %109 in 1 : vector<64x512xbf16>, vector<64x512xbf16>, vector<64x512xbf16> -> vector<64x1536xbf16>
      %c1_46 = arith.constant 1 : index
      %c64 = arith.constant 64 : index
      %c0_47 = arith.constant 0 : index
      %111 = vector.load %arg8[%c1_46, %c64, %c0_47] : memref<3x128x1536xbf16, #tpu.memory_space<vmem>>, vector<1x64x1536xbf16>
      %112 = vector.shape_cast %111 : vector<1x64x1536xbf16> to vector<64x1536xbf16>
      %113 = vector.shape_cast %110 : vector<64x1536xbf16> to vector<1x64x1536xbf16>
      tpu.vector_store %arg8[%c1_46, %c64, %c0_47], %113 {strides = array<i32>} : memref<3x128x1536xbf16, #tpu.memory_space<vmem>>, vector<1x64x1536xbf16>,
      %114 = vector.extract_strided_slice %110 {offsets = [0, 0], sizes = [56, 1536], strides = [1, 1]} : vector<64x1536xbf16> to vector<56x1536xbf16>
      %c0_48 = arith.constant 0 : index
      %c72 = arith.constant 72 : index
      %c0_49 = arith.constant 0 : index
      %115 = vector.load %arg8[%c0_48, %c72, %c0_49] : memref<3x128x1536xbf16, #tpu.memory_space<vmem>>, vector<1x56x1536xbf16>
      %116 = vector.shape_cast %115 : vector<1x56x1536xbf16> to vector<56x1536xbf16>
      %117 = vector.shape_cast %114 : vector<56x1536xbf16> to vector<1x56x1536xbf16>
      tpu.vector_store %arg8[%c0_48, %c72, %c0_49], %117 {strides = array<i32>} : memref<3x128x1536xbf16, #tpu.memory_space<vmem>>, vector<1x56x1536xbf16>,
      %118 = vector.extract_strided_slice %110 {offsets = [8, 0], sizes = [56, 1536], strides = [1, 1]} : vector<64x1536xbf16> to vector<56x1536xbf16>
      %c2_50 = arith.constant 2 : index
      %c64_51 = arith.constant 64 : index
      %c0_52 = arith.constant 0 : index
      %119 = vector.load %arg8[%c2_50, %c64_51, %c0_52] : memref<3x128x1536xbf16, #tpu.memory_space<vmem>>, vector<1x56x1536xbf16>
      %120 = vector.shape_cast %119 : vector<1x56x1536xbf16> to vector<56x1536xbf16>
      %121 = vector.shape_cast %118 : vector<56x1536xbf16> to vector<1x56x1536xbf16>
      tpu.vector_store %arg8[%c2_50, %c64_51, %c0_52], %121 {strides = array<i32>} : memref<3x128x1536xbf16, #tpu.memory_space<vmem>>, vector<1x56x1536xbf16>,
      %cst_53 = arith.constant 0.000000e+00 : bf16
      %122 = vector.broadcast %cst_53 : bf16 to vector<8x1536xbf16>
      %c0_54 = arith.constant 0 : index
      %c64_55 = arith.constant 64 : index
      %c0_56 = arith.constant 0 : index
      %123 = vector.load %arg8[%c0_54, %c64_55, %c0_56] : memref<3x128x1536xbf16, #tpu.memory_space<vmem>>, vector<1x8x1536xbf16>
      %124 = vector.shape_cast %123 : vector<1x8x1536xbf16> to vector<8x1536xbf16>
      %125 = vector.shape_cast %122 : vector<8x1536xbf16> to vector<1x8x1536xbf16>
      tpu.vector_store %arg8[%c0_54, %c64_55, %c0_56], %125 {strides = array<i32>} : memref<3x128x1536xbf16, #tpu.memory_space<vmem>>, vector<1x8x1536xbf16>,
      %c2_57 = arith.constant 2 : index
      %c120 = arith.constant 120 : index
      %c0_58 = arith.constant 0 : index
      %126 = vector.load %arg8[%c2_57, %c120, %c0_58] : memref<3x128x1536xbf16, #tpu.memory_space<vmem>>, vector<1x8x1536xbf16>
      %127 = vector.shape_cast %126 : vector<1x8x1536xbf16> to vector<8x1536xbf16>
      %128 = vector.shape_cast %122 : vector<8x1536xbf16> to vector<1x8x1536xbf16>
      tpu.vector_store %arg8[%c2_57, %c120, %c0_58], %128 {strides = array<i32>} : memref<3x128x1536xbf16, #tpu.memory_space<vmem>>, vector<1x8x1536xbf16>,
    } else {
    }
    %c0_i32_2 = arith.constant 0 : i32
    %5 = arith.cmpi eq, %arg1, %c0_i32_2 : i32
    %6 = arith.extui %5 : i1 to i32
    %c0_i32_3 = arith.constant 0 : i32
    %7 = arith.cmpi ne, %6, %c0_i32_3 : i32
    scf.if %7 {
      %cst_14 = arith.constant 0.000000e+00 : f32
      %20 = vector.broadcast %cst_14 : f32 to vector<128x512xf32>
      %c0_15 = arith.constant 0 : index
      %c0_16 = arith.constant 0 : index
      %21 = vector.load %arg7[%c0_15, %c0_16] : memref<128x512xf32, #tpu.memory_space<vmem>>, vector<128x512xf32>
      tpu.vector_store %arg7[%c0_15, %c0_16], %20 {strides = array<i32>} : memref<128x512xf32, #tpu.memory_space<vmem>>, vector<128x512xf32>,
    } else {
    }
    %c0 = arith.constant 0 : index
    %c0_4 = arith.constant 0 : index
    %8 = vector.load %arg7[%c0, %c0_4] : memref<128x512xf32, #tpu.memory_space<vmem>>, vector<128x512xf32>
    %9 = arith.index_cast %arg1 : i32 to index
    %c0_5 = arith.constant 0 : index
    %c0_6 = arith.constant 0 : index
    %10 = vector.load %arg8[%9, %c0_5, %c0_6] : memref<3x128x1536xbf16, #tpu.memory_space<vmem>>, vector<1x128x1536xbf16>
    %11 = vector.shape_cast %10 : vector<1x128x1536xbf16> to vector<128x1536xbf16>
    %c0_7 = arith.constant 0 : index
    %c0_8 = arith.constant 0 : index
    %c0_9 = arith.constant 0 : index
    %c0_10 = arith.constant 0 : index
    %12 = vector.load %arg3[%c0_7, %c0_8, %c0_9, %c0_10] : memref<1x1x1536x512xbf16, #tpu.memory_space<vmem>>, vector<1x1x1536x512xbf16>
    %13 = vector.shape_cast %12 : vector<1x1x1536x512xbf16> to vector<1536x512xbf16>
    %cst = arith.constant dense<0.000000e+00> : vector<128x512xf32>
    %14 = tpu.matmul %11, %13, %cst {dimension_numbers = #tpu.dot_dimension_numbers<[1], [0], [0], [1], [0, 0, 1, 1], [], []>} : vector<128x1536xbf16>, vector<1536x512xbf16>, vector<128x512xf32> -> vector<128x512xf32>
    %15 = arith.addf %8, %14 : vector<128x512xf32>
    %c0_11 = arith.constant 0 : index
    %c0_12 = arith.constant 0 : index
    %16 = vector.load %arg7[%c0_11, %c0_12] : memref<128x512xf32, #tpu.memory_space<vmem>>, vector<128x512xf32>
    tpu.vector_store %arg7[%c0_11, %c0_12], %15 {strides = array<i32>} : memref<128x512xf32, #tpu.memory_space<vmem>>, vector<128x512xf32>,
    %c2_i32 = arith.constant 2 : i32
    %17 = arith.cmpi eq, %arg1, %c2_i32 : i32
    %18 = arith.extui %17 : i1 to i32
    %c0_i32_13 = arith.constant 0 : i32
    %19 = arith.cmpi ne, %18, %c0_i32_13 : i32
    scf.if %19 {
      %c0_14 = arith.constant 0 : index
      %c0_15 = arith.constant 0 : index
      %20 = vector.load %arg7[%c0_14, %c0_15] : memref<128x512xf32, #tpu.memory_space<vmem>>, vector<128x512xf32>
      %cst_16 = arith.constant dense<0.000000e+00> : vector<512xf32>
      %21 = vector.multi_reduction <add>, %20, %cst_16 [0] : vector<128x512xf32> to vector<512xf32>
      %22 = vector.shape_cast %21 : vector<512xf32> to vector<1x512xf32>
      %23 = arith.mulf %20, %20 : vector<128x512xf32>
      %cst_17 = arith.constant dense<0.000000e+00> : vector<512xf32>
      %24 = vector.multi_reduction <add>, %23, %cst_17 [0] : vector<128x512xf32> to vector<512xf32>
      %25 = vector.shape_cast %24 : vector<512xf32> to vector<1x512xf32>
      %cst_18 = arith.constant 7.812500e-03 : f32
      %26 = vector.broadcast %cst_18 : f32 to vector<1x512xf32>
      %27 = arith.mulf %22, %26 : vector<1x512xf32>
      %cst_19 = arith.constant 7.812500e-03 : f32
      %28 = vector.broadcast %cst_19 : f32 to vector<1x512xf32>
      %29 = arith.mulf %25, %28 : vector<1x512xf32>
      %30 = arith.mulf %27, %27 : vector<1x512xf32>
      %31 = arith.subf %29, %30 : vector<1x512xf32>
      %c0_20 = arith.constant 0 : index
      %c0_21 = arith.constant 0 : index
      %c0_22 = arith.constant 0 : index
      %32 = vector.load %arg4[%c0_20, %c0_21, %c0_22] : memref<1x1x512xf32, #tpu.memory_space<vmem>>, vector<1x1x512xf32>
      %33 = vector.shape_cast %32 : vector<1x1x512xf32> to vector<1x512xf32>
      %cst_23 = arith.constant 9.99999974E-6 : f32
      %34 = vector.broadcast %cst_23 : f32 to vector<1x512xf32>
      %35 = arith.addf %31, %34 : vector<1x512xf32>
      %36 = math.rsqrt %35 : vector<1x512xf32>
      %37 = arith.mulf %33, %36 : vector<1x512xf32>
      %c0_24 = arith.constant 0 : index
      %c0_25 = arith.constant 0 : index
      %c0_26 = arith.constant 0 : index
      %38 = vector.load %arg5[%c0_24, %c0_25, %c0_26] : memref<1x1x512xf32, #tpu.memory_space<vmem>>, vector<1x1x512xf32>
      %39 = vector.shape_cast %38 : vector<1x1x512xf32> to vector<1x512xf32>
      %40 = arith.mulf %27, %37 : vector<1x512xf32>
      %41 = arith.subf %39, %40 : vector<1x512xf32>
      %42 = vector.broadcast %37 : vector<1x512xf32> to vector<128x512xf32>
      %43 = arith.mulf %20, %42 : vector<128x512xf32>
      %44 = vector.broadcast %41 : vector<1x512xf32> to vector<128x512xf32>
      %45 = arith.addf %43, %44 : vector<128x512xf32>
      %c0_i32_27 = arith.constant 0 : i32
      %46 = arith.cmpi eq, %arg0, %c0_i32_27 : i32
      %47 = arith.extui %46 : i1 to i32
      %c0_i32_28 = arith.constant 0 : i32
      %48 = arith.cmpi ne, %47, %c0_i32_28 : i32
      scf.if %48 {
        %cst_30 = arith.constant 0.000000e+00 : f32
        %52 = vector.broadcast %cst_30 : f32 to vector<128x512xf32>
        %53 = arith.maximumf %45, %52 : vector<128x512xf32>
        %54 = arith.truncf %53 : vector<128x512xf32> to vector<128x512xbf16>
        %cst_31 = arith.constant 0.000000e+00 : bf16
        %55 = vector.broadcast %cst_31 : bf16 to vector<1x512xbf16>
        %56 = vector.extract_strided_slice %54 {offsets = [0, 0], sizes = [64, 512], strides = [1, 1]} : vector<128x512xbf16> to vector<64x512xbf16>
        %57 = vector.extract_strided_slice %56 {offsets = [0, 0], sizes = [63, 512], strides = [1, 1]} : vector<64x512xbf16> to vector<63x512xbf16>
        %58 = tpu.concatenate %55, %57 in 0 : vector<1x512xbf16>, vector<63x512xbf16> -> vector<64x512xbf16>
        %59 = vector.extract_strided_slice %56 {offsets = [1, 0], sizes = [63, 512], strides = [1, 1]} : vector<64x512xbf16> to vector<63x512xbf16>
        %60 = tpu.concatenate %59, %55 in 0 : vector<63x512xbf16>, vector<1x512xbf16> -> vector<64x512xbf16>
        %61 = tpu.iota {dimensions = array<i32: 0>} : vector<64x1xi32>
        %c8_i32 = arith.constant 8 : i32
        %c0_i32_32 = arith.constant 0 : i32
        %62 = arith.cmpi eq, %c8_i32, %c0_i32_32 : i32
        %c1_i32_33 = arith.constant 1 : i32
        %63 = arith.select %62, %c1_i32_33, %c8_i32 : i32
        %64 = vector.broadcast %63 : i32 to vector<64x1xi32>
        %65 = arith.remsi %61, %64 : vector<64x1xi32>
        %c0_i32_34 = arith.constant 0 : i32
        %66 = vector.broadcast %c0_i32_34 : i32 to vector<64x1xi32>
        %67 = arith.cmpi ne, %65, %66 : vector<64x1xi32>
        %c0_i32_35 = arith.constant 0 : i32
        %68 = vector.broadcast %c0_i32_35 : i32 to vector<64x1xi32>
        %69 = arith.cmpi slt, %65, %68 : vector<64x1xi32>
        %c0_i32_36 = arith.constant 0 : i32
        %70 = arith.cmpi slt, %63, %c0_i32_36 : i32
        %71 = vector.broadcast %70 : i1 to vector<64x1xi1>
        %72 = vector.broadcast %71 : vector<64x1xi1> to vector<64x1xi1>
        %73 = arith.xori %69, %72 : vector<64x1xi1>
        %74 = arith.andi %73, %67 : vector<64x1xi1>
        %75 = vector.broadcast %63 : i32 to vector<64x1xi32>
        %76 = arith.addi %65, %75 : vector<64x1xi32>
        %77 = arith.select %74, %76, %65 : vector<64x1xi1>, vector<64x1xi32>
        %c0_i32_37 = arith.constant 0 : i32
        %78 = vector.broadcast %c0_i32_37 : i32 to vector<64x1xi32>
        %79 = arith.cmpi eq, %77, %78 : vector<64x1xi32>
        %cst_38 = arith.constant 0.000000e+00 : bf16
        %80 = vector.shape_cast %79 : vector<64x1xi1> to vector<64x1xi1>
        %81 = vector.broadcast %80 : vector<64x1xi1> to vector<64x512xi1>
        %82 = vector.broadcast %cst_38 : bf16 to vector<64x512xbf16>
        %83 = arith.select %81, %82, %58 : vector<64x512xi1>, vector<64x512xbf16>
        %c7_i32 = arith.constant 7 : i32
        %84 = vector.broadcast %c7_i32 : i32 to vector<64x1xi32>
        %85 = arith.cmpi eq, %77, %84 : vector<64x1xi32>
        %cst_39 = arith.constant 0.000000e+00 : bf16
        %86 = vector.shape_cast %85 : vector<64x1xi1> to vector<64x1xi1>
        %87 = vector.broadcast %86 : vector<64x1xi1> to vector<64x512xi1>
        %88 = vector.broadcast %cst_39 : bf16 to vector<64x512xbf16>
        %89 = arith.select %87, %88, %60 : vector<64x512xi1>, vector<64x512xbf16>
        %90 = tpu.concatenate %83, %56, %89 in 1 : vector<64x512xbf16>, vector<64x512xbf16>, vector<64x512xbf16> -> vector<64x1536xbf16>
        %c1 = arith.constant 1 : index
        %c0_40 = arith.constant 0 : index
        %c0_41 = arith.constant 0 : index
        %91 = vector.load %arg8[%c1, %c0_40, %c0_41] : memref<3x128x1536xbf16, #tpu.memory_space<vmem>>, vector<1x64x1536xbf16>
        %92 = vector.shape_cast %91 : vector<1x64x1536xbf16> to vector<64x1536xbf16>
        %93 = vector.shape_cast %90 : vector<64x1536xbf16> to vector<1x64x1536xbf16>
        tpu.vector_store %arg8[%c1, %c0_40, %c0_41], %93 {strides = array<i32>} : memref<3x128x1536xbf16, #tpu.memory_space<vmem>>, vector<1x64x1536xbf16>,
        %94 = vector.extract_strided_slice %90 {offsets = [0, 0], sizes = [56, 1536], strides = [1, 1]} : vector<64x1536xbf16> to vector<56x1536xbf16>
        %c0_42 = arith.constant 0 : index
        %c8 = arith.constant 8 : index
        %c0_43 = arith.constant 0 : index
        %95 = vector.load %arg8[%c0_42, %c8, %c0_43] : memref<3x128x1536xbf16, #tpu.memory_space<vmem>>, vector<1x56x1536xbf16>
        %96 = vector.shape_cast %95 : vector<1x56x1536xbf16> to vector<56x1536xbf16>
        %97 = vector.shape_cast %94 : vector<56x1536xbf16> to vector<1x56x1536xbf16>
        tpu.vector_store %arg8[%c0_42, %c8, %c0_43], %97 {strides = array<i32>} : memref<3x128x1536xbf16, #tpu.memory_space<vmem>>, vector<1x56x1536xbf16>,
        %98 = vector.extract_strided_slice %90 {offsets = [8, 0], sizes = [56, 1536], strides = [1, 1]} : vector<64x1536xbf16> to vector<56x1536xbf16>
        %c2 = arith.constant 2 : index
        %c0_44 = arith.constant 0 : index
        %c0_45 = arith.constant 0 : index
        %99 = vector.load %arg8[%c2, %c0_44, %c0_45] : memref<3x128x1536xbf16, #tpu.memory_space<vmem>>, vector<1x56x1536xbf16>
        %100 = vector.shape_cast %99 : vector<1x56x1536xbf16> to vector<56x1536xbf16>
        %101 = vector.shape_cast %98 : vector<56x1536xbf16> to vector<1x56x1536xbf16>
        tpu.vector_store %arg8[%c2, %c0_44, %c0_45], %101 {strides = array<i32>} : memref<3x128x1536xbf16, #tpu.memory_space<vmem>>, vector<1x56x1536xbf16>,
        %102 = vector.extract_strided_slice %54 {offsets = [64, 0], sizes = [64, 512], strides = [1, 1]} : vector<128x512xbf16> to vector<64x512xbf16>
        %103 = vector.extract_strided_slice %102 {offsets = [0, 0], sizes = [63, 512], strides = [1, 1]} : vector<64x512xbf16> to vector<63x512xbf16>
        %104 = tpu.concatenate %55, %103 in 0 : vector<1x512xbf16>, vector<63x512xbf16> -> vector<64x512xbf16>
        %105 = vector.extract_strided_slice %102 {offsets = [1, 0], sizes = [63, 512], strides = [1, 1]} : vector<64x512xbf16> to vector<63x512xbf16>
        %106 = tpu.concatenate %105, %55 in 0 : vector<63x512xbf16>, vector<1x512xbf16> -> vector<64x512xbf16>
        %107 = tpu.iota {dimensions = array<i32: 0>} : vector<64x1xi32>
        %c8_i32_46 = arith.constant 8 : i32
        %c0_i32_47 = arith.constant 0 : i32
        %108 = arith.cmpi eq, %c8_i32_46, %c0_i32_47 : i32
        %c1_i32_48 = arith.constant 1 : i32
        %109 = arith.select %108, %c1_i32_48, %c8_i32_46 : i32
        %110 = vector.broadcast %109 : i32 to vector<64x1xi32>
        %111 = arith.remsi %107, %110 : vector<64x1xi32>
        %c0_i32_49 = arith.constant 0 : i32
        %112 = vector.broadcast %c0_i32_49 : i32 to vector<64x1xi32>
        %113 = arith.cmpi ne, %111, %112 : vector<64x1xi32>
        %c0_i32_50 = arith.constant 0 : i32
        %114 = vector.broadcast %c0_i32_50 : i32 to vector<64x1xi32>
        %115 = arith.cmpi slt, %111, %114 : vector<64x1xi32>
        %c0_i32_51 = arith.constant 0 : i32
        %116 = arith.cmpi slt, %109, %c0_i32_51 : i32
        %117 = vector.broadcast %116 : i1 to vector<64x1xi1>
        %118 = vector.broadcast %117 : vector<64x1xi1> to vector<64x1xi1>
        %119 = arith.xori %115, %118 : vector<64x1xi1>
        %120 = arith.andi %119, %113 : vector<64x1xi1>
        %121 = vector.broadcast %109 : i32 to vector<64x1xi32>
        %122 = arith.addi %111, %121 : vector<64x1xi32>
        %123 = arith.select %120, %122, %111 : vector<64x1xi1>, vector<64x1xi32>
        %c0_i32_52 = arith.constant 0 : i32
        %124 = vector.broadcast %c0_i32_52 : i32 to vector<64x1xi32>
        %125 = arith.cmpi eq, %123, %124 : vector<64x1xi32>
        %cst_53 = arith.constant 0.000000e+00 : bf16
        %126 = vector.shape_cast %125 : vector<64x1xi1> to vector<64x1xi1>
        %127 = vector.broadcast %126 : vector<64x1xi1> to vector<64x512xi1>
        %128 = vector.broadcast %cst_53 : bf16 to vector<64x512xbf16>
        %129 = arith.select %127, %128, %104 : vector<64x512xi1>, vector<64x512xbf16>
        %c7_i32_54 = arith.constant 7 : i32
        %130 = vector.broadcast %c7_i32_54 : i32 to vector<64x1xi32>
        %131 = arith.cmpi eq, %123, %130 : vector<64x1xi32>
        %cst_55 = arith.constant 0.000000e+00 : bf16
        %132 = vector.shape_cast %131 : vector<64x1xi1> to vector<64x1xi1>
        %133 = vector.broadcast %132 : vector<64x1xi1> to vector<64x512xi1>
        %134 = vector.broadcast %cst_55 : bf16 to vector<64x512xbf16>
        %135 = arith.select %133, %134, %106 : vector<64x512xi1>, vector<64x512xbf16>
        %136 = tpu.concatenate %129, %102, %135 in 1 : vector<64x512xbf16>, vector<64x512xbf16>, vector<64x512xbf16> -> vector<64x1536xbf16>
        %c1_56 = arith.constant 1 : index
        %c64 = arith.constant 64 : index
        %c0_57 = arith.constant 0 : index
        %137 = vector.load %arg8[%c1_56, %c64, %c0_57] : memref<3x128x1536xbf16, #tpu.memory_space<vmem>>, vector<1x64x1536xbf16>
        %138 = vector.shape_cast %137 : vector<1x64x1536xbf16> to vector<64x1536xbf16>
        %139 = vector.shape_cast %136 : vector<64x1536xbf16> to vector<1x64x1536xbf16>
        tpu.vector_store %arg8[%c1_56, %c64, %c0_57], %139 {strides = array<i32>} : memref<3x128x1536xbf16, #tpu.memory_space<vmem>>, vector<1x64x1536xbf16>,
        %140 = vector.extract_strided_slice %136 {offsets = [0, 0], sizes = [56, 1536], strides = [1, 1]} : vector<64x1536xbf16> to vector<56x1536xbf16>
        %c0_58 = arith.constant 0 : index
        %c72 = arith.constant 72 : index
        %c0_59 = arith.constant 0 : index
        %141 = vector.load %arg8[%c0_58, %c72, %c0_59] : memref<3x128x1536xbf16, #tpu.memory_space<vmem>>, vector<1x56x1536xbf16>
        %142 = vector.shape_cast %141 : vector<1x56x1536xbf16> to vector<56x1536xbf16>
        %143 = vector.shape_cast %140 : vector<56x1536xbf16> to vector<1x56x1536xbf16>
        tpu.vector_store %arg8[%c0_58, %c72, %c0_59], %143 {strides = array<i32>} : memref<3x128x1536xbf16, #tpu.memory_space<vmem>>, vector<1x56x1536xbf16>,
        %144 = vector.extract_strided_slice %136 {offsets = [8, 0], sizes = [56, 1536], strides = [1, 1]} : vector<64x1536xbf16> to vector<56x1536xbf16>
        %c2_60 = arith.constant 2 : index
        %c64_61 = arith.constant 64 : index
        %c0_62 = arith.constant 0 : index
        %145 = vector.load %arg8[%c2_60, %c64_61, %c0_62] : memref<3x128x1536xbf16, #tpu.memory_space<vmem>>, vector<1x56x1536xbf16>
        %146 = vector.shape_cast %145 : vector<1x56x1536xbf16> to vector<56x1536xbf16>
        %147 = vector.shape_cast %144 : vector<56x1536xbf16> to vector<1x56x1536xbf16>
        tpu.vector_store %arg8[%c2_60, %c64_61, %c0_62], %147 {strides = array<i32>} : memref<3x128x1536xbf16, #tpu.memory_space<vmem>>, vector<1x56x1536xbf16>,
      } else {
      }
      %c1_i32 = arith.constant 1 : i32
      %49 = arith.cmpi eq, %arg0, %c1_i32 : i32
      %50 = arith.extui %49 : i1 to i32
      %c0_i32_29 = arith.constant 0 : i32
      %51 = arith.cmpi ne, %50, %c0_i32_29 : i32
      scf.if %51 {
        %c0_30 = arith.constant 0 : index
        %c0_31 = arith.constant 0 : index
        %52 = vector.load %arg2[%c0_30, %c0_31] : memref<128x512xf32, #tpu.memory_space<vmem>>, vector<128x512xf32>
        %53 = arith.addf %45, %52 : vector<128x512xf32>
        %cst_32 = arith.constant 0.000000e+00 : f32
        %54 = vector.broadcast %cst_32 : f32 to vector<128x512xf32>
        %55 = arith.maximumf %53, %54 : vector<128x512xf32>
        %c0_33 = arith.constant 0 : index
        %c0_34 = arith.constant 0 : index
        %56 = vector.load %arg6[%c0_33, %c0_34] : memref<128x512xf32, #tpu.memory_space<vmem>>, vector<128x512xf32>
        tpu.vector_store %arg6[%c0_33, %c0_34], %55 {strides = array<i32>} : memref<128x512xf32, #tpu.memory_space<vmem>>, vector<128x512xf32>,
      } else {
      }
    } else {
    }
    return
  }
  func.func @transform_0(%arg0: i32, %arg1: i32) -> (i32, i32) {
    %c0_i32 = arith.constant 0 : i32
    %c0_i32_0 = arith.constant 0 : i32
    %c0_i32_1 = arith.constant 0 : i32
    return %c0_i32, %c0_i32_0 : i32, i32
  }
  func.func @transform_1(%arg0: i32, %arg1: i32) -> (i32, i32, i32, i32) {
    %c0_i32 = arith.constant 0 : i32
    %c0_i32_0 = arith.constant 0 : i32
    %c0_i32_1 = arith.constant 0 : i32
    return %arg0, %arg1, %c0_i32, %c0_i32_0 : i32, i32, i32, i32
  }
  func.func @transform_2(%arg0: i32, %arg1: i32) -> (i32, i32, i32) {
    %c0_i32 = arith.constant 0 : i32
    %c0_i32_0 = arith.constant 0 : i32
    %c0_i32_1 = arith.constant 0 : i32
    return %arg0, %c0_i32, %c0_i32_0 : i32, i32, i32
  }
  func.func @transform_3(%arg0: i32, %arg1: i32) -> (i32, i32, i32) {
    %c0_i32 = arith.constant 0 : i32
    %c0_i32_0 = arith.constant 0 : i32
    %c0_i32_1 = arith.constant 0 : i32
    return %arg0, %c0_i32, %c0_i32_0 : i32, i32, i32
  }
  func.func @transform_4(%arg0: i32, %arg1: i32) -> (i32, i32) {
    %c0_i32 = arith.constant 0 : i32
    %c0_i32_0 = arith.constant 0 : i32
    %c0_i32_1 = arith.constant 0 : i32
    return %c0_i32, %c0_i32_0 : i32, i32
  }
}

</mosaic_0001>

<llo_original>
// kernel: tpu_custom_call.1
$region0: #{tpu_custom_call.1}
  #allocation0 [shape = 'u32[]', space=smem, size = 0x4, offset = 0x4, fixed_abs, tag = 'smem constant byte address 0x4 - core index']
  #allocation1 [shape = 'u32[144,128]{1,0:T(1,128)}', space=vmem, size = 0x12000, scoped, tag = 'internal scratch']
  #allocation2 [shape = 'f32[128,512]{1,0:T(8,128)}', space=vmem, size = 0x40000, scoped, tag = 'scratch operand']
  #allocation3 [shape = 'bf16[3,128,1536]{2,1,0:T(16,128)(2,1)}', space=vmem, size = 0x120000, scoped, tag = 'scratch operand']
  %s0 = inlined_call_operand.hbm [shape: f32[128,512], index: 0, kind: input, shape index: {}]
  %s1 = inlined_call_operand.hbm [shape: bf16[2,3,1536,512], index: 1, kind: input, shape index: {}]
  %s2 = inlined_call_operand.hbm [shape: f32[2,1,512], index: 2, kind: input, shape index: {}]
  %s3 = inlined_call_operand.hbm [shape: f32[2,1,512], index: 3, kind: input, shape index: {}]
  %s4 = inlined_call_operand.hbm [shape: f32[128,512], index: 4, kind: output, shape index: {}]
  %s5 = sld [smem:[#allocation0]]
  $region85: #{tpu_custom_call.1} parent=0
    _
  %s7 = ssub.s32 1, %s5
  %s8 = scalar_select 0, %s7, %s5
  $region1: #{tpu_custom_call.1} parent=0
    #allocation4 [shape = 'u8[262144]{0}', space=vmem, size = 0x40000, scoped, tag = 'input window, operand 0, single buffered']
    #allocation5 [shape = 's32[2]{0}', space=sflag, size = 0x8, scoped, tag = 'scoped memory for tpu_custom_call.1']
    #allocation6 [shape = 's32[2]{0}', space=sflag, size = 0x8, scoped, tag = 'scoped memory for tpu_custom_call.1']
    #allocation7 [shape = 'u8[3145728]{0}', space=vmem, size = 0x300000, scoped, tag = 'input window, operand 1']
    #allocation8 [shape = 's32[2]{0}', space=sflag, size = 0x8, scoped, tag = 'scoped memory for tpu_custom_call.1']
    #allocation9 [shape = 'u8[4096]{0}', space=vmem, size = 0x1000, scoped, tag = 'input window, operand 2']
    #allocation10 [shape = 'u8[4096]{0}', space=vmem, size = 0x1000, scoped, tag = 'input window, operand 3']
    #allocation11 [shape = 's32[2]{0}', space=sflag, size = 0x8, scoped, tag = 'scoped memory for tpu_custom_call.1']
    #allocation12 [shape = 'u8[262144]{0}', space=vmem, size = 0x40000, scoped, tag = 'output window, operand 0, single buffered']
    %9 = vsyncpa [#allocation5], 0
    %10 = vsyncpa [#allocation8], 0
    %s11 = scalar_lea.sflag [#allocation8], 1
    %12 = vsyncpa %s11, 0
    %13 = vsyncpa [#allocation11], 0
    %s14 = scalar_lea.sflag [#allocation11], 1
    %15 = vsyncpa %s14, 0
    %16 = vsyncpa [#allocation6], 0
    loop: start=0, step=1, limit=8
    $region2: #{tpu_custom_call.1} parent=1 // loop_pre_header
      _
    $region3: #{tpu_custom_call.1} parent=1 // loop_header
      %s18 = sphi 0, %s22
      %p19 = scmp.ge.s32.totalorder %s18, 8
      %s25 = sphi 0, %s37
      %s26 = sphi 0, %s33
      %s27 = sphi 0, %s25
      %s28 = sphi 0, %s26
      %s29 = sphi 0, %s27
      %s30 = sphi 0, %s28
      %s38 = sphi 0, %s38
      %s40 = sphi 0, %s38
      %s41 = sphi 0, %s40
      %s55 = sphi 0, %s41
      %s63 = sphi 0, %s65
      %s66 = sphi 0, %s63
      %s67 = sphi 0, %s66
      %s83 = sphi 0, %s67
      %s89 = sphi 0, %s91
      %s92 = sphi 0, %s89
      %s93 = sphi 0, %s92
      %s109 = sphi 0, %s93
      %s115 = sphi 0, %s117
      %s118 = sphi 0, %s115
      %s119 = sphi 0, %s118
      %s135 = sphi 0, %s119
      %s139 = sphi 0, %s139
      %s141 = sphi 0, %s139
      %s142 = sphi 0, %s141
      %s156 = sphi 0, %s142
    $region4: #{tpu_custom_call.1} parent=1 // loop_header_branch
      %21 = sbr.rel (%p19) target = $region8
    $region5: #{tpu_custom_call.1} parent=1 // loop_body
      %s23 = ssub.s32 %s18, 1
      %s24 = ssub.s32 %s18, 2
      %s31 = sadd.s32 1, %s26
      %p32 = scmp.ge.s32.totalorder %s31, 3
      %s33 = scalar_select %p32, 0, %s31
      %s34 = sadd.s32 1, %s25
      %s35 = scalar_select %p32, %s34, %s25
      %p36 = scmp.ge.s32.totalorder %s35, 2
      %s37 = scalar_select %p36, 0, %s35
      %s39 = sadd.s32 %s38, 1
      %p42 = scmp.eq.s32.totalorder %s18, 5
      %p43 = scmp.ne.s32.totalorder %s38, %s40
      %p44 = scmp.eq.s32.totalorder %s18, 0
      %p45 = por %p43, %p44
      %p46 = scmp.ne.s32.totalorder %s38, %s40
      %p47 = scmp.eq.s32.totalorder %s23, 5
      %p48 = por %p46, %p47
      %p49 = scmp.ne.s32.totalorder %s40, %s41
      %p50 = scmp.eq.s32.totalorder %s23, 0
      %p51 = por %p49, %p50
      %p52 = scmp.ne.s32.totalorder %s40, %s41
      %p53 = scmp.eq.s32.totalorder %s24, 5
      %p54 = por %p52, %p53
      %p56 = scmp.ne.s32.totalorder %s41, %s55
      %p57 = scmp.eq.s32.totalorder %s24, 0
      %p58 = por %p56, %p57
      %s59 = ssub.s32 %s25, %s37
      %s60 = ssub.s32 %s26, %s33
      %s61 = sor.u32 %s59, %s60
      %p62 = scmp.eq.s32.totalorder %s61, 0
      %s64 = sadd.s32 %s63, 1
      %s65 = scalar_select %p62, %s63, %s64
      %p68 = pneg %p62
      %p69 = scmp.eq.s32.totalorder %s18, 5
      %p70 = por %p68, %p69
      %p71 = scmp.ne.s32.totalorder %s63, %s66
      %p72 = scmp.eq.s32.totalorder %s18, 0
      %p73 = por %p71, %p72
      %p74 = scmp.ne.s32.totalorder %s63, %s66
      %p75 = scmp.eq.s32.totalorder %s23, 5
      %p76 = por %p74, %p75
      %p77 = scmp.ne.s32.totalorder %s66, %s67
      %p78 = scmp.eq.s32.totalorder %s23, 0
      %p79 = por %p77, %p78
      %p80 = scmp.ne.s32.totalorder %s66, %s67
      %p81 = scmp.eq.s32.totalorder %s24, 5
      %p82 = por %p80, %p81
      %p84 = scmp.ne.s32.totalorder %s67, %s83
      %p85 = scmp.eq.s32.totalorder %s24, 0
      %p86 = por %p84, %p85
      %s87 = ssub.s32 %s25, %s37
      %p88 = scmp.eq.s32.totalorder %s87, 0
      %s90 = sadd.s32 %s89, 1
      %s91 = scalar_select %p88, %s89, %s90
      %p94 = pneg %p88
      %p95 = scmp.eq.s32.totalorder %s18, 5
      %p96 = por %p94, %p95
      %p97 = scmp.ne.s32.totalorder %s89, %s92
      %p98 = scmp.eq.s32.totalorder %s18, 0
      %p99 = por %p97, %p98
      %p100 = scmp.ne.s32.totalorder %s89, %s92
      %p101 = scmp.eq.s32.totalorder %s23, 5
      %p102 = por %p100, %p101
      %p103 = scmp.ne.s32.totalorder %s92, %s93
      %p104 = scmp.eq.s32.totalorder %s23, 0
      %p105 = por %p103, %p104
      %p106 = scmp.ne.s32.totalorder %s92, %s93
      %p107 = scmp.eq.s32.totalorder %s24, 5
      %p108 = por %p106, %p107
      %p110 = scmp.ne.s32.totalorder %s93, %s109
      %p111 = scmp.eq.s32.totalorder %s24, 0
      %p112 = por %p110, %p111
      %s113 = ssub.s32 %s25, %s37
      %p114 = scmp.eq.s32.totalorder %s113, 0
      %s116 = sadd.s32 %s115, 1
      %s117 = scalar_select %p114, %s115, %s116
      %p120 = pneg %p114
      %p121 = scmp.eq.s32.totalorder %s18, 5
      %p122 = por %p120, %p121
      %p123 = scmp.ne.s32.totalorder %s115, %s118
      %p124 = scmp.eq.s32.totalorder %s18, 0
      %p125 = por %p123, %p124
      %p126 = scmp.ne.s32.totalorder %s115, %s118
      %p127 = scmp.eq.s32.totalorder %s23, 5
      %p128 = por %p126, %p127
      %p129 = scmp.ne.s32.totalorder %s118, %s119
      %p130 = scmp.eq.s32.totalorder %s23, 0
      %p131 = por %p129, %p130
      %p132 = scmp.ne.s32.totalorder %s118, %s119
      %p133 = scmp.eq.s32.totalorder %s24, 5
      %p134 = por %p132, %p133
      %p136 = scmp.ne.s32.totalorder %s119, %s135
      %p137 = scmp.eq.s32.totalorder %s24, 0
      %p138 = por %p136, %p137
      %s140 = sadd.s32 %s139, 1
      %p143 = scmp.eq.s32.totalorder %s18, 5
      %p144 = scmp.ne.s32.totalorder %s139, %s141
      %p145 = scmp.eq.s32.totalorder %s18, 0
      %p146 = por %p144, %p145
      %p147 = scmp.ne.s32.totalorder %s139, %s141
      %p148 = scmp.eq.s32.totalorder %s23, 5
      %p149 = por %p147, %p148
      %p150 = scmp.ne.s32.totalorder %s141, %s142
      %p151 = scmp.eq.s32.totalorder %s23, 0
      %p152 = por %p150, %p151
      %p153 = scmp.ne.s32.totalorder %s141, %s142
      %p154 = scmp.eq.s32.totalorder %s24, 5
      %p155 = por %p153, %p154
      %p157 = scmp.ne.s32.totalorder %s142, %s156
      %p158 = scmp.eq.s32.totalorder %s24, 0
      %p159 = por %p157, %p158
      %p160 = scmp.le.s32.totalorder 1, %s18
      %p161 = scmp.lt.s32.totalorder %s18, 7
      %p162 = pnand %p160, %p161
      %p163 = pneg %p162
      // Predicated region
      $region9: #{tpu_custom_call.1} parent=5 // pred_check
        _
      $region10: #{tpu_custom_call.1} parent=5 // pred_check_branch
        %165 = sbr.rel (%p162) target = $region12
      $region11: #{tpu_custom_call.1} parent=5 // pred_region
        %s166 = ssub.s32 %s18, 1
        // Predicated region
        $region13: #{tpu_custom_call.1} parent=11 // pred_check
          %p167 = pneg %p51
        $region14: #{tpu_custom_call.1} parent=11 // pred_check_branch
          %169 = sbr.rel (%p167) target = $region16
        $region15: #{tpu_custom_call.1} parent=11 // pred_region
          %s171 = ssub.s32 8192, 8192
          %172 = vsyncadd [#allocation5], %s171
          %s173 = sshll.u32 [#allocation4], 4
          %s174 = int_to_ptr.vmem [resolvable:$true] %s173
          %179 = dma.hbm_to_vmem [thread:$0]  %s0, 8192, %s174, [#allocation5], 512, 512, 32
        $region16: #{tpu_custom_call.1} parent=11 // pred_fallthru
          _
      $region12: #{tpu_custom_call.1} parent=5 // pred_fallthru
        _
      %p180 = scmp.lt.s32.totalorder %s18, 6
      // Predicated region
      $region17: #{tpu_custom_call.1} parent=5 // pred_check
        %p181 = pneg %p180
      $region18: #{tpu_custom_call.1} parent=5 // pred_check_branch
        %183 = sbr.rel (%p181) target = $region20
      $region19: #{tpu_custom_call.1} parent=5 // pred_region
        // Predicated region
        $region21: #{tpu_custom_call.1} parent=19 // pred_check
          %p184 = pneg %p73
        $region22: #{tpu_custom_call.1} parent=19 // pred_check_branch
          %186 = sbr.rel (%p184) target = $region24
        $region23: #{tpu_custom_call.1} parent=19 // pred_region
          %s187 = sand.u32 %s18, 1
          %s188 = scalar_lea.sflag [#allocation8], %s187
          %s189 = sand.u32 %s63, 1
          %s190 = smul.addr %s189, 3072
          %s191 = scalar_lea.vmem [#allocation7], %s190
          %s193 = ssub.s32 49152, 49152
          %194 = vsyncadd %s188, %s193
          %s195 = smul.addr %s26, 768
          %s196 = smul.addr %s25, 2304
          %s197 = sadd.s32 %s195, %s196
          %s198 = smul.addr %s197, 64
          %s199 = scalar_lea.hbm %s1, %s198
          %s200 = sshll.u32 %s191, 4
          %s201 = int_to_ptr.vmem [resolvable:$true] %s200
          %206 = dma.hbm_to_vmem [thread:$0]  %s199, 49152, %s201, %s188, 256, 256, 16
        $region24: #{tpu_custom_call.1} parent=19 // pred_fallthru
          _
        // Predicated region
        $region25: #{tpu_custom_call.1} parent=19 // pred_check
          %p207 = pneg %p99
        $region26: #{tpu_custom_call.1} parent=19 // pred_check_branch
          %209 = sbr.rel (%p207) target = $region28
        $region27: #{tpu_custom_call.1} parent=19 // pred_region
          %s210 = sand.u32 %s18, 1
          %s211 = scalar_lea.sflag [#allocation8], %s210
          %s212 = sand.u32 %s89, 1
          %s213 = smul.addr %s212, 4
          %s214 = scalar_lea.vmem [#allocation9], %s213
          %s216 = ssub.s32 64, 64
          %217 = vsyncadd %s211, %s216
          %s218 = smul.addr %s25, 4
          %s219 = smul.addr %s218, 16
          %s220 = scalar_lea.hbm %s2, %s219
          %s222 = sshll.u32 %s214, 4
          %s223 = int_to_ptr.vmem [resolvable:$true] %s222
          %225 = dma.hbm_to_vmem [thread:$0]  %s220, 64, %s223, %s211
        $region28: #{tpu_custom_call.1} parent=19 // pred_fallthru
          _
        // Predicated region
        $region29: #{tpu_custom_call.1} parent=19 // pred_check
          %p226 = pneg %p125
        $region30: #{tpu_custom_call.1} parent=19 // pred_check_branch
          %228 = sbr.rel (%p226) target = $region32
        $region31: #{tpu_custom_call.1} parent=19 // pred_region
          %s229 = sand.u32 %s115, 1
          %s230 = scalar_lea.sflag [#allocation11], %s229
          %s231 = sand.u32 %s115, 1
          %s232 = smul.addr %s231, 4
          %s233 = scalar_lea.vmem [#allocation10], %s232
          %s235 = ssub.s32 64, 64
          %236 = vsyncadd %s230, %s235
          %s237 = smul.addr %s25, 4
          %s238 = smul.addr %s237, 16
          %s239 = scalar_lea.hbm %s3, %s238
          %s241 = sshll.u32 %s233, 4
          %s242 = int_to_ptr.vmem [resolvable:$true] %s241
          %244 = dma.hbm_to_vmem [thread:$0]  %s239, 64, %s242, %s230
        $region32: #{tpu_custom_call.1} parent=19 // pred_fallthru
          _
      $region20: #{tpu_custom_call.1} parent=5 // pred_fallthru
        _
      %p245 = scmp.le.s32.totalorder 1, %s18
      %p246 = scmp.lt.s32.totalorder %s18, 7
      %p247 = pnand %p245, %p246
      %p248 = pneg %p247
      // Predicated region
      $region33: #{tpu_custom_call.1} parent=5 // pred_check
        _
      $region34: #{tpu_custom_call.1} parent=5 // pred_check_branch
        %250 = sbr.rel (%p247) target = $region36
      $region35: #{tpu_custom_call.1} parent=5 // pred_region
        %s251 = ssub.s32 %s18, 1
        // Predicated region
        $region37: #{tpu_custom_call.1} parent=35 // pred_check
          %p252 = pneg %p51
        $region38: #{tpu_custom_call.1} parent=35 // pred_check_branch
          %254 = sbr.rel (%p252) target = $region40
        $region39: #{tpu_custom_call.1} parent=35 // pred_region
          %255 = dma.done [#allocation5], 8192
        $region40: #{tpu_custom_call.1} parent=35 // pred_fallthru
          _
        %s256 = sand.u32 %s23, 1
        %s257 = scalar_lea.sflag [#allocation8], %s256
        %s258 = sand.u32 %s66, 1
        %s259 = smul.addr %s258, 3072
        %s260 = scalar_lea.vmem [#allocation7], %s259
        // Predicated region
        $region41: #{tpu_custom_call.1} parent=35 // pred_check
          %p261 = pneg %p79
        $region42: #{tpu_custom_call.1} parent=35 // pred_check_branch
          %263 = sbr.rel (%p261) target = $region44
        $region43: #{tpu_custom_call.1} parent=35 // pred_region
          %264 = dma.done %s257, 49152
        $region44: #{tpu_custom_call.1} parent=35 // pred_fallthru
          _
        %s265 = sand.u32 %s23, 1
        %s266 = scalar_lea.sflag [#allocation8], %s265
        %s267 = sand.u32 %s92, 1
        %s268 = smul.addr %s267, 4
        %s269 = scalar_lea.vmem [#allocation9], %s268
        // Predicated region
        $region45: #{tpu_custom_call.1} parent=35 // pred_check
          %p270 = pneg %p105
        $region46: #{tpu_custom_call.1} parent=35 // pred_check_branch
          %272 = sbr.rel (%p270) target = $region48
        $region47: #{tpu_custom_call.1} parent=35 // pred_region
          %273 = dma.done %s266, 64
        $region48: #{tpu_custom_call.1} parent=35 // pred_fallthru
          _
        %s274 = sand.u32 %s118, 1
        %s275 = scalar_lea.sflag [#allocation11], %s274
        %s276 = sand.u32 %s118, 1
        %s277 = smul.addr %s276, 4
        %s278 = scalar_lea.vmem [#allocation10], %s277
        // Predicated region
        $region49: #{tpu_custom_call.1} parent=35 // pred_check
          %p279 = pneg %p131
        $region50: #{tpu_custom_call.1} parent=35 // pred_check_branch
          %281 = sbr.rel (%p279) target = $region52
        $region51: #{tpu_custom_call.1} parent=35 // pred_region
          %282 = dma.done %s275, 64
        $region52: #{tpu_custom_call.1} parent=35 // pred_fallthru
          _
        %p283 = pneg %p51
        %p284 = pneg %p48
        %s285 = sand.u32 %s23, 1
        %s286 = scalar_lea.sflag [#allocation8], %s285
        %s287 = sand.u32 %s66, 1
        %s288 = smul.addr %s287, 3072
        %s289 = scalar_lea.vmem [#allocation7], %s288
        %p290 = pneg %p79
        %p291 = pneg %p76
        %s292 = sand.u32 %s23, 1
        %s293 = scalar_lea.sflag [#allocation8], %s292
        %s294 = sand.u32 %s92, 1
        %s295 = smul.addr %s294, 4
        %s296 = scalar_lea.vmem [#allocation9], %s295
        %p297 = pneg %p105
        %p298 = pneg %p102
        %s299 = sand.u32 %s118, 1
        %s300 = scalar_lea.sflag [#allocation11], %s299
        %s301 = sand.u32 %s118, 1
        %s302 = smul.addr %s301, 4
        %s303 = scalar_lea.vmem [#allocation10], %s302
        %p304 = pneg %p131
        %p305 = pneg %p128
        %p306 = pneg %p152
        %p307 = pneg %p149
        %p311 = scmp.eq.s32.totalorder %s27, 0
        %p312 = scmp.eq.s32.totalorder %s28, 0
        %p313 = pnand %p311, %p312
        %p314 = pneg %p313
        // Predicated region
        $region53: #{tpu_custom_call.1} parent=35 // pred_check
          _
        $region54: #{tpu_custom_call.1} parent=35 // pred_check_branch
          %316 = sbr.rel (%p313) target = $region56
        $region55: #{tpu_custom_call.1} parent=35 // pred_region
          %v317 = vld [vmem:[#allocation4] sm:$0xff]
          %v318 = vld [vmem:[#allocation4 + $0x8] sm:$0xff]
          %v319 = vld [vmem:[#allocation4 + $0x10] sm:$0xff]
          %v320 = vld [vmem:[#allocation4 + $0x18] sm:$0xff]
          %v321 = vld [vmem:[#allocation4 + $0x20] sm:$0xff]
          %v322 = vld [vmem:[#allocation4 + $0x28] sm:$0xff]
          %v323 = vld [vmem:[#allocation4 + $0x30] sm:$0xff]
          %v324 = vld [vmem:[#allocation4 + $0x38] sm:$0xff]
          %v325 = vld [vmem:[#allocation4 + $0x40] sm:$0xff]
          %v326 = vld [vmem:[#allocation4 + $0x48] sm:$0xff]
          %v327 = vld [vmem:[#allocation4 + $0x50] sm:$0xff]
          %v328 = vld [vmem:[#allocation4 + $0x58] sm:$0xff]
          %v329 = vld [vmem:[#allocation4 + $0x60] sm:$0xff]
          %v330 = vld [vmem:[#allocation4 + $0x68] sm:$0xff]
          %v331 = vld [vmem:[#allocation4 + $0x70] sm:$0xff]
          %v332 = vld [vmem:[#allocation4 + $0x78] sm:$0xff]
          %v333 = vld [vmem:[#allocation4 + $0x80] sm:$0xff]
          %v334 = vld [vmem:[#allocation4 + $0x88] sm:$0xff]
          %v335 = vld [vmem:[#allocation4 + $0x90] sm:$0xff]
          %v336 = vld [vmem:[#allocation4 + $0x98] sm:$0xff]
          %v337 = vld [vmem:[#allocation4 + $0xa0] sm:$0xff]
          %v338 = vld [vmem:[#allocation4 + $0xa8] sm:$0xff]
          %v339 = vld [vmem:[#allocation4 + $0xb0] sm:$0xff]
          %v340 = vld [vmem:[#allocation4 + $0xb8] sm:$0xff]
          %v341 = vld [vmem:[#allocation4 + $0xc0] sm:$0xff]
          %v342 = vld [vmem:[#allocation4 + $0xc8] sm:$0xff]
          %v343 = vld [vmem:[#allocation4 + $0xd0] sm:$0xff]
          %v344 = vld [vmem:[#allocation4 + $0xd8] sm:$0xff]
          %v345 = vld [vmem:[#allocation4 + $0xe0] sm:$0xff]
          %v346 = vld [vmem:[#allocation4 + $0xe8] sm:$0xff]
          %v347 = vld [vmem:[#allocation4 + $0xf0] sm:$0xff]
          %v348 = vld [vmem:[#allocation4 + $0xf8] sm:$0xff]
          %v349 = vld [vmem:[#allocation4 + $0x100] sm:$0xff]
          %v350 = vld [vmem:[#allocation4 + $0x108] sm:$0xff]
          %v351 = vld [vmem:[#allocation4 + $0x110] sm:$0xff]
          %v352 = vld [vmem:[#allocation4 + $0x118] sm:$0xff]
          %v353 = vld [vmem:[#allocation4 + $0x120] sm:$0xff]
          %v354 = vld [vmem:[#allocation4 + $0x128] sm:$0xff]
          %v355 = vld [vmem:[#allocation4 + $0x130] sm:$0xff]
          %v356 = vld [vmem:[#allocation4 + $0x138] sm:$0xff]
          %v357 = vld [vmem:[#allocation4 + $0x140] sm:$0xff]
          %v358 = vld [vmem:[#allocation4 + $0x148] sm:$0xff]
          %v359 = vld [vmem:[#allocation4 + $0x150] sm:$0xff]
          %v360 = vld [vmem:[#allocation4 + $0x158] sm:$0xff]
          %v361 = vld [vmem:[#allocation4 + $0x160] sm:$0xff]
          %v362 = vld [vmem:[#allocation4 + $0x168] sm:$0xff]
          %v363 = vld [vmem:[#allocation4 + $0x170] sm:$0xff]
          %v364 = vld [vmem:[#allocation4 + $0x178] sm:$0xff]
          %v365 = vld [vmem:[#allocation4 + $0x180] sm:$0xff]
          %v366 = vld [vmem:[#allocation4 + $0x188] sm:$0xff]
          %v367 = vld [vmem:[#allocation4 + $0x190] sm:$0xff]
          %v368 = vld [vmem:[#allocation4 + $0x198] sm:$0xff]
          %v369 = vld [vmem:[#allocation4 + $0x1a0] sm:$0xff]
          %v370 = vld [vmem:[#allocation4 + $0x1a8] sm:$0xff]
          %v371 = vld [vmem:[#allocation4 + $0x1b0] sm:$0xff]
          %v372 = vld [vmem:[#allocation4 + $0x1b8] sm:$0xff]
          %v373 = vld [vmem:[#allocation4 + $0x1c0] sm:$0xff]
          %v374 = vld [vmem:[#allocation4 + $0x1c8] sm:$0xff]
          %v375 = vld [vmem:[#allocation4 + $0x1d0] sm:$0xff]
          %v376 = vld [vmem:[#allocation4 + $0x1d8] sm:$0xff]
          %v377 = vld [vmem:[#allocation4 + $0x1e0] sm:$0xff]
          %v378 = vld [vmem:[#allocation4 + $0x1e8] sm:$0xff]
          %v379 = vld [vmem:[#allocation4 + $0x1f0] sm:$0xff]
          %v380 = vld [vmem:[#allocation4 + $0x1f8] sm:$0xff]
          %v381 = vpack.c.bf16 %v321, %v317
          %v382 = vpack.c.bf16 %v322, %v318
          %v383 = vpack.c.bf16 %v323, %v319
          %v384 = vpack.c.bf16 %v324, %v320
          %v385 = vpack.c.bf16 %v329, %v325
          %v386 = vpack.c.bf16 %v330, %v326
          %v387 = vpack.c.bf16 %v331, %v327
          %v388 = vpack.c.bf16 %v332, %v328
          %v389 = vpack.c.bf16 %v337, %v333
          %v390 = vpack.c.bf16 %v338, %v334
          %v391 = vpack.c.bf16 %v339, %v335
          %v392 = vpack.c.bf16 %v340, %v336
          %v393 = vpack.c.bf16 %v345, %v341
          %v394 = vpack.c.bf16 %v346, %v342
          %v395 = vpack.c.bf16 %v347, %v343
          %v396 = vpack.c.bf16 %v348, %v344
          %v397 = vpack.c.bf16 %v353, %v349
          %v398 = vpack.c.bf16 %v354, %v350
          %v399 = vpack.c.bf16 %v355, %v351
          %v400 = vpack.c.bf16 %v356, %v352
          %v401 = vpack.c.bf16 %v361, %v357
          %v402 = vpack.c.bf16 %v362, %v358
          %v403 = vpack.c.bf16 %v363, %v359
          %v404 = vpack.c.bf16 %v364, %v360
          %v405 = vpack.c.bf16 %v369, %v365
          %v406 = vpack.c.bf16 %v370, %v366
          %v407 = vpack.c.bf16 %v371, %v367
          %v408 = vpack.c.bf16 %v372, %v368
          %v409 = vpack.c.bf16 %v377, %v373
          %v410 = vpack.c.bf16 %v378, %v374
          %v411 = vpack.c.bf16 %v379, %v375
          %v412 = vpack.c.bf16 %v380, %v376
          %vm413 = vsmask.f32 256
          %v415 = vshrl.u32 %v381, 16
          %v417 = vrot.slane %v415, 7
          %v418 = vshll.u32 %v381, 16
          %v420 = vor.u32 %v417, %v418
          %v422 = vshrl.u32 %v382, 16
          %v424 = vrot.slane %v422, 7
          %v425 = vshll.u32 %v382, 16
          %v427 = vor.u32 %v424, %v425
          %v429 = vshrl.u32 %v383, 16
          %v431 = vrot.slane %v429, 7
          %v432 = vshll.u32 %v383, 16
          %v434 = vor.u32 %v431, %v432
          %v436 = vshrl.u32 %v384, 16
          %v438 = vrot.slane %v436, 7
          %v439 = vshll.u32 %v384, 16
          %v441 = vor.u32 %v438, %v439
          %v443 = vshrl.u32 %v385, 16
          %v445 = vrot.slane %v443, 7
          %v446 = vshll.u32 %v385, 16
          %v448 = vor.u32 %v445, %v446
          %v449 = vsel %vm413, %v417, %v448
          %v451 = vshrl.u32 %v386, 16
          %v453 = vrot.slane %v451, 7
          %v454 = vshll.u32 %v386, 16
          %v456 = vor.u32 %v453, %v454
          %v457 = vsel %vm413, %v424, %v456
          %v459 = vshrl.u32 %v387, 16
          %v461 = vrot.slane %v459, 7
          %v462 = vshll.u32 %v387, 16
          %v464 = vor.u32 %v461, %v462
          %v465 = vsel %vm413, %v431, %v464
          %v467 = vshrl.u32 %v388, 16
          %v469 = vrot.slane %v467, 7
          %v470 = vshll.u32 %v388, 16
          %v472 = vor.u32 %v469, %v470
          %v473 = vsel %vm413, %v438, %v472
          %v475 = vshrl.u32 %v389, 16
          %v477 = vrot.slane %v475, 7
          %v478 = vshll.u32 %v389, 16
          %v480 = vor.u32 %v477, %v478
          %v481 = vsel %vm413, %v445, %v480
          %v483 = vshrl.u32 %v390, 16
          %v485 = vrot.slane %v483, 7
          %v486 = vshll.u32 %v390, 16
          %v488 = vor.u32 %v485, %v486
          %v489 = vsel %vm413, %v453, %v488
          %v491 = vshrl.u32 %v391, 16
          %v493 = vrot.slane %v491, 7
          %v494 = vshll.u32 %v391, 16
          %v496 = vor.u32 %v493, %v494
          %v497 = vsel %vm413, %v461, %v496
          %v499 = vshrl.u32 %v392, 16
          %v501 = vrot.slane %v499, 7
          %v502 = vshll.u32 %v392, 16
          %v504 = vor.u32 %v501, %v502
          %v505 = vsel %vm413, %v469, %v504
          %v507 = vshrl.u32 %v393, 16
          %v509 = vrot.slane %v507, 7
          %v510 = vshll.u32 %v393, 16
          %v512 = vor.u32 %v509, %v510
          %v513 = vsel %vm413, %v477, %v512
          %v515 = vshrl.u32 %v394, 16
          %v517 = vrot.slane %v515, 7
          %v518 = vshll.u32 %v394, 16
          %v520 = vor.u32 %v517, %v518
          %v521 = vsel %vm413, %v485, %v520
          %v523 = vshrl.u32 %v395, 16
          %v525 = vrot.slane %v523, 7
          %v526 = vshll.u32 %v395, 16
          %v528 = vor.u32 %v525, %v526
          %v529 = vsel %vm413, %v493, %v528
          %v531 = vshrl.u32 %v396, 16
          %v533 = vrot.slane %v531, 7
          %v534 = vshll.u32 %v396, 16
          %v536 = vor.u32 %v533, %v534
          %v537 = vsel %vm413, %v501, %v536
          %vm554 = vcmask 1040384
          %vm555 = vmand %vm554, %vm413
          %v556 = vsel %vm555, 0, %v420
          %v557 = vsel %vm555, 0, %v427
          %v558 = vsel %vm555, 0, %v434
          %v559 = vsel %vm555, 0, %v441
          %vm560 = vsmask.f32 7424
          %v561 = vrot.slane %v418, 1
          %v562 = vor.u32 %v415, %v561
          %v563 = vrot.slane %v446, 1
          %v564 = vsel %vm560, %v562, %v563
          %v565 = vrot.slane %v425, 1
          %v566 = vor.u32 %v422, %v565
          %v567 = vrot.slane %v454, 1
          %v568 = vsel %vm560, %v566, %v567
          %v569 = vrot.slane %v432, 1
          %v570 = vor.u32 %v429, %v569
          %v571 = vrot.slane %v462, 1
          %v572 = vsel %vm560, %v570, %v571
          %v573 = vrot.slane %v439, 1
          %v574 = vor.u32 %v436, %v573
          %v575 = vrot.slane %v470, 1
          %v576 = vsel %vm560, %v574, %v575
          %v577 = vor.u32 %v443, %v563
          %v578 = vrot.slane %v478, 1
          %v579 = vsel %vm560, %v577, %v578
          %v580 = vor.u32 %v451, %v567
          %v581 = vrot.slane %v486, 1
          %v582 = vsel %vm560, %v580, %v581
          %v583 = vor.u32 %v459, %v571
          %v584 = vrot.slane %v494, 1
          %v585 = vsel %vm560, %v583, %v584
          %v586 = vor.u32 %v467, %v575
          %v587 = vrot.slane %v502, 1
          %v588 = vsel %vm560, %v586, %v587
          %v589 = vor.u32 %v475, %v578
          %v590 = vrot.slane %v510, 1
          %v591 = vsel %vm560, %v589, %v590
          %v592 = vor.u32 %v483, %v581
          %v593 = vrot.slane %v518, 1
          %v594 = vsel %vm560, %v592, %v593
          %v595 = vor.u32 %v491, %v584
          %v596 = vrot.slane %v526, 1
          %v597 = vsel %vm560, %v595, %v596
          %v598 = vor.u32 %v499, %v587
          %v599 = vrot.slane %v534, 1
          %v600 = vsel %vm560, %v598, %v599
          %v601 = vor.u32 %v507, %v590
          %v602 = vor.u32 %v515, %v593
          %v603 = vor.u32 %v523, %v596
          %v604 = vor.u32 %v531, %v599
          %vm621 = vcmask 1047552
          %vm622 = vmand %vm621, %vm560
          %v623 = vsel %vm622, %v601, 0
          %v624 = vsel %vm622, %v602, 0
          %v625 = vsel %vm622, %v603, 0
          %v626 = vsel %vm622, %v604, 0
          %v627 = vlaneseq
          %v628 = vshrl.u32 %v627, 7
          %v629 = vadd.s32 %v628, 8
          %v630 = vadd.s32 %v628, 16
          %v631 = vadd.s32 %v628, 24
          %v632 = vadd.s32 %v628, 32
          %v633 = vadd.s32 %v628, 40
          %v634 = vadd.s32 %v628, 48
          %v635 = vadd.s32 %v628, 56
          %vm636 = vcmp.lt.s32.totalorder %v628, 0
          %v637 = vsub.s32 0, %v628
          %v638 = vsel %vm636, %v637, %v628
          %v639 = vshrl.u32 %v638, 3
          %v640 = vand.u32 %v638, 7
          %v641 = vsub.s32 0, %v640
          %v642 = vsel %vm636, %v641, %v640
          %vm643 = vcmp.lt.s32.totalorder %v629, 0
          %v644 = vsub.s32 0, %v629
          %v645 = vsel %vm643, %v644, %v629
          %v646 = vshrl.u32 %v645, 3
          %v647 = vand.u32 %v645, 7
          %v648 = vsub.s32 0, %v647
          %v649 = vsel %vm643, %v648, %v647
          %vm650 = vcmp.lt.s32.totalorder %v630, 0
          %v651 = vsub.s32 0, %v630
          %v652 = vsel %vm650, %v651, %v630
          %v653 = vshrl.u32 %v652, 3
          %v654 = vand.u32 %v652, 7
          %v655 = vsub.s32 0, %v654
          %v656 = vsel %vm650, %v655, %v654
          %vm657 = vcmp.lt.s32.totalorder %v631, 0
          %v658 = vsub.s32 0, %v631
          %v659 = vsel %vm657, %v658, %v631
          %v660 = vshrl.u32 %v659, 3
          %v661 = vand.u32 %v659, 7
          %v662 = vsub.s32 0, %v661
          %v663 = vsel %vm657, %v662, %v661
          %vm664 = vcmp.lt.s32.totalorder %v632, 0
          %v665 = vsub.s32 0, %v632
          %v666 = vsel %vm664, %v665, %v632
          %v667 = vshrl.u32 %v666, 3
          %v668 = vand.u32 %v666, 7
          %v669 = vsub.s32 0, %v668
          %v670 = vsel %vm664, %v669, %v668
          %vm671 = vcmp.lt.s32.totalorder %v633, 0
          %v672 = vsub.s32 0, %v633
          %v673 = vsel %vm671, %v672, %v633
          %v674 = vshrl.u32 %v673, 3
          %v675 = vand.u32 %v673, 7
          %v676 = vsub.s32 0, %v675
          %v677 = vsel %vm671, %v676, %v675
          %vm678 = vcmp.lt.s32.totalorder %v634, 0
          %v679 = vsub.s32 0, %v634
          %v680 = vsel %vm678, %v679, %v634
          %v681 = vshrl.u32 %v680, 3
          %v682 = vand.u32 %v680, 7
          %v683 = vsub.s32 0, %v682
          %v684 = vsel %vm678, %v683, %v682
          %vm685 = vcmp.lt.s32.totalorder %v635, 0
          %v686 = vsub.s32 0, %v635
          %v687 = vsel %vm685, %v686, %v635
          %v688 = vshrl.u32 %v687, 3
          %v689 = vand.u32 %v687, 7
          %v690 = vsub.s32 0, %v689
          %v691 = vsel %vm685, %v690, %v689
          %vm692 = vcmp.ne.s32.totalorder %v642, 0
          %vm693 = vcmp.ne.s32.totalorder %v649, 0
          %vm694 = vcmp.ne.s32.totalorder %v656, 0
          %vm695 = vcmp.ne.s32.totalorder %v663, 0
          %vm696 = vcmp.ne.s32.totalorder %v670, 0
          %vm697 = vcmp.ne.s32.totalorder %v677, 0
          %vm698 = vcmp.ne.s32.totalorder %v684, 0
          %vm699 = vcmp.ne.s32.totalorder %v691, 0
          %vm700 = vcmp.lt.s32.totalorder %v642, 0
          %vm701 = vcmp.lt.s32.totalorder %v649, 0
          %vm702 = vcmp.lt.s32.totalorder %v656, 0
          %vm703 = vcmp.lt.s32.totalorder %v663, 0
          %vm704 = vcmp.lt.s32.totalorder %v670, 0
          %vm705 = vcmp.lt.s32.totalorder %v677, 0
          %vm706 = vcmp.lt.s32.totalorder %v684, 0
          %vm707 = vcmp.lt.s32.totalorder %v691, 0
          %vm708 = vmand %vm700, %vm692
          %vm709 = vmand %vm701, %vm693
          %vm710 = vmand %vm702, %vm694
          %vm711 = vmand %vm703, %vm695
          %vm712 = vmand %vm704, %vm696
          %vm713 = vmand %vm705, %vm697
          %vm714 = vmand %vm706, %vm698
          %vm715 = vmand %vm707, %vm699
          %v716 = vadd.s32 %v642, 8
          %v717 = vadd.s32 %v649, 8
          %v718 = vadd.s32 %v656, 8
          %v719 = vadd.s32 %v663, 8
          %v720 = vadd.s32 %v670, 8
          %v721 = vadd.s32 %v677, 8
          %v722 = vadd.s32 %v684, 8
          %v723 = vadd.s32 %v691, 8
          %v724 = vsel %vm708, %v716, %v642
          %v725 = vsel %vm709, %v717, %v649
          %v726 = vsel %vm710, %v718, %v656
          %v727 = vsel %vm711, %v719, %v663
          %v728 = vsel %vm712, %v720, %v670
          %v729 = vsel %vm713, %v721, %v677
          %v730 = vsel %vm714, %v722, %v684
          %v731 = vsel %vm715, %v723, %v691
          %vm732 = vcmp.eq.s32.totalorder %v724, 0
          %vm733 = vcmp.eq.s32.totalorder %v725, 0
          %vm734 = vcmp.eq.s32.totalorder %v726, 0
          %vm735 = vcmp.eq.s32.totalorder %v727, 0
          %vm736 = vcmp.eq.s32.totalorder %v728, 0
          %vm737 = vcmp.eq.s32.totalorder %v729, 0
          %vm738 = vcmp.eq.s32.totalorder %v730, 0
          %vm739 = vcmp.eq.s32.totalorder %v731, 0
          %v740 = vsel %vm732, 1, 0
          %v741 = vsel %vm733, 1, 0
          %v742 = vsel %vm734, 1, 0
          %v743 = vsel %vm735, 1, 0
          %v744 = vsel %vm736, 1, 0
          %v745 = vsel %vm737, 1, 0
          %v746 = vsel %vm738, 1, 0
          %v747 = vsel %vm739, 1, 0
          %vm748 = vcmp.eq.s32.totalorder %v740, 1
          %vm749 = vcmp.eq.s32.totalorder %v741, 1
          %vm750 = vcmp.eq.s32.totalorder %v742, 1
          %vm751 = vcmp.eq.s32.totalorder %v743, 1
          %vm752 = vcmp.eq.s32.totalorder %v744, 1
          %vm753 = vcmp.eq.s32.totalorder %v745, 1
          %vm754 = vcmp.eq.s32.totalorder %v746, 1
          %vm755 = vcmp.eq.s32.totalorder %v747, 1
          %vm756 = vmpackc.low %vm748, %vm748
          %vm757 = vmpackc.low %vm749, %vm749
          %vm758 = vmpackc.low %vm750, %vm750
          %vm759 = vmpackc.low %vm751, %vm751
          %vm760 = vmpackc.low %vm752, %vm752
          %vm761 = vmpackc.low %vm753, %vm753
          %vm762 = vmpackc.low %vm754, %vm754
          %vm763 = vmpackc.low %vm755, %vm755
          %v764 = vsel %vm756, 65537, 0
          %v765 = vsel %vm757, 65537, 0
          %v766 = vsel %vm758, 65537, 0
          %v767 = vsel %vm759, 65537, 0
          %v768 = vsel %vm760, 65537, 0
          %v769 = vsel %vm761, 65537, 0
          %v770 = vsel %vm762, 65537, 0
          %v771 = vsel %vm763, 65537, 0
          %v772 = vunpack.c.l.b16 %v764
          %v773 = vunpack.c.l.b16 %v765
          %v774 = vunpack.c.l.b16 %v766
          %v775 = vunpack.c.l.b16 %v767
          %v776 = vunpack.c.l.b16 %v768
          %v777 = vunpack.c.l.b16 %v769
          %v778 = vunpack.c.l.b16 %v770
          %v779 = vunpack.c.l.b16 %v771
          %v780 = vpack.c.b16 %v773, %v772
          %v781 = vpack.c.b16 %v775, %v774
          %v782 = vpack.c.b16 %v777, %v776
          %v783 = vpack.c.b16 %v779, %v778
          %vm784 = vcmp.ne.s16.totalorder %v780, 0
          %vm785 = vcmp.ne.s16.totalorder %v781, 0
          %vm786 = vcmp.ne.s16.totalorder %v782, 0
          %vm787 = vcmp.ne.s16.totalorder %v783, 0
          %v788 = vsel %vm784, 0, %v556
          %v789 = vsel %vm784, 0, %v557
          %v790 = vsel %vm784, 0, %v558
          %v791 = vsel %vm784, 0, %v559
          %v792 = vsel %vm785, 0, %v449
          %v793 = vsel %vm785, 0, %v457
          %v794 = vsel %vm785, 0, %v465
          %v795 = vsel %vm785, 0, %v473
          %v796 = vsel %vm786, 0, %v481
          %v797 = vsel %vm786, 0, %v489
          %v798 = vsel %vm786, 0, %v497
          %v799 = vsel %vm786, 0, %v505
          %v800 = vsel %vm787, 0, %v513
          %v801 = vsel %vm787, 0, %v521
          %v802 = vsel %vm787, 0, %v529
          %v803 = vsel %vm787, 0, %v537
          %vm804 = vcmp.eq.s32.totalorder %v724, 7
          %vm805 = vcmp.eq.s32.totalorder %v725, 7
          %vm806 = vcmp.eq.s32.totalorder %v726, 7
          %vm807 = vcmp.eq.s32.totalorder %v727, 7
          %vm808 = vcmp.eq.s32.totalorder %v728, 7
          %vm809 = vcmp.eq.s32.totalorder %v729, 7
          %vm810 = vcmp.eq.s32.totalorder %v730, 7
          %vm811 = vcmp.eq.s32.totalorder %v731, 7
          %v812 = vsel %vm804, 1, 0
          %v813 = vsel %vm805, 1, 0
          %v814 = vsel %vm806, 1, 0
          %v815 = vsel %vm807, 1, 0
          %v816 = vsel %vm808, 1, 0
          %v817 = vsel %vm809, 1, 0
          %v818 = vsel %vm810, 1, 0
          %v819 = vsel %vm811, 1, 0
          %vm820 = vcmp.eq.s32.totalorder %v812, 1
          %vm821 = vcmp.eq.s32.totalorder %v813, 1
          %vm822 = vcmp.eq.s32.totalorder %v814, 1
          %vm823 = vcmp.eq.s32.totalorder %v815, 1
          %vm824 = vcmp.eq.s32.totalorder %v816, 1
          %vm825 = vcmp.eq.s32.totalorder %v817, 1
          %vm826 = vcmp.eq.s32.totalorder %v818, 1
          %vm827 = vcmp.eq.s32.totalorder %v819, 1
          %vm828 = vmpackc.low %vm820, %vm820
          %vm829 = vmpackc.low %vm821, %vm821
          %vm830 = vmpackc.low %vm822, %vm822
          %vm831 = vmpackc.low %vm823, %vm823
          %vm832 = vmpackc.low %vm824, %vm824
          %vm833 = vmpackc.low %vm825, %vm825
          %vm834 = vmpackc.low %vm826, %vm826
          %vm835 = vmpackc.low %vm827, %vm827
          %v836 = vsel %vm828, 65537, 0
          %v837 = vsel %vm829, 65537, 0
          %v838 = vsel %vm830, 65537, 0
          %v839 = vsel %vm831, 65537, 0
          %v840 = vsel %vm832, 65537, 0
          %v841 = vsel %vm833, 65537, 0
          %v842 = vsel %vm834, 65537, 0
          %v843 = vsel %vm835, 65537, 0
          %v844 = vunpack.c.l.b16 %v836
          %v845 = vunpack.c.l.b16 %v837
          %v846 = vunpack.c.l.b16 %v838
          %v847 = vunpack.c.l.b16 %v839
          %v848 = vunpack.c.l.b16 %v840
          %v849 = vunpack.c.l.b16 %v841
          %v850 = vunpack.c.l.b16 %v842
          %v851 = vunpack.c.l.b16 %v843
          %v852 = vpack.c.b16 %v845, %v844
          %v853 = vpack.c.b16 %v847, %v846
          %v854 = vpack.c.b16 %v849, %v848
          %v855 = vpack.c.b16 %v851, %v850
          %vm856 = vcmp.ne.s16.totalorder %v852, 0
          %vm857 = vcmp.ne.s16.totalorder %v853, 0
          %vm858 = vcmp.ne.s16.totalorder %v854, 0
          %vm859 = vcmp.ne.s16.totalorder %v855, 0
          %v860 = vsel %vm856, 0, %v564
          %v861 = vsel %vm856, 0, %v568
          %v862 = vsel %vm856, 0, %v572
          %v863 = vsel %vm856, 0, %v576
          %v864 = vsel %vm857, 0, %v579
          %v865 = vsel %vm857, 0, %v582
          %v866 = vsel %vm857, 0, %v585
          %v867 = vsel %vm857, 0, %v588
          %v868 = vsel %vm858, 0, %v591
          %v869 = vsel %vm858, 0, %v594
          %v870 = vsel %vm858, 0, %v597
          %v871 = vsel %vm858, 0, %v600
          %v872 = vsel %vm859, 0, %v623
          %v873 = vsel %vm859, 0, %v624
          %v874 = vsel %vm859, 0, %v625
          %v875 = vsel %vm859, 0, %v626
          %s876 = scalar_lea.vmem [#allocation3], 768
          %877 = vst [vmem:[%s876] sm:$0xff] %v788
          %878 = vst [vmem:[%s876 + $0x8] sm:$0xff] %v789
          %879 = vst [vmem:[%s876 + $0x10] sm:$0xff] %v790
          %880 = vst [vmem:[%s876 + $0x18] sm:$0xff] %v791
          %881 = vst [vmem:[%s876 + $0x20] sm:$0xff] %v381
          %882 = vst [vmem:[%s876 + $0x28] sm:$0xff] %v382
          %883 = vst [vmem:[%s876 + $0x30] sm:$0xff] %v383
          %884 = vst [vmem:[%s876 + $0x38] sm:$0xff] %v384
          %885 = vst [vmem:[%s876 + $0x40] sm:$0xff] %v860
          %886 = vst [vmem:[%s876 + $0x48] sm:$0xff] %v861
          %887 = vst [vmem:[%s876 + $0x50] sm:$0xff] %v862
          %888 = vst [vmem:[%s876 + $0x58] sm:$0xff] %v863
          %889 = vst [vmem:[%s876 + $0x60] sm:$0xff] %v792
          %890 = vst [vmem:[%s876 + $0x68] sm:$0xff] %v793
          %891 = vst [vmem:[%s876 + $0x70] sm:$0xff] %v794
          %892 = vst [vmem:[%s876 + $0x78] sm:$0xff] %v795
          %893 = vst [vmem:[%s876 + $0x80] sm:$0xff] %v385
          %894 = vst [vmem:[%s876 + $0x88] sm:$0xff] %v386
          %895 = vst [vmem:[%s876 + $0x90] sm:$0xff] %v387
          %896 = vst [vmem:[%s876 + $0x98] sm:$0xff] %v388
          %897 = vst [vmem:[%s876 + $0xa0] sm:$0xff] %v864
          %898 = vst [vmem:[%s876 + $0xa8] sm:$0xff] %v865
          %899 = vst [vmem:[%s876 + $0xb0] sm:$0xff] %v866
          %900 = vst [vmem:[%s876 + $0xb8] sm:$0xff] %v867
          %901 = vst [vmem:[%s876 + $0xc0] sm:$0xff] %v796
          %902 = vst [vmem:[%s876 + $0xc8] sm:$0xff] %v797
          %903 = vst [vmem:[%s876 + $0xd0] sm:$0xff] %v798
          %904 = vst [vmem:[%s876 + $0xd8] sm:$0xff] %v799
          %905 = vst [vmem:[%s876 + $0xe0] sm:$0xff] %v389
          %906 = vst [vmem:[%s876 + $0xe8] sm:$0xff] %v390
          %907 = vst [vmem:[%s876 + $0xf0] sm:$0xff] %v391
          %908 = vst [vmem:[%s876 + $0xf8] sm:$0xff] %v392
          %909 = vst [vmem:[%s876 + $0x100] sm:$0xff] %v868
          %910 = vst [vmem:[%s876 + $0x108] sm:$0xff] %v869
          %911 = vst [vmem:[%s876 + $0x110] sm:$0xff] %v870
          %912 = vst [vmem:[%s876 + $0x118] sm:$0xff] %v871
          %913 = vst [vmem:[%s876 + $0x120] sm:$0xff] %v800
          %914 = vst [vmem:[%s876 + $0x128] sm:$0xff] %v801
          %915 = vst [vmem:[%s876 + $0x130] sm:$0xff] %v802
          %916 = vst [vmem:[%s876 + $0x138] sm:$0xff] %v803
          %917 = vst [vmem:[%s876 + $0x140] sm:$0xff] %v393
          %918 = vst [vmem:[%s876 + $0x148] sm:$0xff] %v394
          %919 = vst [vmem:[%s876 + $0x150] sm:$0xff] %v395
          %920 = vst [vmem:[%s876 + $0x158] sm:$0xff] %v396
          %921 = vst [vmem:[%s876 + $0x160] sm:$0xff] %v872
          %922 = vst [vmem:[%s876 + $0x168] sm:$0xff] %v873
          %923 = vst [vmem:[%s876 + $0x170] sm:$0xff] %v874
          %924 = vst [vmem:[%s876 + $0x178] sm:$0xff] %v875
          %vm973 = vcmask 1043456
          %v974 = vrot.slane %v788, 4
          %v975 = vrot.slane %v789, 4
          %v976 = vrot.slane %v790, 4
          %v977 = vrot.slane %v791, 4
          %v978 = vrot.slane %v381, 4
          %v979 = vrot.slane %v382, 4
          %v980 = vrot.slane %v383, 4
          %v981 = vrot.slane %v384, 4
          %v982 = vrot.slane %v860, 4
          %v983 = vrot.slane %v861, 4
          %v984 = vrot.slane %v862, 4
          %v985 = vrot.slane %v863, 4
          %v986 = vrot.slane %v792, 4
          %v987 = vsel %vm973, %v974, %v986
          %v988 = vrot.slane %v793, 4
          %v989 = vsel %vm973, %v975, %v988
          %v990 = vrot.slane %v794, 4
          %v991 = vsel %vm973, %v976, %v990
          %v992 = vrot.slane %v795, 4
          %v993 = vsel %vm973, %v977, %v992
          %v994 = vrot.slane %v385, 4
          %v995 = vsel %vm973, %v978, %v994
          %v996 = vrot.slane %v386, 4
          %v997 = vsel %vm973, %v979, %v996
          %v998 = vrot.slane %v387, 4
          %v999 = vsel %vm973, %v980, %v998
          %v1000 = vrot.slane %v388, 4
          %v1001 = vsel %vm973, %v981, %v1000
          %v1002 = vrot.slane %v864, 4
          %v1003 = vsel %vm973, %v982, %v1002
          %v1004 = vrot.slane %v865, 4
          %v1005 = vsel %vm973, %v983, %v1004
          %v1006 = vrot.slane %v866, 4
          %v1007 = vsel %vm973, %v984, %v1006
          %v1008 = vrot.slane %v867, 4
          %v1009 = vsel %vm973, %v985, %v1008
          %v1010 = vrot.slane %v796, 4
          %v1011 = vsel %vm973, %v986, %v1010
          %v1012 = vrot.slane %v797, 4
          %v1013 = vsel %vm973, %v988, %v1012
          %v1014 = vrot.slane %v798, 4
          %v1015 = vsel %vm973, %v990, %v1014
          %v1016 = vrot.slane %v799, 4
          %v1017 = vsel %vm973, %v992, %v1016
          %v1018 = vrot.slane %v389, 4
          %v1019 = vsel %vm973, %v994, %v1018
          %v1020 = vrot.slane %v390, 4
          %v1021 = vsel %vm973, %v996, %v1020
          %v1022 = vrot.slane %v391, 4
          %v1023 = vsel %vm973, %v998, %v1022
          %v1024 = vrot.slane %v392, 4
          %v1025 = vsel %vm973, %v1000, %v1024
          %v1026 = vrot.slane %v868, 4
          %v1027 = vsel %vm973, %v1002, %v1026
          %v1028 = vrot.slane %v869, 4
          %v1029 = vsel %vm973, %v1004, %v1028
          %v1030 = vrot.slane %v870, 4
          %v1031 = vsel %vm973, %v1006, %v1030
          %v1032 = vrot.slane %v871, 4
          %v1033 = vsel %vm973, %v1008, %v1032
          %v1034 = vrot.slane %v800, 4
          %v1035 = vsel %vm973, %v1010, %v1034
          %v1036 = vrot.slane %v801, 4
          %v1037 = vsel %vm973, %v1012, %v1036
          %v1038 = vrot.slane %v802, 4
          %v1039 = vsel %vm973, %v1014, %v1038
          %v1040 = vrot.slane %v803, 4
          %v1041 = vsel %vm973, %v1016, %v1040
          %v1042 = vrot.slane %v393, 4
          %v1043 = vsel %vm973, %v1018, %v1042
          %v1044 = vrot.slane %v394, 4
          %v1045 = vsel %vm973, %v1020, %v1044
          %v1046 = vrot.slane %v395, 4
          %v1047 = vsel %vm973, %v1022, %v1046
          %v1048 = vrot.slane %v396, 4
          %v1049 = vsel %vm973, %v1024, %v1048
          %v1050 = vrot.slane %v872, 4
          %v1051 = vsel %vm973, %v1026, %v1050
          %v1052 = vrot.slane %v873, 4
          %v1053 = vsel %vm973, %v1028, %v1052
          %v1054 = vrot.slane %v874, 4
          %v1055 = vsel %vm973, %v1030, %v1054
          %v1056 = vrot.slane %v875, 4
          %v1057 = vsel %vm973, %v1032, %v1056
          %1106 = vst [vmem:[#allocation3] sm:$0xf0] %v974
          %1107 = vst [vmem:[#allocation3 + $0x8] sm:$0xf0] %v975
          %1108 = vst [vmem:[#allocation3 + $0x10] sm:$0xf0] %v976
          %1109 = vst [vmem:[#allocation3 + $0x18] sm:$0xf0] %v977
          %1110 = vst [vmem:[#allocation3 + $0x20] sm:$0xf0] %v978
          %1111 = vst [vmem:[#allocation3 + $0x28] sm:$0xf0] %v979
          %1112 = vst [vmem:[#allocation3 + $0x30] sm:$0xf0] %v980
          %1113 = vst [vmem:[#allocation3 + $0x38] sm:$0xf0] %v981
          %1114 = vst [vmem:[#allocation3 + $0x40] sm:$0xf0] %v982
          %1115 = vst [vmem:[#allocation3 + $0x48] sm:$0xf0] %v983
          %1116 = vst [vmem:[#allocation3 + $0x50] sm:$0xf0] %v984
          %1117 = vst [vmem:[#allocation3 + $0x58] sm:$0xf0] %v985
          %1118 = vst [vmem:[#allocation3 + $0x60] sm:$0xff] %v987
          %1119 = vst [vmem:[#allocation3 + $0x68] sm:$0xff] %v989
          %1120 = vst [vmem:[#allocation3 + $0x70] sm:$0xff] %v991
          %1121 = vst [vmem:[#allocation3 + $0x78] sm:$0xff] %v993
          %1122 = vst [vmem:[#allocation3 + $0x80] sm:$0xff] %v995
          %1123 = vst [vmem:[#allocation3 + $0x88] sm:$0xff] %v997
          %1124 = vst [vmem:[#allocation3 + $0x90] sm:$0xff] %v999
          %1125 = vst [vmem:[#allocation3 + $0x98] sm:$0xff] %v1001
          %1126 = vst [vmem:[#allocation3 + $0xa0] sm:$0xff] %v1003
          %1127 = vst [vmem:[#allocation3 + $0xa8] sm:$0xff] %v1005
          %1128 = vst [vmem:[#allocation3 + $0xb0] sm:$0xff] %v1007
          %1129 = vst [vmem:[#allocation3 + $0xb8] sm:$0xff] %v1009
          %1130 = vst [vmem:[#allocation3 + $0xc0] sm:$0xff] %v1011
          %1131 = vst [vmem:[#allocation3 + $0xc8] sm:$0xff] %v1013
          %1132 = vst [vmem:[#allocation3 + $0xd0] sm:$0xff] %v1015
          %1133 = vst [vmem:[#allocation3 + $0xd8] sm:$0xff] %v1017
          %1134 = vst [vmem:[#allocation3 + $0xe0] sm:$0xff] %v1019
          %1135 = vst [vmem:[#allocation3 + $0xe8] sm:$0xff] %v1021
          %1136 = vst [vmem:[#allocation3 + $0xf0] sm:$0xff] %v1023
          %1137 = vst [vmem:[#allocation3 + $0xf8] sm:$0xff] %v1025
          %1138 = vst [vmem:[#allocation3 + $0x100] sm:$0xff] %v1027
          %1139 = vst [vmem:[#allocation3 + $0x108] sm:$0xff] %v1029
          %1140 = vst [vmem:[#allocation3 + $0x110] sm:$0xff] %v1031
          %1141 = vst [vmem:[#allocation3 + $0x118] sm:$0xff] %v1033
          %1142 = vst [vmem:[#allocation3 + $0x120] sm:$0xff] %v1035
          %1143 = vst [vmem:[#allocation3 + $0x128] sm:$0xff] %v1037
          %1144 = vst [vmem:[#allocation3 + $0x130] sm:$0xff] %v1039
          %1145 = vst [vmem:[#allocation3 + $0x138] sm:$0xff] %v1041
          %1146 = vst [vmem:[#allocation3 + $0x140] sm:$0xff] %v1043
          %1147 = vst [vmem:[#allocation3 + $0x148] sm:$0xff] %v1045
          %1148 = vst [vmem:[#allocation3 + $0x150] sm:$0xff] %v1047
          %1149 = vst [vmem:[#allocation3 + $0x158] sm:$0xff] %v1049
          %1150 = vst [vmem:[#allocation3 + $0x160] sm:$0xff] %v1051
          %1151 = vst [vmem:[#allocation3 + $0x168] sm:$0xff] %v1053
          %1152 = vst [vmem:[#allocation3 + $0x170] sm:$0xff] %v1055
          %1153 = vst [vmem:[#allocation3 + $0x178] sm:$0xff] %v1057
          %s1166 = scalar_lea.vmem [#allocation3], 1536
          %1167 = vst [vmem:[%s1166] sm:$0xff] %v987
          %1168 = vst [vmem:[%s1166 + $0x8] sm:$0xff] %v989
          %1169 = vst [vmem:[%s1166 + $0x10] sm:$0xff] %v991
          %1170 = vst [vmem:[%s1166 + $0x18] sm:$0xff] %v993
          %1171 = vst [vmem:[%s1166 + $0x20] sm:$0xff] %v995
          %1172 = vst [vmem:[%s1166 + $0x28] sm:$0xff] %v997
          %1173 = vst [vmem:[%s1166 + $0x30] sm:$0xff] %v999
          %1174 = vst [vmem:[%s1166 + $0x38] sm:$0xff] %v1001
          %1175 = vst [vmem:[%s1166 + $0x40] sm:$0xff] %v1003
          %1176 = vst [vmem:[%s1166 + $0x48] sm:$0xff] %v1005
          %1177 = vst [vmem:[%s1166 + $0x50] sm:$0xff] %v1007
          %1178 = vst [vmem:[%s1166 + $0x58] sm:$0xff] %v1009
          %1179 = vst [vmem:[%s1166 + $0x60] sm:$0xff] %v1011
          %1180 = vst [vmem:[%s1166 + $0x68] sm:$0xff] %v1013
          %1181 = vst [vmem:[%s1166 + $0x70] sm:$0xff] %v1015
          %1182 = vst [vmem:[%s1166 + $0x78] sm:$0xff] %v1017
          %1183 = vst [vmem:[%s1166 + $0x80] sm:$0xff] %v1019
          %1184 = vst [vmem:[%s1166 + $0x88] sm:$0xff] %v1021
          %1185 = vst [vmem:[%s1166 + $0x90] sm:$0xff] %v1023
          %1186 = vst [vmem:[%s1166 + $0x98] sm:$0xff] %v1025
          %1187 = vst [vmem:[%s1166 + $0xa0] sm:$0xff] %v1027
          %1188 = vst [vmem:[%s1166 + $0xa8] sm:$0xff] %v1029
          %1189 = vst [vmem:[%s1166 + $0xb0] sm:$0xff] %v1031
          %1190 = vst [vmem:[%s1166 + $0xb8] sm:$0xff] %v1033
          %1191 = vst [vmem:[%s1166 + $0xc0] sm:$0xff] %v1035
          %1192 = vst [vmem:[%s1166 + $0xc8] sm:$0xff] %v1037
          %1193 = vst [vmem:[%s1166 + $0xd0] sm:$0xff] %v1039
          %1194 = vst [vmem:[%s1166 + $0xd8] sm:$0xff] %v1041
          %1195 = vst [vmem:[%s1166 + $0xe0] sm:$0xff] %v1043
          %1196 = vst [vmem:[%s1166 + $0xe8] sm:$0xff] %v1045
          %1197 = vst [vmem:[%s1166 + $0xf0] sm:$0xff] %v1047
          %1198 = vst [vmem:[%s1166 + $0xf8] sm:$0xff] %v1049
          %1199 = vst [vmem:[%s1166 + $0x100] sm:$0xff] %v1051
          %1200 = vst [vmem:[%s1166 + $0x108] sm:$0xff] %v1053
          %1201 = vst [vmem:[%s1166 + $0x110] sm:$0xff] %v1055
          %1202 = vst [vmem:[%s1166 + $0x118] sm:$0xff] %v1057
          %1203 = vst [vmem:[%s1166 + $0x120] sm:$0xf] %v1034
          %1204 = vst [vmem:[%s1166 + $0x128] sm:$0xf] %v1036
          %1205 = vst [vmem:[%s1166 + $0x130] sm:$0xf] %v1038
          %1206 = vst [vmem:[%s1166 + $0x138] sm:$0xf] %v1040
          %1207 = vst [vmem:[%s1166 + $0x140] sm:$0xf] %v1042
          %1208 = vst [vmem:[%s1166 + $0x148] sm:$0xf] %v1044
          %1209 = vst [vmem:[%s1166 + $0x150] sm:$0xf] %v1046
          %1210 = vst [vmem:[%s1166 + $0x158] sm:$0xf] %v1048
          %1211 = vst [vmem:[%s1166 + $0x160] sm:$0xf] %v1050
          %1212 = vst [vmem:[%s1166 + $0x168] sm:$0xf] %v1052
          %1213 = vst [vmem:[%s1166 + $0x170] sm:$0xf] %v1054
          %1214 = vst [vmem:[%s1166 + $0x178] sm:$0xf] %v1056
          %1215 = vst [vmem:[#allocation3] sm:$0xf] 0
          %1216 = vst [vmem:[#allocation3 + $0x8] sm:$0xf] 0
          %1217 = vst [vmem:[#allocation3 + $0x10] sm:$0xf] 0
          %1218 = vst [vmem:[#allocation3 + $0x18] sm:$0xf] 0
          %1219 = vst [vmem:[#allocation3 + $0x20] sm:$0xf] 0
          %1220 = vst [vmem:[#allocation3 + $0x28] sm:$0xf] 0
          %1221 = vst [vmem:[#allocation3 + $0x30] sm:$0xf] 0
          %1222 = vst [vmem:[#allocation3 + $0x38] sm:$0xf] 0
          %1223 = vst [vmem:[#allocation3 + $0x40] sm:$0xf] 0
          %1224 = vst [vmem:[#allocation3 + $0x48] sm:$0xf] 0
          %1225 = vst [vmem:[#allocation3 + $0x50] sm:$0xf] 0
          %1226 = vst [vmem:[#allocation3 + $0x58] sm:$0xf] 0
          %1227 = vst [vmem:[%s1166 + $0x120] sm:$0xf0] 0
          %1228 = vst [vmem:[%s1166 + $0x128] sm:$0xf0] 0
          %1229 = vst [vmem:[%s1166 + $0x130] sm:$0xf0] 0
          %1230 = vst [vmem:[%s1166 + $0x138] sm:$0xf0] 0
          %1231 = vst [vmem:[%s1166 + $0x140] sm:$0xf0] 0
          %1232 = vst [vmem:[%s1166 + $0x148] sm:$0xf0] 0
          %1233 = vst [vmem:[%s1166 + $0x150] sm:$0xf0] 0
          %1234 = vst [vmem:[%s1166 + $0x158] sm:$0xf0] 0
          %1235 = vst [vmem:[%s1166 + $0x160] sm:$0xf0] 0
          %1236 = vst [vmem:[%s1166 + $0x168] sm:$0xf0] 0
          %1237 = vst [vmem:[%s1166 + $0x170] sm:$0xf0] 0
          %1238 = vst [vmem:[%s1166 + $0x178] sm:$0xf0] 0
          %v1240 = vshrl.u32 %v397, 16
          %v1242 = vrot.slane %v1240, 7
          %v1243 = vshll.u32 %v397, 16
          %v1245 = vor.u32 %v1242, %v1243
          %v1247 = vshrl.u32 %v398, 16
          %v1249 = vrot.slane %v1247, 7
          %v1250 = vshll.u32 %v398, 16
          %v1252 = vor.u32 %v1249, %v1250
          %v1254 = vshrl.u32 %v399, 16
          %v1256 = vrot.slane %v1254, 7
          %v1257 = vshll.u32 %v399, 16
          %v1259 = vor.u32 %v1256, %v1257
          %v1261 = vshrl.u32 %v400, 16
          %v1263 = vrot.slane %v1261, 7
          %v1264 = vshll.u32 %v400, 16
          %v1266 = vor.u32 %v1263, %v1264
          %v1268 = vshrl.u32 %v401, 16
          %v1270 = vrot.slane %v1268, 7
          %v1271 = vshll.u32 %v401, 16
          %v1273 = vor.u32 %v1270, %v1271
          %v1274 = vsel %vm413, %v1242, %v1273
          %v1276 = vshrl.u32 %v402, 16
          %v1278 = vrot.slane %v1276, 7
          %v1279 = vshll.u32 %v402, 16
          %v1281 = vor.u32 %v1278, %v1279
          %v1282 = vsel %vm413, %v1249, %v1281
          %v1284 = vshrl.u32 %v403, 16
          %v1286 = vrot.slane %v1284, 7
          %v1287 = vshll.u32 %v403, 16
          %v1289 = vor.u32 %v1286, %v1287
          %v1290 = vsel %vm413, %v1256, %v1289
          %v1292 = vshrl.u32 %v404, 16
          %v1294 = vrot.slane %v1292, 7
          %v1295 = vshll.u32 %v404, 16
          %v1297 = vor.u32 %v1294, %v1295
          %v1298 = vsel %vm413, %v1263, %v1297
          %v1300 = vshrl.u32 %v405, 16
          %v1302 = vrot.slane %v1300, 7
          %v1303 = vshll.u32 %v405, 16
          %v1305 = vor.u32 %v1302, %v1303
          %v1306 = vsel %vm413, %v1270, %v1305
          %v1308 = vshrl.u32 %v406, 16
          %v1310 = vrot.slane %v1308, 7
          %v1311 = vshll.u32 %v406, 16
          %v1313 = vor.u32 %v1310, %v1311
          %v1314 = vsel %vm413, %v1278, %v1313
          %v1316 = vshrl.u32 %v407, 16
          %v1318 = vrot.slane %v1316, 7
          %v1319 = vshll.u32 %v407, 16
          %v1321 = vor.u32 %v1318, %v1319
          %v1322 = vsel %vm413, %v1286, %v1321
          %v1324 = vshrl.u32 %v408, 16
          %v1326 = vrot.slane %v1324, 7
          %v1327 = vshll.u32 %v408, 16
          %v1329 = vor.u32 %v1326, %v1327
          %v1330 = vsel %vm413, %v1294, %v1329
          %v1332 = vshrl.u32 %v409, 16
          %v1334 = vrot.slane %v1332, 7
          %v1335 = vshll.u32 %v409, 16
          %v1337 = vor.u32 %v1334, %v1335
          %v1338 = vsel %vm413, %v1302, %v1337
          %v1340 = vshrl.u32 %v410, 16
          %v1342 = vrot.slane %v1340, 7
          %v1343 = vshll.u32 %v410, 16
          %v1345 = vor.u32 %v1342, %v1343
          %v1346 = vsel %vm413, %v1310, %v1345
          %v1348 = vshrl.u32 %v411, 16
          %v1350 = vrot.slane %v1348, 7
          %v1351 = vshll.u32 %v411, 16
          %v1353 = vor.u32 %v1350, %v1351
          %v1354 = vsel %vm413, %v1318, %v1353
          %v1356 = vshrl.u32 %v412, 16
          %v1358 = vrot.slane %v1356, 7
          %v1359 = vshll.u32 %v412, 16
          %v1361 = vor.u32 %v1358, %v1359
          %v1362 = vsel %vm413, %v1326, %v1361
          %v1379 = vsel %vm555, 0, %v1245
          %v1380 = vsel %vm555, 0, %v1252
          %v1381 = vsel %vm555, 0, %v1259
          %v1382 = vsel %vm555, 0, %v1266
          %v1383 = vrot.slane %v1243, 1
          %v1384 = vor.u32 %v1240, %v1383
          %v1385 = vrot.slane %v1271, 1
          %v1386 = vsel %vm560, %v1384, %v1385
          %v1387 = vrot.slane %v1250, 1
          %v1388 = vor.u32 %v1247, %v1387
          %v1389 = vrot.slane %v1279, 1
          %v1390 = vsel %vm560, %v1388, %v1389
          %v1391 = vrot.slane %v1257, 1
          %v1392 = vor.u32 %v1254, %v1391
          %v1393 = vrot.slane %v1287, 1
          %v1394 = vsel %vm560, %v1392, %v1393
          %v1395 = vrot.slane %v1264, 1
          %v1396 = vor.u32 %v1261, %v1395
          %v1397 = vrot.slane %v1295, 1
          %v1398 = vsel %vm560, %v1396, %v1397
          %v1399 = vor.u32 %v1268, %v1385
          %v1400 = vrot.slane %v1303, 1
          %v1401 = vsel %vm560, %v1399, %v1400
          %v1402 = vor.u32 %v1276, %v1389
          %v1403 = vrot.slane %v1311, 1
          %v1404 = vsel %vm560, %v1402, %v1403
          %v1405 = vor.u32 %v1284, %v1393
          %v1406 = vrot.slane %v1319, 1
          %v1407 = vsel %vm560, %v1405, %v1406
          %v1408 = vor.u32 %v1292, %v1397
          %v1409 = vrot.slane %v1327, 1
          %v1410 = vsel %vm560, %v1408, %v1409
          %v1411 = vor.u32 %v1300, %v1400
          %v1412 = vrot.slane %v1335, 1
          %v1413 = vsel %vm560, %v1411, %v1412
          %v1414 = vor.u32 %v1308, %v1403
          %v1415 = vrot.slane %v1343, 1
          %v1416 = vsel %vm560, %v1414, %v1415
          %v1417 = vor.u32 %v1316, %v1406
          %v1418 = vrot.slane %v1351, 1
          %v1419 = vsel %vm560, %v1417, %v1418
          %v1420 = vor.u32 %v1324, %v1409
          %v1421 = vrot.slane %v1359, 1
          %v1422 = vsel %vm560, %v1420, %v1421
          %v1423 = vor.u32 %v1332, %v1412
          %v1424 = vor.u32 %v1340, %v1415
          %v1425 = vor.u32 %v1348, %v1418
          %v1426 = vor.u32 %v1356, %v1421
          %v1443 = vsel %vm622, %v1423, 0
          %v1444 = vsel %vm622, %v1424, 0
          %v1445 = vsel %vm622, %v1425, 0
          %v1446 = vsel %vm622, %v1426, 0
          %v1447 = vsel %vm784, 0, %v1379
          %v1448 = vsel %vm784, 0, %v1380
          %v1449 = vsel %vm784, 0, %v1381
          %v1450 = vsel %vm784, 0, %v1382
          %v1451 = vsel %vm785, 0, %v1274
          %v1452 = vsel %vm785, 0, %v1282
          %v1453 = vsel %vm785, 0, %v1290
          %v1454 = vsel %vm785, 0, %v1298
          %v1455 = vsel %vm786, 0, %v1306
          %v1456 = vsel %vm786, 0, %v1314
          %v1457 = vsel %vm786, 0, %v1322
          %v1458 = vsel %vm786, 0, %v1330
          %v1459 = vsel %vm787, 0, %v1338
          %v1460 = vsel %vm787, 0, %v1346
          %v1461 = vsel %vm787, 0, %v1354
          %v1462 = vsel %vm787, 0, %v1362
          %v1463 = vsel %vm856, 0, %v1386
          %v1464 = vsel %vm856, 0, %v1390
          %v1465 = vsel %vm856, 0, %v1394
          %v1466 = vsel %vm856, 0, %v1398
          %v1467 = vsel %vm857, 0, %v1401
          %v1468 = vsel %vm857, 0, %v1404
          %v1469 = vsel %vm857, 0, %v1407
          %v1470 = vsel %vm857, 0, %v1410
          %v1471 = vsel %vm858, 0, %v1413
          %v1472 = vsel %vm858, 0, %v1416
          %v1473 = vsel %vm858, 0, %v1419
          %v1474 = vsel %vm858, 0, %v1422
          %v1475 = vsel %vm859, 0, %v1443
          %v1476 = vsel %vm859, 0, %v1444
          %v1477 = vsel %vm859, 0, %v1445
          %v1478 = vsel %vm859, 0, %v1446
          %1479 = vst [vmem:[%s876 + $0x180] sm:$0xff] %v1447
          %1480 = vst [vmem:[%s876 + $0x188] sm:$0xff] %v1448
          %1481 = vst [vmem:[%s876 + $0x190] sm:$0xff] %v1449
          %1482 = vst [vmem:[%s876 + $0x198] sm:$0xff] %v1450
          %1483 = vst [vmem:[%s876 + $0x1a0] sm:$0xff] %v397
          %1484 = vst [vmem:[%s876 + $0x1a8] sm:$0xff] %v398
          %1485 = vst [vmem:[%s876 + $0x1b0] sm:$0xff] %v399
          %1486 = vst [vmem:[%s876 + $0x1b8] sm:$0xff] %v400
          %1487 = vst [vmem:[%s876 + $0x1c0] sm:$0xff] %v1463
          %1488 = vst [vmem:[%s876 + $0x1c8] sm:$0xff] %v1464
          %1489 = vst [vmem:[%s876 + $0x1d0] sm:$0xff] %v1465
          %1490 = vst [vmem:[%s876 + $0x1d8] sm:$0xff] %v1466
          %1491 = vst [vmem:[%s876 + $0x1e0] sm:$0xff] %v1451
          %1492 = vst [vmem:[%s876 + $0x1e8] sm:$0xff] %v1452
          %1493 = vst [vmem:[%s876 + $0x1f0] sm:$0xff] %v1453
          %1494 = vst [vmem:[%s876 + $0x1f8] sm:$0xff] %v1454
          %1495 = vst [vmem:[%s876 + $0x200] sm:$0xff] %v401
          %1496 = vst [vmem:[%s876 + $0x208] sm:$0xff] %v402
          %1497 = vst [vmem:[%s876 + $0x210] sm:$0xff] %v403
          %1498 = vst [vmem:[%s876 + $0x218] sm:$0xff] %v404
          %1499 = vst [vmem:[%s876 + $0x220] sm:$0xff] %v1467
          %1500 = vst [vmem:[%s876 + $0x228] sm:$0xff] %v1468
          %1501 = vst [vmem:[%s876 + $0x230] sm:$0xff] %v1469
          %1502 = vst [vmem:[%s876 + $0x238] sm:$0xff] %v1470
          %1503 = vst [vmem:[%s876 + $0x240] sm:$0xff] %v1455
          %1504 = vst [vmem:[%s876 + $0x248] sm:$0xff] %v1456
          %1505 = vst [vmem:[%s876 + $0x250] sm:$0xff] %v1457
          %1506 = vst [vmem:[%s876 + $0x258] sm:$0xff] %v1458
          %1507 = vst [vmem:[%s876 + $0x260] sm:$0xff] %v405
          %1508 = vst [vmem:[%s876 + $0x268] sm:$0xff] %v406
          %1509 = vst [vmem:[%s876 + $0x270] sm:$0xff] %v407
          %1510 = vst [vmem:[%s876 + $0x278] sm:$0xff] %v408
          %1511 = vst [vmem:[%s876 + $0x280] sm:$0xff] %v1471
          %1512 = vst [vmem:[%s876 + $0x288] sm:$0xff] %v1472
          %1513 = vst [vmem:[%s876 + $0x290] sm:$0xff] %v1473
          %1514 = vst [vmem:[%s876 + $0x298] sm:$0xff] %v1474
          %1515 = vst [vmem:[%s876 + $0x2a0] sm:$0xff] %v1459
          %1516 = vst [vmem:[%s876 + $0x2a8] sm:$0xff] %v1460
          %1517 = vst [vmem:[%s876 + $0x2b0] sm:$0xff] %v1461
          %1518 = vst [vmem:[%s876 + $0x2b8] sm:$0xff] %v1462
          %1519 = vst [vmem:[%s876 + $0x2c0] sm:$0xff] %v409
          %1520 = vst [vmem:[%s876 + $0x2c8] sm:$0xff] %v410
          %1521 = vst [vmem:[%s876 + $0x2d0] sm:$0xff] %v411
          %1522 = vst [vmem:[%s876 + $0x2d8] sm:$0xff] %v412
          %1523 = vst [vmem:[%s876 + $0x2e0] sm:$0xff] %v1475
          %1524 = vst [vmem:[%s876 + $0x2e8] sm:$0xff] %v1476
          %1525 = vst [vmem:[%s876 + $0x2f0] sm:$0xff] %v1477
          %1526 = vst [vmem:[%s876 + $0x2f8] sm:$0xff] %v1478
          %v1575 = vrot.slane %v1447, 4
          %v1576 = vrot.slane %v1448, 4
          %v1577 = vrot.slane %v1449, 4
          %v1578 = vrot.slane %v1450, 4
          %v1579 = vrot.slane %v397, 4
          %v1580 = vrot.slane %v398, 4
          %v1581 = vrot.slane %v399, 4
          %v1582 = vrot.slane %v400, 4
          %v1583 = vrot.slane %v1463, 4
          %v1584 = vrot.slane %v1464, 4
          %v1585 = vrot.slane %v1465, 4
          %v1586 = vrot.slane %v1466, 4
          %v1587 = vrot.slane %v1451, 4
          %v1588 = vsel %vm973, %v1575, %v1587
          %v1589 = vrot.slane %v1452, 4
          %v1590 = vsel %vm973, %v1576, %v1589
          %v1591 = vrot.slane %v1453, 4
          %v1592 = vsel %vm973, %v1577, %v1591
          %v1593 = vrot.slane %v1454, 4
          %v1594 = vsel %vm973, %v1578, %v1593
          %v1595 = vrot.slane %v401, 4
          %v1596 = vsel %vm973, %v1579, %v1595
          %v1597 = vrot.slane %v402, 4
          %v1598 = vsel %vm973, %v1580, %v1597
          %v1599 = vrot.slane %v403, 4
          %v1600 = vsel %vm973, %v1581, %v1599
          %v1601 = vrot.slane %v404, 4
          %v1602 = vsel %vm973, %v1582, %v1601
          %v1603 = vrot.slane %v1467, 4
          %v1604 = vsel %vm973, %v1583, %v1603
          %v1605 = vrot.slane %v1468, 4
          %v1606 = vsel %vm973, %v1584, %v1605
          %v1607 = vrot.slane %v1469, 4
          %v1608 = vsel %vm973, %v1585, %v1607
          %v1609 = vrot.slane %v1470, 4
          %v1610 = vsel %vm973, %v1586, %v1609
          %v1611 = vrot.slane %v1455, 4
          %v1612 = vsel %vm973, %v1587, %v1611
          %v1613 = vrot.slane %v1456, 4
          %v1614 = vsel %vm973, %v1589, %v1613
          %v1615 = vrot.slane %v1457, 4
          %v1616 = vsel %vm973, %v1591, %v1615
          %v1617 = vrot.slane %v1458, 4
          %v1618 = vsel %vm973, %v1593, %v1617
          %v1619 = vrot.slane %v405, 4
          %v1620 = vsel %vm973, %v1595, %v1619
          %v1621 = vrot.slane %v406, 4
          %v1622 = vsel %vm973, %v1597, %v1621
          %v1623 = vrot.slane %v407, 4
          %v1624 = vsel %vm973, %v1599, %v1623
          %v1625 = vrot.slane %v408, 4
          %v1626 = vsel %vm973, %v1601, %v1625
          %v1627 = vrot.slane %v1471, 4
          %v1628 = vsel %vm973, %v1603, %v1627
          %v1629 = vrot.slane %v1472, 4
          %v1630 = vsel %vm973, %v1605, %v1629
          %v1631 = vrot.slane %v1473, 4
          %v1632 = vsel %vm973, %v1607, %v1631
          %v1633 = vrot.slane %v1474, 4
          %v1634 = vsel %vm973, %v1609, %v1633
          %v1635 = vrot.slane %v1459, 4
          %v1636 = vsel %vm973, %v1611, %v1635
          %v1637 = vrot.slane %v1460, 4
          %v1638 = vsel %vm973, %v1613, %v1637
          %v1639 = vrot.slane %v1461, 4
          %v1640 = vsel %vm973, %v1615, %v1639
          %v1641 = vrot.slane %v1462, 4
          %v1642 = vsel %vm973, %v1617, %v1641
          %v1643 = vrot.slane %v409, 4
          %v1644 = vsel %vm973, %v1619, %v1643
          %v1645 = vrot.slane %v410, 4
          %v1646 = vsel %vm973, %v1621, %v1645
          %v1647 = vrot.slane %v411, 4
          %v1648 = vsel %vm973, %v1623, %v1647
          %v1649 = vrot.slane %v412, 4
          %v1650 = vsel %vm973, %v1625, %v1649
          %v1651 = vrot.slane %v1475, 4
          %v1652 = vsel %vm973, %v1627, %v1651
          %v1653 = vrot.slane %v1476, 4
          %v1654 = vsel %vm973, %v1629, %v1653
          %v1655 = vrot.slane %v1477, 4
          %v1656 = vsel %vm973, %v1631, %v1655
          %v1657 = vrot.slane %v1478, 4
          %v1658 = vsel %vm973, %v1633, %v1657
          %1707 = vst [vmem:[#allocation3 + $0x180] sm:$0xf0] %v1575
          %1708 = vst [vmem:[#allocation3 + $0x188] sm:$0xf0] %v1576
          %1709 = vst [vmem:[#allocation3 + $0x190] sm:$0xf0] %v1577
          %1710 = vst [vmem:[#allocation3 + $0x198] sm:$0xf0] %v1578
          %1711 = vst [vmem:[#allocation3 + $0x1a0] sm:$0xf0] %v1579
          %1712 = vst [vmem:[#allocation3 + $0x1a8] sm:$0xf0] %v1580
          %1713 = vst [vmem:[#allocation3 + $0x1b0] sm:$0xf0] %v1581
          %1714 = vst [vmem:[#allocation3 + $0x1b8] sm:$0xf0] %v1582
          %1715 = vst [vmem:[#allocation3 + $0x1c0] sm:$0xf0] %v1583
          %1716 = vst [vmem:[#allocation3 + $0x1c8] sm:$0xf0] %v1584
          %1717 = vst [vmem:[#allocation3 + $0x1d0] sm:$0xf0] %v1585
          %1718 = vst [vmem:[#allocation3 + $0x1d8] sm:$0xf0] %v1586
          %1719 = vst [vmem:[#allocation3 + $0x1e0] sm:$0xff] %v1588
          %1720 = vst [vmem:[#allocation3 + $0x1e8] sm:$0xff] %v1590
          %1721 = vst [vmem:[#allocation3 + $0x1f0] sm:$0xff] %v1592
          %1722 = vst [vmem:[#allocation3 + $0x1f8] sm:$0xff] %v1594
          %1723 = vst [vmem:[#allocation3 + $0x200] sm:$0xff] %v1596
          %1724 = vst [vmem:[#allocation3 + $0x208] sm:$0xff] %v1598
          %1725 = vst [vmem:[#allocation3 + $0x210] sm:$0xff] %v1600
          %1726 = vst [vmem:[#allocation3 + $0x218] sm:$0xff] %v1602
          %1727 = vst [vmem:[#allocation3 + $0x220] sm:$0xff] %v1604
          %1728 = vst [vmem:[#allocation3 + $0x228] sm:$0xff] %v1606
          %1729 = vst [vmem:[#allocation3 + $0x230] sm:$0xff] %v1608
          %1730 = vst [vmem:[#allocation3 + $0x238] sm:$0xff] %v1610
          %1731 = vst [vmem:[#allocation3 + $0x240] sm:$0xff] %v1612
          %1732 = vst [vmem:[#allocation3 + $0x248] sm:$0xff] %v1614
          %1733 = vst [vmem:[#allocation3 + $0x250] sm:$0xff] %v1616
          %1734 = vst [vmem:[#allocation3 + $0x258] sm:$0xff] %v1618
          %1735 = vst [vmem:[#allocation3 + $0x260] sm:$0xff] %v1620
          %1736 = vst [vmem:[#allocation3 + $0x268] sm:$0xff] %v1622
          %1737 = vst [vmem:[#allocation3 + $0x270] sm:$0xff] %v1624
          %1738 = vst [vmem:[#allocation3 + $0x278] sm:$0xff] %v1626
          %1739 = vst [vmem:[#allocation3 + $0x280] sm:$0xff] %v1628
          %1740 = vst [vmem:[#allocation3 + $0x288] sm:$0xff] %v1630
          %1741 = vst [vmem:[#allocation3 + $0x290] sm:$0xff] %v1632
          %1742 = vst [vmem:[#allocation3 + $0x298] sm:$0xff] %v1634
          %1743 = vst [vmem:[#allocation3 + $0x2a0] sm:$0xff] %v1636
          %1744 = vst [vmem:[#allocation3 + $0x2a8] sm:$0xff] %v1638
          %1745 = vst [vmem:[#allocation3 + $0x2b0] sm:$0xff] %v1640
          %1746 = vst [vmem:[#allocation3 + $0x2b8] sm:$0xff] %v1642
          %1747 = vst [vmem:[#allocation3 + $0x2c0] sm:$0xff] %v1644
          %1748 = vst [vmem:[#allocation3 + $0x2c8] sm:$0xff] %v1646
          %1749 = vst [vmem:[#allocation3 + $0x2d0] sm:$0xff] %v1648
          %1750 = vst [vmem:[#allocation3 + $0x2d8] sm:$0xff] %v1650
          %1751 = vst [vmem:[#allocation3 + $0x2e0] sm:$0xff] %v1652
          %1752 = vst [vmem:[#allocation3 + $0x2e8] sm:$0xff] %v1654
          %1753 = vst [vmem:[#allocation3 + $0x2f0] sm:$0xff] %v1656
          %1754 = vst [vmem:[#allocation3 + $0x2f8] sm:$0xff] %v1658
          %1767 = vst [vmem:[%s1166 + $0x180] sm:$0xff] %v1588
          %1768 = vst [vmem:[%s1166 + $0x188] sm:$0xff] %v1590
          %1769 = vst [vmem:[%s1166 + $0x190] sm:$0xff] %v1592
          %1770 = vst [vmem:[%s1166 + $0x198] sm:$0xff] %v1594
          %1771 = vst [vmem:[%s1166 + $0x1a0] sm:$0xff] %v1596
          %1772 = vst [vmem:[%s1166 + $0x1a8] sm:$0xff] %v1598
          %1773 = vst [vmem:[%s1166 + $0x1b0] sm:$0xff] %v1600
          %1774 = vst [vmem:[%s1166 + $0x1b8] sm:$0xff] %v1602
          %1775 = vst [vmem:[%s1166 + $0x1c0] sm:$0xff] %v1604
          %1776 = vst [vmem:[%s1166 + $0x1c8] sm:$0xff] %v1606
          %1777 = vst [vmem:[%s1166 + $0x1d0] sm:$0xff] %v1608
          %1778 = vst [vmem:[%s1166 + $0x1d8] sm:$0xff] %v1610
          %1779 = vst [vmem:[%s1166 + $0x1e0] sm:$0xff] %v1612
          %1780 = vst [vmem:[%s1166 + $0x1e8] sm:$0xff] %v1614
          %1781 = vst [vmem:[%s1166 + $0x1f0] sm:$0xff] %v1616
          %1782 = vst [vmem:[%s1166 + $0x1f8] sm:$0xff] %v1618
          %1783 = vst [vmem:[%s1166 + $0x200] sm:$0xff] %v1620
          %1784 = vst [vmem:[%s1166 + $0x208] sm:$0xff] %v1622
          %1785 = vst [vmem:[%s1166 + $0x210] sm:$0xff] %v1624
          %1786 = vst [vmem:[%s1166 + $0x218] sm:$0xff] %v1626
          %1787 = vst [vmem:[%s1166 + $0x220] sm:$0xff] %v1628
          %1788 = vst [vmem:[%s1166 + $0x228] sm:$0xff] %v1630
          %1789 = vst [vmem:[%s1166 + $0x230] sm:$0xff] %v1632
          %1790 = vst [vmem:[%s1166 + $0x238] sm:$0xff] %v1634
          %1791 = vst [vmem:[%s1166 + $0x240] sm:$0xff] %v1636
          %1792 = vst [vmem:[%s1166 + $0x248] sm:$0xff] %v1638
          %1793 = vst [vmem:[%s1166 + $0x250] sm:$0xff] %v1640
          %1794 = vst [vmem:[%s1166 + $0x258] sm:$0xff] %v1642
          %1795 = vst [vmem:[%s1166 + $0x260] sm:$0xff] %v1644
          %1796 = vst [vmem:[%s1166 + $0x268] sm:$0xff] %v1646
          %1797 = vst [vmem:[%s1166 + $0x270] sm:$0xff] %v1648
          %1798 = vst [vmem:[%s1166 + $0x278] sm:$0xff] %v1650
          %1799 = vst [vmem:[%s1166 + $0x280] sm:$0xff] %v1652
          %1800 = vst [vmem:[%s1166 + $0x288] sm:$0xff] %v1654
          %1801 = vst [vmem:[%s1166 + $0x290] sm:$0xff] %v1656
          %1802 = vst [vmem:[%s1166 + $0x298] sm:$0xff] %v1658
          %1803 = vst [vmem:[%s1166 + $0x2a0] sm:$0xf] %v1635
          %1804 = vst [vmem:[%s1166 + $0x2a8] sm:$0xf] %v1637
          %1805 = vst [vmem:[%s1166 + $0x2b0] sm:$0xf] %v1639
          %1806 = vst [vmem:[%s1166 + $0x2b8] sm:$0xf] %v1641
          %1807 = vst [vmem:[%s1166 + $0x2c0] sm:$0xf] %v1643
          %1808 = vst [vmem:[%s1166 + $0x2c8] sm:$0xf] %v1645
          %1809 = vst [vmem:[%s1166 + $0x2d0] sm:$0xf] %v1647
          %1810 = vst [vmem:[%s1166 + $0x2d8] sm:$0xf] %v1649
          %1811 = vst [vmem:[%s1166 + $0x2e0] sm:$0xf] %v1651
          %1812 = vst [vmem:[%s1166 + $0x2e8] sm:$0xf] %v1653
          %1813 = vst [vmem:[%s1166 + $0x2f0] sm:$0xf] %v1655
          %1814 = vst [vmem:[%s1166 + $0x2f8] sm:$0xf] %v1657
          %1815 = vst [vmem:[#allocation3 + $0x180] sm:$0xf] 0
          %1816 = vst [vmem:[#allocation3 + $0x188] sm:$0xf] 0
          %1817 = vst [vmem:[#allocation3 + $0x190] sm:$0xf] 0
          %1818 = vst [vmem:[#allocation3 + $0x198] sm:$0xf] 0
          %1819 = vst [vmem:[#allocation3 + $0x1a0] sm:$0xf] 0
          %1820 = vst [vmem:[#allocation3 + $0x1a8] sm:$0xf] 0
          %1821 = vst [vmem:[#allocation3 + $0x1b0] sm:$0xf] 0
          %1822 = vst [vmem:[#allocation3 + $0x1b8] sm:$0xf] 0
          %1823 = vst [vmem:[#allocation3 + $0x1c0] sm:$0xf] 0
          %1824 = vst [vmem:[#allocation3 + $0x1c8] sm:$0xf] 0
          %1825 = vst [vmem:[#allocation3 + $0x1d0] sm:$0xf] 0
          %1826 = vst [vmem:[#allocation3 + $0x1d8] sm:$0xf] 0
          %1827 = vst [vmem:[%s1166 + $0x2a0] sm:$0xf0] 0
          %1828 = vst [vmem:[%s1166 + $0x2a8] sm:$0xf0] 0
          %1829 = vst [vmem:[%s1166 + $0x2b0] sm:$0xf0] 0
          %1830 = vst [vmem:[%s1166 + $0x2b8] sm:$0xf0] 0
          %1831 = vst [vmem:[%s1166 + $0x2c0] sm:$0xf0] 0
          %1832 = vst [vmem:[%s1166 + $0x2c8] sm:$0xf0] 0
          %1833 = vst [vmem:[%s1166 + $0x2d0] sm:$0xf0] 0
          %1834 = vst [vmem:[%s1166 + $0x2d8] sm:$0xf0] 0
          %1835 = vst [vmem:[%s1166 + $0x2e0] sm:$0xf0] 0
          %1836 = vst [vmem:[%s1166 + $0x2e8] sm:$0xf0] 0
          %1837 = vst [vmem:[%s1166 + $0x2f0] sm:$0xf0] 0
          %1838 = vst [vmem:[%s1166 + $0x2f8] sm:$0xf0] 0
        $region56: #{tpu_custom_call.1} parent=35 // pred_fallthru
          _
        // Predicated region
        $region57: #{tpu_custom_call.1} parent=35 // pred_check
          %p1839 = pneg %p312
        $region58: #{tpu_custom_call.1} parent=35 // pred_check_branch
          %1841 = sbr.rel (%p1839) target = $region60
        $region59: #{tpu_custom_call.1} parent=35 // pred_region
          %1842 = vst [vmem:[#allocation2] sm:$0xff] 0.0
          %1843 = vst [vmem:[#allocation2 + $0x8] sm:$0xff] 0.0
          %1844 = vst [vmem:[#allocation2 + $0x10] sm:$0xff] 0.0
          %1845 = vst [vmem:[#allocation2 + $0x18] sm:$0xff] 0.0
          %1846 = vst [vmem:[#allocation2 + $0x20] sm:$0xff] 0.0
          %1847 = vst [vmem:[#allocation2 + $0x28] sm:$0xff] 0.0
          %1848 = vst [vmem:[#allocation2 + $0x30] sm:$0xff] 0.0
          %1849 = vst [vmem:[#allocation2 + $0x38] sm:$0xff] 0.0
          %1850 = vst [vmem:[#allocation2 + $0x40] sm:$0xff] 0.0
          %1851 = vst [vmem:[#allocation2 + $0x48] sm:$0xff] 0.0
          %1852 = vst [vmem:[#allocation2 + $0x50] sm:$0xff] 0.0
          %1853 = vst [vmem:[#allocation2 + $0x58] sm:$0xff] 0.0
          %1854 = vst [vmem:[#allocation2 + $0x60] sm:$0xff] 0.0
          %1855 = vst [vmem:[#allocation2 + $0x68] sm:$0xff] 0.0
          %1856 = vst [vmem:[#allocation2 + $0x70] sm:$0xff] 0.0
          %1857 = vst [vmem:[#allocation2 + $0x78] sm:$0xff] 0.0
          %1858 = vst [vmem:[#allocation2 + $0x80] sm:$0xff] 0.0
          %1859 = vst [vmem:[#allocation2 + $0x88] sm:$0xff] 0.0
          %1860 = vst [vmem:[#allocation2 + $0x90] sm:$0xff] 0.0
          %1861 = vst [vmem:[#allocation2 + $0x98] sm:$0xff] 0.0
          %1862 = vst [vmem:[#allocation2 + $0xa0] sm:$0xff] 0.0
          %1863 = vst [vmem:[#allocation2 + $0xa8] sm:$0xff] 0.0
          %1864 = vst [vmem:[#allocation2 + $0xb0] sm:$0xff] 0.0
          %1865 = vst [vmem:[#allocation2 + $0xb8] sm:$0xff] 0.0
          %1866 = vst [vmem:[#allocation2 + $0xc0] sm:$0xff] 0.0
          %1867 = vst [vmem:[#allocation2 + $0xc8] sm:$0xff] 0.0
          %1868 = vst [vmem:[#allocation2 + $0xd0] sm:$0xff] 0.0
          %1869 = vst [vmem:[#allocation2 + $0xd8] sm:$0xff] 0.0
          %1870 = vst [vmem:[#allocation2 + $0xe0] sm:$0xff] 0.0
          %1871 = vst [vmem:[#allocation2 + $0xe8] sm:$0xff] 0.0
          %1872 = vst [vmem:[#allocation2 + $0xf0] sm:$0xff] 0.0
          %1873 = vst [vmem:[#allocation2 + $0xf8] sm:$0xff] 0.0
          %1874 = vst [vmem:[#allocation2 + $0x100] sm:$0xff] 0.0
          %1875 = vst [vmem:[#allocation2 + $0x108] sm:$0xff] 0.0
          %1876 = vst [vmem:[#allocation2 + $0x110] sm:$0xff] 0.0
          %1877 = vst [vmem:[#allocation2 + $0x118] sm:$0xff] 0.0
          %1878 = vst [vmem:[#allocation2 + $0x120] sm:$0xff] 0.0
          %1879 = vst [vmem:[#allocation2 + $0x128] sm:$0xff] 0.0
          %1880 = vst [vmem:[#allocation2 + $0x130] sm:$0xff] 0.0
          %1881 = vst [vmem:[#allocation2 + $0x138] sm:$0xff] 0.0
          %1882 = vst [vmem:[#allocation2 + $0x140] sm:$0xff] 0.0
          %1883 = vst [vmem:[#allocation2 + $0x148] sm:$0xff] 0.0
          %1884 = vst [vmem:[#allocation2 + $0x150] sm:$0xff] 0.0
          %1885 = vst [vmem:[#allocation2 + $0x158] sm:$0xff] 0.0
          %1886 = vst [vmem:[#allocation2 + $0x160] sm:$0xff] 0.0
          %1887 = vst [vmem:[#allocation2 + $0x168] sm:$0xff] 0.0
          %1888 = vst [vmem:[#allocation2 + $0x170] sm:$0xff] 0.0
          %1889 = vst [vmem:[#allocation2 + $0x178] sm:$0xff] 0.0
          %1890 = vst [vmem:[#allocation2 + $0x180] sm:$0xff] 0.0
          %1891 = vst [vmem:[#allocation2 + $0x188] sm:$0xff] 0.0
          %1892 = vst [vmem:[#allocation2 + $0x190] sm:$0xff] 0.0
          %1893 = vst [vmem:[#allocation2 + $0x198] sm:$0xff] 0.0
          %1894 = vst [vmem:[#allocation2 + $0x1a0] sm:$0xff] 0.0
          %1895 = vst [vmem:[#allocation2 + $0x1a8] sm:$0xff] 0.0
          %1896 = vst [vmem:[#allocation2 + $0x1b0] sm:$0xff] 0.0
          %1897 = vst [vmem:[#allocation2 + $0x1b8] sm:$0xff] 0.0
          %1898 = vst [vmem:[#allocation2 + $0x1c0] sm:$0xff] 0.0
          %1899 = vst [vmem:[#allocation2 + $0x1c8] sm:$0xff] 0.0
          %1900 = vst [vmem:[#allocation2 + $0x1d0] sm:$0xff] 0.0
          %1901 = vst [vmem:[#allocation2 + $0x1d8] sm:$0xff] 0.0
          %1902 = vst [vmem:[#allocation2 + $0x1e0] sm:$0xff] 0.0
          %1903 = vst [vmem:[#allocation2 + $0x1e8] sm:$0xff] 0.0
          %1904 = vst [vmem:[#allocation2 + $0x1f0] sm:$0xff] 0.0
          %1905 = vst [vmem:[#allocation2 + $0x1f8] sm:$0xff] 0.0
        $region60: #{tpu_custom_call.1} parent=35 // pred_fallthru
          _
        %v1906 = vld [vmem:[#allocation2] sm:$0xff]
        %v1907 = vld [vmem:[#allocation2 + $0x8] sm:$0xff]
        %v1908 = vld [vmem:[#allocation2 + $0x10] sm:$0xff]
        %v1909 = vld [vmem:[#allocation2 + $0x18] sm:$0xff]
        %v1910 = vld [vmem:[#allocation2 + $0x20] sm:$0xff]
        %v1911 = vld [vmem:[#allocation2 + $0x28] sm:$0xff]
        %v1912 = vld [vmem:[#allocation2 + $0x30] sm:$0xff]
        %v1913 = vld [vmem:[#allocation2 + $0x38] sm:$0xff]
        %v1914 = vld [vmem:[#allocation2 + $0x40] sm:$0xff]
        %v1915 = vld [vmem:[#allocation2 + $0x48] sm:$0xff]
        %v1916 = vld [vmem:[#allocation2 + $0x50] sm:$0xff]
        %v1917 = vld [vmem:[#allocation2 + $0x58] sm:$0xff]
        %v1918 = vld [vmem:[#allocation2 + $0x60] sm:$0xff]
        %v1919 = vld [vmem:[#allocation2 + $0x68] sm:$0xff]
        %v1920 = vld [vmem:[#allocation2 + $0x70] sm:$0xff]
        %v1921 = vld [vmem:[#allocation2 + $0x78] sm:$0xff]
        %v1922 = vld [vmem:[#allocation2 + $0x80] sm:$0xff]
        %v1923 = vld [vmem:[#allocation2 + $0x88] sm:$0xff]
        %v1924 = vld [vmem:[#allocation2 + $0x90] sm:$0xff]
        %v1925 = vld [vmem:[#allocation2 + $0x98] sm:$0xff]
        %v1926 = vld [vmem:[#allocation2 + $0xa0] sm:$0xff]
        %v1927 = vld [vmem:[#allocation2 + $0xa8] sm:$0xff]
        %v1928 = vld [vmem:[#allocation2 + $0xb0] sm:$0xff]
        %v1929 = vld [vmem:[#allocation2 + $0xb8] sm:$0xff]
        %v1930 = vld [vmem:[#allocation2 + $0xc0] sm:$0xff]
        %v1931 = vld [vmem:[#allocation2 + $0xc8] sm:$0xff]
        %v1932 = vld [vmem:[#allocation2 + $0xd0] sm:$0xff]
        %v1933 = vld [vmem:[#allocation2 + $0xd8] sm:$0xff]
        %v1934 = vld [vmem:[#allocation2 + $0xe0] sm:$0xff]
        %v1935 = vld [vmem:[#allocation2 + $0xe8] sm:$0xff]
        %v1936 = vld [vmem:[#allocation2 + $0xf0] sm:$0xff]
        %v1937 = vld [vmem:[#allocation2 + $0xf8] sm:$0xff]
        %v1938 = vld [vmem:[#allocation2 + $0x100] sm:$0xff]
        %v1939 = vld [vmem:[#allocation2 + $0x108] sm:$0xff]
        %v1940 = vld [vmem:[#allocation2 + $0x110] sm:$0xff]
        %v1941 = vld [vmem:[#allocation2 + $0x118] sm:$0xff]
        %v1942 = vld [vmem:[#allocation2 + $0x120] sm:$0xff]
        %v1943 = vld [vmem:[#allocation2 + $0x128] sm:$0xff]
        %v1944 = vld [vmem:[#allocation2 + $0x130] sm:$0xff]
        %v1945 = vld [vmem:[#allocation2 + $0x138] sm:$0xff]
        %v1946 = vld [vmem:[#allocation2 + $0x140] sm:$0xff]
        %v1947 = vld [vmem:[#allocation2 + $0x148] sm:$0xff]
        %v1948 = vld [vmem:[#allocation2 + $0x150] sm:$0xff]
        %v1949 = vld [vmem:[#allocation2 + $0x158] sm:$0xff]
        %v1950 = vld [vmem:[#allocation2 + $0x160] sm:$0xff]
        %v1951 = vld [vmem:[#allocation2 + $0x168] sm:$0xff]
        %v1952 = vld [vmem:[#allocation2 + $0x170] sm:$0xff]
        %v1953 = vld [vmem:[#allocation2 + $0x178] sm:$0xff]
        %v1954 = vld [vmem:[#allocation2 + $0x180] sm:$0xff]
        %v1955 = vld [vmem:[#allocation2 + $0x188] sm:$0xff]
        %v1956 = vld [vmem:[#allocation2 + $0x190] sm:$0xff]
        %v1957 = vld [vmem:[#allocation2 + $0x198] sm:$0xff]
        %v1958 = vld [vmem:[#allocation2 + $0x1a0] sm:$0xff]
        %v1959 = vld [vmem:[#allocation2 + $0x1a8] sm:$0xff]
        %v1960 = vld [vmem:[#allocation2 + $0x1b0] sm:$0xff]
        %v1961 = vld [vmem:[#allocation2 + $0x1b8] sm:$0xff]
        %v1962 = vld [vmem:[#allocation2 + $0x1c0] sm:$0xff]
        %v1963 = vld [vmem:[#allocation2 + $0x1c8] sm:$0xff]
        %v1964 = vld [vmem:[#allocation2 + $0x1d0] sm:$0xff]
        %v1965 = vld [vmem:[#allocation2 + $0x1d8] sm:$0xff]
        %v1966 = vld [vmem:[#allocation2 + $0x1e0] sm:$0xff]
        %v1967 = vld [vmem:[#allocation2 + $0x1e8] sm:$0xff]
        %v1968 = vld [vmem:[#allocation2 + $0x1f0] sm:$0xff]
        %v1969 = vld [vmem:[#allocation2 + $0x1f8] sm:$0xff]
        %s1970 = smul.u32 %s28, 96
        %s1971 = smul.addr %s1970, 8
        %s1972 = scalar_lea.vmem [#allocation3], %s1971
        %v1973 = vld [vmem:[%s1972] sm:$0xff]
        %v1974 = vld [vmem:[%s1972 + $0x8] sm:$0xff]
        %v1975 = vld [vmem:[%s1972 + $0x10] sm:$0xff]
        %v1976 = vld [vmem:[%s1972 + $0x18] sm:$0xff]
        %v1977 = vld [vmem:[%s1972 + $0x20] sm:$0xff]
        %v1978 = vld [vmem:[%s1972 + $0x28] sm:$0xff]
        %v1979 = vld [vmem:[%s1972 + $0x30] sm:$0xff]
        %v1980 = vld [vmem:[%s1972 + $0x38] sm:$0xff]
        %v1981 = vld [vmem:[%s1972 + $0x40] sm:$0xff]
        %v1982 = vld [vmem:[%s1972 + $0x48] sm:$0xff]
        %v1983 = vld [vmem:[%s1972 + $0x50] sm:$0xff]
        %v1984 = vld [vmem:[%s1972 + $0x58] sm:$0xff]
        %v1985 = vld [vmem:[%s1972 + $0x60] sm:$0xff]
        %v1986 = vld [vmem:[%s1972 + $0x68] sm:$0xff]
        %v1987 = vld [vmem:[%s1972 + $0x70] sm:$0xff]
        %v1988 = vld [vmem:[%s1972 + $0x78] sm:$0xff]
        %v1989 = vld [vmem:[%s1972 + $0x80] sm:$0xff]
        %v1990 = vld [vmem:[%s1972 + $0x88] sm:$0xff]
        %v1991 = vld [vmem:[%s1972 + $0x90] sm:$0xff]
        %v1992 = vld [vmem:[%s1972 + $0x98] sm:$0xff]
        %v1993 = vld [vmem:[%s1972 + $0xa0] sm:$0xff]
        %v1994 = vld [vmem:[%s1972 + $0xa8] sm:$0xff]
        %v1995 = vld [vmem:[%s1972 + $0xb0] sm:$0xff]
        %v1996 = vld [vmem:[%s1972 + $0xb8] sm:$0xff]
        %v1997 = vld [vmem:[%s1972 + $0xc0] sm:$0xff]
        %v1998 = vld [vmem:[%s1972 + $0xc8] sm:$0xff]
        %v1999 = vld [vmem:[%s1972 + $0xd0] sm:$0xff]
        %v2000 = vld [vmem:[%s1972 + $0xd8] sm:$0xff]
        %v2001 = vld [vmem:[%s1972 + $0xe0] sm:$0xff]
        %v2002 = vld [vmem:[%s1972 + $0xe8] sm:$0xff]
        %v2003 = vld [vmem:[%s1972 + $0xf0] sm:$0xff]
        %v2004 = vld [vmem:[%s1972 + $0xf8] sm:$0xff]
        %v2005 = vld [vmem:[%s1972 + $0x100] sm:$0xff]
        %v2006 = vld [vmem:[%s1972 + $0x108] sm:$0xff]
        %v2007 = vld [vmem:[%s1972 + $0x110] sm:$0xff]
        %v2008 = vld [vmem:[%s1972 + $0x118] sm:$0xff]
        %v2009 = vld [vmem:[%s1972 + $0x120] sm:$0xff]
        %v2010 = vld [vmem:[%s1972 + $0x128] sm:$0xff]
        %v2011 = vld [vmem:[%s1972 + $0x130] sm:$0xff]
        %v2012 = vld [vmem:[%s1972 + $0x138] sm:$0xff]
        %v2013 = vld [vmem:[%s1972 + $0x140] sm:$0xff]
        %v2014 = vld [vmem:[%s1972 + $0x148] sm:$0xff]
        %v2015 = vld [vmem:[%s1972 + $0x150] sm:$0xff]
        %v2016 = vld [vmem:[%s1972 + $0x158] sm:$0xff]
        %v2017 = vld [vmem:[%s1972 + $0x160] sm:$0xff]
        %v2018 = vld [vmem:[%s1972 + $0x168] sm:$0xff]
        %v2019 = vld [vmem:[%s1972 + $0x170] sm:$0xff]
        %v2020 = vld [vmem:[%s1972 + $0x178] sm:$0xff]
        %v2021 = vld [vmem:[%s1972 + $0x180] sm:$0xff]
        %v2022 = vld [vmem:[%s1972 + $0x188] sm:$0xff]
        %v2023 = vld [vmem:[%s1972 + $0x190] sm:$0xff]
        %v2024 = vld [vmem:[%s1972 + $0x198] sm:$0xff]
        %v2025 = vld [vmem:[%s1972 + $0x1a0] sm:$0xff]
        %v2026 = vld [vmem:[%s1972 + $0x1a8] sm:$0xff]
        %v2027 = vld [vmem:[%s1972 + $0x1b0] sm:$0xff]
        %v2028 = vld [vmem:[%s1972 + $0x1b8] sm:$0xff]
        %v2029 = vld [vmem:[%s1972 + $0x1c0] sm:$0xff]
        %v2030 = vld [vmem:[%s1972 + $0x1c8] sm:$0xff]
        %v2031 = vld [vmem:[%s1972 + $0x1d0] sm:$0xff]
        %v2032 = vld [vmem:[%s1972 + $0x1d8] sm:$0xff]
        %v2033 = vld [vmem:[%s1972 + $0x1e0] sm:$0xff]
        %v2034 = vld [vmem:[%s1972 + $0x1e8] sm:$0xff]
        %v2035 = vld [vmem:[%s1972 + $0x1f0] sm:$0xff]
        %v2036 = vld [vmem:[%s1972 + $0x1f8] sm:$0xff]
        %v2037 = vld [vmem:[%s1972 + $0x200] sm:$0xff]
        %v2038 = vld [vmem:[%s1972 + $0x208] sm:$0xff]
        %v2039 = vld [vmem:[%s1972 + $0x210] sm:$0xff]
        %v2040 = vld [vmem:[%s1972 + $0x218] sm:$0xff]
        %v2041 = vld [vmem:[%s1972 + $0x220] sm:$0xff]
        %v2042 = vld [vmem:[%s1972 + $0x228] sm:$0xff]
        %v2043 = vld [vmem:[%s1972 + $0x230] sm:$0xff]
        %v2044 = vld [vmem:[%s1972 + $0x238] sm:$0xff]
        %v2045 = vld [vmem:[%s1972 + $0x240] sm:$0xff]
        %v2046 = vld [vmem:[%s1972 + $0x248] sm:$0xff]
        %v2047 = vld [vmem:[%s1972 + $0x250] sm:$0xff]
        %v2048 = vld [vmem:[%s1972 + $0x258] sm:$0xff]
        %v2049 = vld [vmem:[%s1972 + $0x260] sm:$0xff]
        %v2050 = vld [vmem:[%s1972 + $0x268] sm:$0xff]
        %v2051 = vld [vmem:[%s1972 + $0x270] sm:$0xff]
        %v2052 = vld [vmem:[%s1972 + $0x278] sm:$0xff]
        %v2053 = vld [vmem:[%s1972 + $0x280] sm:$0xff]
        %v2054 = vld [vmem:[%s1972 + $0x288] sm:$0xff]
        %v2055 = vld [vmem:[%s1972 + $0x290] sm:$0xff]
        %v2056 = vld [vmem:[%s1972 + $0x298] sm:$0xff]
        %v2057 = vld [vmem:[%s1972 + $0x2a0] sm:$0xff]
        %v2058 = vld [vmem:[%s1972 + $0x2a8] sm:$0xff]
        %v2059 = vld [vmem:[%s1972 + $0x2b0] sm:$0xff]
        %v2060 = vld [vmem:[%s1972 + $0x2b8] sm:$0xff]
        %v2061 = vld [vmem:[%s1972 + $0x2c0] sm:$0xff]
        %v2062 = vld [vmem:[%s1972 + $0x2c8] sm:$0xff]
        %v2063 = vld [vmem:[%s1972 + $0x2d0] sm:$0xff]
        %v2064 = vld [vmem:[%s1972 + $0x2d8] sm:$0xff]
        %v2065 = vld [vmem:[%s1972 + $0x2e0] sm:$0xff]
        %v2066 = vld [vmem:[%s1972 + $0x2e8] sm:$0xff]
        %v2067 = vld [vmem:[%s1972 + $0x2f0] sm:$0xff]
        %v2068 = vld [vmem:[%s1972 + $0x2f8] sm:$0xff]
        %v2069 = vld [vmem:[%s260] sm:$0xff]
        %v2070 = vld [vmem:[%s260 + $0x8] sm:$0xff]
        %v2071 = vld [vmem:[%s260 + $0x10] sm:$0xff]
        %v2072 = vld [vmem:[%s260 + $0x18] sm:$0xff]
        %v2073 = vld [vmem:[%s260 + $0x20] sm:$0xff]
        %v2074 = vld [vmem:[%s260 + $0x28] sm:$0xff]
        %v2075 = vld [vmem:[%s260 + $0x30] sm:$0xff]
        %v2076 = vld [vmem:[%s260 + $0x38] sm:$0xff]
        %v2077 = vld [vmem:[%s260 + $0x40] sm:$0xff]
        %v2078 = vld [vmem:[%s260 + $0x48] sm:$0xff]
        %v2079 = vld [vmem:[%s260 + $0x50] sm:$0xff]
        %v2080 = vld [vmem:[%s260 + $0x58] sm:$0xff]
        %v2081 = vld [vmem:[%s260 + $0x60] sm:$0xff]
        %v2082 = vld [vmem:[%s260 + $0x68] sm:$0xff]
        %v2083 = vld [vmem:[%s260 + $0x70] sm:$0xff]
        %v2084 = vld [vmem:[%s260 + $0x78] sm:$0xff]
        %v2085 = vld [vmem:[%s260 + $0x80] sm:$0xff]
        %v2086 = vld [vmem:[%s260 + $0x88] sm:$0xff]
        %v2087 = vld [vmem:[%s260 + $0x90] sm:$0xff]
        %v2088 = vld [vmem:[%s260 + $0x98] sm:$0xff]
        %v2089 = vld [vmem:[%s260 + $0xa0] sm:$0xff]
        %v2090 = vld [vmem:[%s260 + $0xa8] sm:$0xff]
        %v2091 = vld [vmem:[%s260 + $0xb0] sm:$0xff]
        %v2092 = vld [vmem:[%s260 + $0xb8] sm:$0xff]
        %v2093 = vld [vmem:[%s260 + $0xc0] sm:$0xff]
        %v2094 = vld [vmem:[%s260 + $0xc8] sm:$0xff]
        %v2095 = vld [vmem:[%s260 + $0xd0] sm:$0xff]
        %v2096 = vld [vmem:[%s260 + $0xd8] sm:$0xff]
        %v2097 = vld [vmem:[%s260 + $0xe0] sm:$0xff]
        %v2098 = vld [vmem:[%s260 + $0xe8] sm:$0xff]
        %v2099 = vld [vmem:[%s260 + $0xf0] sm:$0xff]
        %v2100 = vld [vmem:[%s260 + $0xf8] sm:$0xff]
        %v2101 = vld [vmem:[%s260 + $0x100] sm:$0xff]
        %v2102 = vld [vmem:[%s260 + $0x108] sm:$0xff]
        %v2103 = vld [vmem:[%s260 + $0x110] sm:$0xff]
        %v2104 = vld [vmem:[%s260 + $0x118] sm:$0xff]
        %v2105 = vld [vmem:[%s260 + $0x120] sm:$0xff]
        %v2106 = vld [vmem:[%s260 + $0x128] sm:$0xff]
        %v2107 = vld [vmem:[%s260 + $0x130] sm:$0xff]
        %v2108 = vld [vmem:[%s260 + $0x138] sm:$0xff]
        %v2109 = vld [vmem:[%s260 + $0x140] sm:$0xff]
        %v2110 = vld [vmem:[%s260 + $0x148] sm:$0xff]
        %v2111 = vld [vmem:[%s260 + $0x150] sm:$0xff]
        %v2112 = vld [vmem:[%s260 + $0x158] sm:$0xff]
        %v2113 = vld [vmem:[%s260 + $0x160] sm:$0xff]
        %v2114 = vld [vmem:[%s260 + $0x168] sm:$0xff]
        %v2115 = vld [vmem:[%s260 + $0x170] sm:$0xff]
        %v2116 = vld [vmem:[%s260 + $0x178] sm:$0xff]
        %v2117 = vld [vmem:[%s260 + $0x180] sm:$0xff]
        %v2118 = vld [vmem:[%s260 + $0x188] sm:$0xff]
        %v2119 = vld [vmem:[%s260 + $0x190] sm:$0xff]
        %v2120 = vld [vmem:[%s260 + $0x198] sm:$0xff]
        %v2121 = vld [vmem:[%s260 + $0x1a0] sm:$0xff]
        %v2122 = vld [vmem:[%s260 + $0x1a8] sm:$0xff]
        %v2123 = vld [vmem:[%s260 + $0x1b0] sm:$0xff]
        %v2124 = vld [vmem:[%s260 + $0x1b8] sm:$0xff]
        %v2125 = vld [vmem:[%s260 + $0x1c0] sm:$0xff]
        %v2126 = vld [vmem:[%s260 + $0x1c8] sm:$0xff]
        %v2127 = vld [vmem:[%s260 + $0x1d0] sm:$0xff]
        %v2128 = vld [vmem:[%s260 + $0x1d8] sm:$0xff]
        %v2129 = vld [vmem:[%s260 + $0x1e0] sm:$0xff]
        %v2130 = vld [vmem:[%s260 + $0x1e8] sm:$0xff]
        %v2131 = vld [vmem:[%s260 + $0x1f0] sm:$0xff]
        %v2132 = vld [vmem:[%s260 + $0x1f8] sm:$0xff]
        %v2133 = vld [vmem:[%s260 + $0x200] sm:$0xff]
        %v2134 = vld [vmem:[%s260 + $0x208] sm:$0xff]
        %v2135 = vld [vmem:[%s260 + $0x210] sm:$0xff]
        %v2136 = vld [vmem:[%s260 + $0x218] sm:$0xff]
        %v2137 = vld [vmem:[%s260 + $0x220] sm:$0xff]
        %v2138 = vld [vmem:[%s260 + $0x228] sm:$0xff]
        %v2139 = vld [vmem:[%s260 + $0x230] sm:$0xff]
        %v2140 = vld [vmem:[%s260 + $0x238] sm:$0xff]
        %v2141 = vld [vmem:[%s260 + $0x240] sm:$0xff]
        %v2142 = vld [vmem:[%s260 + $0x248] sm:$0xff]
        %v2143 = vld [vmem:[%s260 + $0x250] sm:$0xff]
        %v2144 = vld [vmem:[%s260 + $0x258] sm:$0xff]
        %v2145 = vld [vmem:[%s260 + $0x260] sm:$0xff]
        %v2146 = vld [vmem:[%s260 + $0x268] sm:$0xff]
        %v2147 = vld [vmem:[%s260 + $0x270] sm:$0xff]
        %v2148 = vld [vmem:[%s260 + $0x278] sm:$0xff]
        %v2149 = vld [vmem:[%s260 + $0x280] sm:$0xff]
        %v2150 = vld [vmem:[%s260 + $0x288] sm:$0xff]
        %v2151 = vld [vmem:[%s260 + $0x290] sm:$0xff]
        %v2152 = vld [vmem:[%s260 + $0x298] sm:$0xff]
        %v2153 = vld [vmem:[%s260 + $0x2a0] sm:$0xff]
        %v2154 = vld [vmem:[%s260 + $0x2a8] sm:$0xff]
        %v2155 = vld [vmem:[%s260 + $0x2b0] sm:$0xff]
        %v2156 = vld [vmem:[%s260 + $0x2b8] sm:$0xff]
        %v2157 = vld [vmem:[%s260 + $0x2c0] sm:$0xff]
        %v2158 = vld [vmem:[%s260 + $0x2c8] sm:$0xff]
        %v2159 = vld [vmem:[%s260 + $0x2d0] sm:$0xff]
        %v2160 = vld [vmem:[%s260 + $0x2d8] sm:$0xff]
        %v2161 = vld [vmem:[%s260 + $0x2e0] sm:$0xff]
        %v2162 = vld [vmem:[%s260 + $0x2e8] sm:$0xff]
        %v2163 = vld [vmem:[%s260 + $0x2f0] sm:$0xff]
        %v2164 = vld [vmem:[%s260 + $0x2f8] sm:$0xff]
        %v2165 = vld [vmem:[%s260 + $0x300] sm:$0xff]
        %v2166 = vld [vmem:[%s260 + $0x308] sm:$0xff]
        %v2167 = vld [vmem:[%s260 + $0x310] sm:$0xff]
        %v2168 = vld [vmem:[%s260 + $0x318] sm:$0xff]
        %v2169 = vld [vmem:[%s260 + $0x320] sm:$0xff]
        %v2170 = vld [vmem:[%s260 + $0x328] sm:$0xff]
        %v2171 = vld [vmem:[%s260 + $0x330] sm:$0xff]
        %v2172 = vld [vmem:[%s260 + $0x338] sm:$0xff]
        %v2173 = vld [vmem:[%s260 + $0x340] sm:$0xff]
        %v2174 = vld [vmem:[%s260 + $0x348] sm:$0xff]
        %v2175 = vld [vmem:[%s260 + $0x350] sm:$0xff]
        %v2176 = vld [vmem:[%s260 + $0x358] sm:$0xff]
        %v2177 = vld [vmem:[%s260 + $0x360] sm:$0xff]
        %v2178 = vld [vmem:[%s260 + $0x368] sm:$0xff]
        %v2179 = vld [vmem:[%s260 + $0x370] sm:$0xff]
        %v2180 = vld [vmem:[%s260 + $0x378] sm:$0xff]
        %v2181 = vld [vmem:[%s260 + $0x380] sm:$0xff]
        %v2182 = vld [vmem:[%s260 + $0x388] sm:$0xff]
        %v2183 = vld [vmem:[%s260 + $0x390] sm:$0xff]
        %v2184 = vld [vmem:[%s260 + $0x398] sm:$0xff]
        %v2185 = vld [vmem:[%s260 + $0x3a0] sm:$0xff]
        %v2186 = vld [vmem:[%s260 + $0x3a8] sm:$0xff]
        %v2187 = vld [vmem:[%s260 + $0x3b0] sm:$0xff]
        %v2188 = vld [vmem:[%s260 + $0x3b8] sm:$0xff]
        %v2189 = vld [vmem:[%s260 + $0x3c0] sm:$0xff]
        %v2190 = vld [vmem:[%s260 + $0x3c8] sm:$0xff]
        %v2191 = vld [vmem:[%s260 + $0x3d0] sm:$0xff]
        %v2192 = vld [vmem:[%s260 + $0x3d8] sm:$0xff]
        %v2193 = vld [vmem:[%s260 + $0x3e0] sm:$0xff]
        %v2194 = vld [vmem:[%s260 + $0x3e8] sm:$0xff]
        %v2195 = vld [vmem:[%s260 + $0x3f0] sm:$0xff]
        %v2196 = vld [vmem:[%s260 + $0x3f8] sm:$0xff]
        %v2197 = vld [vmem:[%s260 + $0x400] sm:$0xff]
        %v2198 = vld [vmem:[%s260 + $0x408] sm:$0xff]
        %v2199 = vld [vmem:[%s260 + $0x410] sm:$0xff]
        %v2200 = vld [vmem:[%s260 + $0x418] sm:$0xff]
        %v2201 = vld [vmem:[%s260 + $0x420] sm:$0xff]
        %v2202 = vld [vmem:[%s260 + $0x428] sm:$0xff]
        %v2203 = vld [vmem:[%s260 + $0x430] sm:$0xff]
        %v2204 = vld [vmem:[%s260 + $0x438] sm:$0xff]
        %v2205 = vld [vmem:[%s260 + $0x440] sm:$0xff]
        %v2206 = vld [vmem:[%s260 + $0x448] sm:$0xff]
        %v2207 = vld [vmem:[%s260 + $0x450] sm:$0xff]
        %v2208 = vld [vmem:[%s260 + $0x458] sm:$0xff]
        %v2209 = vld [vmem:[%s260 + $0x460] sm:$0xff]
        %v2210 = vld [vmem:[%s260 + $0x468] sm:$0xff]
        %v2211 = vld [vmem:[%s260 + $0x470] sm:$0xff]
        %v2212 = vld [vmem:[%s260 + $0x478] sm:$0xff]
        %v2213 = vld [vmem:[%s260 + $0x480] sm:$0xff]
        %v2214 = vld [vmem:[%s260 + $0x488] sm:$0xff]
        %v2215 = vld [vmem:[%s260 + $0x490] sm:$0xff]
        %v2216 = vld [vmem:[%s260 + $0x498] sm:$0xff]
        %v2217 = vld [vmem:[%s260 + $0x4a0] sm:$0xff]
        %v2218 = vld [vmem:[%s260 + $0x4a8] sm:$0xff]
        %v2219 = vld [vmem:[%s260 + $0x4b0] sm:$0xff]
        %v2220 = vld [vmem:[%s260 + $0x4b8] sm:$0xff]
        %v2221 = vld [vmem:[%s260 + $0x4c0] sm:$0xff]
        %v2222 = vld [vmem:[%s260 + $0x4c8] sm:$0xff]
        %v2223 = vld [vmem:[%s260 + $0x4d0] sm:$0xff]
        %v2224 = vld [vmem:[%s260 + $0x4d8] sm:$0xff]
        %v2225 = vld [vmem:[%s260 + $0x4e0] sm:$0xff]
        %v2226 = vld [vmem:[%s260 + $0x4e8] sm:$0xff]
        %v2227 = vld [vmem:[%s260 + $0x4f0] sm:$0xff]
        %v2228 = vld [vmem:[%s260 + $0x4f8] sm:$0xff]
        %v2229 = vld [vmem:[%s260 + $0x500] sm:$0xff]
        %v2230 = vld [vmem:[%s260 + $0x508] sm:$0xff]
        %v2231 = vld [vmem:[%s260 + $0x510] sm:$0xff]
        %v2232 = vld [vmem:[%s260 + $0x518] sm:$0xff]
        %v2233 = vld [vmem:[%s260 + $0x520] sm:$0xff]
        %v2234 = vld [vmem:[%s260 + $0x528] sm:$0xff]
        %v2235 = vld [vmem:[%s260 + $0x530] sm:$0xff]
        %v2236 = vld [vmem:[%s260 + $0x538] sm:$0xff]
        %v2237 = vld [vmem:[%s260 + $0x540] sm:$0xff]
        %v2238 = vld [vmem:[%s260 + $0x548] sm:$0xff]
        %v2239 = vld [vmem:[%s260 + $0x550] sm:$0xff]
        %v2240 = vld [vmem:[%s260 + $0x558] sm:$0xff]
        %v2241 = vld [vmem:[%s260 + $0x560] sm:$0xff]
        %v2242 = vld [vmem:[%s260 + $0x568] sm:$0xff]
        %v2243 = vld [vmem:[%s260 + $0x570] sm:$0xff]
        %v2244 = vld [vmem:[%s260 + $0x578] sm:$0xff]
        %v2245 = vld [vmem:[%s260 + $0x580] sm:$0xff]
        %v2246 = vld [vmem:[%s260 + $0x588] sm:$0xff]
        %v2247 = vld [vmem:[%s260 + $0x590] sm:$0xff]
        %v2248 = vld [vmem:[%s260 + $0x598] sm:$0xff]
        %v2249 = vld [vmem:[%s260 + $0x5a0] sm:$0xff]
        %v2250 = vld [vmem:[%s260 + $0x5a8] sm:$0xff]
        %v2251 = vld [vmem:[%s260 + $0x5b0] sm:$0xff]
        %v2252 = vld [vmem:[%s260 + $0x5b8] sm:$0xff]
        %v2253 = vld [vmem:[%s260 + $0x5c0] sm:$0xff]
        %v2254 = vld [vmem:[%s260 + $0x5c8] sm:$0xff]
        %v2255 = vld [vmem:[%s260 + $0x5d0] sm:$0xff]
        %v2256 = vld [vmem:[%s260 + $0x5d8] sm:$0xff]
        %v2257 = vld [vmem:[%s260 + $0x5e0] sm:$0xff]
        %v2258 = vld [vmem:[%s260 + $0x5e8] sm:$0xff]
        %v2259 = vld [vmem:[%s260 + $0x5f0] sm:$0xff]
        %v2260 = vld [vmem:[%s260 + $0x5f8] sm:$0xff]
        %v2261 = vld [vmem:[%s260 + $0x600] sm:$0xff]
        %v2262 = vld [vmem:[%s260 + $0x608] sm:$0xff]
        %v2263 = vld [vmem:[%s260 + $0x610] sm:$0xff]
        %v2264 = vld [vmem:[%s260 + $0x618] sm:$0xff]
        %v2265 = vld [vmem:[%s260 + $0x620] sm:$0xff]
        %v2266 = vld [vmem:[%s260 + $0x628] sm:$0xff]
        %v2267 = vld [vmem:[%s260 + $0x630] sm:$0xff]
        %v2268 = vld [vmem:[%s260 + $0x638] sm:$0xff]
        %v2269 = vld [vmem:[%s260 + $0x640] sm:$0xff]
        %v2270 = vld [vmem:[%s260 + $0x648] sm:$0xff]
        %v2271 = vld [vmem:[%s260 + $0x650] sm:$0xff]
        %v2272 = vld [vmem:[%s260 + $0x658] sm:$0xff]
        %v2273 = vld [vmem:[%s260 + $0x660] sm:$0xff]
        %v2274 = vld [vmem:[%s260 + $0x668] sm:$0xff]
        %v2275 = vld [vmem:[%s260 + $0x670] sm:$0xff]
        %v2276 = vld [vmem:[%s260 + $0x678] sm:$0xff]
        %v2277 = vld [vmem:[%s260 + $0x680] sm:$0xff]
        %v2278 = vld [vmem:[%s260 + $0x688] sm:$0xff]
        %v2279 = vld [vmem:[%s260 + $0x690] sm:$0xff]
        %v2280 = vld [vmem:[%s260 + $0x698] sm:$0xff]
        %v2281 = vld [vmem:[%s260 + $0x6a0] sm:$0xff]
        %v2282 = vld [vmem:[%s260 + $0x6a8] sm:$0xff]
        %v2283 = vld [vmem:[%s260 + $0x6b0] sm:$0xff]
        %v2284 = vld [vmem:[%s260 + $0x6b8] sm:$0xff]
        %v2285 = vld [vmem:[%s260 + $0x6c0] sm:$0xff]
        %v2286 = vld [vmem:[%s260 + $0x6c8] sm:$0xff]
        %v2287 = vld [vmem:[%s260 + $0x6d0] sm:$0xff]
        %v2288 = vld [vmem:[%s260 + $0x6d8] sm:$0xff]
        %v2289 = vld [vmem:[%s260 + $0x6e0] sm:$0xff]
        %v2290 = vld [vmem:[%s260 + $0x6e8] sm:$0xff]
        %v2291 = vld [vmem:[%s260 + $0x6f0] sm:$0xff]
        %v2292 = vld [vmem:[%s260 + $0x6f8] sm:$0xff]
        %v2293 = vld [vmem:[%s260 + $0x700] sm:$0xff]
        %v2294 = vld [vmem:[%s260 + $0x708] sm:$0xff]
        %v2295 = vld [vmem:[%s260 + $0x710] sm:$0xff]
        %v2296 = vld [vmem:[%s260 + $0x718] sm:$0xff]
        %v2297 = vld [vmem:[%s260 + $0x720] sm:$0xff]
        %v2298 = vld [vmem:[%s260 + $0x728] sm:$0xff]
        %v2299 = vld [vmem:[%s260 + $0x730] sm:$0xff]
        %v2300 = vld [vmem:[%s260 + $0x738] sm:$0xff]
        %v2301 = vld [vmem:[%s260 + $0x740] sm:$0xff]
        %v2302 = vld [vmem:[%s260 + $0x748] sm:$0xff]
        %v2303 = vld [vmem:[%s260 + $0x750] sm:$0xff]
        %v2304 = vld [vmem:[%s260 + $0x758] sm:$0xff]
        %v2305 = vld [vmem:[%s260 + $0x760] sm:$0xff]
        %v2306 = vld [vmem:[%s260 + $0x768] sm:$0xff]
        %v2307 = vld [vmem:[%s260 + $0x770] sm:$0xff]
        %v2308 = vld [vmem:[%s260 + $0x778] sm:$0xff]
        %v2309 = vld [vmem:[%s260 + $0x780] sm:$0xff]
        %v2310 = vld [vmem:[%s260 + $0x788] sm:$0xff]
        %v2311 = vld [vmem:[%s260 + $0x790] sm:$0xff]
        %v2312 = vld [vmem:[%s260 + $0x798] sm:$0xff]
        %v2313 = vld [vmem:[%s260 + $0x7a0] sm:$0xff]
        %v2314 = vld [vmem:[%s260 + $0x7a8] sm:$0xff]
        %v2315 = vld [vmem:[%s260 + $0x7b0] sm:$0xff]
        %v2316 = vld [vmem:[%s260 + $0x7b8] sm:$0xff]
        %v2317 = vld [vmem:[%s260 + $0x7c0] sm:$0xff]
        %v2318 = vld [vmem:[%s260 + $0x7c8] sm:$0xff]
        %v2319 = vld [vmem:[%s260 + $0x7d0] sm:$0xff]
        %v2320 = vld [vmem:[%s260 + $0x7d8] sm:$0xff]
        %v2321 = vld [vmem:[%s260 + $0x7e0] sm:$0xff]
        %v2322 = vld [vmem:[%s260 + $0x7e8] sm:$0xff]
        %v2323 = vld [vmem:[%s260 + $0x7f0] sm:$0xff]
        %v2324 = vld [vmem:[%s260 + $0x7f8] sm:$0xff]
        %v2325 = vld [vmem:[%s260 + $0x800] sm:$0xff]
        %v2326 = vld [vmem:[%s260 + $0x808] sm:$0xff]
        %v2327 = vld [vmem:[%s260 + $0x810] sm:$0xff]
        %v2328 = vld [vmem:[%s260 + $0x818] sm:$0xff]
        %v2329 = vld [vmem:[%s260 + $0x820] sm:$0xff]
        %v2330 = vld [vmem:[%s260 + $0x828] sm:$0xff]
        %v2331 = vld [vmem:[%s260 + $0x830] sm:$0xff]
        %v2332 = vld [vmem:[%s260 + $0x838] sm:$0xff]
        %v2333 = vld [vmem:[%s260 + $0x840] sm:$0xff]
        %v2334 = vld [vmem:[%s260 + $0x848] sm:$0xff]
        %v2335 = vld [vmem:[%s260 + $0x850] sm:$0xff]
        %v2336 = vld [vmem:[%s260 + $0x858] sm:$0xff]
        %v2337 = vld [vmem:[%s260 + $0x860] sm:$0xff]
        %v2338 = vld [vmem:[%s260 + $0x868] sm:$0xff]
        %v2339 = vld [vmem:[%s260 + $0x870] sm:$0xff]
        %v2340 = vld [vmem:[%s260 + $0x878] sm:$0xff]
        %v2341 = vld [vmem:[%s260 + $0x880] sm:$0xff]
        %v2342 = vld [vmem:[%s260 + $0x888] sm:$0xff]
        %v2343 = vld [vmem:[%s260 + $0x890] sm:$0xff]
        %v2344 = vld [vmem:[%s260 + $0x898] sm:$0xff]
        %v2345 = vld [vmem:[%s260 + $0x8a0] sm:$0xff]
        %v2346 = vld [vmem:[%s260 + $0x8a8] sm:$0xff]
        %v2347 = vld [vmem:[%s260 + $0x8b0] sm:$0xff]
        %v2348 = vld [vmem:[%s260 + $0x8b8] sm:$0xff]
        %v2349 = vld [vmem:[%s260 + $0x8c0] sm:$0xff]
        %v2350 = vld [vmem:[%s260 + $0x8c8] sm:$0xff]
        %v2351 = vld [vmem:[%s260 + $0x8d0] sm:$0xff]
        %v2352 = vld [vmem:[%s260 + $0x8d8] sm:$0xff]
        %v2353 = vld [vmem:[%s260 + $0x8e0] sm:$0xff]
        %v2354 = vld [vmem:[%s260 + $0x8e8] sm:$0xff]
        %v2355 = vld [vmem:[%s260 + $0x8f0] sm:$0xff]
        %v2356 = vld [vmem:[%s260 + $0x8f8] sm:$0xff]
        %v2357 = vld [vmem:[%s260 + $0x900] sm:$0xff]
        %v2358 = vld [vmem:[%s260 + $0x908] sm:$0xff]
        %v2359 = vld [vmem:[%s260 + $0x910] sm:$0xff]
        %v2360 = vld [vmem:[%s260 + $0x918] sm:$0xff]
        %v2361 = vld [vmem:[%s260 + $0x920] sm:$0xff]
        %v2362 = vld [vmem:[%s260 + $0x928] sm:$0xff]
        %v2363 = vld [vmem:[%s260 + $0x930] sm:$0xff]
        %v2364 = vld [vmem:[%s260 + $0x938] sm:$0xff]
        %v2365 = vld [vmem:[%s260 + $0x940] sm:$0xff]
        %v2366 = vld [vmem:[%s260 + $0x948] sm:$0xff]
        %v2367 = vld [vmem:[%s260 + $0x950] sm:$0xff]
        %v2368 = vld [vmem:[%s260 + $0x958] sm:$0xff]
        %v2369 = vld [vmem:[%s260 + $0x960] sm:$0xff]
        %v2370 = vld [vmem:[%s260 + $0x968] sm:$0xff]
        %v2371 = vld [vmem:[%s260 + $0x970] sm:$0xff]
        %v2372 = vld [vmem:[%s260 + $0x978] sm:$0xff]
        %v2373 = vld [vmem:[%s260 + $0x980] sm:$0xff]
        %v2374 = vld [vmem:[%s260 + $0x988] sm:$0xff]
        %v2375 = vld [vmem:[%s260 + $0x990] sm:$0xff]
        %v2376 = vld [vmem:[%s260 + $0x998] sm:$0xff]
        %v2377 = vld [vmem:[%s260 + $0x9a0] sm:$0xff]
        %v2378 = vld [vmem:[%s260 + $0x9a8] sm:$0xff]
        %v2379 = vld [vmem:[%s260 + $0x9b0] sm:$0xff]
        %v2380 = vld [vmem:[%s260 + $0x9b8] sm:$0xff]
        %v2381 = vld [vmem:[%s260 + $0x9c0] sm:$0xff]
        %v2382 = vld [vmem:[%s260 + $0x9c8] sm:$0xff]
        %v2383 = vld [vmem:[%s260 + $0x9d0] sm:$0xff]
        %v2384 = vld [vmem:[%s260 + $0x9d8] sm:$0xff]
        %v2385 = vld [vmem:[%s260 + $0x9e0] sm:$0xff]
        %v2386 = vld [vmem:[%s260 + $0x9e8] sm:$0xff]
        %v2387 = vld [vmem:[%s260 + $0x9f0] sm:$0xff]
        %v2388 = vld [vmem:[%s260 + $0x9f8] sm:$0xff]
        %v2389 = vld [vmem:[%s260 + $0xa00] sm:$0xff]
        %v2390 = vld [vmem:[%s260 + $0xa08] sm:$0xff]
        %v2391 = vld [vmem:[%s260 + $0xa10] sm:$0xff]
        %v2392 = vld [vmem:[%s260 + $0xa18] sm:$0xff]
        %v2393 = vld [vmem:[%s260 + $0xa20] sm:$0xff]
        %v2394 = vld [vmem:[%s260 + $0xa28] sm:$0xff]
        %v2395 = vld [vmem:[%s260 + $0xa30] sm:$0xff]
        %v2396 = vld [vmem:[%s260 + $0xa38] sm:$0xff]
        %v2397 = vld [vmem:[%s260 + $0xa40] sm:$0xff]
        %v2398 = vld [vmem:[%s260 + $0xa48] sm:$0xff]
        %v2399 = vld [vmem:[%s260 + $0xa50] sm:$0xff]
        %v2400 = vld [vmem:[%s260 + $0xa58] sm:$0xff]
        %v2401 = vld [vmem:[%s260 + $0xa60] sm:$0xff]
        %v2402 = vld [vmem:[%s260 + $0xa68] sm:$0xff]
        %v2403 = vld [vmem:[%s260 + $0xa70] sm:$0xff]
        %v2404 = vld [vmem:[%s260 + $0xa78] sm:$0xff]
        %v2405 = vld [vmem:[%s260 + $0xa80] sm:$0xff]
        %v2406 = vld [vmem:[%s260 + $0xa88] sm:$0xff]
        %v2407 = vld [vmem:[%s260 + $0xa90] sm:$0xff]
        %v2408 = vld [vmem:[%s260 + $0xa98] sm:$0xff]
        %v2409 = vld [vmem:[%s260 + $0xaa0] sm:$0xff]
        %v2410 = vld [vmem:[%s260 + $0xaa8] sm:$0xff]
        %v2411 = vld [vmem:[%s260 + $0xab0] sm:$0xff]
        %v2412 = vld [vmem:[%s260 + $0xab8] sm:$0xff]
        %v2413 = vld [vmem:[%s260 + $0xac0] sm:$0xff]
        %v2414 = vld [vmem:[%s260 + $0xac8] sm:$0xff]
        %v2415 = vld [vmem:[%s260 + $0xad0] sm:$0xff]
        %v2416 = vld [vmem:[%s260 + $0xad8] sm:$0xff]
        %v2417 = vld [vmem:[%s260 + $0xae0] sm:$0xff]
        %v2418 = vld [vmem:[%s260 + $0xae8] sm:$0xff]
        %v2419 = vld [vmem:[%s260 + $0xaf0] sm:$0xff]
        %v2420 = vld [vmem:[%s260 + $0xaf8] sm:$0xff]
        %v2421 = vld [vmem:[%s260 + $0xb00] sm:$0xff]
        %v2422 = vld [vmem:[%s260 + $0xb08] sm:$0xff]
        %v2423 = vld [vmem:[%s260 + $0xb10] sm:$0xff]
        %v2424 = vld [vmem:[%s260 + $0xb18] sm:$0xff]
        %v2425 = vld [vmem:[%s260 + $0xb20] sm:$0xff]
        %v2426 = vld [vmem:[%s260 + $0xb28] sm:$0xff]
        %v2427 = vld [vmem:[%s260 + $0xb30] sm:$0xff]
        %v2428 = vld [vmem:[%s260 + $0xb38] sm:$0xff]
        %v2429 = vld [vmem:[%s260 + $0xb40] sm:$0xff]
        %v2430 = vld [vmem:[%s260 + $0xb48] sm:$0xff]
        %v2431 = vld [vmem:[%s260 + $0xb50] sm:$0xff]
        %v2432 = vld [vmem:[%s260 + $0xb58] sm:$0xff]
        %v2433 = vld [vmem:[%s260 + $0xb60] sm:$0xff]
        %v2434 = vld [vmem:[%s260 + $0xb68] sm:$0xff]
        %v2435 = vld [vmem:[%s260 + $0xb70] sm:$0xff]
        %v2436 = vld [vmem:[%s260 + $0xb78] sm:$0xff]
        %v2437 = vld [vmem:[%s260 + $0xb80] sm:$0xff]
        %v2438 = vld [vmem:[%s260 + $0xb88] sm:$0xff]
        %v2439 = vld [vmem:[%s260 + $0xb90] sm:$0xff]
        %v2440 = vld [vmem:[%s260 + $0xb98] sm:$0xff]
        %v2441 = vld [vmem:[%s260 + $0xba0] sm:$0xff]
        %v2442 = vld [vmem:[%s260 + $0xba8] sm:$0xff]
        %v2443 = vld [vmem:[%s260 + $0xbb0] sm:$0xff]
        %v2444 = vld [vmem:[%s260 + $0xbb8] sm:$0xff]
        %v2445 = vld [vmem:[%s260 + $0xbc0] sm:$0xff]
        %v2446 = vld [vmem:[%s260 + $0xbc8] sm:$0xff]
        %v2447 = vld [vmem:[%s260 + $0xbd0] sm:$0xff]
        %v2448 = vld [vmem:[%s260 + $0xbd8] sm:$0xff]
        %v2449 = vld [vmem:[%s260 + $0xbe0] sm:$0xff]
        %v2450 = vld [vmem:[%s260 + $0xbe8] sm:$0xff]
        %v2451 = vld [vmem:[%s260 + $0xbf0] sm:$0xff]
        %v2452 = vld [vmem:[%s260 + $0xbf8] sm:$0xff]
        %v2837 = vunpack.c.l.b16 %v2069
        %v2838 = vunpack.c.h.b16 %v2069
        %v2839 = vunpack.c.l.b16 %v2070
        %v2840 = vunpack.c.h.b16 %v2070
        %v2841 = vunpack.c.l.b16 %v2071
        %v2842 = vunpack.c.h.b16 %v2071
        %v2843 = vunpack.c.l.b16 %v2072
        %v2844 = vunpack.c.h.b16 %v2072
        %v2845 = vunpack.c.l.b16 %v2073
        %v2846 = vunpack.c.h.b16 %v2073
        %v2847 = vunpack.c.l.b16 %v2074
        %v2848 = vunpack.c.h.b16 %v2074
        %v2849 = vunpack.c.l.b16 %v2075
        %v2850 = vunpack.c.h.b16 %v2075
        %v2851 = vunpack.c.l.b16 %v2076
        %v2852 = vunpack.c.h.b16 %v2076
        %v2853 = vunpack.c.l.b16 %v2077
        %v2854 = vunpack.c.h.b16 %v2077
        %v2855 = vunpack.c.l.b16 %v2078
        %v2856 = vunpack.c.h.b16 %v2078
        %v2857 = vunpack.c.l.b16 %v2079
        %v2858 = vunpack.c.h.b16 %v2079
        %v2859 = vunpack.c.l.b16 %v2080
        %v2860 = vunpack.c.h.b16 %v2080
        %v2861 = vunpack.c.l.b16 %v2081
        %v2862 = vunpack.c.h.b16 %v2081
        %v2863 = vunpack.c.l.b16 %v2082
        %v2864 = vunpack.c.h.b16 %v2082
        %v2865 = vunpack.c.l.b16 %v2083
        %v2866 = vunpack.c.h.b16 %v2083
        %v2867 = vunpack.c.l.b16 %v2084
        %v2868 = vunpack.c.h.b16 %v2084
        %v2869 = vunpack.c.l.b16 %v2085
        %v2870 = vunpack.c.h.b16 %v2085
        %v2871 = vunpack.c.l.b16 %v2086
        %v2872 = vunpack.c.h.b16 %v2086
        %v2873 = vunpack.c.l.b16 %v2087
        %v2874 = vunpack.c.h.b16 %v2087
        %v2875 = vunpack.c.l.b16 %v2088
        %v2876 = vunpack.c.h.b16 %v2088
        %v2877 = vunpack.c.l.b16 %v2089
        %v2878 = vunpack.c.h.b16 %v2089
        %v2879 = vunpack.c.l.b16 %v2090
        %v2880 = vunpack.c.h.b16 %v2090
        %v2881 = vunpack.c.l.b16 %v2091
        %v2882 = vunpack.c.h.b16 %v2091
        %v2883 = vunpack.c.l.b16 %v2092
        %v2884 = vunpack.c.h.b16 %v2092
        %v2885 = vunpack.c.l.b16 %v2093
        %v2886 = vunpack.c.h.b16 %v2093
        %v2887 = vunpack.c.l.b16 %v2094
        %v2888 = vunpack.c.h.b16 %v2094
        %v2889 = vunpack.c.l.b16 %v2095
        %v2890 = vunpack.c.h.b16 %v2095
        %v2891 = vunpack.c.l.b16 %v2096
        %v2892 = vunpack.c.h.b16 %v2096
        %v2893 = vunpack.c.l.b16 %v2097
        %v2894 = vunpack.c.h.b16 %v2097
        %v2895 = vunpack.c.l.b16 %v2098
        %v2896 = vunpack.c.h.b16 %v2098
        %v2897 = vunpack.c.l.b16 %v2099
        %v2898 = vunpack.c.h.b16 %v2099
        %v2899 = vunpack.c.l.b16 %v2100
        %v2900 = vunpack.c.h.b16 %v2100
        %v2901 = vunpack.c.l.b16 %v2101
        %v2902 = vunpack.c.h.b16 %v2101
        %v2903 = vunpack.c.l.b16 %v2102
        %v2904 = vunpack.c.h.b16 %v2102
        %v2905 = vunpack.c.l.b16 %v2103
        %v2906 = vunpack.c.h.b16 %v2103
        %v2907 = vunpack.c.l.b16 %v2104
        %v2908 = vunpack.c.h.b16 %v2104
        %v2909 = vunpack.c.l.b16 %v2105
        %v2910 = vunpack.c.h.b16 %v2105
        %v2911 = vunpack.c.l.b16 %v2106
        %v2912 = vunpack.c.h.b16 %v2106
        %v2913 = vunpack.c.l.b16 %v2107
        %v2914 = vunpack.c.h.b16 %v2107
        %v2915 = vunpack.c.l.b16 %v2108
        %v2916 = vunpack.c.h.b16 %v2108
        %v2917 = vunpack.c.l.b16 %v2109
        %v2918 = vunpack.c.h.b16 %v2109
        %v2919 = vunpack.c.l.b16 %v2110
        %v2920 = vunpack.c.h.b16 %v2110
        %v2921 = vunpack.c.l.b16 %v2111
        %v2922 = vunpack.c.h.b16 %v2111
        %v2923 = vunpack.c.l.b16 %v2112
        %v2924 = vunpack.c.h.b16 %v2112
        %v2925 = vunpack.c.l.b16 %v2113
        %v2926 = vunpack.c.h.b16 %v2113
        %v2927 = vunpack.c.l.b16 %v2114
        %v2928 = vunpack.c.h.b16 %v2114
        %v2929 = vunpack.c.l.b16 %v2115
        %v2930 = vunpack.c.h.b16 %v2115
        %v2931 = vunpack.c.l.b16 %v2116
        %v2932 = vunpack.c.h.b16 %v2116
        %v2933 = vunpack.c.l.b16 %v2117
        %v2934 = vunpack.c.h.b16 %v2117
        %v2935 = vunpack.c.l.b16 %v2118
        %v2936 = vunpack.c.h.b16 %v2118
        %v2937 = vunpack.c.l.b16 %v2119
        %v2938 = vunpack.c.h.b16 %v2119
        %v2939 = vunpack.c.l.b16 %v2120
        %v2940 = vunpack.c.h.b16 %v2120
        %v2941 = vunpack.c.l.b16 %v2121
        %v2942 = vunpack.c.h.b16 %v2121
        %v2943 = vunpack.c.l.b16 %v2122
        %v2944 = vunpack.c.h.b16 %v2122
        %v2945 = vunpack.c.l.b16 %v2123
        %v2946 = vunpack.c.h.b16 %v2123
        %v2947 = vunpack.c.l.b16 %v2124
        %v2948 = vunpack.c.h.b16 %v2124
        %v2949 = vunpack.c.l.b16 %v2125
        %v2950 = vunpack.c.h.b16 %v2125
        %v2951 = vunpack.c.l.b16 %v2126
        %v2952 = vunpack.c.h.b16 %v2126
        %v2953 = vunpack.c.l.b16 %v2127
        %v2954 = vunpack.c.h.b16 %v2127
        %v2955 = vunpack.c.l.b16 %v2128
        %v2956 = vunpack.c.h.b16 %v2128
        %v2957 = vunpack.c.l.b16 %v2129
        %v2958 = vunpack.c.h.b16 %v2129
        %v2959 = vunpack.c.l.b16 %v2130
        %v2960 = vunpack.c.h.b16 %v2130
        %v2961 = vunpack.c.l.b16 %v2131
        %v2962 = vunpack.c.h.b16 %v2131
        %v2963 = vunpack.c.l.b16 %v2132
        %v2964 = vunpack.c.h.b16 %v2132
        %v2965 = vunpack.c.l.b16 %v2133
        %v2966 = vunpack.c.h.b16 %v2133
        %v2967 = vunpack.c.l.b16 %v2134
        %v2968 = vunpack.c.h.b16 %v2134
        %v2969 = vunpack.c.l.b16 %v2135
        %v2970 = vunpack.c.h.b16 %v2135
        %v2971 = vunpack.c.l.b16 %v2136
        %v2972 = vunpack.c.h.b16 %v2136
        %v2973 = vunpack.c.l.b16 %v2137
        %v2974 = vunpack.c.h.b16 %v2137
        %v2975 = vunpack.c.l.b16 %v2138
        %v2976 = vunpack.c.h.b16 %v2138
        %v2977 = vunpack.c.l.b16 %v2139
        %v2978 = vunpack.c.h.b16 %v2139
        %v2979 = vunpack.c.l.b16 %v2140
        %v2980 = vunpack.c.h.b16 %v2140
        %v2981 = vunpack.c.l.b16 %v2141
        %v2982 = vunpack.c.h.b16 %v2141
        %v2983 = vunpack.c.l.b16 %v2142
        %v2984 = vunpack.c.h.b16 %v2142
        %v2985 = vunpack.c.l.b16 %v2143
        %v2986 = vunpack.c.h.b16 %v2143
        %v2987 = vunpack.c.l.b16 %v2144
        %v2988 = vunpack.c.h.b16 %v2144
        %v2989 = vunpack.c.l.b16 %v2145
        %v2990 = vunpack.c.h.b16 %v2145
        %v2991 = vunpack.c.l.b16 %v2146
        %v2992 = vunpack.c.h.b16 %v2146
        %v2993 = vunpack.c.l.b16 %v2147
        %v2994 = vunpack.c.h.b16 %v2147
        %v2995 = vunpack.c.l.b16 %v2148
        %v2996 = vunpack.c.h.b16 %v2148
        %v2997 = vunpack.c.l.b16 %v2149
        %v2998 = vunpack.c.h.b16 %v2149
        %v2999 = vunpack.c.l.b16 %v2150
        %v3000 = vunpack.c.h.b16 %v2150
        %v3001 = vunpack.c.l.b16 %v2151
        %v3002 = vunpack.c.h.b16 %v2151
        %v3003 = vunpack.c.l.b16 %v2152
        %v3004 = vunpack.c.h.b16 %v2152
        %v3005 = vunpack.c.l.b16 %v2153
        %v3006 = vunpack.c.h.b16 %v2153
        %v3007 = vunpack.c.l.b16 %v2154
        %v3008 = vunpack.c.h.b16 %v2154
        %v3009 = vunpack.c.l.b16 %v2155
        %v3010 = vunpack.c.h.b16 %v2155
        %v3011 = vunpack.c.l.b16 %v2156
        %v3012 = vunpack.c.h.b16 %v2156
        %v3013 = vunpack.c.l.b16 %v2157
        %v3014 = vunpack.c.h.b16 %v2157
        %v3015 = vunpack.c.l.b16 %v2158
        %v3016 = vunpack.c.h.b16 %v2158
        %v3017 = vunpack.c.l.b16 %v2159
        %v3018 = vunpack.c.h.b16 %v2159
        %v3019 = vunpack.c.l.b16 %v2160
        %v3020 = vunpack.c.h.b16 %v2160
        %v3021 = vunpack.c.l.b16 %v2161
        %v3022 = vunpack.c.h.b16 %v2161
        %v3023 = vunpack.c.l.b16 %v2162
        %v3024 = vunpack.c.h.b16 %v2162
        %v3025 = vunpack.c.l.b16 %v2163
        %v3026 = vunpack.c.h.b16 %v2163
        %v3027 = vunpack.c.l.b16 %v2164
        %v3028 = vunpack.c.h.b16 %v2164
        %v3029 = vunpack.c.l.b16 %v2165
        %v3030 = vunpack.c.h.b16 %v2165
        %v3031 = vunpack.c.l.b16 %v2166
        %v3032 = vunpack.c.h.b16 %v2166
        %v3033 = vunpack.c.l.b16 %v2167
        %v3034 = vunpack.c.h.b16 %v2167
        %v3035 = vunpack.c.l.b16 %v2168
        %v3036 = vunpack.c.h.b16 %v2168
        %v3037 = vunpack.c.l.b16 %v2169
        %v3038 = vunpack.c.h.b16 %v2169
        %v3039 = vunpack.c.l.b16 %v2170
        %v3040 = vunpack.c.h.b16 %v2170
        %v3041 = vunpack.c.l.b16 %v2171
        %v3042 = vunpack.c.h.b16 %v2171
        %v3043 = vunpack.c.l.b16 %v2172
        %v3044 = vunpack.c.h.b16 %v2172
        %v3045 = vunpack.c.l.b16 %v2173
        %v3046 = vunpack.c.h.b16 %v2173
        %v3047 = vunpack.c.l.b16 %v2174
        %v3048 = vunpack.c.h.b16 %v2174
        %v3049 = vunpack.c.l.b16 %v2175
        %v3050 = vunpack.c.h.b16 %v2175
        %v3051 = vunpack.c.l.b16 %v2176
        %v3052 = vunpack.c.h.b16 %v2176
        %v3053 = vunpack.c.l.b16 %v2177
        %v3054 = vunpack.c.h.b16 %v2177
        %v3055 = vunpack.c.l.b16 %v2178
        %v3056 = vunpack.c.h.b16 %v2178
        %v3057 = vunpack.c.l.b16 %v2179
        %v3058 = vunpack.c.h.b16 %v2179
        %v3059 = vunpack.c.l.b16 %v2180
        %v3060 = vunpack.c.h.b16 %v2180
        %v3061 = vunpack.c.l.b16 %v2181
        %v3062 = vunpack.c.h.b16 %v2181
        %v3063 = vunpack.c.l.b16 %v2182
        %v3064 = vunpack.c.h.b16 %v2182
        %v3065 = vunpack.c.l.b16 %v2183
        %v3066 = vunpack.c.h.b16 %v2183
        %v3067 = vunpack.c.l.b16 %v2184
        %v3068 = vunpack.c.h.b16 %v2184
        %v3069 = vunpack.c.l.b16 %v2185
        %v3070 = vunpack.c.h.b16 %v2185
        %v3071 = vunpack.c.l.b16 %v2186
        %v3072 = vunpack.c.h.b16 %v2186
        %v3073 = vunpack.c.l.b16 %v2187
        %v3074 = vunpack.c.h.b16 %v2187
        %v3075 = vunpack.c.l.b16 %v2188
        %v3076 = vunpack.c.h.b16 %v2188
        %v3077 = vunpack.c.l.b16 %v2189
        %v3078 = vunpack.c.h.b16 %v2189
        %v3079 = vunpack.c.l.b16 %v2190
        %v3080 = vunpack.c.h.b16 %v2190
        %v3081 = vunpack.c.l.b16 %v2191
        %v3082 = vunpack.c.h.b16 %v2191
        %v3083 = vunpack.c.l.b16 %v2192
        %v3084 = vunpack.c.h.b16 %v2192
        %v3085 = vunpack.c.l.b16 %v2193
        %v3086 = vunpack.c.h.b16 %v2193
        %v3087 = vunpack.c.l.b16 %v2194
        %v3088 = vunpack.c.h.b16 %v2194
        %v3089 = vunpack.c.l.b16 %v2195
        %v3090 = vunpack.c.h.b16 %v2195
        %v3091 = vunpack.c.l.b16 %v2196
        %v3092 = vunpack.c.h.b16 %v2196
        %v3093 = vunpack.c.l.b16 %v2197
        %v3094 = vunpack.c.h.b16 %v2197
        %v3095 = vunpack.c.l.b16 %v2198
        %v3096 = vunpack.c.h.b16 %v2198
        %v3097 = vunpack.c.l.b16 %v2199
        %v3098 = vunpack.c.h.b16 %v2199
        %v3099 = vunpack.c.l.b16 %v2200
        %v3100 = vunpack.c.h.b16 %v2200
        %v3101 = vunpack.c.l.b16 %v2201
        %v3102 = vunpack.c.h.b16 %v2201
        %v3103 = vunpack.c.l.b16 %v2202
        %v3104 = vunpack.c.h.b16 %v2202
        %v3105 = vunpack.c.l.b16 %v2203
        %v3106 = vunpack.c.h.b16 %v2203
        %v3107 = vunpack.c.l.b16 %v2204
        %v3108 = vunpack.c.h.b16 %v2204
        %v3109 = vunpack.c.l.b16 %v2205
        %v3110 = vunpack.c.h.b16 %v2205
        %v3111 = vunpack.c.l.b16 %v2206
        %v3112 = vunpack.c.h.b16 %v2206
        %v3113 = vunpack.c.l.b16 %v2207
        %v3114 = vunpack.c.h.b16 %v2207
        %v3115 = vunpack.c.l.b16 %v2208
        %v3116 = vunpack.c.h.b16 %v2208
        %v3117 = vunpack.c.l.b16 %v2209
        %v3118 = vunpack.c.h.b16 %v2209
        %v3119 = vunpack.c.l.b16 %v2210
        %v3120 = vunpack.c.h.b16 %v2210
        %v3121 = vunpack.c.l.b16 %v2211
        %v3122 = vunpack.c.h.b16 %v2211
        %v3123 = vunpack.c.l.b16 %v2212
        %v3124 = vunpack.c.h.b16 %v2212
        %v3125 = vunpack.c.l.b16 %v2213
        %v3126 = vunpack.c.h.b16 %v2213
        %v3127 = vunpack.c.l.b16 %v2214
        %v3128 = vunpack.c.h.b16 %v2214
        %v3129 = vunpack.c.l.b16 %v2215
        %v3130 = vunpack.c.h.b16 %v2215
        %v3131 = vunpack.c.l.b16 %v2216
        %v3132 = vunpack.c.h.b16 %v2216
        %v3133 = vunpack.c.l.b16 %v2217
        %v3134 = vunpack.c.h.b16 %v2217
        %v3135 = vunpack.c.l.b16 %v2218
        %v3136 = vunpack.c.h.b16 %v2218
        %v3137 = vunpack.c.l.b16 %v2219
        %v3138 = vunpack.c.h.b16 %v2219
        %v3139 = vunpack.c.l.b16 %v2220
        %v3140 = vunpack.c.h.b16 %v2220
        %v3141 = vunpack.c.l.b16 %v2221
        %v3142 = vunpack.c.h.b16 %v2221
        %v3143 = vunpack.c.l.b16 %v2222
        %v3144 = vunpack.c.h.b16 %v2222
        %v3145 = vunpack.c.l.b16 %v2223
        %v3146 = vunpack.c.h.b16 %v2223
        %v3147 = vunpack.c.l.b16 %v2224
        %v3148 = vunpack.c.h.b16 %v2224
        %v3149 = vunpack.c.l.b16 %v2225
        %v3150 = vunpack.c.h.b16 %v2225
        %v3151 = vunpack.c.l.b16 %v2226
        %v3152 = vunpack.c.h.b16 %v2226
        %v3153 = vunpack.c.l.b16 %v2227
        %v3154 = vunpack.c.h.b16 %v2227
        %v3155 = vunpack.c.l.b16 %v2228
        %v3156 = vunpack.c.h.b16 %v2228
        %v3157 = vunpack.c.l.b16 %v2229
        %v3158 = vunpack.c.h.b16 %v2229
        %v3159 = vunpack.c.l.b16 %v2230
        %v3160 = vunpack.c.h.b16 %v2230
        %v3161 = vunpack.c.l.b16 %v2231
        %v3162 = vunpack.c.h.b16 %v2231
        %v3163 = vunpack.c.l.b16 %v2232
        %v3164 = vunpack.c.h.b16 %v2232
        %v3165 = vunpack.c.l.b16 %v2233
        %v3166 = vunpack.c.h.b16 %v2233
        %v3167 = vunpack.c.l.b16 %v2234
        %v3168 = vunpack.c.h.b16 %v2234
        %v3169 = vunpack.c.l.b16 %v2235
        %v3170 = vunpack.c.h.b16 %v2235
        %v3171 = vunpack.c.l.b16 %v2236
        %v3172 = vunpack.c.h.b16 %v2236
        %v3173 = vunpack.c.l.b16 %v2237
        %v3174 = vunpack.c.h.b16 %v2237
        %v3175 = vunpack.c.l.b16 %v2238
        %v3176 = vunpack.c.h.b16 %v2238
        %v3177 = vunpack.c.l.b16 %v2239
        %v3178 = vunpack.c.h.b16 %v2239
        %v3179 = vunpack.c.l.b16 %v2240
        %v3180 = vunpack.c.h.b16 %v2240
        %v3181 = vunpack.c.l.b16 %v2241
        %v3182 = vunpack.c.h.b16 %v2241
        %v3183 = vunpack.c.l.b16 %v2242
        %v3184 = vunpack.c.h.b16 %v2242
        %v3185 = vunpack.c.l.b16 %v2243
        %v3186 = vunpack.c.h.b16 %v2243
        %v3187 = vunpack.c.l.b16 %v2244
        %v3188 = vunpack.c.h.b16 %v2244
        %v3189 = vunpack.c.l.b16 %v2245
        %v3190 = vunpack.c.h.b16 %v2245
        %v3191 = vunpack.c.l.b16 %v2246
        %v3192 = vunpack.c.h.b16 %v2246
        %v3193 = vunpack.c.l.b16 %v2247
        %v3194 = vunpack.c.h.b16 %v2247
        %v3195 = vunpack.c.l.b16 %v2248
        %v3196 = vunpack.c.h.b16 %v2248
        %v3197 = vunpack.c.l.b16 %v2249
        %v3198 = vunpack.c.h.b16 %v2249
        %v3199 = vunpack.c.l.b16 %v2250
        %v3200 = vunpack.c.h.b16 %v2250
        %v3201 = vunpack.c.l.b16 %v2251
        %v3202 = vunpack.c.h.b16 %v2251
        %v3203 = vunpack.c.l.b16 %v2252
        %v3204 = vunpack.c.h.b16 %v2252
        %v3205 = vunpack.c.l.b16 %v2253
        %v3206 = vunpack.c.h.b16 %v2253
        %v3207 = vunpack.c.l.b16 %v2254
        %v3208 = vunpack.c.h.b16 %v2254
        %v3209 = vunpack.c.l.b16 %v2255
        %v3210 = vunpack.c.h.b16 %v2255
        %v3211 = vunpack.c.l.b16 %v2256
        %v3212 = vunpack.c.h.b16 %v2256
        %v3213 = vunpack.c.l.b16 %v2257
        %v3214 = vunpack.c.h.b16 %v2257
        %v3215 = vunpack.c.l.b16 %v2258
        %v3216 = vunpack.c.h.b16 %v2258
        %v3217 = vunpack.c.l.b16 %v2259
        %v3218 = vunpack.c.h.b16 %v2259
        %v3219 = vunpack.c.l.b16 %v2260
        %v3220 = vunpack.c.h.b16 %v2260
        %v3221 = vunpack.c.l.b16 %v2261
        %v3222 = vunpack.c.h.b16 %v2261
        %v3223 = vunpack.c.l.b16 %v2262
        %v3224 = vunpack.c.h.b16 %v2262
        %v3225 = vunpack.c.l.b16 %v2263
        %v3226 = vunpack.c.h.b16 %v2263
        %v3227 = vunpack.c.l.b16 %v2264
        %v3228 = vunpack.c.h.b16 %v2264
        %v3229 = vunpack.c.l.b16 %v2265
        %v3230 = vunpack.c.h.b16 %v2265
        %v3231 = vunpack.c.l.b16 %v2266
        %v3232 = vunpack.c.h.b16 %v2266
        %v3233 = vunpack.c.l.b16 %v2267
        %v3234 = vunpack.c.h.b16 %v2267
        %v3235 = vunpack.c.l.b16 %v2268
        %v3236 = vunpack.c.h.b16 %v2268
        %v3237 = vunpack.c.l.b16 %v2269
        %v3238 = vunpack.c.h.b16 %v2269
        %v3239 = vunpack.c.l.b16 %v2270
        %v3240 = vunpack.c.h.b16 %v2270
        %v3241 = vunpack.c.l.b16 %v2271
        %v3242 = vunpack.c.h.b16 %v2271
        %v3243 = vunpack.c.l.b16 %v2272
        %v3244 = vunpack.c.h.b16 %v2272
        %v3245 = vunpack.c.l.b16 %v2273
        %v3246 = vunpack.c.h.b16 %v2273
        %v3247 = vunpack.c.l.b16 %v2274
        %v3248 = vunpack.c.h.b16 %v2274
        %v3249 = vunpack.c.l.b16 %v2275
        %v3250 = vunpack.c.h.b16 %v2275
        %v3251 = vunpack.c.l.b16 %v2276
        %v3252 = vunpack.c.h.b16 %v2276
        %v3253 = vunpack.c.l.b16 %v2277
        %v3254 = vunpack.c.h.b16 %v2277
        %v3255 = vunpack.c.l.b16 %v2278
        %v3256 = vunpack.c.h.b16 %v2278
        %v3257 = vunpack.c.l.b16 %v2279
        %v3258 = vunpack.c.h.b16 %v2279
        %v3259 = vunpack.c.l.b16 %v2280
        %v3260 = vunpack.c.h.b16 %v2280
        %v3261 = vunpack.c.l.b16 %v2281
        %v3262 = vunpack.c.h.b16 %v2281
        %v3263 = vunpack.c.l.b16 %v2282
        %v3264 = vunpack.c.h.b16 %v2282
        %v3265 = vunpack.c.l.b16 %v2283
        %v3266 = vunpack.c.h.b16 %v2283
        %v3267 = vunpack.c.l.b16 %v2284
        %v3268 = vunpack.c.h.b16 %v2284
        %v3269 = vunpack.c.l.b16 %v2285
        %v3270 = vunpack.c.h.b16 %v2285
        %v3271 = vunpack.c.l.b16 %v2286
        %v3272 = vunpack.c.h.b16 %v2286
        %v3273 = vunpack.c.l.b16 %v2287
        %v3274 = vunpack.c.h.b16 %v2287
        %v3275 = vunpack.c.l.b16 %v2288
        %v3276 = vunpack.c.h.b16 %v2288
        %v3277 = vunpack.c.l.b16 %v2289
        %v3278 = vunpack.c.h.b16 %v2289
        %v3279 = vunpack.c.l.b16 %v2290
        %v3280 = vunpack.c.h.b16 %v2290
        %v3281 = vunpack.c.l.b16 %v2291
        %v3282 = vunpack.c.h.b16 %v2291
        %v3283 = vunpack.c.l.b16 %v2292
        %v3284 = vunpack.c.h.b16 %v2292
        %v3285 = vunpack.c.l.b16 %v2293
        %v3286 = vunpack.c.h.b16 %v2293
        %v3287 = vunpack.c.l.b16 %v2294
        %v3288 = vunpack.c.h.b16 %v2294
        %v3289 = vunpack.c.l.b16 %v2295
        %v3290 = vunpack.c.h.b16 %v2295
        %v3291 = vunpack.c.l.b16 %v2296
        %v3292 = vunpack.c.h.b16 %v2296
        %v3293 = vunpack.c.l.b16 %v2297
        %v3294 = vunpack.c.h.b16 %v2297
        %v3295 = vunpack.c.l.b16 %v2298
        %v3296 = vunpack.c.h.b16 %v2298
        %v3297 = vunpack.c.l.b16 %v2299
        %v3298 = vunpack.c.h.b16 %v2299
        %v3299 = vunpack.c.l.b16 %v2300
        %v3300 = vunpack.c.h.b16 %v2300
        %v3301 = vunpack.c.l.b16 %v2301
        %v3302 = vunpack.c.h.b16 %v2301
        %v3303 = vunpack.c.l.b16 %v2302
        %v3304 = vunpack.c.h.b16 %v2302
        %v3305 = vunpack.c.l.b16 %v2303
        %v3306 = vunpack.c.h.b16 %v2303
        %v3307 = vunpack.c.l.b16 %v2304
        %v3308 = vunpack.c.h.b16 %v2304
        %v3309 = vunpack.c.l.b16 %v2305
        %v3310 = vunpack.c.h.b16 %v2305
        %v3311 = vunpack.c.l.b16 %v2306
        %v3312 = vunpack.c.h.b16 %v2306
        %v3313 = vunpack.c.l.b16 %v2307
        %v3314 = vunpack.c.h.b16 %v2307
        %v3315 = vunpack.c.l.b16 %v2308
        %v3316 = vunpack.c.h.b16 %v2308
        %v3317 = vunpack.c.l.b16 %v2309
        %v3318 = vunpack.c.h.b16 %v2309
        %v3319 = vunpack.c.l.b16 %v2310
        %v3320 = vunpack.c.h.b16 %v2310
        %v3321 = vunpack.c.l.b16 %v2311
        %v3322 = vunpack.c.h.b16 %v2311
        %v3323 = vunpack.c.l.b16 %v2312
        %v3324 = vunpack.c.h.b16 %v2312
        %v3325 = vunpack.c.l.b16 %v2313
        %v3326 = vunpack.c.h.b16 %v2313
        %v3327 = vunpack.c.l.b16 %v2314
        %v3328 = vunpack.c.h.b16 %v2314
        %v3329 = vunpack.c.l.b16 %v2315
        %v3330 = vunpack.c.h.b16 %v2315
        %v3331 = vunpack.c.l.b16 %v2316
        %v3332 = vunpack.c.h.b16 %v2316
        %v3333 = vunpack.c.l.b16 %v2317
        %v3334 = vunpack.c.h.b16 %v2317
        %v3335 = vunpack.c.l.b16 %v2318
        %v3336 = vunpack.c.h.b16 %v2318
        %v3337 = vunpack.c.l.b16 %v2319
        %v3338 = vunpack.c.h.b16 %v2319
        %v3339 = vunpack.c.l.b16 %v2320
        %v3340 = vunpack.c.h.b16 %v2320
        %v3341 = vunpack.c.l.b16 %v2321
        %v3342 = vunpack.c.h.b16 %v2321
        %v3343 = vunpack.c.l.b16 %v2322
        %v3344 = vunpack.c.h.b16 %v2322
        %v3345 = vunpack.c.l.b16 %v2323
        %v3346 = vunpack.c.h.b16 %v2323
        %v3347 = vunpack.c.l.b16 %v2324
        %v3348 = vunpack.c.h.b16 %v2324
        %v3349 = vunpack.c.l.b16 %v2325
        %v3350 = vunpack.c.h.b16 %v2325
        %v3351 = vunpack.c.l.b16 %v2326
        %v3352 = vunpack.c.h.b16 %v2326
        %v3353 = vunpack.c.l.b16 %v2327
        %v3354 = vunpack.c.h.b16 %v2327
        %v3355 = vunpack.c.l.b16 %v2328
        %v3356 = vunpack.c.h.b16 %v2328
        %v3357 = vunpack.c.l.b16 %v2329
        %v3358 = vunpack.c.h.b16 %v2329
        %v3359 = vunpack.c.l.b16 %v2330
        %v3360 = vunpack.c.h.b16 %v2330
        %v3361 = vunpack.c.l.b16 %v2331
        %v3362 = vunpack.c.h.b16 %v2331
        %v3363 = vunpack.c.l.b16 %v2332
        %v3364 = vunpack.c.h.b16 %v2332
        %v3365 = vunpack.c.l.b16 %v2333
        %v3366 = vunpack.c.h.b16 %v2333
        %v3367 = vunpack.c.l.b16 %v2334
        %v3368 = vunpack.c.h.b16 %v2334
        %v3369 = vunpack.c.l.b16 %v2335
        %v3370 = vunpack.c.h.b16 %v2335
        %v3371 = vunpack.c.l.b16 %v2336
        %v3372 = vunpack.c.h.b16 %v2336
        %v3373 = vunpack.c.l.b16 %v2337
        %v3374 = vunpack.c.h.b16 %v2337
        %v3375 = vunpack.c.l.b16 %v2338
        %v3376 = vunpack.c.h.b16 %v2338
        %v3377 = vunpack.c.l.b16 %v2339
        %v3378 = vunpack.c.h.b16 %v2339
        %v3379 = vunpack.c.l.b16 %v2340
        %v3380 = vunpack.c.h.b16 %v2340
        %v3381 = vunpack.c.l.b16 %v2341
        %v3382 = vunpack.c.h.b16 %v2341
        %v3383 = vunpack.c.l.b16 %v2342
        %v3384 = vunpack.c.h.b16 %v2342
        %v3385 = vunpack.c.l.b16 %v2343
        %v3386 = vunpack.c.h.b16 %v2343
        %v3387 = vunpack.c.l.b16 %v2344
        %v3388 = vunpack.c.h.b16 %v2344
        %v3389 = vunpack.c.l.b16 %v2345
        %v3390 = vunpack.c.h.b16 %v2345
        %v3391 = vunpack.c.l.b16 %v2346
        %v3392 = vunpack.c.h.b16 %v2346
        %v3393 = vunpack.c.l.b16 %v2347
        %v3394 = vunpack.c.h.b16 %v2347
        %v3395 = vunpack.c.l.b16 %v2348
        %v3396 = vunpack.c.h.b16 %v2348
        %v3397 = vunpack.c.l.b16 %v2349
        %v3398 = vunpack.c.h.b16 %v2349
        %v3399 = vunpack.c.l.b16 %v2350
        %v3400 = vunpack.c.h.b16 %v2350
        %v3401 = vunpack.c.l.b16 %v2351
        %v3402 = vunpack.c.h.b16 %v2351
        %v3403 = vunpack.c.l.b16 %v2352
        %v3404 = vunpack.c.h.b16 %v2352
        %v3405 = vunpack.c.l.b16 %v2353
        %v3406 = vunpack.c.h.b16 %v2353
        %v3407 = vunpack.c.l.b16 %v2354
        %v3408 = vunpack.c.h.b16 %v2354
        %v3409 = vunpack.c.l.b16 %v2355
        %v3410 = vunpack.c.h.b16 %v2355
        %v3411 = vunpack.c.l.b16 %v2356
        %v3412 = vunpack.c.h.b16 %v2356
        %v3413 = vunpack.c.l.b16 %v2357
        %v3414 = vunpack.c.h.b16 %v2357
        %v3415 = vunpack.c.l.b16 %v2358
        %v3416 = vunpack.c.h.b16 %v2358
        %v3417 = vunpack.c.l.b16 %v2359
        %v3418 = vunpack.c.h.b16 %v2359
        %v3419 = vunpack.c.l.b16 %v2360
        %v3420 = vunpack.c.h.b16 %v2360
        %v3421 = vunpack.c.l.b16 %v2361
        %v3422 = vunpack.c.h.b16 %v2361
        %v3423 = vunpack.c.l.b16 %v2362
        %v3424 = vunpack.c.h.b16 %v2362
        %v3425 = vunpack.c.l.b16 %v2363
        %v3426 = vunpack.c.h.b16 %v2363
        %v3427 = vunpack.c.l.b16 %v2364
        %v3428 = vunpack.c.h.b16 %v2364
        %v3429 = vunpack.c.l.b16 %v2365
        %v3430 = vunpack.c.h.b16 %v2365
        %v3431 = vunpack.c.l.b16 %v2366
        %v3432 = vunpack.c.h.b16 %v2366
        %v3433 = vunpack.c.l.b16 %v2367
        %v3434 = vunpack.c.h.b16 %v2367
        %v3435 = vunpack.c.l.b16 %v2368
        %v3436 = vunpack.c.h.b16 %v2368
        %v3437 = vunpack.c.l.b16 %v2369
        %v3438 = vunpack.c.h.b16 %v2369
        %v3439 = vunpack.c.l.b16 %v2370
        %v3440 = vunpack.c.h.b16 %v2370
        %v3441 = vunpack.c.l.b16 %v2371
        %v3442 = vunpack.c.h.b16 %v2371
        %v3443 = vunpack.c.l.b16 %v2372
        %v3444 = vunpack.c.h.b16 %v2372
        %v3445 = vunpack.c.l.b16 %v2373
        %v3446 = vunpack.c.h.b16 %v2373
        %v3447 = vunpack.c.l.b16 %v2374
        %v3448 = vunpack.c.h.b16 %v2374
        %v3449 = vunpack.c.l.b16 %v2375
        %v3450 = vunpack.c.h.b16 %v2375
        %v3451 = vunpack.c.l.b16 %v2376
        %v3452 = vunpack.c.h.b16 %v2376
        %v3453 = vunpack.c.l.b16 %v2377
        %v3454 = vunpack.c.h.b16 %v2377
        %v3455 = vunpack.c.l.b16 %v2378
        %v3456 = vunpack.c.h.b16 %v2378
        %v3457 = vunpack.c.l.b16 %v2379
        %v3458 = vunpack.c.h.b16 %v2379
        %v3459 = vunpack.c.l.b16 %v2380
        %v3460 = vunpack.c.h.b16 %v2380
        %v3461 = vunpack.c.l.b16 %v2381
        %v3462 = vunpack.c.h.b16 %v2381
        %v3463 = vunpack.c.l.b16 %v2382
        %v3464 = vunpack.c.h.b16 %v2382
        %v3465 = vunpack.c.l.b16 %v2383
        %v3466 = vunpack.c.h.b16 %v2383
        %v3467 = vunpack.c.l.b16 %v2384
        %v3468 = vunpack.c.h.b16 %v2384
        %v3469 = vunpack.c.l.b16 %v2385
        %v3470 = vunpack.c.h.b16 %v2385
        %v3471 = vunpack.c.l.b16 %v2386
        %v3472 = vunpack.c.h.b16 %v2386
        %v3473 = vunpack.c.l.b16 %v2387
        %v3474 = vunpack.c.h.b16 %v2387
        %v3475 = vunpack.c.l.b16 %v2388
        %v3476 = vunpack.c.h.b16 %v2388
        %v3477 = vunpack.c.l.b16 %v2389
        %v3478 = vunpack.c.h.b16 %v2389
        %v3479 = vunpack.c.l.b16 %v2390
        %v3480 = vunpack.c.h.b16 %v2390
        %v3481 = vunpack.c.l.b16 %v2391
        %v3482 = vunpack.c.h.b16 %v2391
        %v3483 = vunpack.c.l.b16 %v2392
        %v3484 = vunpack.c.h.b16 %v2392
        %v3485 = vunpack.c.l.b16 %v2393
        %v3486 = vunpack.c.h.b16 %v2393
        %v3487 = vunpack.c.l.b16 %v2394
        %v3488 = vunpack.c.h.b16 %v2394
        %v3489 = vunpack.c.l.b16 %v2395
        %v3490 = vunpack.c.h.b16 %v2395
        %v3491 = vunpack.c.l.b16 %v2396
        %v3492 = vunpack.c.h.b16 %v2396
        %v3493 = vunpack.c.l.b16 %v2397
        %v3494 = vunpack.c.h.b16 %v2397
        %v3495 = vunpack.c.l.b16 %v2398
        %v3496 = vunpack.c.h.b16 %v2398
        %v3497 = vunpack.c.l.b16 %v2399
        %v3498 = vunpack.c.h.b16 %v2399
        %v3499 = vunpack.c.l.b16 %v2400
        %v3500 = vunpack.c.h.b16 %v2400
        %v3501 = vunpack.c.l.b16 %v2401
        %v3502 = vunpack.c.h.b16 %v2401
        %v3503 = vunpack.c.l.b16 %v2402
        %v3504 = vunpack.c.h.b16 %v2402
        %v3505 = vunpack.c.l.b16 %v2403
        %v3506 = vunpack.c.h.b16 %v2403
        %v3507 = vunpack.c.l.b16 %v2404
        %v3508 = vunpack.c.h.b16 %v2404
        %v3509 = vunpack.c.l.b16 %v2405
        %v3510 = vunpack.c.h.b16 %v2405
        %v3511 = vunpack.c.l.b16 %v2406
        %v3512 = vunpack.c.h.b16 %v2406
        %v3513 = vunpack.c.l.b16 %v2407
        %v3514 = vunpack.c.h.b16 %v2407
        %v3515 = vunpack.c.l.b16 %v2408
        %v3516 = vunpack.c.h.b16 %v2408
        %v3517 = vunpack.c.l.b16 %v2409
        %v3518 = vunpack.c.h.b16 %v2409
        %v3519 = vunpack.c.l.b16 %v2410
        %v3520 = vunpack.c.h.b16 %v2410
        %v3521 = vunpack.c.l.b16 %v2411
        %v3522 = vunpack.c.h.b16 %v2411
        %v3523 = vunpack.c.l.b16 %v2412
        %v3524 = vunpack.c.h.b16 %v2412
        %v3525 = vunpack.c.l.b16 %v2413
        %v3526 = vunpack.c.h.b16 %v2413
        %v3527 = vunpack.c.l.b16 %v2414
        %v3528 = vunpack.c.h.b16 %v2414
        %v3529 = vunpack.c.l.b16 %v2415
        %v3530 = vunpack.c.h.b16 %v2415
        %v3531 = vunpack.c.l.b16 %v2416
        %v3532 = vunpack.c.h.b16 %v2416
        %v3533 = vunpack.c.l.b16 %v2417
        %v3534 = vunpack.c.h.b16 %v2417
        %v3535 = vunpack.c.l.b16 %v2418
        %v3536 = vunpack.c.h.b16 %v2418
        %v3537 = vunpack.c.l.b16 %v2419
        %v3538 = vunpack.c.h.b16 %v2419
        %v3539 = vunpack.c.l.b16 %v2420
        %v3540 = vunpack.c.h.b16 %v2420
        %v3541 = vunpack.c.l.b16 %v2421
        %v3542 = vunpack.c.h.b16 %v2421
        %v3543 = vunpack.c.l.b16 %v2422
        %v3544 = vunpack.c.h.b16 %v2422
        %v3545 = vunpack.c.l.b16 %v2423
        %v3546 = vunpack.c.h.b16 %v2423
        %v3547 = vunpack.c.l.b16 %v2424
        %v3548 = vunpack.c.h.b16 %v2424
        %v3549 = vunpack.c.l.b16 %v2425
        %v3550 = vunpack.c.h.b16 %v2425
        %v3551 = vunpack.c.l.b16 %v2426
        %v3552 = vunpack.c.h.b16 %v2426
        %v3553 = vunpack.c.l.b16 %v2427
        %v3554 = vunpack.c.h.b16 %v2427
        %v3555 = vunpack.c.l.b16 %v2428
        %v3556 = vunpack.c.h.b16 %v2428
        %v3557 = vunpack.c.l.b16 %v2429
        %v3558 = vunpack.c.h.b16 %v2429
        %v3559 = vunpack.c.l.b16 %v2430
        %v3560 = vunpack.c.h.b16 %v2430
        %v3561 = vunpack.c.l.b16 %v2431
        %v3562 = vunpack.c.h.b16 %v2431
        %v3563 = vunpack.c.l.b16 %v2432
        %v3564 = vunpack.c.h.b16 %v2432
        %v3565 = vunpack.c.l.b16 %v2433
        %v3566 = vunpack.c.h.b16 %v2433
        %v3567 = vunpack.c.l.b16 %v2434
        %v3568 = vunpack.c.h.b16 %v2434
        %v3569 = vunpack.c.l.b16 %v2435
        %v3570 = vunpack.c.h.b16 %v2435
        %v3571 = vunpack.c.l.b16 %v2436
        %v3572 = vunpack.c.h.b16 %v2436
        %v3573 = vunpack.c.l.b16 %v2437
        %v3574 = vunpack.c.h.b16 %v2437
        %v3575 = vunpack.c.l.b16 %v2438
        %v3576 = vunpack.c.h.b16 %v2438
        %v3577 = vunpack.c.l.b16 %v2439
        %v3578 = vunpack.c.h.b16 %v2439
        %v3579 = vunpack.c.l.b16 %v2440
        %v3580 = vunpack.c.h.b16 %v2440
        %v3581 = vunpack.c.l.b16 %v2441
        %v3582 = vunpack.c.h.b16 %v2441
        %v3583 = vunpack.c.l.b16 %v2442
        %v3584 = vunpack.c.h.b16 %v2442
        %v3585 = vunpack.c.l.b16 %v2443
        %v3586 = vunpack.c.h.b16 %v2443
        %v3587 = vunpack.c.l.b16 %v2444
        %v3588 = vunpack.c.h.b16 %v2444
        %v3589 = vunpack.c.l.b16 %v2445
        %v3590 = vunpack.c.h.b16 %v2445
        %v3591 = vunpack.c.l.b16 %v2446
        %v3592 = vunpack.c.h.b16 %v2446
        %v3593 = vunpack.c.l.b16 %v2447
        %v3594 = vunpack.c.h.b16 %v2447
        %v3595 = vunpack.c.l.b16 %v2448
        %v3596 = vunpack.c.h.b16 %v2448
        %v3597 = vunpack.c.l.b16 %v2449
        %v3598 = vunpack.c.h.b16 %v2449
        %v3599 = vunpack.c.l.b16 %v2450
        %v3600 = vunpack.c.h.b16 %v2450
        %v3601 = vunpack.c.l.b16 %v2451
        %v3602 = vunpack.c.h.b16 %v2451
        %v3603 = vunpack.c.l.b16 %v2452
        %v3604 = vunpack.c.h.b16 %v2452
        %v3605 = vpack.c.b16 %v2841, %v2837
        %v3606 = vpack.c.b16 %v2842, %v2838
        %v3607 = vpack.c.b16 %v2843, %v2839
        %v3608 = vpack.c.b16 %v2844, %v2840
        %v3609 = vpack.c.b16 %v2849, %v2845
        %v3610 = vpack.c.b16 %v2850, %v2846
        %v3611 = vpack.c.b16 %v2851, %v2847
        %v3612 = vpack.c.b16 %v2852, %v2848
        %v3613 = vpack.c.b16 %v2857, %v2853
        %v3614 = vpack.c.b16 %v2858, %v2854
        %v3615 = vpack.c.b16 %v2859, %v2855
        %v3616 = vpack.c.b16 %v2860, %v2856
        %v3617 = vpack.c.b16 %v2865, %v2861
        %v3618 = vpack.c.b16 %v2866, %v2862
        %v3619 = vpack.c.b16 %v2867, %v2863
        %v3620 = vpack.c.b16 %v2868, %v2864
        %v3621 = vpack.c.b16 %v2873, %v2869
        %v3622 = vpack.c.b16 %v2874, %v2870
        %v3623 = vpack.c.b16 %v2875, %v2871
        %v3624 = vpack.c.b16 %v2876, %v2872
        %v3625 = vpack.c.b16 %v2881, %v2877
        %v3626 = vpack.c.b16 %v2882, %v2878
        %v3627 = vpack.c.b16 %v2883, %v2879
        %v3628 = vpack.c.b16 %v2884, %v2880
        %v3629 = vpack.c.b16 %v2889, %v2885
        %v3630 = vpack.c.b16 %v2890, %v2886
        %v3631 = vpack.c.b16 %v2891, %v2887
        %v3632 = vpack.c.b16 %v2892, %v2888
        %v3633 = vpack.c.b16 %v2897, %v2893
        %v3634 = vpack.c.b16 %v2898, %v2894
        %v3635 = vpack.c.b16 %v2899, %v2895
        %v3636 = vpack.c.b16 %v2900, %v2896
        %v3637 = vpack.c.b16 %v2905, %v2901
        %v3638 = vpack.c.b16 %v2906, %v2902
        %v3639 = vpack.c.b16 %v2907, %v2903
        %v3640 = vpack.c.b16 %v2908, %v2904
        %v3641 = vpack.c.b16 %v2913, %v2909
        %v3642 = vpack.c.b16 %v2914, %v2910
        %v3643 = vpack.c.b16 %v2915, %v2911
        %v3644 = vpack.c.b16 %v2916, %v2912
        %v3645 = vpack.c.b16 %v2921, %v2917
        %v3646 = vpack.c.b16 %v2922, %v2918
        %v3647 = vpack.c.b16 %v2923, %v2919
        %v3648 = vpack.c.b16 %v2924, %v2920
        %v3649 = vpack.c.b16 %v2929, %v2925
        %v3650 = vpack.c.b16 %v2930, %v2926
        %v3651 = vpack.c.b16 %v2931, %v2927
        %v3652 = vpack.c.b16 %v2932, %v2928
        %v3653 = vpack.c.b16 %v2937, %v2933
        %v3654 = vpack.c.b16 %v2938, %v2934
        %v3655 = vpack.c.b16 %v2939, %v2935
        %v3656 = vpack.c.b16 %v2940, %v2936
        %v3657 = vpack.c.b16 %v2945, %v2941
        %v3658 = vpack.c.b16 %v2946, %v2942
        %v3659 = vpack.c.b16 %v2947, %v2943
        %v3660 = vpack.c.b16 %v2948, %v2944
        %v3661 = vpack.c.b16 %v2953, %v2949
        %v3662 = vpack.c.b16 %v2954, %v2950
        %v3663 = vpack.c.b16 %v2955, %v2951
        %v3664 = vpack.c.b16 %v2956, %v2952
        %v3665 = vpack.c.b16 %v2961, %v2957
        %v3666 = vpack.c.b16 %v2962, %v2958
        %v3667 = vpack.c.b16 %v2963, %v2959
        %v3668 = vpack.c.b16 %v2964, %v2960
        %v3669 = vpack.c.b16 %v2969, %v2965
        %v3670 = vpack.c.b16 %v2970, %v2966
        %v3671 = vpack.c.b16 %v2971, %v2967
        %v3672 = vpack.c.b16 %v2972, %v2968
        %v3673 = vpack.c.b16 %v2977, %v2973
        %v3674 = vpack.c.b16 %v2978, %v2974
        %v3675 = vpack.c.b16 %v2979, %v2975
        %v3676 = vpack.c.b16 %v2980, %v2976
        %v3677 = vpack.c.b16 %v2985, %v2981
        %v3678 = vpack.c.b16 %v2986, %v2982
        %v3679 = vpack.c.b16 %v2987, %v2983
        %v3680 = vpack.c.b16 %v2988, %v2984
        %v3681 = vpack.c.b16 %v2993, %v2989
        %v3682 = vpack.c.b16 %v2994, %v2990
        %v3683 = vpack.c.b16 %v2995, %v2991
        %v3684 = vpack.c.b16 %v2996, %v2992
        %v3685 = vpack.c.b16 %v3001, %v2997
        %v3686 = vpack.c.b16 %v3002, %v2998
        %v3687 = vpack.c.b16 %v3003, %v2999
        %v3688 = vpack.c.b16 %v3004, %v3000
        %v3689 = vpack.c.b16 %v3009, %v3005
        %v3690 = vpack.c.b16 %v3010, %v3006
        %v3691 = vpack.c.b16 %v3011, %v3007
        %v3692 = vpack.c.b16 %v3012, %v3008
        %v3693 = vpack.c.b16 %v3017, %v3013
        %v3694 = vpack.c.b16 %v3018, %v3014
        %v3695 = vpack.c.b16 %v3019, %v3015
        %v3696 = vpack.c.b16 %v3020, %v3016
        %v3697 = vpack.c.b16 %v3025, %v3021
        %v3698 = vpack.c.b16 %v3026, %v3022
        %v3699 = vpack.c.b16 %v3027, %v3023
        %v3700 = vpack.c.b16 %v3028, %v3024
        %v3701 = vpack.c.b16 %v3033, %v3029
        %v3702 = vpack.c.b16 %v3034, %v3030
        %v3703 = vpack.c.b16 %v3035, %v3031
        %v3704 = vpack.c.b16 %v3036, %v3032
        %v3705 = vpack.c.b16 %v3041, %v3037
        %v3706 = vpack.c.b16 %v3042, %v3038
        %v3707 = vpack.c.b16 %v3043, %v3039
        %v3708 = vpack.c.b16 %v3044, %v3040
        %v3709 = vpack.c.b16 %v3049, %v3045
        %v3710 = vpack.c.b16 %v3050, %v3046
        %v3711 = vpack.c.b16 %v3051, %v3047
        %v3712 = vpack.c.b16 %v3052, %v3048
        %v3713 = vpack.c.b16 %v3057, %v3053
        %v3714 = vpack.c.b16 %v3058, %v3054
        %v3715 = vpack.c.b16 %v3059, %v3055
        %v3716 = vpack.c.b16 %v3060, %v3056
        %v3717 = vpack.c.b16 %v3065, %v3061
        %v3718 = vpack.c.b16 %v3066, %v3062
        %v3719 = vpack.c.b16 %v3067, %v3063
        %v3720 = vpack.c.b16 %v3068, %v3064
        %v3721 = vpack.c.b16 %v3073, %v3069
        %v3722 = vpack.c.b16 %v3074, %v3070
        %v3723 = vpack.c.b16 %v3075, %v3071
        %v3724 = vpack.c.b16 %v3076, %v3072
        %v3725 = vpack.c.b16 %v3081, %v3077
        %v3726 = vpack.c.b16 %v3082, %v3078
        %v3727 = vpack.c.b16 %v3083, %v3079
        %v3728 = vpack.c.b16 %v3084, %v3080
        %v3729 = vpack.c.b16 %v3089, %v3085
        %v3730 = vpack.c.b16 %v3090, %v3086
        %v3731 = vpack.c.b16 %v3091, %v3087
        %v3732 = vpack.c.b16 %v3092, %v3088
        %v3733 = vpack.c.b16 %v3097, %v3093
        %v3734 = vpack.c.b16 %v3098, %v3094
        %v3735 = vpack.c.b16 %v3099, %v3095
        %v3736 = vpack.c.b16 %v3100, %v3096
        %v3737 = vpack.c.b16 %v3105, %v3101
        %v3738 = vpack.c.b16 %v3106, %v3102
        %v3739 = vpack.c.b16 %v3107, %v3103
        %v3740 = vpack.c.b16 %v3108, %v3104
        %v3741 = vpack.c.b16 %v3113, %v3109
        %v3742 = vpack.c.b16 %v3114, %v3110
        %v3743 = vpack.c.b16 %v3115, %v3111
        %v3744 = vpack.c.b16 %v3116, %v3112
        %v3745 = vpack.c.b16 %v3121, %v3117
        %v3746 = vpack.c.b16 %v3122, %v3118
        %v3747 = vpack.c.b16 %v3123, %v3119
        %v3748 = vpack.c.b16 %v3124, %v3120
        %v3749 = vpack.c.b16 %v3129, %v3125
        %v3750 = vpack.c.b16 %v3130, %v3126
        %v3751 = vpack.c.b16 %v3131, %v3127
        %v3752 = vpack.c.b16 %v3132, %v3128
        %v3753 = vpack.c.b16 %v3137, %v3133
        %v3754 = vpack.c.b16 %v3138, %v3134
        %v3755 = vpack.c.b16 %v3139, %v3135
        %v3756 = vpack.c.b16 %v3140, %v3136
        %v3757 = vpack.c.b16 %v3145, %v3141
        %v3758 = vpack.c.b16 %v3146, %v3142
        %v3759 = vpack.c.b16 %v3147, %v3143
        %v3760 = vpack.c.b16 %v3148, %v3144
        %v3761 = vpack.c.b16 %v3153, %v3149
        %v3762 = vpack.c.b16 %v3154, %v3150
        %v3763 = vpack.c.b16 %v3155, %v3151
        %v3764 = vpack.c.b16 %v3156, %v3152
        %v3765 = vpack.c.b16 %v3161, %v3157
        %v3766 = vpack.c.b16 %v3162, %v3158
        %v3767 = vpack.c.b16 %v3163, %v3159
        %v3768 = vpack.c.b16 %v3164, %v3160
        %v3769 = vpack.c.b16 %v3169, %v3165
        %v3770 = vpack.c.b16 %v3170, %v3166
        %v3771 = vpack.c.b16 %v3171, %v3167
        %v3772 = vpack.c.b16 %v3172, %v3168
        %v3773 = vpack.c.b16 %v3177, %v3173
        %v3774 = vpack.c.b16 %v3178, %v3174
        %v3775 = vpack.c.b16 %v3179, %v3175
        %v3776 = vpack.c.b16 %v3180, %v3176
        %v3777 = vpack.c.b16 %v3185, %v3181
        %v3778 = vpack.c.b16 %v3186, %v3182
        %v3779 = vpack.c.b16 %v3187, %v3183
        %v3780 = vpack.c.b16 %v3188, %v3184
        %v3781 = vpack.c.b16 %v3193, %v3189
        %v3782 = vpack.c.b16 %v3194, %v3190
        %v3783 = vpack.c.b16 %v3195, %v3191
        %v3784 = vpack.c.b16 %v3196, %v3192
        %v3785 = vpack.c.b16 %v3201, %v3197
        %v3786 = vpack.c.b16 %v3202, %v3198
        %v3787 = vpack.c.b16 %v3203, %v3199
        %v3788 = vpack.c.b16 %v3204, %v3200
        %v3789 = vpack.c.b16 %v3209, %v3205
        %v3790 = vpack.c.b16 %v3210, %v3206
        %v3791 = vpack.c.b16 %v3211, %v3207
        %v3792 = vpack.c.b16 %v3212, %v3208
        %v3793 = vpack.c.b16 %v3217, %v3213
        %v3794 = vpack.c.b16 %v3218, %v3214
        %v3795 = vpack.c.b16 %v3219, %v3215
        %v3796 = vpack.c.b16 %v3220, %v3216
        %v3797 = vpack.c.b16 %v3225, %v3221
        %v3798 = vpack.c.b16 %v3226, %v3222
        %v3799 = vpack.c.b16 %v3227, %v3223
        %v3800 = vpack.c.b16 %v3228, %v3224
        %v3801 = vpack.c.b16 %v3233, %v3229
        %v3802 = vpack.c.b16 %v3234, %v3230
        %v3803 = vpack.c.b16 %v3235, %v3231
        %v3804 = vpack.c.b16 %v3236, %v3232
        %v3805 = vpack.c.b16 %v3241, %v3237
        %v3806 = vpack.c.b16 %v3242, %v3238
        %v3807 = vpack.c.b16 %v3243, %v3239
        %v3808 = vpack.c.b16 %v3244, %v3240
        %v3809 = vpack.c.b16 %v3249, %v3245
        %v3810 = vpack.c.b16 %v3250, %v3246
        %v3811 = vpack.c.b16 %v3251, %v3247
        %v3812 = vpack.c.b16 %v3252, %v3248
        %v3813 = vpack.c.b16 %v3257, %v3253
        %v3814 = vpack.c.b16 %v3258, %v3254
        %v3815 = vpack.c.b16 %v3259, %v3255
        %v3816 = vpack.c.b16 %v3260, %v3256
        %v3817 = vpack.c.b16 %v3265, %v3261
        %v3818 = vpack.c.b16 %v3266, %v3262
        %v3819 = vpack.c.b16 %v3267, %v3263
        %v3820 = vpack.c.b16 %v3268, %v3264
        %v3821 = vpack.c.b16 %v3273, %v3269
        %v3822 = vpack.c.b16 %v3274, %v3270
        %v3823 = vpack.c.b16 %v3275, %v3271
        %v3824 = vpack.c.b16 %v3276, %v3272
        %v3825 = vpack.c.b16 %v3281, %v3277
        %v3826 = vpack.c.b16 %v3282, %v3278
        %v3827 = vpack.c.b16 %v3283, %v3279
        %v3828 = vpack.c.b16 %v3284, %v3280
        %v3829 = vpack.c.b16 %v3289, %v3285
        %v3830 = vpack.c.b16 %v3290, %v3286
        %v3831 = vpack.c.b16 %v3291, %v3287
        %v3832 = vpack.c.b16 %v3292, %v3288
        %v3833 = vpack.c.b16 %v3297, %v3293
        %v3834 = vpack.c.b16 %v3298, %v3294
        %v3835 = vpack.c.b16 %v3299, %v3295
        %v3836 = vpack.c.b16 %v3300, %v3296
        %v3837 = vpack.c.b16 %v3305, %v3301
        %v3838 = vpack.c.b16 %v3306, %v3302
        %v3839 = vpack.c.b16 %v3307, %v3303
        %v3840 = vpack.c.b16 %v3308, %v3304
        %v3841 = vpack.c.b16 %v3313, %v3309
        %v3842 = vpack.c.b16 %v3314, %v3310
        %v3843 = vpack.c.b16 %v3315, %v3311
        %v3844 = vpack.c.b16 %v3316, %v3312
        %v3845 = vpack.c.b16 %v3321, %v3317
        %v3846 = vpack.c.b16 %v3322, %v3318
        %v3847 = vpack.c.b16 %v3323, %v3319
        %v3848 = vpack.c.b16 %v3324, %v3320
        %v3849 = vpack.c.b16 %v3329, %v3325
        %v3850 = vpack.c.b16 %v3330, %v3326
        %v3851 = vpack.c.b16 %v3331, %v3327
        %v3852 = vpack.c.b16 %v3332, %v3328
        %v3853 = vpack.c.b16 %v3337, %v3333
        %v3854 = vpack.c.b16 %v3338, %v3334
        %v3855 = vpack.c.b16 %v3339, %v3335
        %v3856 = vpack.c.b16 %v3340, %v3336
        %v3857 = vpack.c.b16 %v3345, %v3341
        %v3858 = vpack.c.b16 %v3346, %v3342
        %v3859 = vpack.c.b16 %v3347, %v3343
        %v3860 = vpack.c.b16 %v3348, %v3344
        %v3861 = vpack.c.b16 %v3353, %v3349
        %v3862 = vpack.c.b16 %v3354, %v3350
        %v3863 = vpack.c.b16 %v3355, %v3351
        %v3864 = vpack.c.b16 %v3356, %v3352
        %v3865 = vpack.c.b16 %v3361, %v3357
        %v3866 = vpack.c.b16 %v3362, %v3358
        %v3867 = vpack.c.b16 %v3363, %v3359
        %v3868 = vpack.c.b16 %v3364, %v3360
        %v3869 = vpack.c.b16 %v3369, %v3365
        %v3870 = vpack.c.b16 %v3370, %v3366
        %v3871 = vpack.c.b16 %v3371, %v3367
        %v3872 = vpack.c.b16 %v3372, %v3368
        %v3873 = vpack.c.b16 %v3377, %v3373
        %v3874 = vpack.c.b16 %v3378, %v3374
        %v3875 = vpack.c.b16 %v3379, %v3375
        %v3876 = vpack.c.b16 %v3380, %v3376
        %v3877 = vpack.c.b16 %v3385, %v3381
        %v3878 = vpack.c.b16 %v3386, %v3382
        %v3879 = vpack.c.b16 %v3387, %v3383
        %v3880 = vpack.c.b16 %v3388, %v3384
        %v3881 = vpack.c.b16 %v3393, %v3389
        %v3882 = vpack.c.b16 %v3394, %v3390
        %v3883 = vpack.c.b16 %v3395, %v3391
        %v3884 = vpack.c.b16 %v3396, %v3392
        %v3885 = vpack.c.b16 %v3401, %v3397
        %v3886 = vpack.c.b16 %v3402, %v3398
        %v3887 = vpack.c.b16 %v3403, %v3399
        %v3888 = vpack.c.b16 %v3404, %v3400
        %v3889 = vpack.c.b16 %v3409, %v3405
        %v3890 = vpack.c.b16 %v3410, %v3406
        %v3891 = vpack.c.b16 %v3411, %v3407
        %v3892 = vpack.c.b16 %v3412, %v3408
        %v3893 = vpack.c.b16 %v3417, %v3413
        %v3894 = vpack.c.b16 %v3418, %v3414
        %v3895 = vpack.c.b16 %v3419, %v3415
        %v3896 = vpack.c.b16 %v3420, %v3416
        %v3897 = vpack.c.b16 %v3425, %v3421
        %v3898 = vpack.c.b16 %v3426, %v3422
        %v3899 = vpack.c.b16 %v3427, %v3423
        %v3900 = vpack.c.b16 %v3428, %v3424
        %v3901 = vpack.c.b16 %v3433, %v3429
        %v3902 = vpack.c.b16 %v3434, %v3430
        %v3903 = vpack.c.b16 %v3435, %v3431
        %v3904 = vpack.c.b16 %v3436, %v3432
        %v3905 = vpack.c.b16 %v3441, %v3437
        %v3906 = vpack.c.b16 %v3442, %v3438
        %v3907 = vpack.c.b16 %v3443, %v3439
        %v3908 = vpack.c.b16 %v3444, %v3440
        %v3909 = vpack.c.b16 %v3449, %v3445
        %v3910 = vpack.c.b16 %v3450, %v3446
        %v3911 = vpack.c.b16 %v3451, %v3447
        %v3912 = vpack.c.b16 %v3452, %v3448
        %v3913 = vpack.c.b16 %v3457, %v3453
        %v3914 = vpack.c.b16 %v3458, %v3454
        %v3915 = vpack.c.b16 %v3459, %v3455
        %v3916 = vpack.c.b16 %v3460, %v3456
        %v3917 = vpack.c.b16 %v3465, %v3461
        %v3918 = vpack.c.b16 %v3466, %v3462
        %v3919 = vpack.c.b16 %v3467, %v3463
        %v3920 = vpack.c.b16 %v3468, %v3464
        %v3921 = vpack.c.b16 %v3473, %v3469
        %v3922 = vpack.c.b16 %v3474, %v3470
        %v3923 = vpack.c.b16 %v3475, %v3471
        %v3924 = vpack.c.b16 %v3476, %v3472
        %v3925 = vpack.c.b16 %v3481, %v3477
        %v3926 = vpack.c.b16 %v3482, %v3478
        %v3927 = vpack.c.b16 %v3483, %v3479
        %v3928 = vpack.c.b16 %v3484, %v3480
        %v3929 = vpack.c.b16 %v3489, %v3485
        %v3930 = vpack.c.b16 %v3490, %v3486
        %v3931 = vpack.c.b16 %v3491, %v3487
        %v3932 = vpack.c.b16 %v3492, %v3488
        %v3933 = vpack.c.b16 %v3497, %v3493
        %v3934 = vpack.c.b16 %v3498, %v3494
        %v3935 = vpack.c.b16 %v3499, %v3495
        %v3936 = vpack.c.b16 %v3500, %v3496
        %v3937 = vpack.c.b16 %v3505, %v3501
        %v3938 = vpack.c.b16 %v3506, %v3502
        %v3939 = vpack.c.b16 %v3507, %v3503
        %v3940 = vpack.c.b16 %v3508, %v3504
        %v3941 = vpack.c.b16 %v3513, %v3509
        %v3942 = vpack.c.b16 %v3514, %v3510
        %v3943 = vpack.c.b16 %v3515, %v3511
        %v3944 = vpack.c.b16 %v3516, %v3512
        %v3945 = vpack.c.b16 %v3521, %v3517
        %v3946 = vpack.c.b16 %v3522, %v3518
        %v3947 = vpack.c.b16 %v3523, %v3519
        %v3948 = vpack.c.b16 %v3524, %v3520
        %v3949 = vpack.c.b16 %v3529, %v3525
        %v3950 = vpack.c.b16 %v3530, %v3526
        %v3951 = vpack.c.b16 %v3531, %v3527
        %v3952 = vpack.c.b16 %v3532, %v3528
        %v3953 = vpack.c.b16 %v3537, %v3533
        %v3954 = vpack.c.b16 %v3538, %v3534
        %v3955 = vpack.c.b16 %v3539, %v3535
        %v3956 = vpack.c.b16 %v3540, %v3536
        %v3957 = vpack.c.b16 %v3545, %v3541
        %v3958 = vpack.c.b16 %v3546, %v3542
        %v3959 = vpack.c.b16 %v3547, %v3543
        %v3960 = vpack.c.b16 %v3548, %v3544
        %v3961 = vpack.c.b16 %v3553, %v3549
        %v3962 = vpack.c.b16 %v3554, %v3550
        %v3963 = vpack.c.b16 %v3555, %v3551
        %v3964 = vpack.c.b16 %v3556, %v3552
        %v3965 = vpack.c.b16 %v3561, %v3557
        %v3966 = vpack.c.b16 %v3562, %v3558
        %v3967 = vpack.c.b16 %v3563, %v3559
        %v3968 = vpack.c.b16 %v3564, %v3560
        %v3969 = vpack.c.b16 %v3569, %v3565
        %v3970 = vpack.c.b16 %v3570, %v3566
        %v3971 = vpack.c.b16 %v3571, %v3567
        %v3972 = vpack.c.b16 %v3572, %v3568
        %v3973 = vpack.c.b16 %v3577, %v3573
        %v3974 = vpack.c.b16 %v3578, %v3574
        %v3975 = vpack.c.b16 %v3579, %v3575
        %v3976 = vpack.c.b16 %v3580, %v3576
        %v3977 = vpack.c.b16 %v3585, %v3581
        %v3978 = vpack.c.b16 %v3586, %v3582
        %v3979 = vpack.c.b16 %v3587, %v3583
        %v3980 = vpack.c.b16 %v3588, %v3584
        %v3981 = vpack.c.b16 %v3593, %v3589
        %v3982 = vpack.c.b16 %v3594, %v3590
        %v3983 = vpack.c.b16 %v3595, %v3591
        %v3984 = vpack.c.b16 %v3596, %v3592
        %v3985 = vpack.c.b16 %v3601, %v3597
        %v3986 = vpack.c.b16 %v3602, %v3598
        %v3987 = vpack.c.b16 %v3603, %v3599
        %v3988 = vpack.c.b16 %v3604, %v3600
        %4373 = vmatprep.subr.bf16.mxu0 %v3606
        %4374 = vmatpush1.bf16.msra.mxu0 %v3605
        %4375 = vmatprep.subr.bf16.mxu0 %v3610
        %4376 = vmatpush1.bf16.msra.mxu0 %v3609
        %4377 = vmatprep.subr.bf16.mxu0 %v3614
        %4378 = vmatpush1.bf16.msra.mxu0 %v3613
        %4379 = vmatprep.subr.bf16.mxu0 %v3618
        %4380 = vmatpush1.bf16.msra.mxu0 %v3617
        %4381 = vmatprep.subr.bf16.mxu0 %v3622
        %4382 = vmatpush1.bf16.msra.mxu0 %v3621
        %4383 = vmatprep.subr.bf16.mxu0 %v3626
        %4384 = vmatpush1.bf16.msra.mxu0 %v3625
        %4385 = vmatprep.subr.bf16.mxu0 %v3630
        %4386 = vmatpush1.bf16.msra.mxu0 %v3629
        %4387 = vmatprep.subr.bf16.mxu0 %v3634
        %4388 = vmatpush1.bf16.msra.mxu0 %v3633
        %4389 = vmatprep.subr.bf16.mxu0 %v3638
        %4390 = vmatpush1.bf16.msra.mxu0 %v3637
        %4391 = vmatprep.subr.bf16.mxu0 %v3642
        %4392 = vmatpush1.bf16.msra.mxu0 %v3641
        %4393 = vmatprep.subr.bf16.mxu0 %v3646
        %4394 = vmatpush1.bf16.msra.mxu0 %v3645
        %4395 = vmatprep.subr.bf16.mxu0 %v3650
        %4396 = vmatpush1.bf16.msra.mxu0 %v3649
        %4397 = vmatprep.subr.bf16.mxu0 %v3654
        %4398 = vmatpush1.bf16.msra.mxu0 %v3653
        %4399 = vmatprep.subr.bf16.mxu0 %v3658
        %4400 = vmatpush1.bf16.msra.mxu0 %v3657
        %4401 = vmatprep.subr.bf16.mxu0 %v3662
        %4402 = vmatpush1.bf16.msra.mxu0 %v3661
        %4403 = vmatprep.subr.bf16.mxu0 %v3666
        %4404 = vmatpush1.bf16.msra.mxu0 %v3665
        %4405 = vmatprep.mubr.bf16.mxu0 %v1974
        %4406 = vmatmul.mubr.bf16.gmra.mrb[0].mxu0 %v1973
        %v4407 = vpop.f32.mrb[0].mxu0
        %v4408 = vadd.f32 0.0, %v4407
        %v4409 = vpop.f32.mrb[0].mxu0
        %v4410 = vadd.f32 0.0, %v4409
        %v4411 = vpop.f32.mrb[0].mxu0
        %v4412 = vadd.f32 0.0, %v4411
        %v4413 = vpop.f32.mrb[0].mxu0
        %v4414 = vadd.f32 0.0, %v4413
        %4415 = vmatprep.mubr.bf16.mxu0 %v1986
        %4416 = vmatmul.mubr.bf16.gmra.mrb[0].mxu0 %v1985
        %v4417 = vpop.f32.mrb[0].mxu0
        %v4418 = vadd.f32 0.0, %v4417
        %v4419 = vpop.f32.mrb[0].mxu0
        %v4420 = vadd.f32 0.0, %v4419
        %v4421 = vpop.f32.mrb[0].mxu0
        %v4422 = vadd.f32 0.0, %v4421
        %v4423 = vpop.f32.mrb[0].mxu0
        %v4424 = vadd.f32 0.0, %v4423
        %4425 = vmatprep.mubr.bf16.mxu0 %v1998
        %4426 = vmatmul.mubr.bf16.gmra.mrb[0].mxu0 %v1997
        %v4427 = vpop.f32.mrb[0].mxu0
        %v4428 = vadd.f32 0.0, %v4427
        %v4429 = vpop.f32.mrb[0].mxu0
        %v4430 = vadd.f32 0.0, %v4429
        %v4431 = vpop.f32.mrb[0].mxu0
        %v4432 = vadd.f32 0.0, %v4431
        %v4433 = vpop.f32.mrb[0].mxu0
        %v4434 = vadd.f32 0.0, %v4433
        %4435 = vmatprep.mubr.bf16.mxu0 %v2010
        %4436 = vmatmul.mubr.bf16.gmra.mrb[0].mxu0 %v2009
        %v4437 = vpop.f32.mrb[0].mxu0
        %v4438 = vadd.f32 0.0, %v4437
        %v4439 = vpop.f32.mrb[0].mxu0
        %v4440 = vadd.f32 0.0, %v4439
        %v4441 = vpop.f32.mrb[0].mxu0
        %v4442 = vadd.f32 0.0, %v4441
        %v4443 = vpop.f32.mrb[0].mxu0
        %v4444 = vadd.f32 0.0, %v4443
        %4445 = vmatprep.mubr.bf16.mxu0 %v2022
        %4446 = vmatmul.mubr.bf16.gmra.mrb[0].mxu0 %v2021
        %v4447 = vpop.f32.mrb[0].mxu0
        %v4448 = vadd.f32 0.0, %v4447
        %v4449 = vpop.f32.mrb[0].mxu0
        %v4450 = vadd.f32 0.0, %v4449
        %v4451 = vpop.f32.mrb[0].mxu0
        %v4452 = vadd.f32 0.0, %v4451
        %v4453 = vpop.f32.mrb[0].mxu0
        %v4454 = vadd.f32 0.0, %v4453
        %4455 = vmatprep.mubr.bf16.mxu0 %v2034
        %4456 = vmatmul.mubr.bf16.gmra.mrb[0].mxu0 %v2033
        %v4457 = vpop.f32.mrb[0].mxu0
        %v4458 = vadd.f32 0.0, %v4457
        %v4459 = vpop.f32.mrb[0].mxu0
        %v4460 = vadd.f32 0.0, %v4459
        %v4461 = vpop.f32.mrb[0].mxu0
        %v4462 = vadd.f32 0.0, %v4461
        %v4463 = vpop.f32.mrb[0].mxu0
        %v4464 = vadd.f32 0.0, %v4463
        %4465 = vmatprep.mubr.bf16.mxu0 %v2046
        %4466 = vmatmul.mubr.bf16.gmra.mrb[0].mxu0 %v2045
        %v4467 = vpop.f32.mrb[0].mxu0
        %v4468 = vadd.f32 0.0, %v4467
        %v4469 = vpop.f32.mrb[0].mxu0
        %v4470 = vadd.f32 0.0, %v4469
        %v4471 = vpop.f32.mrb[0].mxu0
        %v4472 = vadd.f32 0.0, %v4471
        %v4473 = vpop.f32.mrb[0].mxu0
        %v4474 = vadd.f32 0.0, %v4473
        %4475 = vmatprep.mubr.bf16.mxu0 %v2058
        %4476 = vmatmul.mubr.bf16.gmra.mrb[0].mxu0 %v2057
        %v4477 = vpop.f32.mrb[0].mxu0
        %v4478 = vadd.f32 0.0, %v4477
        %v4479 = vpop.f32.mrb[0].mxu0
        %v4480 = vadd.f32 0.0, %v4479
        %v4481 = vpop.f32.mrb[0].mxu0
        %v4482 = vadd.f32 0.0, %v4481
        %v4483 = vpop.f32.mrb[0].mxu0
        %v4484 = vadd.f32 0.0, %v4483
        %4485 = vdwg.mxu0
        %4486 = vmatprep.subr.bf16.mxu0 %v3670
        %4487 = vmatpush1.bf16.msra.mxu0 %v3669
        %4488 = vmatprep.subr.bf16.mxu0 %v3674
        %4489 = vmatpush1.bf16.msra.mxu0 %v3673
        %4490 = vmatprep.subr.bf16.mxu0 %v3678
        %4491 = vmatpush1.bf16.msra.mxu0 %v3677
        %4492 = vmatprep.subr.bf16.mxu0 %v3682
        %4493 = vmatpush1.bf16.msra.mxu0 %v3681
        %4494 = vmatprep.subr.bf16.mxu0 %v3686
        %4495 = vmatpush1.bf16.msra.mxu0 %v3685
        %4496 = vmatprep.subr.bf16.mxu0 %v3690
        %4497 = vmatpush1.bf16.msra.mxu0 %v3689
        %4498 = vmatprep.subr.bf16.mxu0 %v3694
        %4499 = vmatpush1.bf16.msra.mxu0 %v3693
        %4500 = vmatprep.subr.bf16.mxu0 %v3698
        %4501 = vmatpush1.bf16.msra.mxu0 %v3697
        %4502 = vmatprep.subr.bf16.mxu0 %v3702
        %4503 = vmatpush1.bf16.msra.mxu0 %v3701
        %4504 = vmatprep.subr.bf16.mxu0 %v3706
        %4505 = vmatpush1.bf16.msra.mxu0 %v3705
        %4506 = vmatprep.subr.bf16.mxu0 %v3710
        %4507 = vmatpush1.bf16.msra.mxu0 %v3709
        %4508 = vmatprep.subr.bf16.mxu0 %v3714
        %4509 = vmatpush1.bf16.msra.mxu0 %v3713
        %4510 = vmatprep.subr.bf16.mxu0 %v3718
        %4511 = vmatpush1.bf16.msra.mxu0 %v3717
        %4512 = vmatprep.subr.bf16.mxu0 %v3722
        %4513 = vmatpush1.bf16.msra.mxu0 %v3721
        %4514 = vmatprep.subr.bf16.mxu0 %v3726
        %4515 = vmatpush1.bf16.msra.mxu0 %v3725
        %4516 = vmatprep.subr.bf16.mxu0 %v3730
        %4517 = vmatpush1.bf16.msra.mxu0 %v3729
        %4518 = vmatprep.mubr.bf16.mxu0 %v1976
        %4519 = vmatmul.mubr.bf16.gmra.mrb[0].mxu0 %v1975
        %v4520 = vpop.f32.mrb[0].mxu0
        %v4521 = vadd.f32 %v4408, %v4520
        %v4522 = vpop.f32.mrb[0].mxu0
        %v4523 = vadd.f32 %v4410, %v4522
        %v4524 = vpop.f32.mrb[0].mxu0
        %v4525 = vadd.f32 %v4412, %v4524
        %v4526 = vpop.f32.mrb[0].mxu0
        %v4527 = vadd.f32 %v4414, %v4526
        %4528 = vmatprep.mubr.bf16.mxu0 %v1988
        %4529 = vmatmul.mubr.bf16.gmra.mrb[0].mxu0 %v1987
        %v4530 = vpop.f32.mrb[0].mxu0
        %v4531 = vadd.f32 %v4418, %v4530
        %v4532 = vpop.f32.mrb[0].mxu0
        %v4533 = vadd.f32 %v4420, %v4532
        %v4534 = vpop.f32.mrb[0].mxu0
        %v4535 = vadd.f32 %v4422, %v4534
        %v4536 = vpop.f32.mrb[0].mxu0
        %v4537 = vadd.f32 %v4424, %v4536
        %4538 = vmatprep.mubr.bf16.mxu0 %v2000
        %4539 = vmatmul.mubr.bf16.gmra.mrb[0].mxu0 %v1999
        %v4540 = vpop.f32.mrb[0].mxu0
        %v4541 = vadd.f32 %v4428, %v4540
        %v4542 = vpop.f32.mrb[0].mxu0
        %v4543 = vadd.f32 %v4430, %v4542
        %v4544 = vpop.f32.mrb[0].mxu0
        %v4545 = vadd.f32 %v4432, %v4544
        %v4546 = vpop.f32.mrb[0].mxu0
        %v4547 = vadd.f32 %v4434, %v4546
        %4548 = vmatprep.mubr.bf16.mxu0 %v2012
        %4549 = vmatmul.mubr.bf16.gmra.mrb[0].mxu0 %v2011
        %v4550 = vpop.f32.mrb[0].mxu0
        %v4551 = vadd.f32 %v4438, %v4550
        %v4552 = vpop.f32.mrb[0].mxu0
        %v4553 = vadd.f32 %v4440, %v4552
        %v4554 = vpop.f32.mrb[0].mxu0
        %v4555 = vadd.f32 %v4442, %v4554
        %v4556 = vpop.f32.mrb[0].mxu0
        %v4557 = vadd.f32 %v4444, %v4556
        %4558 = vmatprep.mubr.bf16.mxu0 %v2024
        %4559 = vmatmul.mubr.bf16.gmra.mrb[0].mxu0 %v2023
        %v4560 = vpop.f32.mrb[0].mxu0
        %v4561 = vadd.f32 %v4448, %v4560
        %v4562 = vpop.f32.mrb[0].mxu0
        %v4563 = vadd.f32 %v4450, %v4562
        %v4564 = vpop.f32.mrb[0].mxu0
        %v4565 = vadd.f32 %v4452, %v4564
        %v4566 = vpop.f32.mrb[0].mxu0
        %v4567 = vadd.f32 %v4454, %v4566
        %4568 = vmatprep.mubr.bf16.mxu0 %v2036
        %4569 = vmatmul.mubr.bf16.gmra.mrb[0].mxu0 %v2035
        %v4570 = vpop.f32.mrb[0].mxu0
        %v4571 = vadd.f32 %v4458, %v4570
        %v4572 = vpop.f32.mrb[0].mxu0
        %v4573 = vadd.f32 %v4460, %v4572
        %v4574 = vpop.f32.mrb[0].mxu0
        %v4575 = vadd.f32 %v4462, %v4574
        %v4576 = vpop.f32.mrb[0].mxu0
        %v4577 = vadd.f32 %v4464, %v4576
        %4578 = vmatprep.mubr.bf16.mxu0 %v2048
        %4579 = vmatmul.mubr.bf16.gmra.mrb[0].mxu0 %v2047
        %v4580 = vpop.f32.mrb[0].mxu0
        %v4581 = vadd.f32 %v4468, %v4580
        %v4582 = vpop.f32.mrb[0].mxu0
        %v4583 = vadd.f32 %v4470, %v4582
        %v4584 = vpop.f32.mrb[0].mxu0
        %v4585 = vadd.f32 %v4472, %v4584
        %v4586 = vpop.f32.mrb[0].mxu0
        %v4587 = vadd.f32 %v4474, %v4586
        %4588 = vmatprep.mubr.bf16.mxu0 %v2060
        %4589 = vmatmul.mubr.bf16.gmra.mrb[0].mxu0 %v2059
        %v4590 = vpop.f32.mrb[0].mxu0
        %v4591 = vadd.f32 %v4478, %v4590
        %v4592 = vpop.f32.mrb[0].mxu0
        %v4593 = vadd.f32 %v4480, %v4592
        %v4594 = vpop.f32.mrb[0].mxu0
        %v4595 = vadd.f32 %v4482, %v4594
        %v4596 = vpop.f32.mrb[0].mxu0
        %v4597 = vadd.f32 %v4484, %v4596
        %4598 = vdwg.mxu0
        %4599 = vmatprep.subr.bf16.mxu0 %v3734
        %4600 = vmatpush1.bf16.msra.mxu0 %v3733
        %4601 = vmatprep.subr.bf16.mxu0 %v3738
        %4602 = vmatpush1.bf16.msra.mxu0 %v3737
        %4603 = vmatprep.subr.bf16.mxu0 %v3742
        %4604 = vmatpush1.bf16.msra.mxu0 %v3741
        %4605 = vmatprep.subr.bf16.mxu0 %v3746
        %4606 = vmatpush1.bf16.msra.mxu0 %v3745
        %4607 = vmatprep.subr.bf16.mxu0 %v3750
        %4608 = vmatpush1.bf16.msra.mxu0 %v3749
        %4609 = vmatprep.subr.bf16.mxu0 %v3754
        %4610 = vmatpush1.bf16.msra.mxu0 %v3753
        %4611 = vmatprep.subr.bf16.mxu0 %v3758
        %4612 = vmatpush1.bf16.msra.mxu0 %v3757
        %4613 = vmatprep.subr.bf16.mxu0 %v3762
        %4614 = vmatpush1.bf16.msra.mxu0 %v3761
        %4615 = vmatprep.subr.bf16.mxu0 %v3766
        %4616 = vmatpush1.bf16.msra.mxu0 %v3765
        %4617 = vmatprep.subr.bf16.mxu0 %v3770
        %4618 = vmatpush1.bf16.msra.mxu0 %v3769
        %4619 = vmatprep.subr.bf16.mxu0 %v3774
        %4620 = vmatpush1.bf16.msra.mxu0 %v3773
        %4621 = vmatprep.subr.bf16.mxu0 %v3778
        %4622 = vmatpush1.bf16.msra.mxu0 %v3777
        %4623 = vmatprep.subr.bf16.mxu0 %v3782
        %4624 = vmatpush1.bf16.msra.mxu0 %v3781
        %4625 = vmatprep.subr.bf16.mxu0 %v3786
        %4626 = vmatpush1.bf16.msra.mxu0 %v3785
        %4627 = vmatprep.subr.bf16.mxu0 %v3790
        %4628 = vmatpush1.bf16.msra.mxu0 %v3789
        %4629 = vmatprep.subr.bf16.mxu0 %v3794
        %4630 = vmatpush1.bf16.msra.mxu0 %v3793
        %4631 = vmatprep.mubr.bf16.mxu0 %v1978
        %4632 = vmatmul.mubr.bf16.gmra.mrb[0].mxu0 %v1977
        %v4633 = vpop.f32.mrb[0].mxu0
        %v4634 = vadd.f32 %v4521, %v4633
        %v4635 = vpop.f32.mrb[0].mxu0
        %v4636 = vadd.f32 %v4523, %v4635
        %v4637 = vpop.f32.mrb[0].mxu0
        %v4638 = vadd.f32 %v4525, %v4637
        %v4639 = vpop.f32.mrb[0].mxu0
        %v4640 = vadd.f32 %v4527, %v4639
        %4641 = vmatprep.mubr.bf16.mxu0 %v1990
        %4642 = vmatmul.mubr.bf16.gmra.mrb[0].mxu0 %v1989
        %v4643 = vpop.f32.mrb[0].mxu0
        %v4644 = vadd.f32 %v4531, %v4643
        %v4645 = vpop.f32.mrb[0].mxu0
        %v4646 = vadd.f32 %v4533, %v4645
        %v4647 = vpop.f32.mrb[0].mxu0
        %v4648 = vadd.f32 %v4535, %v4647
        %v4649 = vpop.f32.mrb[0].mxu0
        %v4650 = vadd.f32 %v4537, %v4649
        %4651 = vmatprep.mubr.bf16.mxu0 %v2002
        %4652 = vmatmul.mubr.bf16.gmra.mrb[0].mxu0 %v2001
        %v4653 = vpop.f32.mrb[0].mxu0
        %v4654 = vadd.f32 %v4541, %v4653
        %v4655 = vpop.f32.mrb[0].mxu0
        %v4656 = vadd.f32 %v4543, %v4655
        %v4657 = vpop.f32.mrb[0].mxu0
        %v4658 = vadd.f32 %v4545, %v4657
        %v4659 = vpop.f32.mrb[0].mxu0
        %v4660 = vadd.f32 %v4547, %v4659
        %4661 = vmatprep.mubr.bf16.mxu0 %v2014
        %4662 = vmatmul.mubr.bf16.gmra.mrb[0].mxu0 %v2013
        %v4663 = vpop.f32.mrb[0].mxu0
        %v4664 = vadd.f32 %v4551, %v4663
        %v4665 = vpop.f32.mrb[0].mxu0
        %v4666 = vadd.f32 %v4553, %v4665
        %v4667 = vpop.f32.mrb[0].mxu0
        %v4668 = vadd.f32 %v4555, %v4667
        %v4669 = vpop.f32.mrb[0].mxu0
        %v4670 = vadd.f32 %v4557, %v4669
        %4671 = vmatprep.mubr.bf16.mxu0 %v2026
        %4672 = vmatmul.mubr.bf16.gmra.mrb[0].mxu0 %v2025
        %v4673 = vpop.f32.mrb[0].mxu0
        %v4674 = vadd.f32 %v4561, %v4673
        %v4675 = vpop.f32.mrb[0].mxu0
        %v4676 = vadd.f32 %v4563, %v4675
        %v4677 = vpop.f32.mrb[0].mxu0
        %v4678 = vadd.f32 %v4565, %v4677
        %v4679 = vpop.f32.mrb[0].mxu0
        %v4680 = vadd.f32 %v4567, %v4679
        %4681 = vmatprep.mubr.bf16.mxu0 %v2038
        %4682 = vmatmul.mubr.bf16.gmra.mrb[0].mxu0 %v2037
        %v4683 = vpop.f32.mrb[0].mxu0
        %v4684 = vadd.f32 %v4571, %v4683
        %v4685 = vpop.f32.mrb[0].mxu0
        %v4686 = vadd.f32 %v4573, %v4685
        %v4687 = vpop.f32.mrb[0].mxu0
        %v4688 = vadd.f32 %v4575, %v4687
        %v4689 = vpop.f32.mrb[0].mxu0
        %v4690 = vadd.f32 %v4577, %v4689
        %4691 = vmatprep.mubr.bf16.mxu0 %v2050
        %4692 = vmatmul.mubr.bf16.gmra.mrb[0].mxu0 %v2049
        %v4693 = vpop.f32.mrb[0].mxu0
        %v4694 = vadd.f32 %v4581, %v4693
        %v4695 = vpop.f32.mrb[0].mxu0
        %v4696 = vadd.f32 %v4583, %v4695
        %v4697 = vpop.f32.mrb[0].mxu0
        %v4698 = vadd.f32 %v4585, %v4697
        %v4699 = vpop.f32.mrb[0].mxu0
        %v4700 = vadd.f32 %v4587, %v4699
        %4701 = vmatprep.mubr.bf16.mxu0 %v2062
        %4702 = vmatmul.mubr.bf16.gmra.mrb[0].mxu0 %v2061
        %v4703 = vpop.f32.mrb[0].mxu0
        %v4704 = vadd.f32 %v4591, %v4703
        %v4705 = vpop.f32.mrb[0].mxu0
        %v4706 = vadd.f32 %v4593, %v4705
        %v4707 = vpop.f32.mrb[0].mxu0
        %v4708 = vadd.f32 %v4595, %v4707
        %v4709 = vpop.f32.mrb[0].mxu0
        %v4710 = vadd.f32 %v4597, %v4709
        %4711 = vdwg.mxu0
        %4712 = vmatprep.subr.bf16.mxu0 %v3798
        %4713 = vmatpush1.bf16.msra.mxu0 %v3797
        %4714 = vmatprep.subr.bf16.mxu0 %v3802
        %4715 = vmatpush1.bf16.msra.mxu0 %v3801
        %4716 = vmatprep.subr.bf16.mxu0 %v3806
        %4717 = vmatpush1.bf16.msra.mxu0 %v3805
        %4718 = vmatprep.subr.bf16.mxu0 %v3810
        %4719 = vmatpush1.bf16.msra.mxu0 %v3809
        %4720 = vmatprep.subr.bf16.mxu0 %v3814
        %4721 = vmatpush1.bf16.msra.mxu0 %v3813
        %4722 = vmatprep.subr.bf16.mxu0 %v3818
        %4723 = vmatpush1.bf16.msra.mxu0 %v3817
        %4724 = vmatprep.subr.bf16.mxu0 %v3822
        %4725 = vmatpush1.bf16.msra.mxu0 %v3821
        %4726 = vmatprep.subr.bf16.mxu0 %v3826
        %4727 = vmatpush1.bf16.msra.mxu0 %v3825
        %4728 = vmatprep.subr.bf16.mxu0 %v3830
        %4729 = vmatpush1.bf16.msra.mxu0 %v3829
        %4730 = vmatprep.subr.bf16.mxu0 %v3834
        %4731 = vmatpush1.bf16.msra.mxu0 %v3833
        %4732 = vmatprep.subr.bf16.mxu0 %v3838
        %4733 = vmatpush1.bf16.msra.mxu0 %v3837
        %4734 = vmatprep.subr.bf16.mxu0 %v3842
        %4735 = vmatpush1.bf16.msra.mxu0 %v3841
        %4736 = vmatprep.subr.bf16.mxu0 %v3846
        %4737 = vmatpush1.bf16.msra.mxu0 %v3845
        %4738 = vmatprep.subr.bf16.mxu0 %v3850
        %4739 = vmatpush1.bf16.msra.mxu0 %v3849
        %4740 = vmatprep.subr.bf16.mxu0 %v3854
        %4741 = vmatpush1.bf16.msra.mxu0 %v3853
        %4742 = vmatprep.subr.bf16.mxu0 %v3858
        %4743 = vmatpush1.bf16.msra.mxu0 %v3857
        %4744 = vmatprep.mubr.bf16.mxu0 %v1980
        %4745 = vmatmul.mubr.bf16.gmra.mrb[0].mxu0 %v1979
        %v4746 = vpop.f32.mrb[0].mxu0
        %v4747 = vadd.f32 %v4634, %v4746
        %v4748 = vpop.f32.mrb[0].mxu0
        %v4749 = vadd.f32 %v4636, %v4748
        %v4750 = vpop.f32.mrb[0].mxu0
        %v4751 = vadd.f32 %v4638, %v4750
        %v4752 = vpop.f32.mrb[0].mxu0
        %v4753 = vadd.f32 %v4640, %v4752
        %4754 = vmatprep.mubr.bf16.mxu0 %v1992
        %4755 = vmatmul.mubr.bf16.gmra.mrb[0].mxu0 %v1991
        %v4756 = vpop.f32.mrb[0].mxu0
        %v4757 = vadd.f32 %v4644, %v4756
        %v4758 = vpop.f32.mrb[0].mxu0
        %v4759 = vadd.f32 %v4646, %v4758
        %v4760 = vpop.f32.mrb[0].mxu0
        %v4761 = vadd.f32 %v4648, %v4760
        %v4762 = vpop.f32.mrb[0].mxu0
        %v4763 = vadd.f32 %v4650, %v4762
        %4764 = vmatprep.mubr.bf16.mxu0 %v2004
        %4765 = vmatmul.mubr.bf16.gmra.mrb[0].mxu0 %v2003
        %v4766 = vpop.f32.mrb[0].mxu0
        %v4767 = vadd.f32 %v4654, %v4766
        %v4768 = vpop.f32.mrb[0].mxu0
        %v4769 = vadd.f32 %v4656, %v4768
        %v4770 = vpop.f32.mrb[0].mxu0
        %v4771 = vadd.f32 %v4658, %v4770
        %v4772 = vpop.f32.mrb[0].mxu0
        %v4773 = vadd.f32 %v4660, %v4772
        %4774 = vmatprep.mubr.bf16.mxu0 %v2016
        %4775 = vmatmul.mubr.bf16.gmra.mrb[0].mxu0 %v2015
        %v4776 = vpop.f32.mrb[0].mxu0
        %v4777 = vadd.f32 %v4664, %v4776
        %v4778 = vpop.f32.mrb[0].mxu0
        %v4779 = vadd.f32 %v4666, %v4778
        %v4780 = vpop.f32.mrb[0].mxu0
        %v4781 = vadd.f32 %v4668, %v4780
        %v4782 = vpop.f32.mrb[0].mxu0
        %v4783 = vadd.f32 %v4670, %v4782
        %4784 = vmatprep.mubr.bf16.mxu0 %v2028
        %4785 = vmatmul.mubr.bf16.gmra.mrb[0].mxu0 %v2027
        %v4786 = vpop.f32.mrb[0].mxu0
        %v4787 = vadd.f32 %v4674, %v4786
        %v4788 = vpop.f32.mrb[0].mxu0
        %v4789 = vadd.f32 %v4676, %v4788
        %v4790 = vpop.f32.mrb[0].mxu0
        %v4791 = vadd.f32 %v4678, %v4790
        %v4792 = vpop.f32.mrb[0].mxu0
        %v4793 = vadd.f32 %v4680, %v4792
        %4794 = vmatprep.mubr.bf16.mxu0 %v2040
        %4795 = vmatmul.mubr.bf16.gmra.mrb[0].mxu0 %v2039
        %v4796 = vpop.f32.mrb[0].mxu0
        %v4797 = vadd.f32 %v4684, %v4796
        %v4798 = vpop.f32.mrb[0].mxu0
        %v4799 = vadd.f32 %v4686, %v4798
        %v4800 = vpop.f32.mrb[0].mxu0
        %v4801 = vadd.f32 %v4688, %v4800
        %v4802 = vpop.f32.mrb[0].mxu0
        %v4803 = vadd.f32 %v4690, %v4802
        %4804 = vmatprep.mubr.bf16.mxu0 %v2052
        %4805 = vmatmul.mubr.bf16.gmra.mrb[0].mxu0 %v2051
        %v4806 = vpop.f32.mrb[0].mxu0
        %v4807 = vadd.f32 %v4694, %v4806
        %v4808 = vpop.f32.mrb[0].mxu0
        %v4809 = vadd.f32 %v4696, %v4808
        %v4810 = vpop.f32.mrb[0].mxu0
        %v4811 = vadd.f32 %v4698, %v4810
        %v4812 = vpop.f32.mrb[0].mxu0
        %v4813 = vadd.f32 %v4700, %v4812
        %4814 = vmatprep.mubr.bf16.mxu0 %v2064
        %4815 = vmatmul.mubr.bf16.gmra.mrb[0].mxu0 %v2063
        %v4816 = vpop.f32.mrb[0].mxu0
        %v4817 = vadd.f32 %v4704, %v4816
        %v4818 = vpop.f32.mrb[0].mxu0
        %v4819 = vadd.f32 %v4706, %v4818
        %v4820 = vpop.f32.mrb[0].mxu0
        %v4821 = vadd.f32 %v4708, %v4820
        %v4822 = vpop.f32.mrb[0].mxu0
        %v4823 = vadd.f32 %v4710, %v4822
        %4824 = vdwg.mxu0
        %4825 = vmatprep.subr.bf16.mxu0 %v3862
        %4826 = vmatpush1.bf16.msra.mxu0 %v3861
        %4827 = vmatprep.subr.bf16.mxu0 %v3866
        %4828 = vmatpush1.bf16.msra.mxu0 %v3865
        %4829 = vmatprep.subr.bf16.mxu0 %v3870
        %4830 = vmatpush1.bf16.msra.mxu0 %v3869
        %4831 = vmatprep.subr.bf16.mxu0 %v3874
        %4832 = vmatpush1.bf16.msra.mxu0 %v3873
        %4833 = vmatprep.subr.bf16.mxu0 %v3878
        %4834 = vmatpush1.bf16.msra.mxu0 %v3877
        %4835 = vmatprep.subr.bf16.mxu0 %v3882
        %4836 = vmatpush1.bf16.msra.mxu0 %v3881
        %4837 = vmatprep.subr.bf16.mxu0 %v3886
        %4838 = vmatpush1.bf16.msra.mxu0 %v3885
        %4839 = vmatprep.subr.bf16.mxu0 %v3890
        %4840 = vmatpush1.bf16.msra.mxu0 %v3889
        %4841 = vmatprep.subr.bf16.mxu0 %v3894
        %4842 = vmatpush1.bf16.msra.mxu0 %v3893
        %4843 = vmatprep.subr.bf16.mxu0 %v3898
        %4844 = vmatpush1.bf16.msra.mxu0 %v3897
        %4845 = vmatprep.subr.bf16.mxu0 %v3902
        %4846 = vmatpush1.bf16.msra.mxu0 %v3901
        %4847 = vmatprep.subr.bf16.mxu0 %v3906
        %4848 = vmatpush1.bf16.msra.mxu0 %v3905
        %4849 = vmatprep.subr.bf16.mxu0 %v3910
        %4850 = vmatpush1.bf16.msra.mxu0 %v3909
        %4851 = vmatprep.subr.bf16.mxu0 %v3914
        %4852 = vmatpush1.bf16.msra.mxu0 %v3913
        %4853 = vmatprep.subr.bf16.mxu0 %v3918
        %4854 = vmatpush1.bf16.msra.mxu0 %v3917
        %4855 = vmatprep.subr.bf16.mxu0 %v3922
        %4856 = vmatpush1.bf16.msra.mxu0 %v3921
        %4857 = vmatprep.mubr.bf16.mxu0 %v1982
        %4858 = vmatmul.mubr.bf16.gmra.mrb[0].mxu0 %v1981
        %v4859 = vpop.f32.mrb[0].mxu0
        %v4860 = vadd.f32 %v4747, %v4859
        %v4861 = vpop.f32.mrb[0].mxu0
        %v4862 = vadd.f32 %v4749, %v4861
        %v4863 = vpop.f32.mrb[0].mxu0
        %v4864 = vadd.f32 %v4751, %v4863
        %v4865 = vpop.f32.mrb[0].mxu0
        %v4866 = vadd.f32 %v4753, %v4865
        %4867 = vmatprep.mubr.bf16.mxu0 %v1994
        %4868 = vmatmul.mubr.bf16.gmra.mrb[0].mxu0 %v1993
        %v4869 = vpop.f32.mrb[0].mxu0
        %v4870 = vadd.f32 %v4757, %v4869
        %v4871 = vpop.f32.mrb[0].mxu0
        %v4872 = vadd.f32 %v4759, %v4871
        %v4873 = vpop.f32.mrb[0].mxu0
        %v4874 = vadd.f32 %v4761, %v4873
        %v4875 = vpop.f32.mrb[0].mxu0
        %v4876 = vadd.f32 %v4763, %v4875
        %4877 = vmatprep.mubr.bf16.mxu0 %v2006
        %4878 = vmatmul.mubr.bf16.gmra.mrb[0].mxu0 %v2005
        %v4879 = vpop.f32.mrb[0].mxu0
        %v4880 = vadd.f32 %v4767, %v4879
        %v4881 = vpop.f32.mrb[0].mxu0
        %v4882 = vadd.f32 %v4769, %v4881
        %v4883 = vpop.f32.mrb[0].mxu0
        %v4884 = vadd.f32 %v4771, %v4883
        %v4885 = vpop.f32.mrb[0].mxu0
        %v4886 = vadd.f32 %v4773, %v4885
        %4887 = vmatprep.mubr.bf16.mxu0 %v2018
        %4888 = vmatmul.mubr.bf16.gmra.mrb[0].mxu0 %v2017
        %v4889 = vpop.f32.mrb[0].mxu0
        %v4890 = vadd.f32 %v4777, %v4889
        %v4891 = vpop.f32.mrb[0].mxu0
        %v4892 = vadd.f32 %v4779, %v4891
        %v4893 = vpop.f32.mrb[0].mxu0
        %v4894 = vadd.f32 %v4781, %v4893
        %v4895 = vpop.f32.mrb[0].mxu0
        %v4896 = vadd.f32 %v4783, %v4895
        %4897 = vmatprep.mubr.bf16.mxu0 %v2030
        %4898 = vmatmul.mubr.bf16.gmra.mrb[0].mxu0 %v2029
        %v4899 = vpop.f32.mrb[0].mxu0
        %v4900 = vadd.f32 %v4787, %v4899
        %v4901 = vpop.f32.mrb[0].mxu0
        %v4902 = vadd.f32 %v4789, %v4901
        %v4903 = vpop.f32.mrb[0].mxu0
        %v4904 = vadd.f32 %v4791, %v4903
        %v4905 = vpop.f32.mrb[0].mxu0
        %v4906 = vadd.f32 %v4793, %v4905
        %4907 = vmatprep.mubr.bf16.mxu0 %v2042
        %4908 = vmatmul.mubr.bf16.gmra.mrb[0].mxu0 %v2041
        %v4909 = vpop.f32.mrb[0].mxu0
        %v4910 = vadd.f32 %v4797, %v4909
        %v4911 = vpop.f32.mrb[0].mxu0
        %v4912 = vadd.f32 %v4799, %v4911
        %v4913 = vpop.f32.mrb[0].mxu0
        %v4914 = vadd.f32 %v4801, %v4913
        %v4915 = vpop.f32.mrb[0].mxu0
        %v4916 = vadd.f32 %v4803, %v4915
        %4917 = vmatprep.mubr.bf16.mxu0 %v2054
        %4918 = vmatmul.mubr.bf16.gmra.mrb[0].mxu0 %v2053
        %v4919 = vpop.f32.mrb[0].mxu0
        %v4920 = vadd.f32 %v4807, %v4919
        %v4921 = vpop.f32.mrb[0].mxu0
        %v4922 = vadd.f32 %v4809, %v4921
        %v4923 = vpop.f32.mrb[0].mxu0
        %v4924 = vadd.f32 %v4811, %v4923
        %v4925 = vpop.f32.mrb[0].mxu0
        %v4926 = vadd.f32 %v4813, %v4925
        %4927 = vmatprep.mubr.bf16.mxu0 %v2066
        %4928 = vmatmul.mubr.bf16.gmra.mrb[0].mxu0 %v2065
        %v4929 = vpop.f32.mrb[0].mxu0
        %v4930 = vadd.f32 %v4817, %v4929
        %v4931 = vpop.f32.mrb[0].mxu0
        %v4932 = vadd.f32 %v4819, %v4931
        %v4933 = vpop.f32.mrb[0].mxu0
        %v4934 = vadd.f32 %v4821, %v4933
        %v4935 = vpop.f32.mrb[0].mxu0
        %v4936 = vadd.f32 %v4823, %v4935
        %4937 = vdwg.mxu0
        %4938 = vmatprep.subr.bf16.mxu0 %v3926
        %4939 = vmatpush1.bf16.msra.mxu0 %v3925
        %4940 = vmatprep.subr.bf16.mxu0 %v3930
        %4941 = vmatpush1.bf16.msra.mxu0 %v3929
        %4942 = vmatprep.subr.bf16.mxu0 %v3934
        %4943 = vmatpush1.bf16.msra.mxu0 %v3933
        %4944 = vmatprep.subr.bf16.mxu0 %v3938
        %4945 = vmatpush1.bf16.msra.mxu0 %v3937
        %4946 = vmatprep.subr.bf16.mxu0 %v3942
        %4947 = vmatpush1.bf16.msra.mxu0 %v3941
        %4948 = vmatprep.subr.bf16.mxu0 %v3946
        %4949 = vmatpush1.bf16.msra.mxu0 %v3945
        %4950 = vmatprep.subr.bf16.mxu0 %v3950
        %4951 = vmatpush1.bf16.msra.mxu0 %v3949
        %4952 = vmatprep.subr.bf16.mxu0 %v3954
        %4953 = vmatpush1.bf16.msra.mxu0 %v3953
        %4954 = vmatprep.subr.bf16.mxu0 %v3958
        %4955 = vmatpush1.bf16.msra.mxu0 %v3957
        %4956 = vmatprep.subr.bf16.mxu0 %v3962
        %4957 = vmatpush1.bf16.msra.mxu0 %v3961
        %4958 = vmatprep.subr.bf16.mxu0 %v3966
        %4959 = vmatpush1.bf16.msra.mxu0 %v3965
        %4960 = vmatprep.subr.bf16.mxu0 %v3970
        %4961 = vmatpush1.bf16.msra.mxu0 %v3969
        %4962 = vmatprep.subr.bf16.mxu0 %v3974
        %4963 = vmatpush1.bf16.msra.mxu0 %v3973
        %4964 = vmatprep.subr.bf16.mxu0 %v3978
        %4965 = vmatpush1.bf16.msra.mxu0 %v3977
        %4966 = vmatprep.subr.bf16.mxu0 %v3982
        %4967 = vmatpush1.bf16.msra.mxu0 %v3981
        %4968 = vmatprep.subr.bf16.mxu0 %v3986
        %4969 = vmatpush1.bf16.msra.mxu0 %v3985
        %4970 = vmatprep.mubr.bf16.mxu0 %v1984
        %4971 = vmatmul.mubr.bf16.gmra.mrb[0].mxu0 %v1983
        %v4972 = vpop.f32.mrb[0].mxu0
        %v4973 = vadd.f32 %v4860, %v4972
        %v4974 = vpop.f32.mrb[0].mxu0
        %v4975 = vadd.f32 %v4862, %v4974
        %v4976 = vpop.f32.mrb[0].mxu0
        %v4977 = vadd.f32 %v4864, %v4976
        %v4978 = vpop.f32.mrb[0].mxu0
        %v4979 = vadd.f32 %v4866, %v4978
        %4980 = vmatprep.mubr.bf16.mxu0 %v1996
        %4981 = vmatmul.mubr.bf16.gmra.mrb[0].mxu0 %v1995
        %v4982 = vpop.f32.mrb[0].mxu0
        %v4983 = vadd.f32 %v4870, %v4982
        %v4984 = vpop.f32.mrb[0].mxu0
        %v4985 = vadd.f32 %v4872, %v4984
        %v4986 = vpop.f32.mrb[0].mxu0
        %v4987 = vadd.f32 %v4874, %v4986
        %v4988 = vpop.f32.mrb[0].mxu0
        %v4989 = vadd.f32 %v4876, %v4988
        %4990 = vmatprep.mubr.bf16.mxu0 %v2008
        %4991 = vmatmul.mubr.bf16.gmra.mrb[0].mxu0 %v2007
        %v4992 = vpop.f32.mrb[0].mxu0
        %v4993 = vadd.f32 %v4880, %v4992
        %v4994 = vpop.f32.mrb[0].mxu0
        %v4995 = vadd.f32 %v4882, %v4994
        %v4996 = vpop.f32.mrb[0].mxu0
        %v4997 = vadd.f32 %v4884, %v4996
        %v4998 = vpop.f32.mrb[0].mxu0
        %v4999 = vadd.f32 %v4886, %v4998
        %5000 = vmatprep.mubr.bf16.mxu0 %v2020
        %5001 = vmatmul.mubr.bf16.gmra.mrb[0].mxu0 %v2019
        %v5002 = vpop.f32.mrb[0].mxu0
        %v5003 = vadd.f32 %v4890, %v5002
        %v5004 = vpop.f32.mrb[0].mxu0
        %v5005 = vadd.f32 %v4892, %v5004
        %v5006 = vpop.f32.mrb[0].mxu0
        %v5007 = vadd.f32 %v4894, %v5006
        %v5008 = vpop.f32.mrb[0].mxu0
        %v5009 = vadd.f32 %v4896, %v5008
        %5010 = vmatprep.mubr.bf16.mxu0 %v2032
        %5011 = vmatmul.mubr.bf16.gmra.mrb[0].mxu0 %v2031
        %v5012 = vpop.f32.mrb[0].mxu0
        %v5013 = vadd.f32 %v4900, %v5012
        %v5014 = vpop.f32.mrb[0].mxu0
        %v5015 = vadd.f32 %v4902, %v5014
        %v5016 = vpop.f32.mrb[0].mxu0
        %v5017 = vadd.f32 %v4904, %v5016
        %v5018 = vpop.f32.mrb[0].mxu0
        %v5019 = vadd.f32 %v4906, %v5018
        %5020 = vmatprep.mubr.bf16.mxu0 %v2044
        %5021 = vmatmul.mubr.bf16.gmra.mrb[0].mxu0 %v2043
        %v5022 = vpop.f32.mrb[0].mxu0
        %v5023 = vadd.f32 %v4910, %v5022
        %v5024 = vpop.f32.mrb[0].mxu0
        %v5025 = vadd.f32 %v4912, %v5024
        %v5026 = vpop.f32.mrb[0].mxu0
        %v5027 = vadd.f32 %v4914, %v5026
        %v5028 = vpop.f32.mrb[0].mxu0
        %v5029 = vadd.f32 %v4916, %v5028
        %5030 = vmatprep.mubr.bf16.mxu0 %v2056
        %5031 = vmatmul.mubr.bf16.gmra.mrb[0].mxu0 %v2055
        %v5032 = vpop.f32.mrb[0].mxu0
        %v5033 = vadd.f32 %v4920, %v5032
        %v5034 = vpop.f32.mrb[0].mxu0
        %v5035 = vadd.f32 %v4922, %v5034
        %v5036 = vpop.f32.mrb[0].mxu0
        %v5037 = vadd.f32 %v4924, %v5036
        %v5038 = vpop.f32.mrb[0].mxu0
        %v5039 = vadd.f32 %v4926, %v5038
        %5040 = vmatprep.mubr.bf16.mxu0 %v2068
        %5041 = vmatmul.mubr.bf16.gmra.mrb[0].mxu0 %v2067
        %v5042 = vpop.f32.mrb[0].mxu0
        %v5043 = vadd.f32 %v4930, %v5042
        %v5044 = vpop.f32.mrb[0].mxu0
        %v5045 = vadd.f32 %v4932, %v5044
        %v5046 = vpop.f32.mrb[0].mxu0
        %v5047 = vadd.f32 %v4934, %v5046
        %v5048 = vpop.f32.mrb[0].mxu0
        %v5049 = vadd.f32 %v4936, %v5048
        %5050 = vdwg.mxu0
        %5051 = vmatprep.subr.bf16.mxu0 %v3608
        %5052 = vmatpush1.bf16.msra.mxu0 %v3607
        %5053 = vmatprep.subr.bf16.mxu0 %v3612
        %5054 = vmatpush1.bf16.msra.mxu0 %v3611
        %5055 = vmatprep.subr.bf16.mxu0 %v3616
        %5056 = vmatpush1.bf16.msra.mxu0 %v3615
        %5057 = vmatprep.subr.bf16.mxu0 %v3620
        %5058 = vmatpush1.bf16.msra.mxu0 %v3619
        %5059 = vmatprep.subr.bf16.mxu0 %v3624
        %5060 = vmatpush1.bf16.msra.mxu0 %v3623
        %5061 = vmatprep.subr.bf16.mxu0 %v3628
        %5062 = vmatpush1.bf16.msra.mxu0 %v3627
        %5063 = vmatprep.subr.bf16.mxu0 %v3632
        %5064 = vmatpush1.bf16.msra.mxu0 %v3631
        %5065 = vmatprep.subr.bf16.mxu0 %v3636
        %5066 = vmatpush1.bf16.msra.mxu0 %v3635
        %5067 = vmatprep.subr.bf16.mxu0 %v3640
        %5068 = vmatpush1.bf16.msra.mxu0 %v3639
        %5069 = vmatprep.subr.bf16.mxu0 %v3644
        %5070 = vmatpush1.bf16.msra.mxu0 %v3643
        %5071 = vmatprep.subr.bf16.mxu0 %v3648
        %5072 = vmatpush1.bf16.msra.mxu0 %v3647
        %5073 = vmatprep.subr.bf16.mxu0 %v3652
        %5074 = vmatpush1.bf16.msra.mxu0 %v3651
        %5075 = vmatprep.subr.bf16.mxu0 %v3656
        %5076 = vmatpush1.bf16.msra.mxu0 %v3655
        %5077 = vmatprep.subr.bf16.mxu0 %v3660
        %5078 = vmatpush1.bf16.msra.mxu0 %v3659
        %5079 = vmatprep.subr.bf16.mxu0 %v3664
        %5080 = vmatpush1.bf16.msra.mxu0 %v3663
        %5081 = vmatprep.subr.bf16.mxu0 %v3668
        %5082 = vmatpush1.bf16.msra.mxu0 %v3667
        %5083 = vmatprep.mubr.bf16.mxu0 %v1974
        %5084 = vmatmul.mubr.bf16.gmra.mrb[0].mxu0 %v1973
        %v5085 = vpop.f32.mrb[0].mxu0
        %v5086 = vadd.f32 0.0, %v5085
        %v5087 = vpop.f32.mrb[0].mxu0
        %v5088 = vadd.f32 0.0, %v5087
        %v5089 = vpop.f32.mrb[0].mxu0
        %v5090 = vadd.f32 0.0, %v5089
        %v5091 = vpop.f32.mrb[0].mxu0
        %v5092 = vadd.f32 0.0, %v5091
        %5093 = vmatprep.mubr.bf16.mxu0 %v1986
        %5094 = vmatmul.mubr.bf16.gmra.mrb[0].mxu0 %v1985
        %v5095 = vpop.f32.mrb[0].mxu0
        %v5096 = vadd.f32 0.0, %v5095
        %v5097 = vpop.f32.mrb[0].mxu0
        %v5098 = vadd.f32 0.0, %v5097
        %v5099 = vpop.f32.mrb[0].mxu0
        %v5100 = vadd.f32 0.0, %v5099
        %v5101 = vpop.f32.mrb[0].mxu0
        %v5102 = vadd.f32 0.0, %v5101
        %5103 = vmatprep.mubr.bf16.mxu0 %v1998
        %5104 = vmatmul.mubr.bf16.gmra.mrb[0].mxu0 %v1997
        %v5105 = vpop.f32.mrb[0].mxu0
        %v5106 = vadd.f32 0.0, %v5105
        %v5107 = vpop.f32.mrb[0].mxu0
        %v5108 = vadd.f32 0.0, %v5107
        %v5109 = vpop.f32.mrb[0].mxu0
        %v5110 = vadd.f32 0.0, %v5109
        %v5111 = vpop.f32.mrb[0].mxu0
        %v5112 = vadd.f32 0.0, %v5111
        %5113 = vmatprep.mubr.bf16.mxu0 %v2010
        %5114 = vmatmul.mubr.bf16.gmra.mrb[0].mxu0 %v2009
        %v5115 = vpop.f32.mrb[0].mxu0
        %v5116 = vadd.f32 0.0, %v5115
        %v5117 = vpop.f32.mrb[0].mxu0
        %v5118 = vadd.f32 0.0, %v5117
        %v5119 = vpop.f32.mrb[0].mxu0
        %v5120 = vadd.f32 0.0, %v5119
        %v5121 = vpop.f32.mrb[0].mxu0
        %v5122 = vadd.f32 0.0, %v5121
        %5123 = vmatprep.mubr.bf16.mxu0 %v2022
        %5124 = vmatmul.mubr.bf16.gmra.mrb[0].mxu0 %v2021
        %v5125 = vpop.f32.mrb[0].mxu0
        %v5126 = vadd.f32 0.0, %v5125
        %v5127 = vpop.f32.mrb[0].mxu0
        %v5128 = vadd.f32 0.0, %v5127
        %v5129 = vpop.f32.mrb[0].mxu0
        %v5130 = vadd.f32 0.0, %v5129
        %v5131 = vpop.f32.mrb[0].mxu0
        %v5132 = vadd.f32 0.0, %v5131
        %5133 = vmatprep.mubr.bf16.mxu0 %v2034
        %5134 = vmatmul.mubr.bf16.gmra.mrb[0].mxu0 %v2033
        %v5135 = vpop.f32.mrb[0].mxu0
        %v5136 = vadd.f32 0.0, %v5135
        %v5137 = vpop.f32.mrb[0].mxu0
        %v5138 = vadd.f32 0.0, %v5137
        %v5139 = vpop.f32.mrb[0].mxu0
        %v5140 = vadd.f32 0.0, %v5139
        %v5141 = vpop.f32.mrb[0].mxu0
        %v5142 = vadd.f32 0.0, %v5141
        %5143 = vmatprep.mubr.bf16.mxu0 %v2046
        %5144 = vmatmul.mubr.bf16.gmra.mrb[0].mxu0 %v2045
        %v5145 = vpop.f32.mrb[0].mxu0
        %v5146 = vadd.f32 0.0, %v5145
        %v5147 = vpop.f32.mrb[0].mxu0
        %v5148 = vadd.f32 0.0, %v5147
        %v5149 = vpop.f32.mrb[0].mxu0
        %v5150 = vadd.f32 0.0, %v5149
        %v5151 = vpop.f32.mrb[0].mxu0
        %v5152 = vadd.f32 0.0, %v5151
        %5153 = vmatprep.mubr.bf16.mxu0 %v2058
        %5154 = vmatmul.mubr.bf16.gmra.mrb[0].mxu0 %v2057
        %v5155 = vpop.f32.mrb[0].mxu0
        %v5156 = vadd.f32 0.0, %v5155
        %v5157 = vpop.f32.mrb[0].mxu0
        %v5158 = vadd.f32 0.0, %v5157
        %v5159 = vpop.f32.mrb[0].mxu0
        %v5160 = vadd.f32 0.0, %v5159
        %v5161 = vpop.f32.mrb[0].mxu0
        %v5162 = vadd.f32 0.0, %v5161
        %5163 = vdwg.mxu0
        %5164 = vmatprep.subr.bf16.mxu0 %v3672
        %5165 = vmatpush1.bf16.msra.mxu0 %v3671
        %5166 = vmatprep.subr.bf16.mxu0 %v3676
        %5167 = vmatpush1.bf16.msra.mxu0 %v3675
        %5168 = vmatprep.subr.bf16.mxu0 %v3680
        %5169 = vmatpush1.bf16.msra.mxu0 %v3679
        %5170 = vmatprep.subr.bf16.mxu0 %v3684
        %5171 = vmatpush1.bf16.msra.mxu0 %v3683
        %5172 = vmatprep.subr.bf16.mxu0 %v3688
        %5173 = vmatpush1.bf16.msra.mxu0 %v3687
        %5174 = vmatprep.subr.bf16.mxu0 %v3692
        %5175 = vmatpush1.bf16.msra.mxu0 %v3691
        %5176 = vmatprep.subr.bf16.mxu0 %v3696
        %5177 = vmatpush1.bf16.msra.mxu0 %v3695
        %5178 = vmatprep.subr.bf16.mxu0 %v3700
        %5179 = vmatpush1.bf16.msra.mxu0 %v3699
        %5180 = vmatprep.subr.bf16.mxu0 %v3704
        %5181 = vmatpush1.bf16.msra.mxu0 %v3703
        %5182 = vmatprep.subr.bf16.mxu0 %v3708
        %5183 = vmatpush1.bf16.msra.mxu0 %v3707
        %5184 = vmatprep.subr.bf16.mxu0 %v3712
        %5185 = vmatpush1.bf16.msra.mxu0 %v3711
        %5186 = vmatprep.subr.bf16.mxu0 %v3716
        %5187 = vmatpush1.bf16.msra.mxu0 %v3715
        %5188 = vmatprep.subr.bf16.mxu0 %v3720
        %5189 = vmatpush1.bf16.msra.mxu0 %v3719
        %5190 = vmatprep.subr.bf16.mxu0 %v3724
        %5191 = vmatpush1.bf16.msra.mxu0 %v3723
        %5192 = vmatprep.subr.bf16.mxu0 %v3728
        %5193 = vmatpush1.bf16.msra.mxu0 %v3727
        %5194 = vmatprep.subr.bf16.mxu0 %v3732
        %5195 = vmatpush1.bf16.msra.mxu0 %v3731
        %5196 = vmatprep.mubr.bf16.mxu0 %v1976
        %5197 = vmatmul.mubr.bf16.gmra.mrb[0].mxu0 %v1975
        %v5198 = vpop.f32.mrb[0].mxu0
        %v5199 = vadd.f32 %v5086, %v5198
        %v5200 = vpop.f32.mrb[0].mxu0
        %v5201 = vadd.f32 %v5088, %v5200
        %v5202 = vpop.f32.mrb[0].mxu0
        %v5203 = vadd.f32 %v5090, %v5202
        %v5204 = vpop.f32.mrb[0].mxu0
        %v5205 = vadd.f32 %v5092, %v5204
        %5206 = vmatprep.mubr.bf16.mxu0 %v1988
        %5207 = vmatmul.mubr.bf16.gmra.mrb[0].mxu0 %v1987
        %v5208 = vpop.f32.mrb[0].mxu0
        %v5209 = vadd.f32 %v5096, %v5208
        %v5210 = vpop.f32.mrb[0].mxu0
        %v5211 = vadd.f32 %v5098, %v5210
        %v5212 = vpop.f32.mrb[0].mxu0
        %v5213 = vadd.f32 %v5100, %v5212
        %v5214 = vpop.f32.mrb[0].mxu0
        %v5215 = vadd.f32 %v5102, %v5214
        %5216 = vmatprep.mubr.bf16.mxu0 %v2000
        %5217 = vmatmul.mubr.bf16.gmra.mrb[0].mxu0 %v1999
        %v5218 = vpop.f32.mrb[0].mxu0
        %v5219 = vadd.f32 %v5106, %v5218
        %v5220 = vpop.f32.mrb[0].mxu0
        %v5221 = vadd.f32 %v5108, %v5220
        %v5222 = vpop.f32.mrb[0].mxu0
        %v5223 = vadd.f32 %v5110, %v5222
        %v5224 = vpop.f32.mrb[0].mxu0
        %v5225 = vadd.f32 %v5112, %v5224
        %5226 = vmatprep.mubr.bf16.mxu0 %v2012
        %5227 = vmatmul.mubr.bf16.gmra.mrb[0].mxu0 %v2011
        %v5228 = vpop.f32.mrb[0].mxu0
        %v5229 = vadd.f32 %v5116, %v5228
        %v5230 = vpop.f32.mrb[0].mxu0
        %v5231 = vadd.f32 %v5118, %v5230
        %v5232 = vpop.f32.mrb[0].mxu0
        %v5233 = vadd.f32 %v5120, %v5232
        %v5234 = vpop.f32.mrb[0].mxu0
        %v5235 = vadd.f32 %v5122, %v5234
        %5236 = vmatprep.mubr.bf16.mxu0 %v2024
        %5237 = vmatmul.mubr.bf16.gmra.mrb[0].mxu0 %v2023
        %v5238 = vpop.f32.mrb[0].mxu0
        %v5239 = vadd.f32 %v5126, %v5238
        %v5240 = vpop.f32.mrb[0].mxu0
        %v5241 = vadd.f32 %v5128, %v5240
        %v5242 = vpop.f32.mrb[0].mxu0
        %v5243 = vadd.f32 %v5130, %v5242
        %v5244 = vpop.f32.mrb[0].mxu0
        %v5245 = vadd.f32 %v5132, %v5244
        %5246 = vmatprep.mubr.bf16.mxu0 %v2036
        %5247 = vmatmul.mubr.bf16.gmra.mrb[0].mxu0 %v2035
        %v5248 = vpop.f32.mrb[0].mxu0
        %v5249 = vadd.f32 %v5136, %v5248
        %v5250 = vpop.f32.mrb[0].mxu0
        %v5251 = vadd.f32 %v5138, %v5250
        %v5252 = vpop.f32.mrb[0].mxu0
        %v5253 = vadd.f32 %v5140, %v5252
        %v5254 = vpop.f32.mrb[0].mxu0
        %v5255 = vadd.f32 %v5142, %v5254
        %5256 = vmatprep.mubr.bf16.mxu0 %v2048
        %5257 = vmatmul.mubr.bf16.gmra.mrb[0].mxu0 %v2047
        %v5258 = vpop.f32.mrb[0].mxu0
        %v5259 = vadd.f32 %v5146, %v5258
        %v5260 = vpop.f32.mrb[0].mxu0
        %v5261 = vadd.f32 %v5148, %v5260
        %v5262 = vpop.f32.mrb[0].mxu0
        %v5263 = vadd.f32 %v5150, %v5262
        %v5264 = vpop.f32.mrb[0].mxu0
        %v5265 = vadd.f32 %v5152, %v5264
        %5266 = vmatprep.mubr.bf16.mxu0 %v2060
        %5267 = vmatmul.mubr.bf16.gmra.mrb[0].mxu0 %v2059
        %v5268 = vpop.f32.mrb[0].mxu0
        %v5269 = vadd.f32 %v5156, %v5268
        %v5270 = vpop.f32.mrb[0].mxu0
        %v5271 = vadd.f32 %v5158, %v5270
        %v5272 = vpop.f32.mrb[0].mxu0
        %v5273 = vadd.f32 %v5160, %v5272
        %v5274 = vpop.f32.mrb[0].mxu0
        %v5275 = vadd.f32 %v5162, %v5274
        %5276 = vdwg.mxu0
        %5277 = vmatprep.subr.bf16.mxu0 %v3736
        %5278 = vmatpush1.bf16.msra.mxu0 %v3735
        %5279 = vmatprep.subr.bf16.mxu0 %v3740
        %5280 = vmatpush1.bf16.msra.mxu0 %v3739
        %5281 = vmatprep.subr.bf16.mxu0 %v3744
        %5282 = vmatpush1.bf16.msra.mxu0 %v3743
        %5283 = vmatprep.subr.bf16.mxu0 %v3748
        %5284 = vmatpush1.bf16.msra.mxu0 %v3747
        %5285 = vmatprep.subr.bf16.mxu0 %v3752
        %5286 = vmatpush1.bf16.msra.mxu0 %v3751
        %5287 = vmatprep.subr.bf16.mxu0 %v3756
        %5288 = vmatpush1.bf16.msra.mxu0 %v3755
        %5289 = vmatprep.subr.bf16.mxu0 %v3760
        %5290 = vmatpush1.bf16.msra.mxu0 %v3759
        %5291 = vmatprep.subr.bf16.mxu0 %v3764
        %5292 = vmatpush1.bf16.msra.mxu0 %v3763
        %5293 = vmatprep.subr.bf16.mxu0 %v3768
        %5294 = vmatpush1.bf16.msra.mxu0 %v3767
        %5295 = vmatprep.subr.bf16.mxu0 %v3772
        %5296 = vmatpush1.bf16.msra.mxu0 %v3771
        %5297 = vmatprep.subr.bf16.mxu0 %v3776
        %5298 = vmatpush1.bf16.msra.mxu0 %v3775
        %5299 = vmatprep.subr.bf16.mxu0 %v3780
        %5300 = vmatpush1.bf16.msra.mxu0 %v3779
        %5301 = vmatprep.subr.bf16.mxu0 %v3784
        %5302 = vmatpush1.bf16.msra.mxu0 %v3783
        %5303 = vmatprep.subr.bf16.mxu0 %v3788
        %5304 = vmatpush1.bf16.msra.mxu0 %v3787
        %5305 = vmatprep.subr.bf16.mxu0 %v3792
        %5306 = vmatpush1.bf16.msra.mxu0 %v3791
        %5307 = vmatprep.subr.bf16.mxu0 %v3796
        %5308 = vmatpush1.bf16.msra.mxu0 %v3795
        %5309 = vmatprep.mubr.bf16.mxu0 %v1978
        %5310 = vmatmul.mubr.bf16.gmra.mrb[0].mxu0 %v1977
        %v5311 = vpop.f32.mrb[0].mxu0
        %v5312 = vadd.f32 %v5199, %v5311
        %v5313 = vpop.f32.mrb[0].mxu0
        %v5314 = vadd.f32 %v5201, %v5313
        %v5315 = vpop.f32.mrb[0].mxu0
        %v5316 = vadd.f32 %v5203, %v5315
        %v5317 = vpop.f32.mrb[0].mxu0
        %v5318 = vadd.f32 %v5205, %v5317
        %5319 = vmatprep.mubr.bf16.mxu0 %v1990
        %5320 = vmatmul.mubr.bf16.gmra.mrb[0].mxu0 %v1989
        %v5321 = vpop.f32.mrb[0].mxu0
        %v5322 = vadd.f32 %v5209, %v5321
        %v5323 = vpop.f32.mrb[0].mxu0
        %v5324 = vadd.f32 %v5211, %v5323
        %v5325 = vpop.f32.mrb[0].mxu0
        %v5326 = vadd.f32 %v5213, %v5325
        %v5327 = vpop.f32.mrb[0].mxu0
        %v5328 = vadd.f32 %v5215, %v5327
        %5329 = vmatprep.mubr.bf16.mxu0 %v2002
        %5330 = vmatmul.mubr.bf16.gmra.mrb[0].mxu0 %v2001
        %v5331 = vpop.f32.mrb[0].mxu0
        %v5332 = vadd.f32 %v5219, %v5331
        %v5333 = vpop.f32.mrb[0].mxu0
        %v5334 = vadd.f32 %v5221, %v5333
        %v5335 = vpop.f32.mrb[0].mxu0
        %v5336 = vadd.f32 %v5223, %v5335
        %v5337 = vpop.f32.mrb[0].mxu0
        %v5338 = vadd.f32 %v5225, %v5337
        %5339 = vmatprep.mubr.bf16.mxu0 %v2014
        %5340 = vmatmul.mubr.bf16.gmra.mrb[0].mxu0 %v2013
        %v5341 = vpop.f32.mrb[0].mxu0
        %v5342 = vadd.f32 %v5229, %v5341
        %v5343 = vpop.f32.mrb[0].mxu0
        %v5344 = vadd.f32 %v5231, %v5343
        %v5345 = vpop.f32.mrb[0].mxu0
        %v5346 = vadd.f32 %v5233, %v5345
        %v5347 = vpop.f32.mrb[0].mxu0
        %v5348 = vadd.f32 %v5235, %v5347
        %5349 = vmatprep.mubr.bf16.mxu0 %v2026
        %5350 = vmatmul.mubr.bf16.gmra.mrb[0].mxu0 %v2025
        %v5351 = vpop.f32.mrb[0].mxu0
        %v5352 = vadd.f32 %v5239, %v5351
        %v5353 = vpop.f32.mrb[0].mxu0
        %v5354 = vadd.f32 %v5241, %v5353
        %v5355 = vpop.f32.mrb[0].mxu0
        %v5356 = vadd.f32 %v5243, %v5355
        %v5357 = vpop.f32.mrb[0].mxu0
        %v5358 = vadd.f32 %v5245, %v5357
        %5359 = vmatprep.mubr.bf16.mxu0 %v2038
        %5360 = vmatmul.mubr.bf16.gmra.mrb[0].mxu0 %v2037
        %v5361 = vpop.f32.mrb[0].mxu0
        %v5362 = vadd.f32 %v5249, %v5361
        %v5363 = vpop.f32.mrb[0].mxu0
        %v5364 = vadd.f32 %v5251, %v5363
        %v5365 = vpop.f32.mrb[0].mxu0
        %v5366 = vadd.f32 %v5253, %v5365
        %v5367 = vpop.f32.mrb[0].mxu0
        %v5368 = vadd.f32 %v5255, %v5367
        %5369 = vmatprep.mubr.bf16.mxu0 %v2050
        %5370 = vmatmul.mubr.bf16.gmra.mrb[0].mxu0 %v2049
        %v5371 = vpop.f32.mrb[0].mxu0
        %v5372 = vadd.f32 %v5259, %v5371
        %v5373 = vpop.f32.mrb[0].mxu0
        %v5374 = vadd.f32 %v5261, %v5373
        %v5375 = vpop.f32.mrb[0].mxu0
        %v5376 = vadd.f32 %v5263, %v5375
        %v5377 = vpop.f32.mrb[0].mxu0
        %v5378 = vadd.f32 %v5265, %v5377
        %5379 = vmatprep.mubr.bf16.mxu0 %v2062
        %5380 = vmatmul.mubr.bf16.gmra.mrb[0].mxu0 %v2061
        %v5381 = vpop.f32.mrb[0].mxu0
        %v5382 = vadd.f32 %v5269, %v5381
        %v5383 = vpop.f32.mrb[0].mxu0
        %v5384 = vadd.f32 %v5271, %v5383
        %v5385 = vpop.f32.mrb[0].mxu0
        %v5386 = vadd.f32 %v5273, %v5385
        %v5387 = vpop.f32.mrb[0].mxu0
        %v5388 = vadd.f32 %v5275, %v5387
        %5389 = vdwg.mxu0
        %5390 = vmatprep.subr.bf16.mxu0 %v3800
        %5391 = vmatpush1.bf16.msra.mxu0 %v3799
        %5392 = vmatprep.subr.bf16.mxu0 %v3804
        %5393 = vmatpush1.bf16.msra.mxu0 %v3803
        %5394 = vmatprep.subr.bf16.mxu0 %v3808
        %5395 = vmatpush1.bf16.msra.mxu0 %v3807
        %5396 = vmatprep.subr.bf16.mxu0 %v3812
        %5397 = vmatpush1.bf16.msra.mxu0 %v3811
        %5398 = vmatprep.subr.bf16.mxu0 %v3816
        %5399 = vmatpush1.bf16.msra.mxu0 %v3815
        %5400 = vmatprep.subr.bf16.mxu0 %v3820
        %5401 = vmatpush1.bf16.msra.mxu0 %v3819
        %5402 = vmatprep.subr.bf16.mxu0 %v3824
        %5403 = vmatpush1.bf16.msra.mxu0 %v3823
        %5404 = vmatprep.subr.bf16.mxu0 %v3828
        %5405 = vmatpush1.bf16.msra.mxu0 %v3827
        %5406 = vmatprep.subr.bf16.mxu0 %v3832
        %5407 = vmatpush1.bf16.msra.mxu0 %v3831
        %5408 = vmatprep.subr.bf16.mxu0 %v3836
        %5409 = vmatpush1.bf16.msra.mxu0 %v3835
        %5410 = vmatprep.subr.bf16.mxu0 %v3840
        %5411 = vmatpush1.bf16.msra.mxu0 %v3839
        %5412 = vmatprep.subr.bf16.mxu0 %v3844
        %5413 = vmatpush1.bf16.msra.mxu0 %v3843
        %5414 = vmatprep.subr.bf16.mxu0 %v3848
        %5415 = vmatpush1.bf16.msra.mxu0 %v3847
        %5416 = vmatprep.subr.bf16.mxu0 %v3852
        %5417 = vmatpush1.bf16.msra.mxu0 %v3851
        %5418 = vmatprep.subr.bf16.mxu0 %v3856
        %5419 = vmatpush1.bf16.msra.mxu0 %v3855
        %5420 = vmatprep.subr.bf16.mxu0 %v3860
        %5421 = vmatpush1.bf16.msra.mxu0 %v3859
        %5422 = vmatprep.mubr.bf16.mxu0 %v1980
        %5423 = vmatmul.mubr.bf16.gmra.mrb[0].mxu0 %v1979
        %v5424 = vpop.f32.mrb[0].mxu0
        %v5425 = vadd.f32 %v5312, %v5424
        %v5426 = vpop.f32.mrb[0].mxu0
        %v5427 = vadd.f32 %v5314, %v5426
        %v5428 = vpop.f32.mrb[0].mxu0
        %v5429 = vadd.f32 %v5316, %v5428
        %v5430 = vpop.f32.mrb[0].mxu0
        %v5431 = vadd.f32 %v5318, %v5430
        %5432 = vmatprep.mubr.bf16.mxu0 %v1992
        %5433 = vmatmul.mubr.bf16.gmra.mrb[0].mxu0 %v1991
        %v5434 = vpop.f32.mrb[0].mxu0
        %v5435 = vadd.f32 %v5322, %v5434
        %v5436 = vpop.f32.mrb[0].mxu0
        %v5437 = vadd.f32 %v5324, %v5436
        %v5438 = vpop.f32.mrb[0].mxu0
        %v5439 = vadd.f32 %v5326, %v5438
        %v5440 = vpop.f32.mrb[0].mxu0
        %v5441 = vadd.f32 %v5328, %v5440
        %5442 = vmatprep.mubr.bf16.mxu0 %v2004
        %5443 = vmatmul.mubr.bf16.gmra.mrb[0].mxu0 %v2003
        %v5444 = vpop.f32.mrb[0].mxu0
        %v5445 = vadd.f32 %v5332, %v5444
        %v5446 = vpop.f32.mrb[0].mxu0
        %v5447 = vadd.f32 %v5334, %v5446
        %v5448 = vpop.f32.mrb[0].mxu0
        %v5449 = vadd.f32 %v5336, %v5448
        %v5450 = vpop.f32.mrb[0].mxu0
        %v5451 = vadd.f32 %v5338, %v5450
        %5452 = vmatprep.mubr.bf16.mxu0 %v2016
        %5453 = vmatmul.mubr.bf16.gmra.mrb[0].mxu0 %v2015
        %v5454 = vpop.f32.mrb[0].mxu0
        %v5455 = vadd.f32 %v5342, %v5454
        %v5456 = vpop.f32.mrb[0].mxu0
        %v5457 = vadd.f32 %v5344, %v5456
        %v5458 = vpop.f32.mrb[0].mxu0
        %v5459 = vadd.f32 %v5346, %v5458
        %v5460 = vpop.f32.mrb[0].mxu0
        %v5461 = vadd.f32 %v5348, %v5460
        %5462 = vmatprep.mubr.bf16.mxu0 %v2028
        %5463 = vmatmul.mubr.bf16.gmra.mrb[0].mxu0 %v2027
        %v5464 = vpop.f32.mrb[0].mxu0
        %v5465 = vadd.f32 %v5352, %v5464
        %v5466 = vpop.f32.mrb[0].mxu0
        %v5467 = vadd.f32 %v5354, %v5466
        %v5468 = vpop.f32.mrb[0].mxu0
        %v5469 = vadd.f32 %v5356, %v5468
        %v5470 = vpop.f32.mrb[0].mxu0
        %v5471 = vadd.f32 %v5358, %v5470
        %5472 = vmatprep.mubr.bf16.mxu0 %v2040
        %5473 = vmatmul.mubr.bf16.gmra.mrb[0].mxu0 %v2039
        %v5474 = vpop.f32.mrb[0].mxu0
        %v5475 = vadd.f32 %v5362, %v5474
        %v5476 = vpop.f32.mrb[0].mxu0
        %v5477 = vadd.f32 %v5364, %v5476
        %v5478 = vpop.f32.mrb[0].mxu0
        %v5479 = vadd.f32 %v5366, %v5478
        %v5480 = vpop.f32.mrb[0].mxu0
        %v5481 = vadd.f32 %v5368, %v5480
        %5482 = vmatprep.mubr.bf16.mxu0 %v2052
        %5483 = vmatmul.mubr.bf16.gmra.mrb[0].mxu0 %v2051
        %v5484 = vpop.f32.mrb[0].mxu0
        %v5485 = vadd.f32 %v5372, %v5484
        %v5486 = vpop.f32.mrb[0].mxu0
        %v5487 = vadd.f32 %v5374, %v5486
        %v5488 = vpop.f32.mrb[0].mxu0
        %v5489 = vadd.f32 %v5376, %v5488
        %v5490 = vpop.f32.mrb[0].mxu0
        %v5491 = vadd.f32 %v5378, %v5490
        %5492 = vmatprep.mubr.bf16.mxu0 %v2064
        %5493 = vmatmul.mubr.bf16.gmra.mrb[0].mxu0 %v2063
        %v5494 = vpop.f32.mrb[0].mxu0
        %v5495 = vadd.f32 %v5382, %v5494
        %v5496 = vpop.f32.mrb[0].mxu0
        %v5497 = vadd.f32 %v5384, %v5496
        %v5498 = vpop.f32.mrb[0].mxu0
        %v5499 = vadd.f32 %v5386, %v5498
        %v5500 = vpop.f32.mrb[0].mxu0
        %v5501 = vadd.f32 %v5388, %v5500
        %5502 = vdwg.mxu0
        %5503 = vmatprep.subr.bf16.mxu0 %v3864
        %5504 = vmatpush1.bf16.msra.mxu0 %v3863
        %5505 = vmatprep.subr.bf16.mxu0 %v3868
        %5506 = vmatpush1.bf16.msra.mxu0 %v3867
        %5507 = vmatprep.subr.bf16.mxu0 %v3872
        %5508 = vmatpush1.bf16.msra.mxu0 %v3871
        %5509 = vmatprep.subr.bf16.mxu0 %v3876
        %5510 = vmatpush1.bf16.msra.mxu0 %v3875
        %5511 = vmatprep.subr.bf16.mxu0 %v3880
        %5512 = vmatpush1.bf16.msra.mxu0 %v3879
        %5513 = vmatprep.subr.bf16.mxu0 %v3884
        %5514 = vmatpush1.bf16.msra.mxu0 %v3883
        %5515 = vmatprep.subr.bf16.mxu0 %v3888
        %5516 = vmatpush1.bf16.msra.mxu0 %v3887
        %5517 = vmatprep.subr.bf16.mxu0 %v3892
        %5518 = vmatpush1.bf16.msra.mxu0 %v3891
        %5519 = vmatprep.subr.bf16.mxu0 %v3896
        %5520 = vmatpush1.bf16.msra.mxu0 %v3895
        %5521 = vmatprep.subr.bf16.mxu0 %v3900
        %5522 = vmatpush1.bf16.msra.mxu0 %v3899
        %5523 = vmatprep.subr.bf16.mxu0 %v3904
        %5524 = vmatpush1.bf16.msra.mxu0 %v3903
        %5525 = vmatprep.subr.bf16.mxu0 %v3908
        %5526 = vmatpush1.bf16.msra.mxu0 %v3907
        %5527 = vmatprep.subr.bf16.mxu0 %v3912
        %5528 = vmatpush1.bf16.msra.mxu0 %v3911
        %5529 = vmatprep.subr.bf16.mxu0 %v3916
        %5530 = vmatpush1.bf16.msra.mxu0 %v3915
        %5531 = vmatprep.subr.bf16.mxu0 %v3920
        %5532 = vmatpush1.bf16.msra.mxu0 %v3919
        %5533 = vmatprep.subr.bf16.mxu0 %v3924
        %5534 = vmatpush1.bf16.msra.mxu0 %v3923
        %5535 = vmatprep.mubr.bf16.mxu0 %v1982
        %5536 = vmatmul.mubr.bf16.gmra.mrb[0].mxu0 %v1981
        %v5537 = vpop.f32.mrb[0].mxu0
        %v5538 = vadd.f32 %v5425, %v5537
        %v5539 = vpop.f32.mrb[0].mxu0
        %v5540 = vadd.f32 %v5427, %v5539
        %v5541 = vpop.f32.mrb[0].mxu0
        %v5542 = vadd.f32 %v5429, %v5541
        %v5543 = vpop.f32.mrb[0].mxu0
        %v5544 = vadd.f32 %v5431, %v5543
        %5545 = vmatprep.mubr.bf16.mxu0 %v1994
        %5546 = vmatmul.mubr.bf16.gmra.mrb[0].mxu0 %v1993
        %v5547 = vpop.f32.mrb[0].mxu0
        %v5548 = vadd.f32 %v5435, %v5547
        %v5549 = vpop.f32.mrb[0].mxu0
        %v5550 = vadd.f32 %v5437, %v5549
        %v5551 = vpop.f32.mrb[0].mxu0
        %v5552 = vadd.f32 %v5439, %v5551
        %v5553 = vpop.f32.mrb[0].mxu0
        %v5554 = vadd.f32 %v5441, %v5553
        %5555 = vmatprep.mubr.bf16.mxu0 %v2006
        %5556 = vmatmul.mubr.bf16.gmra.mrb[0].mxu0 %v2005
        %v5557 = vpop.f32.mrb[0].mxu0
        %v5558 = vadd.f32 %v5445, %v5557
        %v5559 = vpop.f32.mrb[0].mxu0
        %v5560 = vadd.f32 %v5447, %v5559
        %v5561 = vpop.f32.mrb[0].mxu0
        %v5562 = vadd.f32 %v5449, %v5561
        %v5563 = vpop.f32.mrb[0].mxu0
        %v5564 = vadd.f32 %v5451, %v5563
        %5565 = vmatprep.mubr.bf16.mxu0 %v2018
        %5566 = vmatmul.mubr.bf16.gmra.mrb[0].mxu0 %v2017
        %v5567 = vpop.f32.mrb[0].mxu0
        %v5568 = vadd.f32 %v5455, %v5567
        %v5569 = vpop.f32.mrb[0].mxu0
        %v5570 = vadd.f32 %v5457, %v5569
        %v5571 = vpop.f32.mrb[0].mxu0
        %v5572 = vadd.f32 %v5459, %v5571
        %v5573 = vpop.f32.mrb[0].mxu0
        %v5574 = vadd.f32 %v5461, %v5573
        %5575 = vmatprep.mubr.bf16.mxu0 %v2030
        %5576 = vmatmul.mubr.bf16.gmra.mrb[0].mxu0 %v2029
        %v5577 = vpop.f32.mrb[0].mxu0
        %v5578 = vadd.f32 %v5465, %v5577
        %v5579 = vpop.f32.mrb[0].mxu0
        %v5580 = vadd.f32 %v5467, %v5579
        %v5581 = vpop.f32.mrb[0].mxu0
        %v5582 = vadd.f32 %v5469, %v5581
        %v5583 = vpop.f32.mrb[0].mxu0
        %v5584 = vadd.f32 %v5471, %v5583
        %5585 = vmatprep.mubr.bf16.mxu0 %v2042
        %5586 = vmatmul.mubr.bf16.gmra.mrb[0].mxu0 %v2041
        %v5587 = vpop.f32.mrb[0].mxu0
        %v5588 = vadd.f32 %v5475, %v5587
        %v5589 = vpop.f32.mrb[0].mxu0
        %v5590 = vadd.f32 %v5477, %v5589
        %v5591 = vpop.f32.mrb[0].mxu0
        %v5592 = vadd.f32 %v5479, %v5591
        %v5593 = vpop.f32.mrb[0].mxu0
        %v5594 = vadd.f32 %v5481, %v5593
        %5595 = vmatprep.mubr.bf16.mxu0 %v2054
        %5596 = vmatmul.mubr.bf16.gmra.mrb[0].mxu0 %v2053
        %v5597 = vpop.f32.mrb[0].mxu0
        %v5598 = vadd.f32 %v5485, %v5597
        %v5599 = vpop.f32.mrb[0].mxu0
        %v5600 = vadd.f32 %v5487, %v5599
        %v5601 = vpop.f32.mrb[0].mxu0
        %v5602 = vadd.f32 %v5489, %v5601
        %v5603 = vpop.f32.mrb[0].mxu0
        %v5604 = vadd.f32 %v5491, %v5603
        %5605 = vmatprep.mubr.bf16.mxu0 %v2066
        %5606 = vmatmul.mubr.bf16.gmra.mrb[0].mxu0 %v2065
        %v5607 = vpop.f32.mrb[0].mxu0
        %v5608 = vadd.f32 %v5495, %v5607
        %v5609 = vpop.f32.mrb[0].mxu0
        %v5610 = vadd.f32 %v5497, %v5609
        %v5611 = vpop.f32.mrb[0].mxu0
        %v5612 = vadd.f32 %v5499, %v5611
        %v5613 = vpop.f32.mrb[0].mxu0
        %v5614 = vadd.f32 %v5501, %v5613
        %5615 = vdwg.mxu0
        %5616 = vmatprep.subr.bf16.mxu0 %v3928
        %5617 = vmatpush1.bf16.msra.mxu0 %v3927
        %5618 = vmatprep.subr.bf16.mxu0 %v3932
        %5619 = vmatpush1.bf16.msra.mxu0 %v3931
        %5620 = vmatprep.subr.bf16.mxu0 %v3936
        %5621 = vmatpush1.bf16.msra.mxu0 %v3935
        %5622 = vmatprep.subr.bf16.mxu0 %v3940
        %5623 = vmatpush1.bf16.msra.mxu0 %v3939
        %5624 = vmatprep.subr.bf16.mxu0 %v3944
        %5625 = vmatpush1.bf16.msra.mxu0 %v3943
        %5626 = vmatprep.subr.bf16.mxu0 %v3948
        %5627 = vmatpush1.bf16.msra.mxu0 %v3947
        %5628 = vmatprep.subr.bf16.mxu0 %v3952
        %5629 = vmatpush1.bf16.msra.mxu0 %v3951
        %5630 = vmatprep.subr.bf16.mxu0 %v3956
        %5631 = vmatpush1.bf16.msra.mxu0 %v3955
        %5632 = vmatprep.subr.bf16.mxu0 %v3960
        %5633 = vmatpush1.bf16.msra.mxu0 %v3959
        %5634 = vmatprep.subr.bf16.mxu0 %v3964
        %5635 = vmatpush1.bf16.msra.mxu0 %v3963
        %5636 = vmatprep.subr.bf16.mxu0 %v3968
        %5637 = vmatpush1.bf16.msra.mxu0 %v3967
        %5638 = vmatprep.subr.bf16.mxu0 %v3972
        %5639 = vmatpush1.bf16.msra.mxu0 %v3971
        %5640 = vmatprep.subr.bf16.mxu0 %v3976
        %5641 = vmatpush1.bf16.msra.mxu0 %v3975
        %5642 = vmatprep.subr.bf16.mxu0 %v3980
        %5643 = vmatpush1.bf16.msra.mxu0 %v3979
        %5644 = vmatprep.subr.bf16.mxu0 %v3984
        %5645 = vmatpush1.bf16.msra.mxu0 %v3983
        %5646 = vmatprep.subr.bf16.mxu0 %v3988
        %5647 = vmatpush1.bf16.msra.mxu0 %v3987
        %5648 = vmatprep.mubr.bf16.mxu0 %v1984
        %5649 = vmatmul.mubr.bf16.gmra.mrb[0].mxu0 %v1983
        %v5650 = vpop.f32.mrb[0].mxu0
        %v5651 = vadd.f32 %v5538, %v5650
        %v5652 = vpop.f32.mrb[0].mxu0
        %v5653 = vadd.f32 %v5540, %v5652
        %v5654 = vpop.f32.mrb[0].mxu0
        %v5655 = vadd.f32 %v5542, %v5654
        %v5656 = vpop.f32.mrb[0].mxu0
        %v5657 = vadd.f32 %v5544, %v5656
        %5658 = vmatprep.mubr.bf16.mxu0 %v1996
        %5659 = vmatmul.mubr.bf16.gmra.mrb[0].mxu0 %v1995
        %v5660 = vpop.f32.mrb[0].mxu0
        %v5661 = vadd.f32 %v5548, %v5660
        %v5662 = vpop.f32.mrb[0].mxu0
        %v5663 = vadd.f32 %v5550, %v5662
        %v5664 = vpop.f32.mrb[0].mxu0
        %v5665 = vadd.f32 %v5552, %v5664
        %v5666 = vpop.f32.mrb[0].mxu0
        %v5667 = vadd.f32 %v5554, %v5666
        %5668 = vmatprep.mubr.bf16.mxu0 %v2008
        %5669 = vmatmul.mubr.bf16.gmra.mrb[0].mxu0 %v2007
        %v5670 = vpop.f32.mrb[0].mxu0
        %v5671 = vadd.f32 %v5558, %v5670
        %v5672 = vpop.f32.mrb[0].mxu0
        %v5673 = vadd.f32 %v5560, %v5672
        %v5674 = vpop.f32.mrb[0].mxu0
        %v5675 = vadd.f32 %v5562, %v5674
        %v5676 = vpop.f32.mrb[0].mxu0
        %v5677 = vadd.f32 %v5564, %v5676
        %5678 = vmatprep.mubr.bf16.mxu0 %v2020
        %5679 = vmatmul.mubr.bf16.gmra.mrb[0].mxu0 %v2019
        %v5680 = vpop.f32.mrb[0].mxu0
        %v5681 = vadd.f32 %v5568, %v5680
        %v5682 = vpop.f32.mrb[0].mxu0
        %v5683 = vadd.f32 %v5570, %v5682
        %v5684 = vpop.f32.mrb[0].mxu0
        %v5685 = vadd.f32 %v5572, %v5684
        %v5686 = vpop.f32.mrb[0].mxu0
        %v5687 = vadd.f32 %v5574, %v5686
        %5688 = vmatprep.mubr.bf16.mxu0 %v2032
        %5689 = vmatmul.mubr.bf16.gmra.mrb[0].mxu0 %v2031
        %v5690 = vpop.f32.mrb[0].mxu0
        %v5691 = vadd.f32 %v5578, %v5690
        %v5692 = vpop.f32.mrb[0].mxu0
        %v5693 = vadd.f32 %v5580, %v5692
        %v5694 = vpop.f32.mrb[0].mxu0
        %v5695 = vadd.f32 %v5582, %v5694
        %v5696 = vpop.f32.mrb[0].mxu0
        %v5697 = vadd.f32 %v5584, %v5696
        %5698 = vmatprep.mubr.bf16.mxu0 %v2044
        %5699 = vmatmul.mubr.bf16.gmra.mrb[0].mxu0 %v2043
        %v5700 = vpop.f32.mrb[0].mxu0
        %v5701 = vadd.f32 %v5588, %v5700
        %v5702 = vpop.f32.mrb[0].mxu0
        %v5703 = vadd.f32 %v5590, %v5702
        %v5704 = vpop.f32.mrb[0].mxu0
        %v5705 = vadd.f32 %v5592, %v5704
        %v5706 = vpop.f32.mrb[0].mxu0
        %v5707 = vadd.f32 %v5594, %v5706
        %5708 = vmatprep.mubr.bf16.mxu0 %v2056
        %5709 = vmatmul.mubr.bf16.gmra.mrb[0].mxu0 %v2055
        %v5710 = vpop.f32.mrb[0].mxu0
        %v5711 = vadd.f32 %v5598, %v5710
        %v5712 = vpop.f32.mrb[0].mxu0
        %v5713 = vadd.f32 %v5600, %v5712
        %v5714 = vpop.f32.mrb[0].mxu0
        %v5715 = vadd.f32 %v5602, %v5714
        %v5716 = vpop.f32.mrb[0].mxu0
        %v5717 = vadd.f32 %v5604, %v5716
        %5718 = vmatprep.mubr.bf16.mxu0 %v2068
        %5719 = vmatmul.mubr.bf16.gmra.mrb[0].mxu0 %v2067
        %v5720 = vpop.f32.mrb[0].mxu0
        %v5721 = vadd.f32 %v5608, %v5720
        %v5722 = vpop.f32.mrb[0].mxu0
        %v5723 = vadd.f32 %v5610, %v5722
        %v5724 = vpop.f32.mrb[0].mxu0
        %v5725 = vadd.f32 %v5612, %v5724
        %v5726 = vpop.f32.mrb[0].mxu0
        %v5727 = vadd.f32 %v5614, %v5726
        %5728 = vdwg.mxu0
        %v5729 = vadd.f32 %v1906, %v4973
        %v5730 = vadd.f32 %v1907, %v4975
        %v5731 = vadd.f32 %v1908, %v5651
        %v5732 = vadd.f32 %v1909, %v5653
        %v5733 = vadd.f32 %v1910, %v4977
        %v5734 = vadd.f32 %v1911, %v4979
        %v5735 = vadd.f32 %v1912, %v5655
        %v5736 = vadd.f32 %v1913, %v5657
        %v5737 = vadd.f32 %v1914, %v4983
        %v5738 = vadd.f32 %v1915, %v4985
        %v5739 = vadd.f32 %v1916, %v5661
        %v5740 = vadd.f32 %v1917, %v5663
        %v5741 = vadd.f32 %v1918, %v4987
        %v5742 = vadd.f32 %v1919, %v4989
        %v5743 = vadd.f32 %v1920, %v5665
        %v5744 = vadd.f32 %v1921, %v5667
        %v5745 = vadd.f32 %v1922, %v4993
        %v5746 = vadd.f32 %v1923, %v4995
        %v5747 = vadd.f32 %v1924, %v5671
        %v5748 = vadd.f32 %v1925, %v5673
        %v5749 = vadd.f32 %v1926, %v4997
        %v5750 = vadd.f32 %v1927, %v4999
        %v5751 = vadd.f32 %v1928, %v5675
        %v5752 = vadd.f32 %v1929, %v5677
        %v5753 = vadd.f32 %v1930, %v5003
        %v5754 = vadd.f32 %v1931, %v5005
        %v5755 = vadd.f32 %v1932, %v5681
        %v5756 = vadd.f32 %v1933, %v5683
        %v5757 = vadd.f32 %v1934, %v5007
        %v5758 = vadd.f32 %v1935, %v5009
        %v5759 = vadd.f32 %v1936, %v5685
        %v5760 = vadd.f32 %v1937, %v5687
        %v5761 = vadd.f32 %v1938, %v5013
        %v5762 = vadd.f32 %v1939, %v5015
        %v5763 = vadd.f32 %v1940, %v5691
        %v5764 = vadd.f32 %v1941, %v5693
        %v5765 = vadd.f32 %v1942, %v5017
        %v5766 = vadd.f32 %v1943, %v5019
        %v5767 = vadd.f32 %v1944, %v5695
        %v5768 = vadd.f32 %v1945, %v5697
        %v5769 = vadd.f32 %v1946, %v5023
        %v5770 = vadd.f32 %v1947, %v5025
        %v5771 = vadd.f32 %v1948, %v5701
        %v5772 = vadd.f32 %v1949, %v5703
        %v5773 = vadd.f32 %v1950, %v5027
        %v5774 = vadd.f32 %v1951, %v5029
        %v5775 = vadd.f32 %v1952, %v5705
        %v5776 = vadd.f32 %v1953, %v5707
        %v5777 = vadd.f32 %v1954, %v5033
        %v5778 = vadd.f32 %v1955, %v5035
        %v5779 = vadd.f32 %v1956, %v5711
        %v5780 = vadd.f32 %v1957, %v5713
        %v5781 = vadd.f32 %v1958, %v5037
        %v5782 = vadd.f32 %v1959, %v5039
        %v5783 = vadd.f32 %v1960, %v5715
        %v5784 = vadd.f32 %v1961, %v5717
        %v5785 = vadd.f32 %v1962, %v5043
        %v5786 = vadd.f32 %v1963, %v5045
        %v5787 = vadd.f32 %v1964, %v5721
        %v5788 = vadd.f32 %v1965, %v5723
        %v5789 = vadd.f32 %v1966, %v5047
        %v5790 = vadd.f32 %v1967, %v5049
        %v5791 = vadd.f32 %v1968, %v5725
        %v5792 = vadd.f32 %v1969, %v5727
        %5793 = vst [vmem:[#allocation2] sm:$0xff] %v5729
        %5794 = vst [vmem:[#allocation2 + $0x8] sm:$0xff] %v5730
        %5795 = vst [vmem:[#allocation2 + $0x10] sm:$0xff] %v5731
        %5796 = vst [vmem:[#allocation2 + $0x18] sm:$0xff] %v5732
        %5797 = vst [vmem:[#allocation2 + $0x20] sm:$0xff] %v5733
        %5798 = vst [vmem:[#allocation2 + $0x28] sm:$0xff] %v5734
        %5799 = vst [vmem:[#allocation2 + $0x30] sm:$0xff] %v5735
        %5800 = vst [vmem:[#allocation2 + $0x38] sm:$0xff] %v5736
        %5801 = vst [vmem:[#allocation2 + $0x40] sm:$0xff] %v5737
        %5802 = vst [vmem:[#allocation2 + $0x48] sm:$0xff] %v5738
        %5803 = vst [vmem:[#allocation2 + $0x50] sm:$0xff] %v5739
        %5804 = vst [vmem:[#allocation2 + $0x58] sm:$0xff] %v5740
        %5805 = vst [vmem:[#allocation2 + $0x60] sm:$0xff] %v5741
        %5806 = vst [vmem:[#allocation2 + $0x68] sm:$0xff] %v5742
        %5807 = vst [vmem:[#allocation2 + $0x70] sm:$0xff] %v5743
        %5808 = vst [vmem:[#allocation2 + $0x78] sm:$0xff] %v5744
        %5809 = vst [vmem:[#allocation2 + $0x80] sm:$0xff] %v5745
        %5810 = vst [vmem:[#allocation2 + $0x88] sm:$0xff] %v5746
        %5811 = vst [vmem:[#allocation2 + $0x90] sm:$0xff] %v5747
        %5812 = vst [vmem:[#allocation2 + $0x98] sm:$0xff] %v5748
        %5813 = vst [vmem:[#allocation2 + $0xa0] sm:$0xff] %v5749
        %5814 = vst [vmem:[#allocation2 + $0xa8] sm:$0xff] %v5750
        %5815 = vst [vmem:[#allocation2 + $0xb0] sm:$0xff] %v5751
        %5816 = vst [vmem:[#allocation2 + $0xb8] sm:$0xff] %v5752
        %5817 = vst [vmem:[#allocation2 + $0xc0] sm:$0xff] %v5753
        %5818 = vst [vmem:[#allocation2 + $0xc8] sm:$0xff] %v5754
        %5819 = vst [vmem:[#allocation2 + $0xd0] sm:$0xff] %v5755
        %5820 = vst [vmem:[#allocation2 + $0xd8] sm:$0xff] %v5756
        %5821 = vst [vmem:[#allocation2 + $0xe0] sm:$0xff] %v5757
        %5822 = vst [vmem:[#allocation2 + $0xe8] sm:$0xff] %v5758
        %5823 = vst [vmem:[#allocation2 + $0xf0] sm:$0xff] %v5759
        %5824 = vst [vmem:[#allocation2 + $0xf8] sm:$0xff] %v5760
        %5825 = vst [vmem:[#allocation2 + $0x100] sm:$0xff] %v5761
        %5826 = vst [vmem:[#allocation2 + $0x108] sm:$0xff] %v5762
        %5827 = vst [vmem:[#allocation2 + $0x110] sm:$0xff] %v5763
        %5828 = vst [vmem:[#allocation2 + $0x118] sm:$0xff] %v5764
        %5829 = vst [vmem:[#allocation2 + $0x120] sm:$0xff] %v5765
        %5830 = vst [vmem:[#allocation2 + $0x128] sm:$0xff] %v5766
        %5831 = vst [vmem:[#allocation2 + $0x130] sm:$0xff] %v5767
        %5832 = vst [vmem:[#allocation2 + $0x138] sm:$0xff] %v5768
        %5833 = vst [vmem:[#allocation2 + $0x140] sm:$0xff] %v5769
        %5834 = vst [vmem:[#allocation2 + $0x148] sm:$0xff] %v5770
        %5835 = vst [vmem:[#allocation2 + $0x150] sm:$0xff] %v5771
        %5836 = vst [vmem:[#allocation2 + $0x158] sm:$0xff] %v5772
        %5837 = vst [vmem:[#allocation2 + $0x160] sm:$0xff] %v5773
        %5838 = vst [vmem:[#allocation2 + $0x168] sm:$0xff] %v5774
        %5839 = vst [vmem:[#allocation2 + $0x170] sm:$0xff] %v5775
        %5840 = vst [vmem:[#allocation2 + $0x178] sm:$0xff] %v5776
        %5841 = vst [vmem:[#allocation2 + $0x180] sm:$0xff] %v5777
        %5842 = vst [vmem:[#allocation2 + $0x188] sm:$0xff] %v5778
        %5843 = vst [vmem:[#allocation2 + $0x190] sm:$0xff] %v5779
        %5844 = vst [vmem:[#allocation2 + $0x198] sm:$0xff] %v5780
        %5845 = vst [vmem:[#allocation2 + $0x1a0] sm:$0xff] %v5781
        %5846 = vst [vmem:[#allocation2 + $0x1a8] sm:$0xff] %v5782
        %5847 = vst [vmem:[#allocation2 + $0x1b0] sm:$0xff] %v5783
        %5848 = vst [vmem:[#allocation2 + $0x1b8] sm:$0xff] %v5784
        %5849 = vst [vmem:[#allocation2 + $0x1c0] sm:$0xff] %v5785
        %5850 = vst [vmem:[#allocation2 + $0x1c8] sm:$0xff] %v5786
        %5851 = vst [vmem:[#allocation2 + $0x1d0] sm:$0xff] %v5787
        %5852 = vst [vmem:[#allocation2 + $0x1d8] sm:$0xff] %v5788
        %5853 = vst [vmem:[#allocation2 + $0x1e0] sm:$0xff] %v5789
        %5854 = vst [vmem:[#allocation2 + $0x1e8] sm:$0xff] %v5790
        %5855 = vst [vmem:[#allocation2 + $0x1f0] sm:$0xff] %v5791
        %5856 = vst [vmem:[#allocation2 + $0x1f8] sm:$0xff] %v5792
        %p5857 = scmp.eq.s32.totalorder %s28, 2
        // Predicated region
        $region61: #{tpu_custom_call.1} parent=35 // pred_check
          %p5858 = pneg %p5857
        $region62: #{tpu_custom_call.1} parent=35 // pred_check_branch
          %5860 = sbr.rel (%p5858) target = $region64
        $region63: #{tpu_custom_call.1} parent=35 // pred_region
          %v5861 = vld [vmem:[#allocation2] sm:$0xff]
          %v5862 = vld [vmem:[#allocation2 + $0x8] sm:$0xff]
          %v5863 = vld [vmem:[#allocation2 + $0x10] sm:$0xff]
          %v5864 = vld [vmem:[#allocation2 + $0x18] sm:$0xff]
          %v5865 = vld [vmem:[#allocation2 + $0x20] sm:$0xff]
          %v5866 = vld [vmem:[#allocation2 + $0x28] sm:$0xff]
          %v5867 = vld [vmem:[#allocation2 + $0x30] sm:$0xff]
          %v5868 = vld [vmem:[#allocation2 + $0x38] sm:$0xff]
          %v5869 = vld [vmem:[#allocation2 + $0x40] sm:$0xff]
          %v5870 = vld [vmem:[#allocation2 + $0x48] sm:$0xff]
          %v5871 = vld [vmem:[#allocation2 + $0x50] sm:$0xff]
          %v5872 = vld [vmem:[#allocation2 + $0x58] sm:$0xff]
          %v5873 = vld [vmem:[#allocation2 + $0x60] sm:$0xff]
          %v5874 = vld [vmem:[#allocation2 + $0x68] sm:$0xff]
          %v5875 = vld [vmem:[#allocation2 + $0x70] sm:$0xff]
          %v5876 = vld [vmem:[#allocation2 + $0x78] sm:$0xff]
          %v5877 = vld [vmem:[#allocation2 + $0x80] sm:$0xff]
          %v5878 = vld [vmem:[#allocation2 + $0x88] sm:$0xff]
          %v5879 = vld [vmem:[#allocation2 + $0x90] sm:$0xff]
          %v5880 = vld [vmem:[#allocation2 + $0x98] sm:$0xff]
          %v5881 = vld [vmem:[#allocation2 + $0xa0] sm:$0xff]
          %v5882 = vld [vmem:[#allocation2 + $0xa8] sm:$0xff]
          %v5883 = vld [vmem:[#allocation2 + $0xb0] sm:$0xff]
          %v5884 = vld [vmem:[#allocation2 + $0xb8] sm:$0xff]
          %v5885 = vld [vmem:[#allocation2 + $0xc0] sm:$0xff]
          %v5886 = vld [vmem:[#allocation2 + $0xc8] sm:$0xff]
          %v5887 = vld [vmem:[#allocation2 + $0xd0] sm:$0xff]
          %v5888 = vld [vmem:[#allocation2 + $0xd8] sm:$0xff]
          %v5889 = vld [vmem:[#allocation2 + $0xe0] sm:$0xff]
          %v5890 = vld [vmem:[#allocation2 + $0xe8] sm:$0xff]
          %v5891 = vld [vmem:[#allocation2 + $0xf0] sm:$0xff]
          %v5892 = vld [vmem:[#allocation2 + $0xf8] sm:$0xff]
          %v5893 = vld [vmem:[#allocation2 + $0x100] sm:$0xff]
          %v5894 = vld [vmem:[#allocation2 + $0x108] sm:$0xff]
          %v5895 = vld [vmem:[#allocation2 + $0x110] sm:$0xff]
          %v5896 = vld [vmem:[#allocation2 + $0x118] sm:$0xff]
          %v5897 = vld [vmem:[#allocation2 + $0x120] sm:$0xff]
          %v5898 = vld [vmem:[#allocation2 + $0x128] sm:$0xff]
          %v5899 = vld [vmem:[#allocation2 + $0x130] sm:$0xff]
          %v5900 = vld [vmem:[#allocation2 + $0x138] sm:$0xff]
          %v5901 = vld [vmem:[#allocation2 + $0x140] sm:$0xff]
          %v5902 = vld [vmem:[#allocation2 + $0x148] sm:$0xff]
          %v5903 = vld [vmem:[#allocation2 + $0x150] sm:$0xff]
          %v5904 = vld [vmem:[#allocation2 + $0x158] sm:$0xff]
          %v5905 = vld [vmem:[#allocation2 + $0x160] sm:$0xff]
          %v5906 = vld [vmem:[#allocation2 + $0x168] sm:$0xff]
          %v5907 = vld [vmem:[#allocation2 + $0x170] sm:$0xff]
          %v5908 = vld [vmem:[#allocation2 + $0x178] sm:$0xff]
          %v5909 = vld [vmem:[#allocation2 + $0x180] sm:$0xff]
          %v5910 = vld [vmem:[#allocation2 + $0x188] sm:$0xff]
          %v5911 = vld [vmem:[#allocation2 + $0x190] sm:$0xff]
          %v5912 = vld [vmem:[#allocation2 + $0x198] sm:$0xff]
          %v5913 = vld [vmem:[#allocation2 + $0x1a0] sm:$0xff]
          %v5914 = vld [vmem:[#allocation2 + $0x1a8] sm:$0xff]
          %v5915 = vld [vmem:[#allocation2 + $0x1b0] sm:$0xff]
          %v5916 = vld [vmem:[#allocation2 + $0x1b8] sm:$0xff]
          %v5917 = vld [vmem:[#allocation2 + $0x1c0] sm:$0xff]
          %v5918 = vld [vmem:[#allocation2 + $0x1c8] sm:$0xff]
          %v5919 = vld [vmem:[#allocation2 + $0x1d0] sm:$0xff]
          %v5920 = vld [vmem:[#allocation2 + $0x1d8] sm:$0xff]
          %v5921 = vld [vmem:[#allocation2 + $0x1e0] sm:$0xff]
          %v5922 = vld [vmem:[#allocation2 + $0x1e8] sm:$0xff]
          %v5923 = vld [vmem:[#allocation2 + $0x1f0] sm:$0xff]
          %v5924 = vld [vmem:[#allocation2 + $0x1f8] sm:$0xff]
          %v5925 = vadd.f32 %v5861, %v5865
          %v5926 = vadd.f32 %v5925, %v5869
          %v5927 = vadd.f32 %v5926, %v5873
          %v5928 = vadd.f32 %v5927, %v5877
          %v5929 = vadd.f32 %v5928, %v5881
          %v5930 = vadd.f32 %v5929, %v5885
          %v5931 = vadd.f32 %v5930, %v5889
          %v5932 = vadd.f32 %v5931, %v5893
          %v5933 = vadd.f32 %v5932, %v5897
          %v5934 = vadd.f32 %v5933, %v5901
          %v5935 = vadd.f32 %v5934, %v5905
          %v5936 = vadd.f32 %v5935, %v5909
          %v5937 = vadd.f32 %v5936, %v5913
          %v5938 = vadd.f32 %v5937, %v5917
          %v5939 = vadd.f32 %v5938, %v5921
          %v5940 = vrot.slane %v5939, 4
          %v5941 = vadd.f32 %v5939, %v5940
          %v5942 = vrot.slane %v5941, 2
          %v5943 = vadd.f32 %v5941, %v5942
          %v5944 = vrot.slane %v5943, 1
          %v5945 = vadd.f32 %v5943, %v5944
          %v5946 = vadd.f32 %v5862, %v5866
          %v5947 = vadd.f32 %v5946, %v5870
          %v5948 = vadd.f32 %v5947, %v5874
          %v5949 = vadd.f32 %v5948, %v5878
          %v5950 = vadd.f32 %v5949, %v5882
          %v5951 = vadd.f32 %v5950, %v5886
          %v5952 = vadd.f32 %v5951, %v5890
          %v5953 = vadd.f32 %v5952, %v5894
          %v5954 = vadd.f32 %v5953, %v5898
          %v5955 = vadd.f32 %v5954, %v5902
          %v5956 = vadd.f32 %v5955, %v5906
          %v5957 = vadd.f32 %v5956, %v5910
          %v5958 = vadd.f32 %v5957, %v5914
          %v5959 = vadd.f32 %v5958, %v5918
          %v5960 = vadd.f32 %v5959, %v5922
          %v5961 = vrot.slane %v5960, 4
          %v5962 = vadd.f32 %v5960, %v5961
          %v5963 = vrot.slane %v5962, 2
          %v5964 = vadd.f32 %v5962, %v5963
          %v5965 = vrot.slane %v5964, 1
          %v5966 = vadd.f32 %v5964, %v5965
          %v5967 = vadd.f32 %v5863, %v5867
          %v5968 = vadd.f32 %v5967, %v5871
          %v5969 = vadd.f32 %v5968, %v5875
          %v5970 = vadd.f32 %v5969, %v5879
          %v5971 = vadd.f32 %v5970, %v5883
          %v5972 = vadd.f32 %v5971, %v5887
          %v5973 = vadd.f32 %v5972, %v5891
          %v5974 = vadd.f32 %v5973, %v5895
          %v5975 = vadd.f32 %v5974, %v5899
          %v5976 = vadd.f32 %v5975, %v5903
          %v5977 = vadd.f32 %v5976, %v5907
          %v5978 = vadd.f32 %v5977, %v5911
          %v5979 = vadd.f32 %v5978, %v5915
          %v5980 = vadd.f32 %v5979, %v5919
          %v5981 = vadd.f32 %v5980, %v5923
          %v5982 = vrot.slane %v5981, 4
          %v5983 = vadd.f32 %v5981, %v5982
          %v5984 = vrot.slane %v5983, 2
          %v5985 = vadd.f32 %v5983, %v5984
          %v5986 = vrot.slane %v5985, 1
          %v5987 = vadd.f32 %v5985, %v5986
          %v5988 = vadd.f32 %v5864, %v5868
          %v5989 = vadd.f32 %v5988, %v5872
          %v5990 = vadd.f32 %v5989, %v5876
          %v5991 = vadd.f32 %v5990, %v5880
          %v5992 = vadd.f32 %v5991, %v5884
          %v5993 = vadd.f32 %v5992, %v5888
          %v5994 = vadd.f32 %v5993, %v5892
          %v5995 = vadd.f32 %v5994, %v5896
          %v5996 = vadd.f32 %v5995, %v5900
          %v5997 = vadd.f32 %v5996, %v5904
          %v5998 = vadd.f32 %v5997, %v5908
          %v5999 = vadd.f32 %v5998, %v5912
          %v6000 = vadd.f32 %v5999, %v5916
          %v6001 = vadd.f32 %v6000, %v5920
          %v6002 = vadd.f32 %v6001, %v5924
          %v6003 = vrot.slane %v6002, 4
          %v6004 = vadd.f32 %v6002, %v6003
          %v6005 = vrot.slane %v6004, 2
          %v6006 = vadd.f32 %v6004, %v6005
          %v6007 = vrot.slane %v6006, 1
          %v6008 = vadd.f32 %v6006, %v6007
          %v6009 = vmul.f32 %v5861, %v5861
          %v6010 = vmul.f32 %v5862, %v5862
          %v6011 = vmul.f32 %v5863, %v5863
          %v6012 = vmul.f32 %v5864, %v5864
          %v6013 = vmul.f32 %v5865, %v5865
          %v6014 = vmul.f32 %v5866, %v5866
          %v6015 = vmul.f32 %v5867, %v5867
          %v6016 = vmul.f32 %v5868, %v5868
          %v6017 = vmul.f32 %v5869, %v5869
          %v6018 = vmul.f32 %v5870, %v5870
          %v6019 = vmul.f32 %v5871, %v5871
          %v6020 = vmul.f32 %v5872, %v5872
          %v6021 = vmul.f32 %v5873, %v5873
          %v6022 = vmul.f32 %v5874, %v5874
          %v6023 = vmul.f32 %v5875, %v5875
          %v6024 = vmul.f32 %v5876, %v5876
          %v6025 = vmul.f32 %v5877, %v5877
          %v6026 = vmul.f32 %v5878, %v5878
          %v6027 = vmul.f32 %v5879, %v5879
          %v6028 = vmul.f32 %v5880, %v5880
          %v6029 = vmul.f32 %v5881, %v5881
          %v6030 = vmul.f32 %v5882, %v5882
          %v6031 = vmul.f32 %v5883, %v5883
          %v6032 = vmul.f32 %v5884, %v5884
          %v6033 = vmul.f32 %v5885, %v5885
          %v6034 = vmul.f32 %v5886, %v5886
          %v6035 = vmul.f32 %v5887, %v5887
          %v6036 = vmul.f32 %v5888, %v5888
          %v6037 = vmul.f32 %v5889, %v5889
          %v6038 = vmul.f32 %v5890, %v5890
          %v6039 = vmul.f32 %v5891, %v5891
          %v6040 = vmul.f32 %v5892, %v5892
          %v6041 = vmul.f32 %v5893, %v5893
          %v6042 = vmul.f32 %v5894, %v5894
          %v6043 = vmul.f32 %v5895, %v5895
          %v6044 = vmul.f32 %v5896, %v5896
          %v6045 = vmul.f32 %v5897, %v5897
          %v6046 = vmul.f32 %v5898, %v5898
          %v6047 = vmul.f32 %v5899, %v5899
          %v6048 = vmul.f32 %v5900, %v5900
          %v6049 = vmul.f32 %v5901, %v5901
          %v6050 = vmul.f32 %v5902, %v5902
          %v6051 = vmul.f32 %v5903, %v5903
          %v6052 = vmul.f32 %v5904, %v5904
          %v6053 = vmul.f32 %v5905, %v5905
          %v6054 = vmul.f32 %v5906, %v5906
          %v6055 = vmul.f32 %v5907, %v5907
          %v6056 = vmul.f32 %v5908, %v5908
          %v6057 = vmul.f32 %v5909, %v5909
          %v6058 = vmul.f32 %v5910, %v5910
          %v6059 = vmul.f32 %v5911, %v5911
          %v6060 = vmul.f32 %v5912, %v5912
          %v6061 = vmul.f32 %v5913, %v5913
          %v6062 = vmul.f32 %v5914, %v5914
          %v6063 = vmul.f32 %v5915, %v5915
          %v6064 = vmul.f32 %v5916, %v5916
          %v6065 = vmul.f32 %v5917, %v5917
          %v6066 = vmul.f32 %v5918, %v5918
          %v6067 = vmul.f32 %v5919, %v5919
          %v6068 = vmul.f32 %v5920, %v5920
          %v6069 = vmul.f32 %v5921, %v5921
          %v6070 = vmul.f32 %v5922, %v5922
          %v6071 = vmul.f32 %v5923, %v5923
          %v6072 = vmul.f32 %v5924, %v5924
          %v6073 = vadd.f32 %v6009, %v6013
          %v6074 = vadd.f32 %v6073, %v6017
          %v6075 = vadd.f32 %v6074, %v6021
          %v6076 = vadd.f32 %v6075, %v6025
          %v6077 = vadd.f32 %v6076, %v6029
          %v6078 = vadd.f32 %v6077, %v6033
          %v6079 = vadd.f32 %v6078, %v6037
          %v6080 = vadd.f32 %v6079, %v6041
          %v6081 = vadd.f32 %v6080, %v6045
          %v6082 = vadd.f32 %v6081, %v6049
          %v6083 = vadd.f32 %v6082, %v6053
          %v6084 = vadd.f32 %v6083, %v6057
          %v6085 = vadd.f32 %v6084, %v6061
          %v6086 = vadd.f32 %v6085, %v6065
          %v6087 = vadd.f32 %v6086, %v6069
          %v6088 = vrot.slane %v6087, 4
          %v6089 = vadd.f32 %v6087, %v6088
          %v6090 = vrot.slane %v6089, 2
          %v6091 = vadd.f32 %v6089, %v6090
          %v6092 = vrot.slane %v6091, 1
          %v6093 = vadd.f32 %v6091, %v6092
          %v6094 = vadd.f32 %v6010, %v6014
          %v6095 = vadd.f32 %v6094, %v6018
          %v6096 = vadd.f32 %v6095, %v6022
          %v6097 = vadd.f32 %v6096, %v6026
          %v6098 = vadd.f32 %v6097, %v6030
          %v6099 = vadd.f32 %v6098, %v6034
          %v6100 = vadd.f32 %v6099, %v6038
          %v6101 = vadd.f32 %v6100, %v6042
          %v6102 = vadd.f32 %v6101, %v6046
          %v6103 = vadd.f32 %v6102, %v6050
          %v6104 = vadd.f32 %v6103, %v6054
          %v6105 = vadd.f32 %v6104, %v6058
          %v6106 = vadd.f32 %v6105, %v6062
          %v6107 = vadd.f32 %v6106, %v6066
          %v6108 = vadd.f32 %v6107, %v6070
          %v6109 = vrot.slane %v6108, 4
          %v6110 = vadd.f32 %v6108, %v6109
          %v6111 = vrot.slane %v6110, 2
          %v6112 = vadd.f32 %v6110, %v6111
          %v6113 = vrot.slane %v6112, 1
          %v6114 = vadd.f32 %v6112, %v6113
          %v6115 = vadd.f32 %v6011, %v6015
          %v6116 = vadd.f32 %v6115, %v6019
          %v6117 = vadd.f32 %v6116, %v6023
          %v6118 = vadd.f32 %v6117, %v6027
          %v6119 = vadd.f32 %v6118, %v6031
          %v6120 = vadd.f32 %v6119, %v6035
          %v6121 = vadd.f32 %v6120, %v6039
          %v6122 = vadd.f32 %v6121, %v6043
          %v6123 = vadd.f32 %v6122, %v6047
          %v6124 = vadd.f32 %v6123, %v6051
          %v6125 = vadd.f32 %v6124, %v6055
          %v6126 = vadd.f32 %v6125, %v6059
          %v6127 = vadd.f32 %v6126, %v6063
          %v6128 = vadd.f32 %v6127, %v6067
          %v6129 = vadd.f32 %v6128, %v6071
          %v6130 = vrot.slane %v6129, 4
          %v6131 = vadd.f32 %v6129, %v6130
          %v6132 = vrot.slane %v6131, 2
          %v6133 = vadd.f32 %v6131, %v6132
          %v6134 = vrot.slane %v6133, 1
          %v6135 = vadd.f32 %v6133, %v6134
          %v6136 = vadd.f32 %v6012, %v6016
          %v6137 = vadd.f32 %v6136, %v6020
          %v6138 = vadd.f32 %v6137, %v6024
          %v6139 = vadd.f32 %v6138, %v6028
          %v6140 = vadd.f32 %v6139, %v6032
          %v6141 = vadd.f32 %v6140, %v6036
          %v6142 = vadd.f32 %v6141, %v6040
          %v6143 = vadd.f32 %v6142, %v6044
          %v6144 = vadd.f32 %v6143, %v6048
          %v6145 = vadd.f32 %v6144, %v6052
          %v6146 = vadd.f32 %v6145, %v6056
          %v6147 = vadd.f32 %v6146, %v6060
          %v6148 = vadd.f32 %v6147, %v6064
          %v6149 = vadd.f32 %v6148, %v6068
          %v6150 = vadd.f32 %v6149, %v6072
          %v6151 = vrot.slane %v6150, 4
          %v6152 = vadd.f32 %v6150, %v6151
          %v6153 = vrot.slane %v6152, 2
          %v6154 = vadd.f32 %v6152, %v6153
          %v6155 = vrot.slane %v6154, 1
          %v6156 = vadd.f32 %v6154, %v6155
          %v6157 = vmul.f32 %v5945, 0.0078125
          %v6158 = vmul.f32 %v5966, 0.0078125
          %v6159 = vmul.f32 %v5987, 0.0078125
          %v6160 = vmul.f32 %v6008, 0.0078125
          %v6161 = vmul.f32 %v6093, 0.0078125
          %v6162 = vmul.f32 %v6114, 0.0078125
          %v6163 = vmul.f32 %v6135, 0.0078125
          %v6164 = vmul.f32 %v6156, 0.0078125
          %v6165 = vmul.f32 %v6157, %v6157
          %v6166 = vmul.f32 %v6158, %v6158
          %v6167 = vmul.f32 %v6159, %v6159
          %v6168 = vmul.f32 %v6160, %v6160
          %v6169 = vsub.f32 %v6161, %v6165
          %v6170 = vsub.f32 %v6162, %v6166
          %v6171 = vsub.f32 %v6163, %v6167
          %v6172 = vsub.f32 %v6164, %v6168
          %v6173 = vld [vmem:[%s269] sm:$0xf]
          %v6174 = vadd.f32 %v6169, 1e-05
          %v6175 = vadd.f32 %v6170, 1e-05
          %v6176 = vadd.f32 %v6171, 1e-05
          %v6177 = vadd.f32 %v6172, 1e-05
          %v6178 = vrsqrt.pop %v6174
          %v6179 = vrsqrt.pop %v6175
          %v6180 = vrsqrt.pop %v6176
          %v6181 = vrsqrt.pop %v6177
          %v6186 = vcombine.low %v6178, %v6179
          %v6187 = vcombine.low %v6180, %v6181
          %v6189 = vunpack.c.l.s4 1966171168
          %v6190 = vunpack.c.0.s8 %v6189
          %v6191 = vlaneseq
          %v6192 = vshrl.u32 %v6191, 7
          %v6193 = vsub.s32 %v6190, %v6192
          %v6194 = vrot.slane %v6186, %v6193
          %v6196 = vunpack.c.l.s4 1966171168
          %v6197 = vunpack.c.0.s8 %v6196
          %v6198 = vlaneseq
          %v6199 = vshrl.u32 %v6198, 7
          %v6200 = vsub.s32 %v6197, %v6199
          %v6201 = vrot.slane %v6187, %v6200
          %v6202 = vcombine.low %v6194, %v6201
          %v6204 = vunpack.c.l.s4 1966171168
          %v6205 = vunpack.c.0.s8 %v6204
          %v6206 = vlaneseq
          %v6207 = vshrl.u32 %v6206, 7
          %v6208 = vsub.s32 %v6205, %v6207
          %v6209 = vrot.slane %v6202, %v6208
          %v6211 = vmul.f32 %v6173, %v6209
          %v6212 = vld [vmem:[%s278] sm:$0xf]
          %v6214 = vlaneseq
          %v6215 = vshrl.u32 %v6214, 7
          %v6216 = vsub.s32 0, %v6215
          %v6217 = vrot.slane %v6211, %v6216
          %v6218 = vlaneseq
          %v6219 = vshrl.u32 %v6218, 7
          %v6220 = vsub.s32 1, %v6219
          %v6221 = vrot.slane %v6211, %v6220
          %v6222 = vlaneseq
          %v6223 = vshrl.u32 %v6222, 7
          %v6224 = vsub.s32 2, %v6223
          %v6225 = vrot.slane %v6211, %v6224
          %v6226 = vlaneseq
          %v6227 = vshrl.u32 %v6226, 7
          %v6228 = vsub.s32 3, %v6227
          %v6229 = vrot.slane %v6211, %v6228
          %v6234 = vmul.f32 %v6157, %v6217
          %v6235 = vmul.f32 %v6158, %v6221
          %v6236 = vmul.f32 %v6159, %v6225
          %v6237 = vmul.f32 %v6160, %v6229
          %v6242 = vcombine.low %v6234, %v6235
          %v6243 = vcombine.low %v6236, %v6237
          %v6245 = vunpack.c.l.s4 1966171168
          %v6246 = vunpack.c.0.s8 %v6245
          %v6247 = vlaneseq
          %v6248 = vshrl.u32 %v6247, 7
          %v6249 = vsub.s32 %v6246, %v6248
          %v6250 = vrot.slane %v6242, %v6249
          %v6252 = vunpack.c.l.s4 1966171168
          %v6253 = vunpack.c.0.s8 %v6252
          %v6254 = vlaneseq
          %v6255 = vshrl.u32 %v6254, 7
          %v6256 = vsub.s32 %v6253, %v6255
          %v6257 = vrot.slane %v6243, %v6256
          %v6258 = vcombine.low %v6250, %v6257
          %v6260 = vunpack.c.l.s4 1966171168
          %v6261 = vunpack.c.0.s8 %v6260
          %v6262 = vlaneseq
          %v6263 = vshrl.u32 %v6262, 7
          %v6264 = vsub.s32 %v6261, %v6263
          %v6265 = vrot.slane %v6258, %v6264
          %v6267 = vsub.f32 %v6212, %v6265
          %v6268 = vmul.f32 %v5861, %v6217
          %v6269 = vmul.f32 %v5862, %v6221
          %v6270 = vmul.f32 %v5863, %v6225
          %v6271 = vmul.f32 %v5864, %v6229
          %v6272 = vmul.f32 %v5865, %v6217
          %v6273 = vmul.f32 %v5866, %v6221
          %v6274 = vmul.f32 %v5867, %v6225
          %v6275 = vmul.f32 %v5868, %v6229
          %v6276 = vmul.f32 %v5869, %v6217
          %v6277 = vmul.f32 %v5870, %v6221
          %v6278 = vmul.f32 %v5871, %v6225
          %v6279 = vmul.f32 %v5872, %v6229
          %v6280 = vmul.f32 %v5873, %v6217
          %v6281 = vmul.f32 %v5874, %v6221
          %v6282 = vmul.f32 %v5875, %v6225
          %v6283 = vmul.f32 %v5876, %v6229
          %v6284 = vmul.f32 %v5877, %v6217
          %v6285 = vmul.f32 %v5878, %v6221
          %v6286 = vmul.f32 %v5879, %v6225
          %v6287 = vmul.f32 %v5880, %v6229
          %v6288 = vmul.f32 %v5881, %v6217
          %v6289 = vmul.f32 %v5882, %v6221
          %v6290 = vmul.f32 %v5883, %v6225
          %v6291 = vmul.f32 %v5884, %v6229
          %v6292 = vmul.f32 %v5885, %v6217
          %v6293 = vmul.f32 %v5886, %v6221
          %v6294 = vmul.f32 %v5887, %v6225
          %v6295 = vmul.f32 %v5888, %v6229
          %v6296 = vmul.f32 %v5889, %v6217
          %v6297 = vmul.f32 %v5890, %v6221
          %v6298 = vmul.f32 %v5891, %v6225
          %v6299 = vmul.f32 %v5892, %v6229
          %v6300 = vmul.f32 %v5893, %v6217
          %v6301 = vmul.f32 %v5894, %v6221
          %v6302 = vmul.f32 %v5895, %v6225
          %v6303 = vmul.f32 %v5896, %v6229
          %v6304 = vmul.f32 %v5897, %v6217
          %v6305 = vmul.f32 %v5898, %v6221
          %v6306 = vmul.f32 %v5899, %v6225
          %v6307 = vmul.f32 %v5900, %v6229
          %v6308 = vmul.f32 %v5901, %v6217
          %v6309 = vmul.f32 %v5902, %v6221
          %v6310 = vmul.f32 %v5903, %v6225
          %v6311 = vmul.f32 %v5904, %v6229
          %v6312 = vmul.f32 %v5905, %v6217
          %v6313 = vmul.f32 %v5906, %v6221
          %v6314 = vmul.f32 %v5907, %v6225
          %v6315 = vmul.f32 %v5908, %v6229
          %v6316 = vmul.f32 %v5909, %v6217
          %v6317 = vmul.f32 %v5910, %v6221
          %v6318 = vmul.f32 %v5911, %v6225
          %v6319 = vmul.f32 %v5912, %v6229
          %v6320 = vmul.f32 %v5913, %v6217
          %v6321 = vmul.f32 %v5914, %v6221
          %v6322 = vmul.f32 %v5915, %v6225
          %v6323 = vmul.f32 %v5916, %v6229
          %v6324 = vmul.f32 %v5917, %v6217
          %v6325 = vmul.f32 %v5918, %v6221
          %v6326 = vmul.f32 %v5919, %v6225
          %v6327 = vmul.f32 %v5920, %v6229
          %v6328 = vmul.f32 %v5921, %v6217
          %v6329 = vmul.f32 %v5922, %v6221
          %v6330 = vmul.f32 %v5923, %v6225
          %v6331 = vmul.f32 %v5924, %v6229
          %v6333 = vlaneseq
          %v6334 = vshrl.u32 %v6333, 7
          %v6335 = vsub.s32 0, %v6334
          %v6336 = vrot.slane %v6267, %v6335
          %v6337 = vlaneseq
          %v6338 = vshrl.u32 %v6337, 7
          %v6339 = vsub.s32 1, %v6338
          %v6340 = vrot.slane %v6267, %v6339
          %v6341 = vlaneseq
          %v6342 = vshrl.u32 %v6341, 7
          %v6343 = vsub.s32 2, %v6342
          %v6344 = vrot.slane %v6267, %v6343
          %v6345 = vlaneseq
          %v6346 = vshrl.u32 %v6345, 7
          %v6347 = vsub.s32 3, %v6346
          %v6348 = vrot.slane %v6267, %v6347
          %v6353 = vadd.f32 %v6268, %v6336
          %v6354 = vadd.f32 %v6269, %v6340
          %v6355 = vadd.f32 %v6270, %v6344
          %v6356 = vadd.f32 %v6271, %v6348
          %v6357 = vadd.f32 %v6272, %v6336
          %v6358 = vadd.f32 %v6273, %v6340
          %v6359 = vadd.f32 %v6274, %v6344
          %v6360 = vadd.f32 %v6275, %v6348
          %v6361 = vadd.f32 %v6276, %v6336
          %v6362 = vadd.f32 %v6277, %v6340
          %v6363 = vadd.f32 %v6278, %v6344
          %v6364 = vadd.f32 %v6279, %v6348
          %v6365 = vadd.f32 %v6280, %v6336
          %v6366 = vadd.f32 %v6281, %v6340
          %v6367 = vadd.f32 %v6282, %v6344
          %v6368 = vadd.f32 %v6283, %v6348
          %v6369 = vadd.f32 %v6284, %v6336
          %v6370 = vadd.f32 %v6285, %v6340
          %v6371 = vadd.f32 %v6286, %v6344
          %v6372 = vadd.f32 %v6287, %v6348
          %v6373 = vadd.f32 %v6288, %v6336
          %v6374 = vadd.f32 %v6289, %v6340
          %v6375 = vadd.f32 %v6290, %v6344
          %v6376 = vadd.f32 %v6291, %v6348
          %v6377 = vadd.f32 %v6292, %v6336
          %v6378 = vadd.f32 %v6293, %v6340
          %v6379 = vadd.f32 %v6294, %v6344
          %v6380 = vadd.f32 %v6295, %v6348
          %v6381 = vadd.f32 %v6296, %v6336
          %v6382 = vadd.f32 %v6297, %v6340
          %v6383 = vadd.f32 %v6298, %v6344
          %v6384 = vadd.f32 %v6299, %v6348
          %v6385 = vadd.f32 %v6300, %v6336
          %v6386 = vadd.f32 %v6301, %v6340
          %v6387 = vadd.f32 %v6302, %v6344
          %v6388 = vadd.f32 %v6303, %v6348
          %v6389 = vadd.f32 %v6304, %v6336
          %v6390 = vadd.f32 %v6305, %v6340
          %v6391 = vadd.f32 %v6306, %v6344
          %v6392 = vadd.f32 %v6307, %v6348
          %v6393 = vadd.f32 %v6308, %v6336
          %v6394 = vadd.f32 %v6309, %v6340
          %v6395 = vadd.f32 %v6310, %v6344
          %v6396 = vadd.f32 %v6311, %v6348
          %v6397 = vadd.f32 %v6312, %v6336
          %v6398 = vadd.f32 %v6313, %v6340
          %v6399 = vadd.f32 %v6314, %v6344
          %v6400 = vadd.f32 %v6315, %v6348
          %v6401 = vadd.f32 %v6316, %v6336
          %v6402 = vadd.f32 %v6317, %v6340
          %v6403 = vadd.f32 %v6318, %v6344
          %v6404 = vadd.f32 %v6319, %v6348
          %v6405 = vadd.f32 %v6320, %v6336
          %v6406 = vadd.f32 %v6321, %v6340
          %v6407 = vadd.f32 %v6322, %v6344
          %v6408 = vadd.f32 %v6323, %v6348
          %v6409 = vadd.f32 %v6324, %v6336
          %v6410 = vadd.f32 %v6325, %v6340
          %v6411 = vadd.f32 %v6326, %v6344
          %v6412 = vadd.f32 %v6327, %v6348
          %v6413 = vadd.f32 %v6328, %v6336
          %v6414 = vadd.f32 %v6329, %v6340
          %v6415 = vadd.f32 %v6330, %v6344
          %v6416 = vadd.f32 %v6331, %v6348
          // Predicated region
          $region65: #{tpu_custom_call.1} parent=63 // pred_check
            %p6417 = pneg %p311
          $region66: #{tpu_custom_call.1} parent=63 // pred_check_branch
            %6419 = sbr.rel (%p6417) target = $region68
          $region67: #{tpu_custom_call.1} parent=63 // pred_region
            %v6420 = vmax.f32 %v6353, 0.0
            %v6421 = vmax.f32 %v6354, 0.0
            %v6422 = vmax.f32 %v6355, 0.0
            %v6423 = vmax.f32 %v6356, 0.0
            %v6424 = vmax.f32 %v6357, 0.0
            %v6425 = vmax.f32 %v6358, 0.0
            %v6426 = vmax.f32 %v6359, 0.0
            %v6427 = vmax.f32 %v6360, 0.0
            %v6428 = vmax.f32 %v6361, 0.0
            %v6429 = vmax.f32 %v6362, 0.0
            %v6430 = vmax.f32 %v6363, 0.0
            %v6431 = vmax.f32 %v6364, 0.0
            %v6432 = vmax.f32 %v6365, 0.0
            %v6433 = vmax.f32 %v6366, 0.0
            %v6434 = vmax.f32 %v6367, 0.0
            %v6435 = vmax.f32 %v6368, 0.0
            %v6436 = vmax.f32 %v6369, 0.0
            %v6437 = vmax.f32 %v6370, 0.0
            %v6438 = vmax.f32 %v6371, 0.0
            %v6439 = vmax.f32 %v6372, 0.0
            %v6440 = vmax.f32 %v6373, 0.0
            %v6441 = vmax.f32 %v6374, 0.0
            %v6442 = vmax.f32 %v6375, 0.0
            %v6443 = vmax.f32 %v6376, 0.0
            %v6444 = vmax.f32 %v6377, 0.0
            %v6445 = vmax.f32 %v6378, 0.0
            %v6446 = vmax.f32 %v6379, 0.0
            %v6447 = vmax.f32 %v6380, 0.0
            %v6448 = vmax.f32 %v6381, 0.0
            %v6449 = vmax.f32 %v6382, 0.0
            %v6450 = vmax.f32 %v6383, 0.0
            %v6451 = vmax.f32 %v6384, 0.0
            %v6452 = vmax.f32 %v6385, 0.0
            %v6453 = vmax.f32 %v6386, 0.0
            %v6454 = vmax.f32 %v6387, 0.0
            %v6455 = vmax.f32 %v6388, 0.0
            %v6456 = vmax.f32 %v6389, 0.0
            %v6457 = vmax.f32 %v6390, 0.0
            %v6458 = vmax.f32 %v6391, 0.0
            %v6459 = vmax.f32 %v6392, 0.0
            %v6460 = vmax.f32 %v6393, 0.0
            %v6461 = vmax.f32 %v6394, 0.0
            %v6462 = vmax.f32 %v6395, 0.0
            %v6463 = vmax.f32 %v6396, 0.0
            %v6464 = vmax.f32 %v6397, 0.0
            %v6465 = vmax.f32 %v6398, 0.0
            %v6466 = vmax.f32 %v6399, 0.0
            %v6467 = vmax.f32 %v6400, 0.0
            %v6468 = vmax.f32 %v6401, 0.0
            %v6469 = vmax.f32 %v6402, 0.0
            %v6470 = vmax.f32 %v6403, 0.0
            %v6471 = vmax.f32 %v6404, 0.0
            %v6472 = vmax.f32 %v6405, 0.0
            %v6473 = vmax.f32 %v6406, 0.0
            %v6474 = vmax.f32 %v6407, 0.0
            %v6475 = vmax.f32 %v6408, 0.0
            %v6476 = vmax.f32 %v6409, 0.0
            %v6477 = vmax.f32 %v6410, 0.0
            %v6478 = vmax.f32 %v6411, 0.0
            %v6479 = vmax.f32 %v6412, 0.0
            %v6480 = vmax.f32 %v6413, 0.0
            %v6481 = vmax.f32 %v6414, 0.0
            %v6482 = vmax.f32 %v6415, 0.0
            %v6483 = vmax.f32 %v6416, 0.0
            %v6484 = vpack.c.bf16 %v6424, %v6420
            %v6485 = vpack.c.bf16 %v6425, %v6421
            %v6486 = vpack.c.bf16 %v6426, %v6422
            %v6487 = vpack.c.bf16 %v6427, %v6423
            %v6488 = vpack.c.bf16 %v6432, %v6428
            %v6489 = vpack.c.bf16 %v6433, %v6429
            %v6490 = vpack.c.bf16 %v6434, %v6430
            %v6491 = vpack.c.bf16 %v6435, %v6431
            %v6492 = vpack.c.bf16 %v6440, %v6436
            %v6493 = vpack.c.bf16 %v6441, %v6437
            %v6494 = vpack.c.bf16 %v6442, %v6438
            %v6495 = vpack.c.bf16 %v6443, %v6439
            %v6496 = vpack.c.bf16 %v6448, %v6444
            %v6497 = vpack.c.bf16 %v6449, %v6445
            %v6498 = vpack.c.bf16 %v6450, %v6446
            %v6499 = vpack.c.bf16 %v6451, %v6447
            %v6500 = vpack.c.bf16 %v6456, %v6452
            %v6501 = vpack.c.bf16 %v6457, %v6453
            %v6502 = vpack.c.bf16 %v6458, %v6454
            %v6503 = vpack.c.bf16 %v6459, %v6455
            %v6504 = vpack.c.bf16 %v6464, %v6460
            %v6505 = vpack.c.bf16 %v6465, %v6461
            %v6506 = vpack.c.bf16 %v6466, %v6462
            %v6507 = vpack.c.bf16 %v6467, %v6463
            %v6508 = vpack.c.bf16 %v6472, %v6468
            %v6509 = vpack.c.bf16 %v6473, %v6469
            %v6510 = vpack.c.bf16 %v6474, %v6470
            %v6511 = vpack.c.bf16 %v6475, %v6471
            %v6512 = vpack.c.bf16 %v6480, %v6476
            %v6513 = vpack.c.bf16 %v6481, %v6477
            %v6514 = vpack.c.bf16 %v6482, %v6478
            %v6515 = vpack.c.bf16 %v6483, %v6479
            %vm6516 = vsmask.f32 256
            %v6518 = vshrl.u32 %v6484, 16
            %v6520 = vrot.slane %v6518, 7
            %v6521 = vshll.u32 %v6484, 16
            %v6523 = vor.u32 %v6520, %v6521
            %v6525 = vshrl.u32 %v6485, 16
            %v6527 = vrot.slane %v6525, 7
            %v6528 = vshll.u32 %v6485, 16
            %v6530 = vor.u32 %v6527, %v6528
            %v6532 = vshrl.u32 %v6486, 16
            %v6534 = vrot.slane %v6532, 7
            %v6535 = vshll.u32 %v6486, 16
            %v6537 = vor.u32 %v6534, %v6535
            %v6539 = vshrl.u32 %v6487, 16
            %v6541 = vrot.slane %v6539, 7
            %v6542 = vshll.u32 %v6487, 16
            %v6544 = vor.u32 %v6541, %v6542
            %v6546 = vshrl.u32 %v6488, 16
            %v6548 = vrot.slane %v6546, 7
            %v6549 = vshll.u32 %v6488, 16
            %v6551 = vor.u32 %v6548, %v6549
            %v6552 = vsel %vm6516, %v6520, %v6551
            %v6554 = vshrl.u32 %v6489, 16
            %v6556 = vrot.slane %v6554, 7
            %v6557 = vshll.u32 %v6489, 16
            %v6559 = vor.u32 %v6556, %v6557
            %v6560 = vsel %vm6516, %v6527, %v6559
            %v6562 = vshrl.u32 %v6490, 16
            %v6564 = vrot.slane %v6562, 7
            %v6565 = vshll.u32 %v6490, 16
            %v6567 = vor.u32 %v6564, %v6565
            %v6568 = vsel %vm6516, %v6534, %v6567
            %v6570 = vshrl.u32 %v6491, 16
            %v6572 = vrot.slane %v6570, 7
            %v6573 = vshll.u32 %v6491, 16
            %v6575 = vor.u32 %v6572, %v6573
            %v6576 = vsel %vm6516, %v6541, %v6575
            %v6578 = vshrl.u32 %v6492, 16
            %v6580 = vrot.slane %v6578, 7
            %v6581 = vshll.u32 %v6492, 16
            %v6583 = vor.u32 %v6580, %v6581
            %v6584 = vsel %vm6516, %v6548, %v6583
            %v6586 = vshrl.u32 %v6493, 16
            %v6588 = vrot.slane %v6586, 7
            %v6589 = vshll.u32 %v6493, 16
            %v6591 = vor.u32 %v6588, %v6589
            %v6592 = vsel %vm6516, %v6556, %v6591
            %v6594 = vshrl.u32 %v6494, 16
            %v6596 = vrot.slane %v6594, 7
            %v6597 = vshll.u32 %v6494, 16
            %v6599 = vor.u32 %v6596, %v6597
            %v6600 = vsel %vm6516, %v6564, %v6599
            %v6602 = vshrl.u32 %v6495, 16
            %v6604 = vrot.slane %v6602, 7
            %v6605 = vshll.u32 %v6495, 16
            %v6607 = vor.u32 %v6604, %v6605
            %v6608 = vsel %vm6516, %v6572, %v6607
            %v6610 = vshrl.u32 %v6496, 16
            %v6612 = vrot.slane %v6610, 7
            %v6613 = vshll.u32 %v6496, 16
            %v6615 = vor.u32 %v6612, %v6613
            %v6616 = vsel %vm6516, %v6580, %v6615
            %v6618 = vshrl.u32 %v6497, 16
            %v6620 = vrot.slane %v6618, 7
            %v6621 = vshll.u32 %v6497, 16
            %v6623 = vor.u32 %v6620, %v6621
            %v6624 = vsel %vm6516, %v6588, %v6623
            %v6626 = vshrl.u32 %v6498, 16
            %v6628 = vrot.slane %v6626, 7
            %v6629 = vshll.u32 %v6498, 16
            %v6631 = vor.u32 %v6628, %v6629
            %v6632 = vsel %vm6516, %v6596, %v6631
            %v6634 = vshrl.u32 %v6499, 16
            %v6636 = vrot.slane %v6634, 7
            %v6637 = vshll.u32 %v6499, 16
            %v6639 = vor.u32 %v6636, %v6637
            %v6640 = vsel %vm6516, %v6604, %v6639
            %vm6657 = vcmask 1040384
            %vm6658 = vmand %vm6657, %vm6516
            %v6659 = vsel %vm6658, 0, %v6523
            %v6660 = vsel %vm6658, 0, %v6530
            %v6661 = vsel %vm6658, 0, %v6537
            %v6662 = vsel %vm6658, 0, %v6544
            %vm6663 = vsmask.f32 7424
            %v6664 = vrot.slane %v6521, 1
            %v6665 = vor.u32 %v6518, %v6664
            %v6666 = vrot.slane %v6549, 1
            %v6667 = vsel %vm6663, %v6665, %v6666
            %v6668 = vrot.slane %v6528, 1
            %v6669 = vor.u32 %v6525, %v6668
            %v6670 = vrot.slane %v6557, 1
            %v6671 = vsel %vm6663, %v6669, %v6670
            %v6672 = vrot.slane %v6535, 1
            %v6673 = vor.u32 %v6532, %v6672
            %v6674 = vrot.slane %v6565, 1
            %v6675 = vsel %vm6663, %v6673, %v6674
            %v6676 = vrot.slane %v6542, 1
            %v6677 = vor.u32 %v6539, %v6676
            %v6678 = vrot.slane %v6573, 1
            %v6679 = vsel %vm6663, %v6677, %v6678
            %v6680 = vor.u32 %v6546, %v6666
            %v6681 = vrot.slane %v6581, 1
            %v6682 = vsel %vm6663, %v6680, %v6681
            %v6683 = vor.u32 %v6554, %v6670
            %v6684 = vrot.slane %v6589, 1
            %v6685 = vsel %vm6663, %v6683, %v6684
            %v6686 = vor.u32 %v6562, %v6674
            %v6687 = vrot.slane %v6597, 1
            %v6688 = vsel %vm6663, %v6686, %v6687
            %v6689 = vor.u32 %v6570, %v6678
            %v6690 = vrot.slane %v6605, 1
            %v6691 = vsel %vm6663, %v6689, %v6690
            %v6692 = vor.u32 %v6578, %v6681
            %v6693 = vrot.slane %v6613, 1
            %v6694 = vsel %vm6663, %v6692, %v6693
            %v6695 = vor.u32 %v6586, %v6684
            %v6696 = vrot.slane %v6621, 1
            %v6697 = vsel %vm6663, %v6695, %v6696
            %v6698 = vor.u32 %v6594, %v6687
            %v6699 = vrot.slane %v6629, 1
            %v6700 = vsel %vm6663, %v6698, %v6699
            %v6701 = vor.u32 %v6602, %v6690
            %v6702 = vrot.slane %v6637, 1
            %v6703 = vsel %vm6663, %v6701, %v6702
            %v6704 = vor.u32 %v6610, %v6693
            %v6705 = vor.u32 %v6618, %v6696
            %v6706 = vor.u32 %v6626, %v6699
            %v6707 = vor.u32 %v6634, %v6702
            %vm6724 = vcmask 1047552
            %vm6725 = vmand %vm6724, %vm6663
            %v6726 = vsel %vm6725, %v6704, 0
            %v6727 = vsel %vm6725, %v6705, 0
            %v6728 = vsel %vm6725, %v6706, 0
            %v6729 = vsel %vm6725, %v6707, 0
            %v6730 = vlaneseq
            %v6731 = vshrl.u32 %v6730, 7
            %v6732 = vadd.s32 %v6731, 8
            %v6733 = vadd.s32 %v6731, 16
            %v6734 = vadd.s32 %v6731, 24
            %v6735 = vadd.s32 %v6731, 32
            %v6736 = vadd.s32 %v6731, 40
            %v6737 = vadd.s32 %v6731, 48
            %v6738 = vadd.s32 %v6731, 56
            %vm6739 = vcmp.lt.s32.totalorder %v6731, 0
            %v6740 = vsub.s32 0, %v6731
            %v6741 = vsel %vm6739, %v6740, %v6731
            %v6742 = vshrl.u32 %v6741, 3
            %v6743 = vand.u32 %v6741, 7
            %v6744 = vsub.s32 0, %v6743
            %v6745 = vsel %vm6739, %v6744, %v6743
            %vm6746 = vcmp.lt.s32.totalorder %v6732, 0
            %v6747 = vsub.s32 0, %v6732
            %v6748 = vsel %vm6746, %v6747, %v6732
            %v6749 = vshrl.u32 %v6748, 3
            %v6750 = vand.u32 %v6748, 7
            %v6751 = vsub.s32 0, %v6750
            %v6752 = vsel %vm6746, %v6751, %v6750
            %vm6753 = vcmp.lt.s32.totalorder %v6733, 0
            %v6754 = vsub.s32 0, %v6733
            %v6755 = vsel %vm6753, %v6754, %v6733
            %v6756 = vshrl.u32 %v6755, 3
            %v6757 = vand.u32 %v6755, 7
            %v6758 = vsub.s32 0, %v6757
            %v6759 = vsel %vm6753, %v6758, %v6757
            %vm6760 = vcmp.lt.s32.totalorder %v6734, 0
            %v6761 = vsub.s32 0, %v6734
            %v6762 = vsel %vm6760, %v6761, %v6734
            %v6763 = vshrl.u32 %v6762, 3
            %v6764 = vand.u32 %v6762, 7
            %v6765 = vsub.s32 0, %v6764
            %v6766 = vsel %vm6760, %v6765, %v6764
            %vm6767 = vcmp.lt.s32.totalorder %v6735, 0
            %v6768 = vsub.s32 0, %v6735
            %v6769 = vsel %vm6767, %v6768, %v6735
            %v6770 = vshrl.u32 %v6769, 3
            %v6771 = vand.u32 %v6769, 7
            %v6772 = vsub.s32 0, %v6771
            %v6773 = vsel %vm6767, %v6772, %v6771
            %vm6774 = vcmp.lt.s32.totalorder %v6736, 0
            %v6775 = vsub.s32 0, %v6736
            %v6776 = vsel %vm6774, %v6775, %v6736
            %v6777 = vshrl.u32 %v6776, 3
            %v6778 = vand.u32 %v6776, 7
            %v6779 = vsub.s32 0, %v6778
            %v6780 = vsel %vm6774, %v6779, %v6778
            %vm6781 = vcmp.lt.s32.totalorder %v6737, 0
            %v6782 = vsub.s32 0, %v6737
            %v6783 = vsel %vm6781, %v6782, %v6737
            %v6784 = vshrl.u32 %v6783, 3
            %v6785 = vand.u32 %v6783, 7
            %v6786 = vsub.s32 0, %v6785
            %v6787 = vsel %vm6781, %v6786, %v6785
            %vm6788 = vcmp.lt.s32.totalorder %v6738, 0
            %v6789 = vsub.s32 0, %v6738
            %v6790 = vsel %vm6788, %v6789, %v6738
            %v6791 = vshrl.u32 %v6790, 3
            %v6792 = vand.u32 %v6790, 7
            %v6793 = vsub.s32 0, %v6792
            %v6794 = vsel %vm6788, %v6793, %v6792
            %vm6795 = vcmp.ne.s32.totalorder %v6745, 0
            %vm6796 = vcmp.ne.s32.totalorder %v6752, 0
            %vm6797 = vcmp.ne.s32.totalorder %v6759, 0
            %vm6798 = vcmp.ne.s32.totalorder %v6766, 0
            %vm6799 = vcmp.ne.s32.totalorder %v6773, 0
            %vm6800 = vcmp.ne.s32.totalorder %v6780, 0
            %vm6801 = vcmp.ne.s32.totalorder %v6787, 0
            %vm6802 = vcmp.ne.s32.totalorder %v6794, 0
            %vm6803 = vcmp.lt.s32.totalorder %v6745, 0
            %vm6804 = vcmp.lt.s32.totalorder %v6752, 0
            %vm6805 = vcmp.lt.s32.totalorder %v6759, 0
            %vm6806 = vcmp.lt.s32.totalorder %v6766, 0
            %vm6807 = vcmp.lt.s32.totalorder %v6773, 0
            %vm6808 = vcmp.lt.s32.totalorder %v6780, 0
            %vm6809 = vcmp.lt.s32.totalorder %v6787, 0
            %vm6810 = vcmp.lt.s32.totalorder %v6794, 0
            %vm6811 = vmand %vm6803, %vm6795
            %vm6812 = vmand %vm6804, %vm6796
            %vm6813 = vmand %vm6805, %vm6797
            %vm6814 = vmand %vm6806, %vm6798
            %vm6815 = vmand %vm6807, %vm6799
            %vm6816 = vmand %vm6808, %vm6800
            %vm6817 = vmand %vm6809, %vm6801
            %vm6818 = vmand %vm6810, %vm6802
            %v6819 = vadd.s32 %v6745, 8
            %v6820 = vadd.s32 %v6752, 8
            %v6821 = vadd.s32 %v6759, 8
            %v6822 = vadd.s32 %v6766, 8
            %v6823 = vadd.s32 %v6773, 8
            %v6824 = vadd.s32 %v6780, 8
            %v6825 = vadd.s32 %v6787, 8
            %v6826 = vadd.s32 %v6794, 8
            %v6827 = vsel %vm6811, %v6819, %v6745
            %v6828 = vsel %vm6812, %v6820, %v6752
            %v6829 = vsel %vm6813, %v6821, %v6759
            %v6830 = vsel %vm6814, %v6822, %v6766
            %v6831 = vsel %vm6815, %v6823, %v6773
            %v6832 = vsel %vm6816, %v6824, %v6780
            %v6833 = vsel %vm6817, %v6825, %v6787
            %v6834 = vsel %vm6818, %v6826, %v6794
            %vm6835 = vcmp.eq.s32.totalorder %v6827, 0
            %vm6836 = vcmp.eq.s32.totalorder %v6828, 0
            %vm6837 = vcmp.eq.s32.totalorder %v6829, 0
            %vm6838 = vcmp.eq.s32.totalorder %v6830, 0
            %vm6839 = vcmp.eq.s32.totalorder %v6831, 0
            %vm6840 = vcmp.eq.s32.totalorder %v6832, 0
            %vm6841 = vcmp.eq.s32.totalorder %v6833, 0
            %vm6842 = vcmp.eq.s32.totalorder %v6834, 0
            %v6843 = vsel %vm6835, 1, 0
            %v6844 = vsel %vm6836, 1, 0
            %v6845 = vsel %vm6837, 1, 0
            %v6846 = vsel %vm6838, 1, 0
            %v6847 = vsel %vm6839, 1, 0
            %v6848 = vsel %vm6840, 1, 0
            %v6849 = vsel %vm6841, 1, 0
            %v6850 = vsel %vm6842, 1, 0
            %vm6851 = vcmp.eq.s32.totalorder %v6843, 1
            %vm6852 = vcmp.eq.s32.totalorder %v6844, 1
            %vm6853 = vcmp.eq.s32.totalorder %v6845, 1
            %vm6854 = vcmp.eq.s32.totalorder %v6846, 1
            %vm6855 = vcmp.eq.s32.totalorder %v6847, 1
            %vm6856 = vcmp.eq.s32.totalorder %v6848, 1
            %vm6857 = vcmp.eq.s32.totalorder %v6849, 1
            %vm6858 = vcmp.eq.s32.totalorder %v6850, 1
            %vm6859 = vmpackc.low %vm6851, %vm6851
            %vm6860 = vmpackc.low %vm6852, %vm6852
            %vm6861 = vmpackc.low %vm6853, %vm6853
            %vm6862 = vmpackc.low %vm6854, %vm6854
            %vm6863 = vmpackc.low %vm6855, %vm6855
            %vm6864 = vmpackc.low %vm6856, %vm6856
            %vm6865 = vmpackc.low %vm6857, %vm6857
            %vm6866 = vmpackc.low %vm6858, %vm6858
            %v6867 = vsel %vm6859, 65537, 0
            %v6868 = vsel %vm6860, 65537, 0
            %v6869 = vsel %vm6861, 65537, 0
            %v6870 = vsel %vm6862, 65537, 0
            %v6871 = vsel %vm6863, 65537, 0
            %v6872 = vsel %vm6864, 65537, 0
            %v6873 = vsel %vm6865, 65537, 0
            %v6874 = vsel %vm6866, 65537, 0
            %v6875 = vunpack.c.l.b16 %v6867
            %v6876 = vunpack.c.l.b16 %v6868
            %v6877 = vunpack.c.l.b16 %v6869
            %v6878 = vunpack.c.l.b16 %v6870
            %v6879 = vunpack.c.l.b16 %v6871
            %v6880 = vunpack.c.l.b16 %v6872
            %v6881 = vunpack.c.l.b16 %v6873
            %v6882 = vunpack.c.l.b16 %v6874
            %v6883 = vpack.c.b16 %v6876, %v6875
            %v6884 = vpack.c.b16 %v6878, %v6877
            %v6885 = vpack.c.b16 %v6880, %v6879
            %v6886 = vpack.c.b16 %v6882, %v6881
            %vm6887 = vcmp.ne.s16.totalorder %v6883, 0
            %vm6888 = vcmp.ne.s16.totalorder %v6884, 0
            %vm6889 = vcmp.ne.s16.totalorder %v6885, 0
            %vm6890 = vcmp.ne.s16.totalorder %v6886, 0
            %v6891 = vsel %vm6887, 0, %v6659
            %v6892 = vsel %vm6887, 0, %v6660
            %v6893 = vsel %vm6887, 0, %v6661
            %v6894 = vsel %vm6887, 0, %v6662
            %v6895 = vsel %vm6888, 0, %v6552
            %v6896 = vsel %vm6888, 0, %v6560
            %v6897 = vsel %vm6888, 0, %v6568
            %v6898 = vsel %vm6888, 0, %v6576
            %v6899 = vsel %vm6889, 0, %v6584
            %v6900 = vsel %vm6889, 0, %v6592
            %v6901 = vsel %vm6889, 0, %v6600
            %v6902 = vsel %vm6889, 0, %v6608
            %v6903 = vsel %vm6890, 0, %v6616
            %v6904 = vsel %vm6890, 0, %v6624
            %v6905 = vsel %vm6890, 0, %v6632
            %v6906 = vsel %vm6890, 0, %v6640
            %vm6907 = vcmp.eq.s32.totalorder %v6827, 7
            %vm6908 = vcmp.eq.s32.totalorder %v6828, 7
            %vm6909 = vcmp.eq.s32.totalorder %v6829, 7
            %vm6910 = vcmp.eq.s32.totalorder %v6830, 7
            %vm6911 = vcmp.eq.s32.totalorder %v6831, 7
            %vm6912 = vcmp.eq.s32.totalorder %v6832, 7
            %vm6913 = vcmp.eq.s32.totalorder %v6833, 7
            %vm6914 = vcmp.eq.s32.totalorder %v6834, 7
            %v6915 = vsel %vm6907, 1, 0
            %v6916 = vsel %vm6908, 1, 0
            %v6917 = vsel %vm6909, 1, 0
            %v6918 = vsel %vm6910, 1, 0
            %v6919 = vsel %vm6911, 1, 0
            %v6920 = vsel %vm6912, 1, 0
            %v6921 = vsel %vm6913, 1, 0
            %v6922 = vsel %vm6914, 1, 0
            %vm6923 = vcmp.eq.s32.totalorder %v6915, 1
            %vm6924 = vcmp.eq.s32.totalorder %v6916, 1
            %vm6925 = vcmp.eq.s32.totalorder %v6917, 1
            %vm6926 = vcmp.eq.s32.totalorder %v6918, 1
            %vm6927 = vcmp.eq.s32.totalorder %v6919, 1
            %vm6928 = vcmp.eq.s32.totalorder %v6920, 1
            %vm6929 = vcmp.eq.s32.totalorder %v6921, 1
            %vm6930 = vcmp.eq.s32.totalorder %v6922, 1
            %vm6931 = vmpackc.low %vm6923, %vm6923
            %vm6932 = vmpackc.low %vm6924, %vm6924
            %vm6933 = vmpackc.low %vm6925, %vm6925
            %vm6934 = vmpackc.low %vm6926, %vm6926
            %vm6935 = vmpackc.low %vm6927, %vm6927
            %vm6936 = vmpackc.low %vm6928, %vm6928
            %vm6937 = vmpackc.low %vm6929, %vm6929
            %vm6938 = vmpackc.low %vm6930, %vm6930
            %v6939 = vsel %vm6931, 65537, 0
            %v6940 = vsel %vm6932, 65537, 0
            %v6941 = vsel %vm6933, 65537, 0
            %v6942 = vsel %vm6934, 65537, 0
            %v6943 = vsel %vm6935, 65537, 0
            %v6944 = vsel %vm6936, 65537, 0
            %v6945 = vsel %vm6937, 65537, 0
            %v6946 = vsel %vm6938, 65537, 0
            %v6947 = vunpack.c.l.b16 %v6939
            %v6948 = vunpack.c.l.b16 %v6940
            %v6949 = vunpack.c.l.b16 %v6941
            %v6950 = vunpack.c.l.b16 %v6942
            %v6951 = vunpack.c.l.b16 %v6943
            %v6952 = vunpack.c.l.b16 %v6944
            %v6953 = vunpack.c.l.b16 %v6945
            %v6954 = vunpack.c.l.b16 %v6946
            %v6955 = vpack.c.b16 %v6948, %v6947
            %v6956 = vpack.c.b16 %v6950, %v6949
            %v6957 = vpack.c.b16 %v6952, %v6951
            %v6958 = vpack.c.b16 %v6954, %v6953
            %vm6959 = vcmp.ne.s16.totalorder %v6955, 0
            %vm6960 = vcmp.ne.s16.totalorder %v6956, 0
            %vm6961 = vcmp.ne.s16.totalorder %v6957, 0
            %vm6962 = vcmp.ne.s16.totalorder %v6958, 0
            %v6963 = vsel %vm6959, 0, %v6667
            %v6964 = vsel %vm6959, 0, %v6671
            %v6965 = vsel %vm6959, 0, %v6675
            %v6966 = vsel %vm6959, 0, %v6679
            %v6967 = vsel %vm6960, 0, %v6682
            %v6968 = vsel %vm6960, 0, %v6685
            %v6969 = vsel %vm6960, 0, %v6688
            %v6970 = vsel %vm6960, 0, %v6691
            %v6971 = vsel %vm6961, 0, %v6694
            %v6972 = vsel %vm6961, 0, %v6697
            %v6973 = vsel %vm6961, 0, %v6700
            %v6974 = vsel %vm6961, 0, %v6703
            %v6975 = vsel %vm6962, 0, %v6726
            %v6976 = vsel %vm6962, 0, %v6727
            %v6977 = vsel %vm6962, 0, %v6728
            %v6978 = vsel %vm6962, 0, %v6729
            %s6979 = scalar_lea.vmem [#allocation3], 768
            %6980 = vst [vmem:[%s6979] sm:$0xff] %v6891
            %6981 = vst [vmem:[%s6979 + $0x8] sm:$0xff] %v6892
            %6982 = vst [vmem:[%s6979 + $0x10] sm:$0xff] %v6893
            %6983 = vst [vmem:[%s6979 + $0x18] sm:$0xff] %v6894
            %6984 = vst [vmem:[%s6979 + $0x20] sm:$0xff] %v6484
            %6985 = vst [vmem:[%s6979 + $0x28] sm:$0xff] %v6485
            %6986 = vst [vmem:[%s6979 + $0x30] sm:$0xff] %v6486
            %6987 = vst [vmem:[%s6979 + $0x38] sm:$0xff] %v6487
            %6988 = vst [vmem:[%s6979 + $0x40] sm:$0xff] %v6963
            %6989 = vst [vmem:[%s6979 + $0x48] sm:$0xff] %v6964
            %6990 = vst [vmem:[%s6979 + $0x50] sm:$0xff] %v6965
            %6991 = vst [vmem:[%s6979 + $0x58] sm:$0xff] %v6966
            %6992 = vst [vmem:[%s6979 + $0x60] sm:$0xff] %v6895
            %6993 = vst [vmem:[%s6979 + $0x68] sm:$0xff] %v6896
            %6994 = vst [vmem:[%s6979 + $0x70] sm:$0xff] %v6897
            %6995 = vst [vmem:[%s6979 + $0x78] sm:$0xff] %v6898
            %6996 = vst [vmem:[%s6979 + $0x80] sm:$0xff] %v6488
            %6997 = vst [vmem:[%s6979 + $0x88] sm:$0xff] %v6489
            %6998 = vst [vmem:[%s6979 + $0x90] sm:$0xff] %v6490
            %6999 = vst [vmem:[%s6979 + $0x98] sm:$0xff] %v6491
            %7000 = vst [vmem:[%s6979 + $0xa0] sm:$0xff] %v6967
            %7001 = vst [vmem:[%s6979 + $0xa8] sm:$0xff] %v6968
            %7002 = vst [vmem:[%s6979 + $0xb0] sm:$0xff] %v6969
            %7003 = vst [vmem:[%s6979 + $0xb8] sm:$0xff] %v6970
            %7004 = vst [vmem:[%s6979 + $0xc0] sm:$0xff] %v6899
            %7005 = vst [vmem:[%s6979 + $0xc8] sm:$0xff] %v6900
            %7006 = vst [vmem:[%s6979 + $0xd0] sm:$0xff] %v6901
            %7007 = vst [vmem:[%s6979 + $0xd8] sm:$0xff] %v6902
            %7008 = vst [vmem:[%s6979 + $0xe0] sm:$0xff] %v6492
            %7009 = vst [vmem:[%s6979 + $0xe8] sm:$0xff] %v6493
            %7010 = vst [vmem:[%s6979 + $0xf0] sm:$0xff] %v6494
            %7011 = vst [vmem:[%s6979 + $0xf8] sm:$0xff] %v6495
            %7012 = vst [vmem:[%s6979 + $0x100] sm:$0xff] %v6971
            %7013 = vst [vmem:[%s6979 + $0x108] sm:$0xff] %v6972
            %7014 = vst [vmem:[%s6979 + $0x110] sm:$0xff] %v6973
            %7015 = vst [vmem:[%s6979 + $0x118] sm:$0xff] %v6974
            %7016 = vst [vmem:[%s6979 + $0x120] sm:$0xff] %v6903
            %7017 = vst [vmem:[%s6979 + $0x128] sm:$0xff] %v6904
            %7018 = vst [vmem:[%s6979 + $0x130] sm:$0xff] %v6905
            %7019 = vst [vmem:[%s6979 + $0x138] sm:$0xff] %v6906
            %7020 = vst [vmem:[%s6979 + $0x140] sm:$0xff] %v6496
            %7021 = vst [vmem:[%s6979 + $0x148] sm:$0xff] %v6497
            %7022 = vst [vmem:[%s6979 + $0x150] sm:$0xff] %v6498
            %7023 = vst [vmem:[%s6979 + $0x158] sm:$0xff] %v6499
            %7024 = vst [vmem:[%s6979 + $0x160] sm:$0xff] %v6975
            %7025 = vst [vmem:[%s6979 + $0x168] sm:$0xff] %v6976
            %7026 = vst [vmem:[%s6979 + $0x170] sm:$0xff] %v6977
            %7027 = vst [vmem:[%s6979 + $0x178] sm:$0xff] %v6978
            %vm7076 = vcmask 1043456
            %v7077 = vrot.slane %v6891, 4
            %v7078 = vrot.slane %v6892, 4
            %v7079 = vrot.slane %v6893, 4
            %v7080 = vrot.slane %v6894, 4
            %v7081 = vrot.slane %v6484, 4
            %v7082 = vrot.slane %v6485, 4
            %v7083 = vrot.slane %v6486, 4
            %v7084 = vrot.slane %v6487, 4
            %v7085 = vrot.slane %v6963, 4
            %v7086 = vrot.slane %v6964, 4
            %v7087 = vrot.slane %v6965, 4
            %v7088 = vrot.slane %v6966, 4
            %v7089 = vrot.slane %v6895, 4
            %v7090 = vsel %vm7076, %v7077, %v7089
            %v7091 = vrot.slane %v6896, 4
            %v7092 = vsel %vm7076, %v7078, %v7091
            %v7093 = vrot.slane %v6897, 4
            %v7094 = vsel %vm7076, %v7079, %v7093
            %v7095 = vrot.slane %v6898, 4
            %v7096 = vsel %vm7076, %v7080, %v7095
            %v7097 = vrot.slane %v6488, 4
            %v7098 = vsel %vm7076, %v7081, %v7097
            %v7099 = vrot.slane %v6489, 4
            %v7100 = vsel %vm7076, %v7082, %v7099
            %v7101 = vrot.slane %v6490, 4
            %v7102 = vsel %vm7076, %v7083, %v7101
            %v7103 = vrot.slane %v6491, 4
            %v7104 = vsel %vm7076, %v7084, %v7103
            %v7105 = vrot.slane %v6967, 4
            %v7106 = vsel %vm7076, %v7085, %v7105
            %v7107 = vrot.slane %v6968, 4
            %v7108 = vsel %vm7076, %v7086, %v7107
            %v7109 = vrot.slane %v6969, 4
            %v7110 = vsel %vm7076, %v7087, %v7109
            %v7111 = vrot.slane %v6970, 4
            %v7112 = vsel %vm7076, %v7088, %v7111
            %v7113 = vrot.slane %v6899, 4
            %v7114 = vsel %vm7076, %v7089, %v7113
            %v7115 = vrot.slane %v6900, 4
            %v7116 = vsel %vm7076, %v7091, %v7115
            %v7117 = vrot.slane %v6901, 4
            %v7118 = vsel %vm7076, %v7093, %v7117
            %v7119 = vrot.slane %v6902, 4
            %v7120 = vsel %vm7076, %v7095, %v7119
            %v7121 = vrot.slane %v6492, 4
            %v7122 = vsel %vm7076, %v7097, %v7121
            %v7123 = vrot.slane %v6493, 4
            %v7124 = vsel %vm7076, %v7099, %v7123
            %v7125 = vrot.slane %v6494, 4
            %v7126 = vsel %vm7076, %v7101, %v7125
            %v7127 = vrot.slane %v6495, 4
            %v7128 = vsel %vm7076, %v7103, %v7127
            %v7129 = vrot.slane %v6971, 4
            %v7130 = vsel %vm7076, %v7105, %v7129
            %v7131 = vrot.slane %v6972, 4
            %v7132 = vsel %vm7076, %v7107, %v7131
            %v7133 = vrot.slane %v6973, 4
            %v7134 = vsel %vm7076, %v7109, %v7133
            %v7135 = vrot.slane %v6974, 4
            %v7136 = vsel %vm7076, %v7111, %v7135
            %v7137 = vrot.slane %v6903, 4
            %v7138 = vsel %vm7076, %v7113, %v7137
            %v7139 = vrot.slane %v6904, 4
            %v7140 = vsel %vm7076, %v7115, %v7139
            %v7141 = vrot.slane %v6905, 4
            %v7142 = vsel %vm7076, %v7117, %v7141
            %v7143 = vrot.slane %v6906, 4
            %v7144 = vsel %vm7076, %v7119, %v7143
            %v7145 = vrot.slane %v6496, 4
            %v7146 = vsel %vm7076, %v7121, %v7145
            %v7147 = vrot.slane %v6497, 4
            %v7148 = vsel %vm7076, %v7123, %v7147
            %v7149 = vrot.slane %v6498, 4
            %v7150 = vsel %vm7076, %v7125, %v7149
            %v7151 = vrot.slane %v6499, 4
            %v7152 = vsel %vm7076, %v7127, %v7151
            %v7153 = vrot.slane %v6975, 4
            %v7154 = vsel %vm7076, %v7129, %v7153
            %v7155 = vrot.slane %v6976, 4
            %v7156 = vsel %vm7076, %v7131, %v7155
            %v7157 = vrot.slane %v6977, 4
            %v7158 = vsel %vm7076, %v7133, %v7157
            %v7159 = vrot.slane %v6978, 4
            %v7160 = vsel %vm7076, %v7135, %v7159
            %7209 = vst [vmem:[#allocation3] sm:$0xf0] %v7077
            %7210 = vst [vmem:[#allocation3 + $0x8] sm:$0xf0] %v7078
            %7211 = vst [vmem:[#allocation3 + $0x10] sm:$0xf0] %v7079
            %7212 = vst [vmem:[#allocation3 + $0x18] sm:$0xf0] %v7080
            %7213 = vst [vmem:[#allocation3 + $0x20] sm:$0xf0] %v7081
            %7214 = vst [vmem:[#allocation3 + $0x28] sm:$0xf0] %v7082
            %7215 = vst [vmem:[#allocation3 + $0x30] sm:$0xf0] %v7083
            %7216 = vst [vmem:[#allocation3 + $0x38] sm:$0xf0] %v7084
            %7217 = vst [vmem:[#allocation3 + $0x40] sm:$0xf0] %v7085
            %7218 = vst [vmem:[#allocation3 + $0x48] sm:$0xf0] %v7086
            %7219 = vst [vmem:[#allocation3 + $0x50] sm:$0xf0] %v7087
            %7220 = vst [vmem:[#allocation3 + $0x58] sm:$0xf0] %v7088
            %7221 = vst [vmem:[#allocation3 + $0x60] sm:$0xff] %v7090
            %7222 = vst [vmem:[#allocation3 + $0x68] sm:$0xff] %v7092
            %7223 = vst [vmem:[#allocation3 + $0x70] sm:$0xff] %v7094
            %7224 = vst [vmem:[#allocation3 + $0x78] sm:$0xff] %v7096
            %7225 = vst [vmem:[#allocation3 + $0x80] sm:$0xff] %v7098
            %7226 = vst [vmem:[#allocation3 + $0x88] sm:$0xff] %v7100
            %7227 = vst [vmem:[#allocation3 + $0x90] sm:$0xff] %v7102
            %7228 = vst [vmem:[#allocation3 + $0x98] sm:$0xff] %v7104
            %7229 = vst [vmem:[#allocation3 + $0xa0] sm:$0xff] %v7106
            %7230 = vst [vmem:[#allocation3 + $0xa8] sm:$0xff] %v7108
            %7231 = vst [vmem:[#allocation3 + $0xb0] sm:$0xff] %v7110
            %7232 = vst [vmem:[#allocation3 + $0xb8] sm:$0xff] %v7112
            %7233 = vst [vmem:[#allocation3 + $0xc0] sm:$0xff] %v7114
            %7234 = vst [vmem:[#allocation3 + $0xc8] sm:$0xff] %v7116
            %7235 = vst [vmem:[#allocation3 + $0xd0] sm:$0xff] %v7118
            %7236 = vst [vmem:[#allocation3 + $0xd8] sm:$0xff] %v7120
            %7237 = vst [vmem:[#allocation3 + $0xe0] sm:$0xff] %v7122
            %7238 = vst [vmem:[#allocation3 + $0xe8] sm:$0xff] %v7124
            %7239 = vst [vmem:[#allocation3 + $0xf0] sm:$0xff] %v7126
            %7240 = vst [vmem:[#allocation3 + $0xf8] sm:$0xff] %v7128
            %7241 = vst [vmem:[#allocation3 + $0x100] sm:$0xff] %v7130
            %7242 = vst [vmem:[#allocation3 + $0x108] sm:$0xff] %v7132
            %7243 = vst [vmem:[#allocation3 + $0x110] sm:$0xff] %v7134
            %7244 = vst [vmem:[#allocation3 + $0x118] sm:$0xff] %v7136
            %7245 = vst [vmem:[#allocation3 + $0x120] sm:$0xff] %v7138
            %7246 = vst [vmem:[#allocation3 + $0x128] sm:$0xff] %v7140
            %7247 = vst [vmem:[#allocation3 + $0x130] sm:$0xff] %v7142
            %7248 = vst [vmem:[#allocation3 + $0x138] sm:$0xff] %v7144
            %7249 = vst [vmem:[#allocation3 + $0x140] sm:$0xff] %v7146
            %7250 = vst [vmem:[#allocation3 + $0x148] sm:$0xff] %v7148
            %7251 = vst [vmem:[#allocation3 + $0x150] sm:$0xff] %v7150
            %7252 = vst [vmem:[#allocation3 + $0x158] sm:$0xff] %v7152
            %7253 = vst [vmem:[#allocation3 + $0x160] sm:$0xff] %v7154
            %7254 = vst [vmem:[#allocation3 + $0x168] sm:$0xff] %v7156
            %7255 = vst [vmem:[#allocation3 + $0x170] sm:$0xff] %v7158
            %7256 = vst [vmem:[#allocation3 + $0x178] sm:$0xff] %v7160
            %s7269 = scalar_lea.vmem [#allocation3], 1536
            %7270 = vst [vmem:[%s7269] sm:$0xff] %v7090
            %7271 = vst [vmem:[%s7269 + $0x8] sm:$0xff] %v7092
            %7272 = vst [vmem:[%s7269 + $0x10] sm:$0xff] %v7094
            %7273 = vst [vmem:[%s7269 + $0x18] sm:$0xff] %v7096
            %7274 = vst [vmem:[%s7269 + $0x20] sm:$0xff] %v7098
            %7275 = vst [vmem:[%s7269 + $0x28] sm:$0xff] %v7100
            %7276 = vst [vmem:[%s7269 + $0x30] sm:$0xff] %v7102
            %7277 = vst [vmem:[%s7269 + $0x38] sm:$0xff] %v7104
            %7278 = vst [vmem:[%s7269 + $0x40] sm:$0xff] %v7106
            %7279 = vst [vmem:[%s7269 + $0x48] sm:$0xff] %v7108
            %7280 = vst [vmem:[%s7269 + $0x50] sm:$0xff] %v7110
            %7281 = vst [vmem:[%s7269 + $0x58] sm:$0xff] %v7112
            %7282 = vst [vmem:[%s7269 + $0x60] sm:$0xff] %v7114
            %7283 = vst [vmem:[%s7269 + $0x68] sm:$0xff] %v7116
            %7284 = vst [vmem:[%s7269 + $0x70] sm:$0xff] %v7118
            %7285 = vst [vmem:[%s7269 + $0x78] sm:$0xff] %v7120
            %7286 = vst [vmem:[%s7269 + $0x80] sm:$0xff] %v7122
            %7287 = vst [vmem:[%s7269 + $0x88] sm:$0xff] %v7124
            %7288 = vst [vmem:[%s7269 + $0x90] sm:$0xff] %v7126
            %7289 = vst [vmem:[%s7269 + $0x98] sm:$0xff] %v7128
            %7290 = vst [vmem:[%s7269 + $0xa0] sm:$0xff] %v7130
            %7291 = vst [vmem:[%s7269 + $0xa8] sm:$0xff] %v7132
            %7292 = vst [vmem:[%s7269 + $0xb0] sm:$0xff] %v7134
            %7293 = vst [vmem:[%s7269 + $0xb8] sm:$0xff] %v7136
            %7294 = vst [vmem:[%s7269 + $0xc0] sm:$0xff] %v7138
            %7295 = vst [vmem:[%s7269 + $0xc8] sm:$0xff] %v7140
            %7296 = vst [vmem:[%s7269 + $0xd0] sm:$0xff] %v7142
            %7297 = vst [vmem:[%s7269 + $0xd8] sm:$0xff] %v7144
            %7298 = vst [vmem:[%s7269 + $0xe0] sm:$0xff] %v7146
            %7299 = vst [vmem:[%s7269 + $0xe8] sm:$0xff] %v7148
            %7300 = vst [vmem:[%s7269 + $0xf0] sm:$0xff] %v7150
            %7301 = vst [vmem:[%s7269 + $0xf8] sm:$0xff] %v7152
            %7302 = vst [vmem:[%s7269 + $0x100] sm:$0xff] %v7154
            %7303 = vst [vmem:[%s7269 + $0x108] sm:$0xff] %v7156
            %7304 = vst [vmem:[%s7269 + $0x110] sm:$0xff] %v7158
            %7305 = vst [vmem:[%s7269 + $0x118] sm:$0xff] %v7160
            %7306 = vst [vmem:[%s7269 + $0x120] sm:$0xf] %v7137
            %7307 = vst [vmem:[%s7269 + $0x128] sm:$0xf] %v7139
            %7308 = vst [vmem:[%s7269 + $0x130] sm:$0xf] %v7141
            %7309 = vst [vmem:[%s7269 + $0x138] sm:$0xf] %v7143
            %7310 = vst [vmem:[%s7269 + $0x140] sm:$0xf] %v7145
            %7311 = vst [vmem:[%s7269 + $0x148] sm:$0xf] %v7147
            %7312 = vst [vmem:[%s7269 + $0x150] sm:$0xf] %v7149
            %7313 = vst [vmem:[%s7269 + $0x158] sm:$0xf] %v7151
            %7314 = vst [vmem:[%s7269 + $0x160] sm:$0xf] %v7153
            %7315 = vst [vmem:[%s7269 + $0x168] sm:$0xf] %v7155
            %7316 = vst [vmem:[%s7269 + $0x170] sm:$0xf] %v7157
            %7317 = vst [vmem:[%s7269 + $0x178] sm:$0xf] %v7159
            %v7319 = vshrl.u32 %v6500, 16
            %v7321 = vrot.slane %v7319, 7
            %v7322 = vshll.u32 %v6500, 16
            %v7324 = vor.u32 %v7321, %v7322
            %v7326 = vshrl.u32 %v6501, 16
            %v7328 = vrot.slane %v7326, 7
            %v7329 = vshll.u32 %v6501, 16
            %v7331 = vor.u32 %v7328, %v7329
            %v7333 = vshrl.u32 %v6502, 16
            %v7335 = vrot.slane %v7333, 7
            %v7336 = vshll.u32 %v6502, 16
            %v7338 = vor.u32 %v7335, %v7336
            %v7340 = vshrl.u32 %v6503, 16
            %v7342 = vrot.slane %v7340, 7
            %v7343 = vshll.u32 %v6503, 16
            %v7345 = vor.u32 %v7342, %v7343
            %v7347 = vshrl.u32 %v6504, 16
            %v7349 = vrot.slane %v7347, 7
            %v7350 = vshll.u32 %v6504, 16
            %v7352 = vor.u32 %v7349, %v7350
            %v7353 = vsel %vm6516, %v7321, %v7352
            %v7355 = vshrl.u32 %v6505, 16
            %v7357 = vrot.slane %v7355, 7
            %v7358 = vshll.u32 %v6505, 16
            %v7360 = vor.u32 %v7357, %v7358
            %v7361 = vsel %vm6516, %v7328, %v7360
            %v7363 = vshrl.u32 %v6506, 16
            %v7365 = vrot.slane %v7363, 7
            %v7366 = vshll.u32 %v6506, 16
            %v7368 = vor.u32 %v7365, %v7366
            %v7369 = vsel %vm6516, %v7335, %v7368
            %v7371 = vshrl.u32 %v6507, 16
            %v7373 = vrot.slane %v7371, 7
            %v7374 = vshll.u32 %v6507, 16
            %v7376 = vor.u32 %v7373, %v7374
            %v7377 = vsel %vm6516, %v7342, %v7376
            %v7379 = vshrl.u32 %v6508, 16
            %v7381 = vrot.slane %v7379, 7
            %v7382 = vshll.u32 %v6508, 16
            %v7384 = vor.u32 %v7381, %v7382
            %v7385 = vsel %vm6516, %v7349, %v7384
            %v7387 = vshrl.u32 %v6509, 16
            %v7389 = vrot.slane %v7387, 7
            %v7390 = vshll.u32 %v6509, 16
            %v7392 = vor.u32 %v7389, %v7390
            %v7393 = vsel %vm6516, %v7357, %v7392
            %v7395 = vshrl.u32 %v6510, 16
            %v7397 = vrot.slane %v7395, 7
            %v7398 = vshll.u32 %v6510, 16
            %v7400 = vor.u32 %v7397, %v7398
            %v7401 = vsel %vm6516, %v7365, %v7400
            %v7403 = vshrl.u32 %v6511, 16
            %v7405 = vrot.slane %v7403, 7
            %v7406 = vshll.u32 %v6511, 16
            %v7408 = vor.u32 %v7405, %v7406
            %v7409 = vsel %vm6516, %v7373, %v7408
            %v7411 = vshrl.u32 %v6512, 16
            %v7413 = vrot.slane %v7411, 7
            %v7414 = vshll.u32 %v6512, 16
            %v7416 = vor.u32 %v7413, %v7414
            %v7417 = vsel %vm6516, %v7381, %v7416
            %v7419 = vshrl.u32 %v6513, 16
            %v7421 = vrot.slane %v7419, 7
            %v7422 = vshll.u32 %v6513, 16
            %v7424 = vor.u32 %v7421, %v7422
            %v7425 = vsel %vm6516, %v7389, %v7424
            %v7427 = vshrl.u32 %v6514, 16
            %v7429 = vrot.slane %v7427, 7
            %v7430 = vshll.u32 %v6514, 16
            %v7432 = vor.u32 %v7429, %v7430
            %v7433 = vsel %vm6516, %v7397, %v7432
            %v7435 = vshrl.u32 %v6515, 16
            %v7437 = vrot.slane %v7435, 7
            %v7438 = vshll.u32 %v6515, 16
            %v7440 = vor.u32 %v7437, %v7438
            %v7441 = vsel %vm6516, %v7405, %v7440
            %v7458 = vsel %vm6658, 0, %v7324
            %v7459 = vsel %vm6658, 0, %v7331
            %v7460 = vsel %vm6658, 0, %v7338
            %v7461 = vsel %vm6658, 0, %v7345
            %v7462 = vrot.slane %v7322, 1
            %v7463 = vor.u32 %v7319, %v7462
            %v7464 = vrot.slane %v7350, 1
            %v7465 = vsel %vm6663, %v7463, %v7464
            %v7466 = vrot.slane %v7329, 1
            %v7467 = vor.u32 %v7326, %v7466
            %v7468 = vrot.slane %v7358, 1
            %v7469 = vsel %vm6663, %v7467, %v7468
            %v7470 = vrot.slane %v7336, 1
            %v7471 = vor.u32 %v7333, %v7470
            %v7472 = vrot.slane %v7366, 1
            %v7473 = vsel %vm6663, %v7471, %v7472
            %v7474 = vrot.slane %v7343, 1
            %v7475 = vor.u32 %v7340, %v7474
            %v7476 = vrot.slane %v7374, 1
            %v7477 = vsel %vm6663, %v7475, %v7476
            %v7478 = vor.u32 %v7347, %v7464
            %v7479 = vrot.slane %v7382, 1
            %v7480 = vsel %vm6663, %v7478, %v7479
            %v7481 = vor.u32 %v7355, %v7468
            %v7482 = vrot.slane %v7390, 1
            %v7483 = vsel %vm6663, %v7481, %v7482
            %v7484 = vor.u32 %v7363, %v7472
            %v7485 = vrot.slane %v7398, 1
            %v7486 = vsel %vm6663, %v7484, %v7485
            %v7487 = vor.u32 %v7371, %v7476
            %v7488 = vrot.slane %v7406, 1
            %v7489 = vsel %vm6663, %v7487, %v7488
            %v7490 = vor.u32 %v7379, %v7479
            %v7491 = vrot.slane %v7414, 1
            %v7492 = vsel %vm6663, %v7490, %v7491
            %v7493 = vor.u32 %v7387, %v7482
            %v7494 = vrot.slane %v7422, 1
            %v7495 = vsel %vm6663, %v7493, %v7494
            %v7496 = vor.u32 %v7395, %v7485
            %v7497 = vrot.slane %v7430, 1
            %v7498 = vsel %vm6663, %v7496, %v7497
            %v7499 = vor.u32 %v7403, %v7488
            %v7500 = vrot.slane %v7438, 1
            %v7501 = vsel %vm6663, %v7499, %v7500
            %v7502 = vor.u32 %v7411, %v7491
            %v7503 = vor.u32 %v7419, %v7494
            %v7504 = vor.u32 %v7427, %v7497
            %v7505 = vor.u32 %v7435, %v7500
            %v7522 = vsel %vm6725, %v7502, 0
            %v7523 = vsel %vm6725, %v7503, 0
            %v7524 = vsel %vm6725, %v7504, 0
            %v7525 = vsel %vm6725, %v7505, 0
            %v7526 = vsel %vm6887, 0, %v7458
            %v7527 = vsel %vm6887, 0, %v7459
            %v7528 = vsel %vm6887, 0, %v7460
            %v7529 = vsel %vm6887, 0, %v7461
            %v7530 = vsel %vm6888, 0, %v7353
            %v7531 = vsel %vm6888, 0, %v7361
            %v7532 = vsel %vm6888, 0, %v7369
            %v7533 = vsel %vm6888, 0, %v7377
            %v7534 = vsel %vm6889, 0, %v7385
            %v7535 = vsel %vm6889, 0, %v7393
            %v7536 = vsel %vm6889, 0, %v7401
            %v7537 = vsel %vm6889, 0, %v7409
            %v7538 = vsel %vm6890, 0, %v7417
            %v7539 = vsel %vm6890, 0, %v7425
            %v7540 = vsel %vm6890, 0, %v7433
            %v7541 = vsel %vm6890, 0, %v7441
            %v7542 = vsel %vm6959, 0, %v7465
            %v7543 = vsel %vm6959, 0, %v7469
            %v7544 = vsel %vm6959, 0, %v7473
            %v7545 = vsel %vm6959, 0, %v7477
            %v7546 = vsel %vm6960, 0, %v7480
            %v7547 = vsel %vm6960, 0, %v7483
            %v7548 = vsel %vm6960, 0, %v7486
            %v7549 = vsel %vm6960, 0, %v7489
            %v7550 = vsel %vm6961, 0, %v7492
            %v7551 = vsel %vm6961, 0, %v7495
            %v7552 = vsel %vm6961, 0, %v7498
            %v7553 = vsel %vm6961, 0, %v7501
            %v7554 = vsel %vm6962, 0, %v7522
            %v7555 = vsel %vm6962, 0, %v7523
            %v7556 = vsel %vm6962, 0, %v7524
            %v7557 = vsel %vm6962, 0, %v7525
            %7558 = vst [vmem:[%s6979 + $0x180] sm:$0xff] %v7526
            %7559 = vst [vmem:[%s6979 + $0x188] sm:$0xff] %v7527
            %7560 = vst [vmem:[%s6979 + $0x190] sm:$0xff] %v7528
            %7561 = vst [vmem:[%s6979 + $0x198] sm:$0xff] %v7529
            %7562 = vst [vmem:[%s6979 + $0x1a0] sm:$0xff] %v6500
            %7563 = vst [vmem:[%s6979 + $0x1a8] sm:$0xff] %v6501
            %7564 = vst [vmem:[%s6979 + $0x1b0] sm:$0xff] %v6502
            %7565 = vst [vmem:[%s6979 + $0x1b8] sm:$0xff] %v6503
            %7566 = vst [vmem:[%s6979 + $0x1c0] sm:$0xff] %v7542
            %7567 = vst [vmem:[%s6979 + $0x1c8] sm:$0xff] %v7543
            %7568 = vst [vmem:[%s6979 + $0x1d0] sm:$0xff] %v7544
            %7569 = vst [vmem:[%s6979 + $0x1d8] sm:$0xff] %v7545
            %7570 = vst [vmem:[%s6979 + $0x1e0] sm:$0xff] %v7530
            %7571 = vst [vmem:[%s6979 + $0x1e8] sm:$0xff] %v7531
            %7572 = vst [vmem:[%s6979 + $0x1f0] sm:$0xff] %v7532
            %7573 = vst [vmem:[%s6979 + $0x1f8] sm:$0xff] %v7533
            %7574 = vst [vmem:[%s6979 + $0x200] sm:$0xff] %v6504
            %7575 = vst [vmem:[%s6979 + $0x208] sm:$0xff] %v6505
            %7576 = vst [vmem:[%s6979 + $0x210] sm:$0xff] %v6506
            %7577 = vst [vmem:[%s6979 + $0x218] sm:$0xff] %v6507
            %7578 = vst [vmem:[%s6979 + $0x220] sm:$0xff] %v7546
            %7579 = vst [vmem:[%s6979 + $0x228] sm:$0xff] %v7547
            %7580 = vst [vmem:[%s6979 + $0x230] sm:$0xff] %v7548
            %7581 = vst [vmem:[%s6979 + $0x238] sm:$0xff] %v7549
            %7582 = vst [vmem:[%s6979 + $0x240] sm:$0xff] %v7534
            %7583 = vst [vmem:[%s6979 + $0x248] sm:$0xff] %v7535
            %7584 = vst [vmem:[%s6979 + $0x250] sm:$0xff] %v7536
            %7585 = vst [vmem:[%s6979 + $0x258] sm:$0xff] %v7537
            %7586 = vst [vmem:[%s6979 + $0x260] sm:$0xff] %v6508
            %7587 = vst [vmem:[%s6979 + $0x268] sm:$0xff] %v6509
            %7588 = vst [vmem:[%s6979 + $0x270] sm:$0xff] %v6510
            %7589 = vst [vmem:[%s6979 + $0x278] sm:$0xff] %v6511
            %7590 = vst [vmem:[%s6979 + $0x280] sm:$0xff] %v7550
            %7591 = vst [vmem:[%s6979 + $0x288] sm:$0xff] %v7551
            %7592 = vst [vmem:[%s6979 + $0x290] sm:$0xff] %v7552
            %7593 = vst [vmem:[%s6979 + $0x298] sm:$0xff] %v7553
            %7594 = vst [vmem:[%s6979 + $0x2a0] sm:$0xff] %v7538
            %7595 = vst [vmem:[%s6979 + $0x2a8] sm:$0xff] %v7539
            %7596 = vst [vmem:[%s6979 + $0x2b0] sm:$0xff] %v7540
            %7597 = vst [vmem:[%s6979 + $0x2b8] sm:$0xff] %v7541
            %7598 = vst [vmem:[%s6979 + $0x2c0] sm:$0xff] %v6512
            %7599 = vst [vmem:[%s6979 + $0x2c8] sm:$0xff] %v6513
            %7600 = vst [vmem:[%s6979 + $0x2d0] sm:$0xff] %v6514
            %7601 = vst [vmem:[%s6979 + $0x2d8] sm:$0xff] %v6515
            %7602 = vst [vmem:[%s6979 + $0x2e0] sm:$0xff] %v7554
            %7603 = vst [vmem:[%s6979 + $0x2e8] sm:$0xff] %v7555
            %7604 = vst [vmem:[%s6979 + $0x2f0] sm:$0xff] %v7556
            %7605 = vst [vmem:[%s6979 + $0x2f8] sm:$0xff] %v7557
            %v7654 = vrot.slane %v7526, 4
            %v7655 = vrot.slane %v7527, 4
            %v7656 = vrot.slane %v7528, 4
            %v7657 = vrot.slane %v7529, 4
            %v7658 = vrot.slane %v6500, 4
            %v7659 = vrot.slane %v6501, 4
            %v7660 = vrot.slane %v6502, 4
            %v7661 = vrot.slane %v6503, 4
            %v7662 = vrot.slane %v7542, 4
            %v7663 = vrot.slane %v7543, 4
            %v7664 = vrot.slane %v7544, 4
            %v7665 = vrot.slane %v7545, 4
            %v7666 = vrot.slane %v7530, 4
            %v7667 = vsel %vm7076, %v7654, %v7666
            %v7668 = vrot.slane %v7531, 4
            %v7669 = vsel %vm7076, %v7655, %v7668
            %v7670 = vrot.slane %v7532, 4
            %v7671 = vsel %vm7076, %v7656, %v7670
            %v7672 = vrot.slane %v7533, 4
            %v7673 = vsel %vm7076, %v7657, %v7672
            %v7674 = vrot.slane %v6504, 4
            %v7675 = vsel %vm7076, %v7658, %v7674
            %v7676 = vrot.slane %v6505, 4
            %v7677 = vsel %vm7076, %v7659, %v7676
            %v7678 = vrot.slane %v6506, 4
            %v7679 = vsel %vm7076, %v7660, %v7678
            %v7680 = vrot.slane %v6507, 4
            %v7681 = vsel %vm7076, %v7661, %v7680
            %v7682 = vrot.slane %v7546, 4
            %v7683 = vsel %vm7076, %v7662, %v7682
            %v7684 = vrot.slane %v7547, 4
            %v7685 = vsel %vm7076, %v7663, %v7684
            %v7686 = vrot.slane %v7548, 4
            %v7687 = vsel %vm7076, %v7664, %v7686
            %v7688 = vrot.slane %v7549, 4
            %v7689 = vsel %vm7076, %v7665, %v7688
            %v7690 = vrot.slane %v7534, 4
            %v7691 = vsel %vm7076, %v7666, %v7690
            %v7692 = vrot.slane %v7535, 4
            %v7693 = vsel %vm7076, %v7668, %v7692
            %v7694 = vrot.slane %v7536, 4
            %v7695 = vsel %vm7076, %v7670, %v7694
            %v7696 = vrot.slane %v7537, 4
            %v7697 = vsel %vm7076, %v7672, %v7696
            %v7698 = vrot.slane %v6508, 4
            %v7699 = vsel %vm7076, %v7674, %v7698
            %v7700 = vrot.slane %v6509, 4
            %v7701 = vsel %vm7076, %v7676, %v7700
            %v7702 = vrot.slane %v6510, 4
            %v7703 = vsel %vm7076, %v7678, %v7702
            %v7704 = vrot.slane %v6511, 4
            %v7705 = vsel %vm7076, %v7680, %v7704
            %v7706 = vrot.slane %v7550, 4
            %v7707 = vsel %vm7076, %v7682, %v7706
            %v7708 = vrot.slane %v7551, 4
            %v7709 = vsel %vm7076, %v7684, %v7708
            %v7710 = vrot.slane %v7552, 4
            %v7711 = vsel %vm7076, %v7686, %v7710
            %v7712 = vrot.slane %v7553, 4
            %v7713 = vsel %vm7076, %v7688, %v7712
            %v7714 = vrot.slane %v7538, 4
            %v7715 = vsel %vm7076, %v7690, %v7714
            %v7716 = vrot.slane %v7539, 4
            %v7717 = vsel %vm7076, %v7692, %v7716
            %v7718 = vrot.slane %v7540, 4
            %v7719 = vsel %vm7076, %v7694, %v7718
            %v7720 = vrot.slane %v7541, 4
            %v7721 = vsel %vm7076, %v7696, %v7720
            %v7722 = vrot.slane %v6512, 4
            %v7723 = vsel %vm7076, %v7698, %v7722
            %v7724 = vrot.slane %v6513, 4
            %v7725 = vsel %vm7076, %v7700, %v7724
            %v7726 = vrot.slane %v6514, 4
            %v7727 = vsel %vm7076, %v7702, %v7726
            %v7728 = vrot.slane %v6515, 4
            %v7729 = vsel %vm7076, %v7704, %v7728
            %v7730 = vrot.slane %v7554, 4
            %v7731 = vsel %vm7076, %v7706, %v7730
            %v7732 = vrot.slane %v7555, 4
            %v7733 = vsel %vm7076, %v7708, %v7732
            %v7734 = vrot.slane %v7556, 4
            %v7735 = vsel %vm7076, %v7710, %v7734
            %v7736 = vrot.slane %v7557, 4
            %v7737 = vsel %vm7076, %v7712, %v7736
            %7786 = vst [vmem:[#allocation3 + $0x180] sm:$0xf0] %v7654
            %7787 = vst [vmem:[#allocation3 + $0x188] sm:$0xf0] %v7655
            %7788 = vst [vmem:[#allocation3 + $0x190] sm:$0xf0] %v7656
            %7789 = vst [vmem:[#allocation3 + $0x198] sm:$0xf0] %v7657
            %7790 = vst [vmem:[#allocation3 + $0x1a0] sm:$0xf0] %v7658
            %7791 = vst [vmem:[#allocation3 + $0x1a8] sm:$0xf0] %v7659
            %7792 = vst [vmem:[#allocation3 + $0x1b0] sm:$0xf0] %v7660
            %7793 = vst [vmem:[#allocation3 + $0x1b8] sm:$0xf0] %v7661
            %7794 = vst [vmem:[#allocation3 + $0x1c0] sm:$0xf0] %v7662
            %7795 = vst [vmem:[#allocation3 + $0x1c8] sm:$0xf0] %v7663
            %7796 = vst [vmem:[#allocation3 + $0x1d0] sm:$0xf0] %v7664
            %7797 = vst [vmem:[#allocation3 + $0x1d8] sm:$0xf0] %v7665
            %7798 = vst [vmem:[#allocation3 + $0x1e0] sm:$0xff] %v7667
            %7799 = vst [vmem:[#allocation3 + $0x1e8] sm:$0xff] %v7669
            %7800 = vst [vmem:[#allocation3 + $0x1f0] sm:$0xff] %v7671
            %7801 = vst [vmem:[#allocation3 + $0x1f8] sm:$0xff] %v7673
            %7802 = vst [vmem:[#allocation3 + $0x200] sm:$0xff] %v7675
            %7803 = vst [vmem:[#allocation3 + $0x208] sm:$0xff] %v7677
            %7804 = vst [vmem:[#allocation3 + $0x210] sm:$0xff] %v7679
            %7805 = vst [vmem:[#allocation3 + $0x218] sm:$0xff] %v7681
            %7806 = vst [vmem:[#allocation3 + $0x220] sm:$0xff] %v7683
            %7807 = vst [vmem:[#allocation3 + $0x228] sm:$0xff] %v7685
            %7808 = vst [vmem:[#allocation3 + $0x230] sm:$0xff] %v7687
            %7809 = vst [vmem:[#allocation3 + $0x238] sm:$0xff] %v7689
            %7810 = vst [vmem:[#allocation3 + $0x240] sm:$0xff] %v7691
            %7811 = vst [vmem:[#allocation3 + $0x248] sm:$0xff] %v7693
            %7812 = vst [vmem:[#allocation3 + $0x250] sm:$0xff] %v7695
            %7813 = vst [vmem:[#allocation3 + $0x258] sm:$0xff] %v7697
            %7814 = vst [vmem:[#allocation3 + $0x260] sm:$0xff] %v7699
            %7815 = vst [vmem:[#allocation3 + $0x268] sm:$0xff] %v7701
            %7816 = vst [vmem:[#allocation3 + $0x270] sm:$0xff] %v7703
            %7817 = vst [vmem:[#allocation3 + $0x278] sm:$0xff] %v7705
            %7818 = vst [vmem:[#allocation3 + $0x280] sm:$0xff] %v7707
            %7819 = vst [vmem:[#allocation3 + $0x288] sm:$0xff] %v7709
            %7820 = vst [vmem:[#allocation3 + $0x290] sm:$0xff] %v7711
            %7821 = vst [vmem:[#allocation3 + $0x298] sm:$0xff] %v7713
            %7822 = vst [vmem:[#allocation3 + $0x2a0] sm:$0xff] %v7715
            %7823 = vst [vmem:[#allocation3 + $0x2a8] sm:$0xff] %v7717
            %7824 = vst [vmem:[#allocation3 + $0x2b0] sm:$0xff] %v7719
            %7825 = vst [vmem:[#allocation3 + $0x2b8] sm:$0xff] %v7721
            %7826 = vst [vmem:[#allocation3 + $0x2c0] sm:$0xff] %v7723
            %7827 = vst [vmem:[#allocation3 + $0x2c8] sm:$0xff] %v7725
            %7828 = vst [vmem:[#allocation3 + $0x2d0] sm:$0xff] %v7727
            %7829 = vst [vmem:[#allocation3 + $0x2d8] sm:$0xff] %v7729
            %7830 = vst [vmem:[#allocation3 + $0x2e0] sm:$0xff] %v7731
            %7831 = vst [vmem:[#allocation3 + $0x2e8] sm:$0xff] %v7733
            %7832 = vst [vmem:[#allocation3 + $0x2f0] sm:$0xff] %v7735
            %7833 = vst [vmem:[#allocation3 + $0x2f8] sm:$0xff] %v7737
            %7846 = vst [vmem:[%s7269 + $0x180] sm:$0xff] %v7667
            %7847 = vst [vmem:[%s7269 + $0x188] sm:$0xff] %v7669
            %7848 = vst [vmem:[%s7269 + $0x190] sm:$0xff] %v7671
            %7849 = vst [vmem:[%s7269 + $0x198] sm:$0xff] %v7673
            %7850 = vst [vmem:[%s7269 + $0x1a0] sm:$0xff] %v7675
            %7851 = vst [vmem:[%s7269 + $0x1a8] sm:$0xff] %v7677
            %7852 = vst [vmem:[%s7269 + $0x1b0] sm:$0xff] %v7679
            %7853 = vst [vmem:[%s7269 + $0x1b8] sm:$0xff] %v7681
            %7854 = vst [vmem:[%s7269 + $0x1c0] sm:$0xff] %v7683
            %7855 = vst [vmem:[%s7269 + $0x1c8] sm:$0xff] %v7685
            %7856 = vst [vmem:[%s7269 + $0x1d0] sm:$0xff] %v7687
            %7857 = vst [vmem:[%s7269 + $0x1d8] sm:$0xff] %v7689
            %7858 = vst [vmem:[%s7269 + $0x1e0] sm:$0xff] %v7691
            %7859 = vst [vmem:[%s7269 + $0x1e8] sm:$0xff] %v7693
            %7860 = vst [vmem:[%s7269 + $0x1f0] sm:$0xff] %v7695
            %7861 = vst [vmem:[%s7269 + $0x1f8] sm:$0xff] %v7697
            %7862 = vst [vmem:[%s7269 + $0x200] sm:$0xff] %v7699
            %7863 = vst [vmem:[%s7269 + $0x208] sm:$0xff] %v7701
            %7864 = vst [vmem:[%s7269 + $0x210] sm:$0xff] %v7703
            %7865 = vst [vmem:[%s7269 + $0x218] sm:$0xff] %v7705
            %7866 = vst [vmem:[%s7269 + $0x220] sm:$0xff] %v7707
            %7867 = vst [vmem:[%s7269 + $0x228] sm:$0xff] %v7709
            %7868 = vst [vmem:[%s7269 + $0x230] sm:$0xff] %v7711
            %7869 = vst [vmem:[%s7269 + $0x238] sm:$0xff] %v7713
            %7870 = vst [vmem:[%s7269 + $0x240] sm:$0xff] %v7715
            %7871 = vst [vmem:[%s7269 + $0x248] sm:$0xff] %v7717
            %7872 = vst [vmem:[%s7269 + $0x250] sm:$0xff] %v7719
            %7873 = vst [vmem:[%s7269 + $0x258] sm:$0xff] %v7721
            %7874 = vst [vmem:[%s7269 + $0x260] sm:$0xff] %v7723
            %7875 = vst [vmem:[%s7269 + $0x268] sm:$0xff] %v7725
            %7876 = vst [vmem:[%s7269 + $0x270] sm:$0xff] %v7727
            %7877 = vst [vmem:[%s7269 + $0x278] sm:$0xff] %v7729
            %7878 = vst [vmem:[%s7269 + $0x280] sm:$0xff] %v7731
            %7879 = vst [vmem:[%s7269 + $0x288] sm:$0xff] %v7733
            %7880 = vst [vmem:[%s7269 + $0x290] sm:$0xff] %v7735
            %7881 = vst [vmem:[%s7269 + $0x298] sm:$0xff] %v7737
            %7882 = vst [vmem:[%s7269 + $0x2a0] sm:$0xf] %v7714
            %7883 = vst [vmem:[%s7269 + $0x2a8] sm:$0xf] %v7716
            %7884 = vst [vmem:[%s7269 + $0x2b0] sm:$0xf] %v7718
            %7885 = vst [vmem:[%s7269 + $0x2b8] sm:$0xf] %v7720
            %7886 = vst [vmem:[%s7269 + $0x2c0] sm:$0xf] %v7722
            %7887 = vst [vmem:[%s7269 + $0x2c8] sm:$0xf] %v7724
            %7888 = vst [vmem:[%s7269 + $0x2d0] sm:$0xf] %v7726
            %7889 = vst [vmem:[%s7269 + $0x2d8] sm:$0xf] %v7728
            %7890 = vst [vmem:[%s7269 + $0x2e0] sm:$0xf] %v7730
            %7891 = vst [vmem:[%s7269 + $0x2e8] sm:$0xf] %v7732
            %7892 = vst [vmem:[%s7269 + $0x2f0] sm:$0xf] %v7734
            %7893 = vst [vmem:[%s7269 + $0x2f8] sm:$0xf] %v7736
          $region68: #{tpu_custom_call.1} parent=63 // pred_fallthru
            _
          %p7894 = scmp.eq.s32.totalorder %s27, 1
          // Predicated region
          $region69: #{tpu_custom_call.1} parent=63 // pred_check
            %p7895 = pneg %p7894
          $region70: #{tpu_custom_call.1} parent=63 // pred_check_branch
            %7897 = sbr.rel (%p7895) target = $region72
          $region71: #{tpu_custom_call.1} parent=63 // pred_region
            %v7898 = vld [vmem:[#allocation4] sm:$0xff]
            %v7899 = vld [vmem:[#allocation4 + $0x8] sm:$0xff]
            %v7900 = vld [vmem:[#allocation4 + $0x10] sm:$0xff]
            %v7901 = vld [vmem:[#allocation4 + $0x18] sm:$0xff]
            %v7902 = vld [vmem:[#allocation4 + $0x20] sm:$0xff]
            %v7903 = vld [vmem:[#allocation4 + $0x28] sm:$0xff]
            %v7904 = vld [vmem:[#allocation4 + $0x30] sm:$0xff]
            %v7905 = vld [vmem:[#allocation4 + $0x38] sm:$0xff]
            %v7906 = vld [vmem:[#allocation4 + $0x40] sm:$0xff]
            %v7907 = vld [vmem:[#allocation4 + $0x48] sm:$0xff]
            %v7908 = vld [vmem:[#allocation4 + $0x50] sm:$0xff]
            %v7909 = vld [vmem:[#allocation4 + $0x58] sm:$0xff]
            %v7910 = vld [vmem:[#allocation4 + $0x60] sm:$0xff]
            %v7911 = vld [vmem:[#allocation4 + $0x68] sm:$0xff]
            %v7912 = vld [vmem:[#allocation4 + $0x70] sm:$0xff]
            %v7913 = vld [vmem:[#allocation4 + $0x78] sm:$0xff]
            %v7914 = vld [vmem:[#allocation4 + $0x80] sm:$0xff]
            %v7915 = vld [vmem:[#allocation4 + $0x88] sm:$0xff]
            %v7916 = vld [vmem:[#allocation4 + $0x90] sm:$0xff]
            %v7917 = vld [vmem:[#allocation4 + $0x98] sm:$0xff]
            %v7918 = vld [vmem:[#allocation4 + $0xa0] sm:$0xff]
            %v7919 = vld [vmem:[#allocation4 + $0xa8] sm:$0xff]
            %v7920 = vld [vmem:[#allocation4 + $0xb0] sm:$0xff]
            %v7921 = vld [vmem:[#allocation4 + $0xb8] sm:$0xff]
            %v7922 = vld [vmem:[#allocation4 + $0xc0] sm:$0xff]
            %v7923 = vld [vmem:[#allocation4 + $0xc8] sm:$0xff]
            %v7924 = vld [vmem:[#allocation4 + $0xd0] sm:$0xff]
            %v7925 = vld [vmem:[#allocation4 + $0xd8] sm:$0xff]
            %v7926 = vld [vmem:[#allocation4 + $0xe0] sm:$0xff]
            %v7927 = vld [vmem:[#allocation4 + $0xe8] sm:$0xff]
            %v7928 = vld [vmem:[#allocation4 + $0xf0] sm:$0xff]
            %v7929 = vld [vmem:[#allocation4 + $0xf8] sm:$0xff]
            %v7930 = vld [vmem:[#allocation4 + $0x100] sm:$0xff]
            %v7931 = vld [vmem:[#allocation4 + $0x108] sm:$0xff]
            %v7932 = vld [vmem:[#allocation4 + $0x110] sm:$0xff]
            %v7933 = vld [vmem:[#allocation4 + $0x118] sm:$0xff]
            %v7934 = vld [vmem:[#allocation4 + $0x120] sm:$0xff]
            %v7935 = vld [vmem:[#allocation4 + $0x128] sm:$0xff]
            %v7936 = vld [vmem:[#allocation4 + $0x130] sm:$0xff]
            %v7937 = vld [vmem:[#allocation4 + $0x138] sm:$0xff]
            %v7938 = vld [vmem:[#allocation4 + $0x140] sm:$0xff]
            %v7939 = vld [vmem:[#allocation4 + $0x148] sm:$0xff]
            %v7940 = vld [vmem:[#allocation4 + $0x150] sm:$0xff]
            %v7941 = vld [vmem:[#allocation4 + $0x158] sm:$0xff]
            %v7942 = vld [vmem:[#allocation4 + $0x160] sm:$0xff]
            %v7943 = vld [vmem:[#allocation4 + $0x168] sm:$0xff]
            %v7944 = vld [vmem:[#allocation4 + $0x170] sm:$0xff]
            %v7945 = vld [vmem:[#allocation4 + $0x178] sm:$0xff]
            %v7946 = vld [vmem:[#allocation4 + $0x180] sm:$0xff]
            %v7947 = vld [vmem:[#allocation4 + $0x188] sm:$0xff]
            %v7948 = vld [vmem:[#allocation4 + $0x190] sm:$0xff]
            %v7949 = vld [vmem:[#allocation4 + $0x198] sm:$0xff]
            %v7950 = vld [vmem:[#allocation4 + $0x1a0] sm:$0xff]
            %v7951 = vld [vmem:[#allocation4 + $0x1a8] sm:$0xff]
            %v7952 = vld [vmem:[#allocation4 + $0x1b0] sm:$0xff]
            %v7953 = vld [vmem:[#allocation4 + $0x1b8] sm:$0xff]
            %v7954 = vld [vmem:[#allocation4 + $0x1c0] sm:$0xff]
            %v7955 = vld [vmem:[#allocation4 + $0x1c8] sm:$0xff]
            %v7956 = vld [vmem:[#allocation4 + $0x1d0] sm:$0xff]
            %v7957 = vld [vmem:[#allocation4 + $0x1d8] sm:$0xff]
            %v7958 = vld [vmem:[#allocation4 + $0x1e0] sm:$0xff]
            %v7959 = vld [vmem:[#allocation4 + $0x1e8] sm:$0xff]
            %v7960 = vld [vmem:[#allocation4 + $0x1f0] sm:$0xff]
            %v7961 = vld [vmem:[#allocation4 + $0x1f8] sm:$0xff]
            %v7962 = vadd.f32 %v6353, %v7898
            %v7963 = vadd.f32 %v6354, %v7899
            %v7964 = vadd.f32 %v6355, %v7900
            %v7965 = vadd.f32 %v6356, %v7901
            %v7966 = vadd.f32 %v6357, %v7902
            %v7967 = vadd.f32 %v6358, %v7903
            %v7968 = vadd.f32 %v6359, %v7904
            %v7969 = vadd.f32 %v6360, %v7905
            %v7970 = vadd.f32 %v6361, %v7906
            %v7971 = vadd.f32 %v6362, %v7907
            %v7972 = vadd.f32 %v6363, %v7908
            %v7973 = vadd.f32 %v6364, %v7909
            %v7974 = vadd.f32 %v6365, %v7910
            %v7975 = vadd.f32 %v6366, %v7911
            %v7976 = vadd.f32 %v6367, %v7912
            %v7977 = vadd.f32 %v6368, %v7913
            %v7978 = vadd.f32 %v6369, %v7914
            %v7979 = vadd.f32 %v6370, %v7915
            %v7980 = vadd.f32 %v6371, %v7916
            %v7981 = vadd.f32 %v6372, %v7917
            %v7982 = vadd.f32 %v6373, %v7918
            %v7983 = vadd.f32 %v6374, %v7919
            %v7984 = vadd.f32 %v6375, %v7920
            %v7985 = vadd.f32 %v6376, %v7921
            %v7986 = vadd.f32 %v6377, %v7922
            %v7987 = vadd.f32 %v6378, %v7923
            %v7988 = vadd.f32 %v6379, %v7924
            %v7989 = vadd.f32 %v6380, %v7925
            %v7990 = vadd.f32 %v6381, %v7926
            %v7991 = vadd.f32 %v6382, %v7927
            %v7992 = vadd.f32 %v6383, %v7928
            %v7993 = vadd.f32 %v6384, %v7929
            %v7994 = vadd.f32 %v6385, %v7930
            %v7995 = vadd.f32 %v6386, %v7931
            %v7996 = vadd.f32 %v6387, %v7932
            %v7997 = vadd.f32 %v6388, %v7933
            %v7998 = vadd.f32 %v6389, %v7934
            %v7999 = vadd.f32 %v6390, %v7935
            %v8000 = vadd.f32 %v6391, %v7936
            %v8001 = vadd.f32 %v6392, %v7937
            %v8002 = vadd.f32 %v6393, %v7938
            %v8003 = vadd.f32 %v6394, %v7939
            %v8004 = vadd.f32 %v6395, %v7940
            %v8005 = vadd.f32 %v6396, %v7941
            %v8006 = vadd.f32 %v6397, %v7942
            %v8007 = vadd.f32 %v6398, %v7943
            %v8008 = vadd.f32 %v6399, %v7944
            %v8009 = vadd.f32 %v6400, %v7945
            %v8010 = vadd.f32 %v6401, %v7946
            %v8011 = vadd.f32 %v6402, %v7947
            %v8012 = vadd.f32 %v6403, %v7948
            %v8013 = vadd.f32 %v6404, %v7949
            %v8014 = vadd.f32 %v6405, %v7950
            %v8015 = vadd.f32 %v6406, %v7951
            %v8016 = vadd.f32 %v6407, %v7952
            %v8017 = vadd.f32 %v6408, %v7953
            %v8018 = vadd.f32 %v6409, %v7954
            %v8019 = vadd.f32 %v6410, %v7955
            %v8020 = vadd.f32 %v6411, %v7956
            %v8021 = vadd.f32 %v6412, %v7957
            %v8022 = vadd.f32 %v6413, %v7958
            %v8023 = vadd.f32 %v6414, %v7959
            %v8024 = vadd.f32 %v6415, %v7960
            %v8025 = vadd.f32 %v6416, %v7961
            %v8026 = vmax.f32 %v7962, 0.0
            %v8027 = vmax.f32 %v7963, 0.0
            %v8028 = vmax.f32 %v7964, 0.0
            %v8029 = vmax.f32 %v7965, 0.0
            %v8030 = vmax.f32 %v7966, 0.0
            %v8031 = vmax.f32 %v7967, 0.0
            %v8032 = vmax.f32 %v7968, 0.0
            %v8033 = vmax.f32 %v7969, 0.0
            %v8034 = vmax.f32 %v7970, 0.0
            %v8035 = vmax.f32 %v7971, 0.0
            %v8036 = vmax.f32 %v7972, 0.0
            %v8037 = vmax.f32 %v7973, 0.0
            %v8038 = vmax.f32 %v7974, 0.0
            %v8039 = vmax.f32 %v7975, 0.0
            %v8040 = vmax.f32 %v7976, 0.0
            %v8041 = vmax.f32 %v7977, 0.0
            %v8042 = vmax.f32 %v7978, 0.0
            %v8043 = vmax.f32 %v7979, 0.0
            %v8044 = vmax.f32 %v7980, 0.0
            %v8045 = vmax.f32 %v7981, 0.0
            %v8046 = vmax.f32 %v7982, 0.0
            %v8047 = vmax.f32 %v7983, 0.0
            %v8048 = vmax.f32 %v7984, 0.0
            %v8049 = vmax.f32 %v7985, 0.0
            %v8050 = vmax.f32 %v7986, 0.0
            %v8051 = vmax.f32 %v7987, 0.0
            %v8052 = vmax.f32 %v7988, 0.0
            %v8053 = vmax.f32 %v7989, 0.0
            %v8054 = vmax.f32 %v7990, 0.0
            %v8055 = vmax.f32 %v7991, 0.0
            %v8056 = vmax.f32 %v7992, 0.0
            %v8057 = vmax.f32 %v7993, 0.0
            %v8058 = vmax.f32 %v7994, 0.0
            %v8059 = vmax.f32 %v7995, 0.0
            %v8060 = vmax.f32 %v7996, 0.0
            %v8061 = vmax.f32 %v7997, 0.0
            %v8062 = vmax.f32 %v7998, 0.0
            %v8063 = vmax.f32 %v7999, 0.0
            %v8064 = vmax.f32 %v8000, 0.0
            %v8065 = vmax.f32 %v8001, 0.0
            %v8066 = vmax.f32 %v8002, 0.0
            %v8067 = vmax.f32 %v8003, 0.0
            %v8068 = vmax.f32 %v8004, 0.0
            %v8069 = vmax.f32 %v8005, 0.0
            %v8070 = vmax.f32 %v8006, 0.0
            %v8071 = vmax.f32 %v8007, 0.0
            %v8072 = vmax.f32 %v8008, 0.0
            %v8073 = vmax.f32 %v8009, 0.0
            %v8074 = vmax.f32 %v8010, 0.0
            %v8075 = vmax.f32 %v8011, 0.0
            %v8076 = vmax.f32 %v8012, 0.0
            %v8077 = vmax.f32 %v8013, 0.0
            %v8078 = vmax.f32 %v8014, 0.0
            %v8079 = vmax.f32 %v8015, 0.0
            %v8080 = vmax.f32 %v8016, 0.0
            %v8081 = vmax.f32 %v8017, 0.0
            %v8082 = vmax.f32 %v8018, 0.0
            %v8083 = vmax.f32 %v8019, 0.0
            %v8084 = vmax.f32 %v8020, 0.0
            %v8085 = vmax.f32 %v8021, 0.0
            %v8086 = vmax.f32 %v8022, 0.0
            %v8087 = vmax.f32 %v8023, 0.0
            %v8088 = vmax.f32 %v8024, 0.0
            %v8089 = vmax.f32 %v8025, 0.0
            %8090 = vst [vmem:[#allocation12] sm:$0xff] %v8026
            %8091 = vst [vmem:[#allocation12 + $0x8] sm:$0xff] %v8027
            %8092 = vst [vmem:[#allocation12 + $0x10] sm:$0xff] %v8028
            %8093 = vst [vmem:[#allocation12 + $0x18] sm:$0xff] %v8029
            %8094 = vst [vmem:[#allocation12 + $0x20] sm:$0xff] %v8030
            %8095 = vst [vmem:[#allocation12 + $0x28] sm:$0xff] %v8031
            %8096 = vst [vmem:[#allocation12 + $0x30] sm:$0xff] %v8032
            %8097 = vst [vmem:[#allocation12 + $0x38] sm:$0xff] %v8033
            %8098 = vst [vmem:[#allocation12 + $0x40] sm:$0xff] %v8034
            %8099 = vst [vmem:[#allocation12 + $0x48] sm:$0xff] %v8035
            %8100 = vst [vmem:[#allocation12 + $0x50] sm:$0xff] %v8036
            %8101 = vst [vmem:[#allocation12 + $0x58] sm:$0xff] %v8037
            %8102 = vst [vmem:[#allocation12 + $0x60] sm:$0xff] %v8038
            %8103 = vst [vmem:[#allocation12 + $0x68] sm:$0xff] %v8039
            %8104 = vst [vmem:[#allocation12 + $0x70] sm:$0xff] %v8040
            %8105 = vst [vmem:[#allocation12 + $0x78] sm:$0xff] %v8041
            %8106 = vst [vmem:[#allocation12 + $0x80] sm:$0xff] %v8042
            %8107 = vst [vmem:[#allocation12 + $0x88] sm:$0xff] %v8043
            %8108 = vst [vmem:[#allocation12 + $0x90] sm:$0xff] %v8044
            %8109 = vst [vmem:[#allocation12 + $0x98] sm:$0xff] %v8045
            %8110 = vst [vmem:[#allocation12 + $0xa0] sm:$0xff] %v8046
            %8111 = vst [vmem:[#allocation12 + $0xa8] sm:$0xff] %v8047
            %8112 = vst [vmem:[#allocation12 + $0xb0] sm:$0xff] %v8048
            %8113 = vst [vmem:[#allocation12 + $0xb8] sm:$0xff] %v8049
            %8114 = vst [vmem:[#allocation12 + $0xc0] sm:$0xff] %v8050
            %8115 = vst [vmem:[#allocation12 + $0xc8] sm:$0xff] %v8051
            %8116 = vst [vmem:[#allocation12 + $0xd0] sm:$0xff] %v8052
            %8117 = vst [vmem:[#allocation12 + $0xd8] sm:$0xff] %v8053
            %8118 = vst [vmem:[#allocation12 + $0xe0] sm:$0xff] %v8054
            %8119 = vst [vmem:[#allocation12 + $0xe8] sm:$0xff] %v8055
            %8120 = vst [vmem:[#allocation12 + $0xf0] sm:$0xff] %v8056
            %8121 = vst [vmem:[#allocation12 + $0xf8] sm:$0xff] %v8057
            %8122 = vst [vmem:[#allocation12 + $0x100] sm:$0xff] %v8058
            %8123 = vst [vmem:[#allocation12 + $0x108] sm:$0xff] %v8059
            %8124 = vst [vmem:[#allocation12 + $0x110] sm:$0xff] %v8060
            %8125 = vst [vmem:[#allocation12 + $0x118] sm:$0xff] %v8061
            %8126 = vst [vmem:[#allocation12 + $0x120] sm:$0xff] %v8062
            %8127 = vst [vmem:[#allocation12 + $0x128] sm:$0xff] %v8063
            %8128 = vst [vmem:[#allocation12 + $0x130] sm:$0xff] %v8064
            %8129 = vst [vmem:[#allocation12 + $0x138] sm:$0xff] %v8065
            %8130 = vst [vmem:[#allocation12 + $0x140] sm:$0xff] %v8066
            %8131 = vst [vmem:[#allocation12 + $0x148] sm:$0xff] %v8067
            %8132 = vst [vmem:[#allocation12 + $0x150] sm:$0xff] %v8068
            %8133 = vst [vmem:[#allocation12 + $0x158] sm:$0xff] %v8069
            %8134 = vst [vmem:[#allocation12 + $0x160] sm:$0xff] %v8070
            %8135 = vst [vmem:[#allocation12 + $0x168] sm:$0xff] %v8071
            %8136 = vst [vmem:[#allocation12 + $0x170] sm:$0xff] %v8072
            %8137 = vst [vmem:[#allocation12 + $0x178] sm:$0xff] %v8073
            %8138 = vst [vmem:[#allocation12 + $0x180] sm:$0xff] %v8074
            %8139 = vst [vmem:[#allocation12 + $0x188] sm:$0xff] %v8075
            %8140 = vst [vmem:[#allocation12 + $0x190] sm:$0xff] %v8076
            %8141 = vst [vmem:[#allocation12 + $0x198] sm:$0xff] %v8077
            %8142 = vst [vmem:[#allocation12 + $0x1a0] sm:$0xff] %v8078
            %8143 = vst [vmem:[#allocation12 + $0x1a8] sm:$0xff] %v8079
            %8144 = vst [vmem:[#allocation12 + $0x1b0] sm:$0xff] %v8080
            %8145 = vst [vmem:[#allocation12 + $0x1b8] sm:$0xff] %v8081
            %8146 = vst [vmem:[#allocation12 + $0x1c0] sm:$0xff] %v8082
            %8147 = vst [vmem:[#allocation12 + $0x1c8] sm:$0xff] %v8083
            %8148 = vst [vmem:[#allocation12 + $0x1d0] sm:$0xff] %v8084
            %8149 = vst [vmem:[#allocation12 + $0x1d8] sm:$0xff] %v8085
            %8150 = vst [vmem:[#allocation12 + $0x1e0] sm:$0xff] %v8086
            %8151 = vst [vmem:[#allocation12 + $0x1e8] sm:$0xff] %v8087
            %8152 = vst [vmem:[#allocation12 + $0x1f0] sm:$0xff] %v8088
            %8153 = vst [vmem:[#allocation12 + $0x1f8] sm:$0xff] %v8089
          $region72: #{tpu_custom_call.1} parent=63 // pred_fallthru
            _
        $region64: #{tpu_custom_call.1} parent=35 // pred_fallthru
          _
        // Predicated region
        $region73: #{tpu_custom_call.1} parent=35 // pred_check
          %p8154 = pneg %p149
        $region74: #{tpu_custom_call.1} parent=35 // pred_check_branch
          %8156 = sbr.rel (%p8154) target = $region76
        $region75: #{tpu_custom_call.1} parent=35 // pred_region
          %s8158 = ssub.s32 8192, 8192
          %8159 = vsyncadd [#allocation6], %s8158
          %s8160 = sshll.u32 [#allocation12], 4
          %s8161 = int_to_ptr.vmem [resolvable:$true] %s8160
          %8166 = dma.vmem_to_hbm [thread:$0]  %s8161, 8192, %s4, [#allocation6], 512, 512, 32
        $region76: #{tpu_custom_call.1} parent=35 // pred_fallthru
          _
        // Predicated region
        $region77: #{tpu_custom_call.1} parent=35 // pred_check
          %p8167 = pneg %p149
        $region78: #{tpu_custom_call.1} parent=35 // pred_check_branch
          %8169 = sbr.rel (%p8167) target = $region80
        $region79: #{tpu_custom_call.1} parent=35 // pred_region
          %8170 = dma.done [#allocation6], 8192
        $region80: #{tpu_custom_call.1} parent=35 // pred_fallthru
          _
      $region36: #{tpu_custom_call.1} parent=5 // pred_fallthru
        _
      %p8171 = scmp.le.s32.totalorder 2, %s18
      // Predicated region
      $region81: #{tpu_custom_call.1} parent=5 // pred_check
        %p8172 = pneg %p8171
      $region82: #{tpu_custom_call.1} parent=5 // pred_check_branch
        %8174 = sbr.rel (%p8172) target = $region84
      $region83: #{tpu_custom_call.1} parent=5 // pred_region
        %s8175 = ssub.s32 %s18, 2
      $region84: #{tpu_custom_call.1} parent=5 // pred_fallthru
        _
    $region6: #{tpu_custom_call.1} parent=1 // loop_footer
      %s22 = sadd.s32 1, %s18
    $region7: #{tpu_custom_call.1} parent=1 // loop_footer_branch
      %17 = sbr.rel target = $region3
    $region8: #{tpu_custom_call.1} parent=1 // loop_exit
      _
    %8176 = vsyncpa [#allocation5], 1
    %s8177 = scalar_lea.sflag [#allocation5], 1
    %8178 = vsyncpa %s8177, 1
    %8179 = vsyncpa [#allocation8], 1
    %s8180 = scalar_lea.sflag [#allocation8], 1
    %8181 = vsyncpa %s8180, 1
    %8182 = vsyncpa [#allocation11], 1
    %s8183 = scalar_lea.sflag [#allocation11], 1
    %8184 = vsyncpa %s8183, 1
    %8185 = vsyncpa [#allocation6], 1
    %s8186 = scalar_lea.sflag [#allocation6], 1
    %8187 = vsyncpa %s8186, 1

</llo_original>
